<compile_context>
chip_gen: v7x
topology: tpu7x:2x2x1
jax: 0.10.0
libtpu: 0.0.40
codegen_flags: <defaults>
</compile_context>

<pallas_src>
import functools

import jax
import jax.numpy as jnp
import numpy as np
from jax.experimental import pallas as pl
from jax.experimental.pallas import tpu as pltpu


_LANE = 128  # pad Cout to a multiple of the lane width for dense stores


def _round_up(x, m):
    return ((x + m - 1) // m) * m


def _vmem_limit_bytes():
    """Generation-aware scoped-VMEM budget (v5e/v6e: 128 MiB, v7x: 64 MiB)."""
    try:
        cap = int(pltpu.get_tpu_info().vmem_capacity_bytes)
    except Exception:
        cap = 64 * 1024 * 1024
    return int(min(max(cap * 3 // 4, 32 * 1024 * 1024), 100 * 1024 * 1024))


# ---------------------------------------------------------------------------
# Fused Pallas kernel: conv1+bn1+relu -> conv2+bn2 -> shortcut add -> relu
# ---------------------------------------------------------------------------
def _basic_block_kernel(x_ref, w1_ref, b1_ref, w2_ref, b2_ref, wsc_ref,
                        mask_ref, o_ref, y1p_ref, *, stride, ho, wo):
    """One image per grid step.

    x_ref:    (1, s*s, (ho+3)*(wo+2), Cin)  bf16  phase-decomposed padded input
    w1_ref:   (9, Cin, Cout_p)              bf16  BN1 scale folded in
    b1_ref:   (1, Cout_p)                   f32
    w2_ref:   (9, Cout_p, Cout_p)           bf16  BN2 scale folded in
    b2_ref:   (1, Cout_p)                   f32   (+ shortcut-BN bias)
    wsc_ref:  (Cin, Cout_p)                 bf16  1x1 shortcut (or identity)
    mask_ref: (ho*(wo+2), 1)                f32   1 on valid cols, 0 on wrap
    o_ref:    (1, ho*(wo+2), Cout_p)        bf16
    y1p_ref:  ((ho+3)*(wo+2), Cout_p)       bf16  VMEM scratch (padded y1)
    """
    s = stride
    wq = wo + 2
    m1 = ho * wq
    mq, cout_p = y1p_ref.shape

    # ---- conv1 (3x3, stride s) + folded BN1 + ReLU ----
    # Every tap of the phase-decomposed flat input is a static contiguous slab.
    acc1 = None
    for kh in range(3):
        for kw in range(3):
            ph = (kh % s) * s + (kw % s)
            off = (kh // s) * wq + (kw // s)
            tap = x_ref[0, ph, off:off + m1, :]
            d = jnp.dot(tap, w1_ref[3 * kh + kw, :, :],
                        preferred_element_type=jnp.float32)
            acc1 = d if acc1 is None else acc1 + d
    # mask zeroes the 2 wrap-around columns per output row; they double as
    # conv2's left/right zero padding in the flat layout below.
    y1 = jnp.maximum(acc1 + b1_ref[...], 0.0) * mask_ref[...]

    # ---- re-layout y1 into its zero-padded flat form (same row stride wq) ----
    y1p_ref[...] = jnp.zeros((mq, cout_p), y1p_ref.dtype)
    y1p_ref[wq + 1:wq + 1 + m1, :] = y1.astype(y1p_ref.dtype)

    # ---- conv2 (3x3, stride 1) + folded BN2 ----
    acc2 = None
    for kh in range(3):
        for kw in range(3):
            off = kh * wq + kw
            tap = y1p_ref[off:off + m1, :]
            d = jnp.dot(tap, w2_ref[3 * kh + kw, :, :],
                        preferred_element_type=jnp.float32)
            acc2 = d if acc2 is None else acc2 + d

    # ---- shortcut (1x1, folded BN / identity) + residual add + ReLU ----
    # The residual slab is exactly conv1's centre tap (kh=kw=1).
    ph_c = (1 % s) * s + (1 % s)
    off_c = (1 // s) * wq + (1 // s)
    res = x_ref[0, ph_c, off_c:off_c + m1, :]
    sc = jnp.dot(res, wsc_ref[...], preferred_element_type=jnp.float32)
    out = jnp.maximum(acc2 + b2_ref[...] + sc, 0.0)
    o_ref[0, :, :] = out.astype(o_ref.dtype)


def _basic_block_call(xph, w1, b1, w2, b2, wsc, mask, *, stride, ho, wo):
    n, s2, mq, cin = xph.shape
    cout_p = w1.shape[-1]
    wq = wo + 2
    m1 = ho * wq
    assert mq == (ho + 3) * wq

    kernel = functools.partial(_basic_block_kernel,
                               stride=stride, ho=ho, wo=wo)
    return pl.pallas_call(
        kernel,
        out_shape=jax.ShapeDtypeStruct((n, m1, cout_p), jnp.bfloat16),
        grid=(n,),
        in_specs=[
            pl.BlockSpec((1, s2, mq, cin), lambda i: (i, 0, 0, 0)),
            pl.BlockSpec((9, cin, cout_p), lambda i: (0, 0, 0)),
            pl.BlockSpec((1, cout_p), lambda i: (0, 0)),
            pl.BlockSpec((9, cout_p, cout_p), lambda i: (0, 0, 0)),
            pl.BlockSpec((1, cout_p), lambda i: (0, 0)),
            pl.BlockSpec((cin, cout_p), lambda i: (0, 0)),
            pl.BlockSpec((m1, 1), lambda i: (0, 0)),
        ],
        out_specs=pl.BlockSpec((1, m1, cout_p), lambda i: (i, 0, 0)),
        scratch_shapes=[pltpu.VMEM((mq, cout_p), jnp.bfloat16)],
        compiler_params=pltpu.CompilerParams(
            dimension_semantics=("parallel",),
            vmem_limit_bytes=_vmem_limit_bytes(),
        ),
    )(xph, w1, b1, w2, b2, wsc, mask)


# ---------------------------------------------------------------------------
# Wrapper glue: layout prep (bf16, pad, phase-decompose, flatten) + epilogue
# ---------------------------------------------------------------------------
def basic_block_forward(x_nchw, params, *, stride=1, out_channels=None):
    """Matches BasicBlock.forward (eval-mode BN). NCHW f32 in / out."""
    s = stride
    x = jnp.transpose(x_nchw, (0, 2, 3, 1)).astype(jnp.bfloat16)   # NHWC bf16
    n, h, w, cin = x.shape
    cout = out_channels
    cout_p = params['w1'].shape[-1]
    ho = (h - 1) // s + 1
    wo = (w - 1) // s + 1
    hq, wq = ho + 3, wo + 2

    # Zero-pad (1 top/left, remainder bottom/right) so each of the s*s stride
    # phases is exactly (hq, wq); then flatten spatial per phase.
    xp = jnp.pad(x, ((0, 0), (1, s * hq - h - 1), (1, s * wq - w - 1), (0, 0)))
    xph = xp.reshape(n, hq, s, wq, s, cin).transpose(0, 2, 4, 1, 3, 5)
    xph = xph.reshape(n, s * s, hq * wq, cin)

    # Column-validity mask for the flat conv1 output.
    m1 = ho * wq
    mask = jnp.asarray(
        (np.arange(m1) % wq < wo).astype(np.float32)).reshape(m1, 1)

    out = _basic_block_call(xph, params['w1'], params['b1'], params['w2'],
                            params['b2'], params['wsc'], mask,
                            stride=s, ho=ho, wo=wo)
    out = out.reshape(n, ho, wq, cout_p)[:, :, :wo, :cout]
    return jnp.transpose(out, (0, 3, 1, 2)).astype(jnp.float32)


def init_basic_block_params(key, in_channels, out_channels, stride=1):
    """Deterministic synthetic parameters (PyTorch shapes) + kernel form."""
    eps = 1e-5
    keys = jax.random.split(key, 6)
    cout_p = _round_up(out_channels, _LANE)

    def conv_init(k, cout, cin, ksz):
        bound = 1.0 / np.sqrt(cin * ksz * ksz)
        return jax.random.uniform(k, (cout, cin, ksz, ksz), jnp.float32,
                                  -bound, bound)

    def bn_init(k, c):
        k1, k2, k3, k4 = jax.random.split(k, 4)
        gamma = jax.random.uniform(k1, (c,), jnp.float32, 0.5, 1.5)
        beta = 0.1 * jax.random.normal(k2, (c,), jnp.float32)
        mean = 0.1 * jax.random.normal(k3, (c,), jnp.float32)
        var = jax.random.uniform(k4, (c,), jnp.float32, 0.5, 1.5)
        return gamma, beta, mean, var

    def fold(bn):
        g, b, m, v = bn
        sc = g / jnp.sqrt(v + eps)
        return sc, b - m * sc

    def pad_bias(v):
        return jnp.pad(v, (0, cout_p - v.shape[0]))[None, :].astype(jnp.float32)

    def tap_weight(w_oihw, scale, cin_pad):
        # (O, I, 3, 3) -> (9, I_pad, Cout_p) bf16 with the BN scale folded in.
        o, i = w_oihw.shape[:2]
        wk = jnp.transpose(w_oihw, (2, 3, 1, 0)).reshape(9, i, o)
        wk = wk * scale[None, None, :]
        wk = jnp.pad(wk, ((0, 0), (0, cin_pad - i), (0, cout_p - o)))
        return wk.astype(jnp.bfloat16)

    conv1_w = conv_init(keys[0], out_channels, in_channels, 3)
    bn1 = bn_init(keys[1], out_channels)
    conv2_w = conv_init(keys[2], out_channels, out_channels, 3)
    bn2 = bn_init(keys[3], out_channels)
    raw = {'conv1_w': conv1_w, 'bn1': bn1, 'conv2_w': conv2_w, 'bn2': bn2}

    s1, b1 = fold(bn1)
    s2, b2 = fold(bn2)
    params = {
        'w1': tap_weight(conv1_w, s1, in_channels),
        'b1': pad_bias(b1),
        'w2': tap_weight(conv2_w, s2, cout_p),
        'b2': pad_bias(b2),
    }

    if stride != 1 or in_channels != out_channels:
        sc_w = conv_init(keys[4], out_channels, in_channels, 1)
        bn_sc = bn_init(keys[5], out_channels)
        raw['sc_w'] = sc_w
        raw['bn_sc'] = bn_sc
        ssc, bsc = fold(bn_sc)
        wsc = jnp.transpose(sc_w[:, :, 0, 0], (1, 0)) * ssc[None, :]
        params['wsc'] = jnp.pad(
            wsc, ((0, 0), (0, cout_p - out_channels))).astype(jnp.bfloat16)
        params['b2'] = pad_bias(b2 + bsc)
    else:
        # Identity shortcut expressed as an exact identity 1x1 projection.
        assert in_channels == out_channels
        eye = jnp.eye(in_channels, dtype=jnp.float32)
        params['wsc'] = jnp.pad(
            eye, ((0, 0), (0, cout_p - out_channels))).astype(jnp.bfloat16)
    return raw, params


# ---------------------------------------------------------------------------
# Pure-JAX reference (lax conv, f32 HIGHEST) for the correctness check
# ---------------------------------------------------------------------------
def reference_forward(x_nchw, raw, stride=1):
    def conv(x, w, s, pad):
        return jax.lax.conv_general_dilated(
            x, w, window_strides=(s, s), padding=[(pad, pad), (pad, pad)],
            dimension_numbers=('NCHW', 'OIHW', 'NCHW'),
            precision=jax.lax.Precision.HIGHEST)

    def bn(x, g, b, m, v):
        sc = g / jnp.sqrt(v + 1e-5)
        return x * sc[None, :, None, None] + (b - m * sc)[None, :, None, None]

    y = jax.nn.relu(bn(conv(x_nchw, raw['conv1_w'], stride, 1), *raw['bn1']))
    y = bn(conv(y, raw['conv2_w'], 1, 1), *raw['bn2'])
    if 'sc_w' in raw:
        sc = bn(conv(x_nchw, raw['sc_w'], stride, 0), *raw['bn_sc'])
    else:
        sc = x_nchw
    return jax.nn.relu(y + sc)


if __name__ == "__main__":
    key = jax.random.PRNGKey(0)
    N, H, W = 2, 16, 16
    # (Cin, Cout, stride): projection / identity / strided-projection shortcut.
    configs = [(4, 8, 1), (8, 8, 1), (4, 8, 2)]

    for cin, cout, stride in configs:
        key, k_x, k_p = jax.random.split(key, 3)
        x = jax.random.normal(k_x, (N, cin, H, W), jnp.float32)
        raw, params = init_basic_block_params(k_p, cin, cout, stride)

        fwd = jax.jit(functools.partial(basic_block_forward,
                                        stride=stride, out_channels=cout))
        out = jax.block_until_ready(fwd(x, params))

        ho = (H - 1) // stride + 1
        assert out.shape == (N, cout, ho, ho), out.shape

        ref = reference_forward(x, raw, stride)
        # bf16 MXU operands (f32 accumulation) vs f32 HIGHEST reference.
        np.testing.assert_allclose(np.asarray(out), np.asarray(ref),
                                   rtol=4e-2, atol=4e-2)

    print("KERNEL_OK")
</pallas_src>

<mosaic_0001>
module attributes {stable_mosaic.version = 11 : i64} {
  func.func @_basic_block_kernel(%arg0: i32, %arg1: memref<1x1x342x4xbf16, #tpu.memory_space<vmem>>, %arg2: memref<9x4x128xbf16, #tpu.memory_space<vmem>>, %arg3: memref<1x128xf32, #tpu.memory_space<vmem>>, %arg4: memref<9x128x128xbf16, #tpu.memory_space<vmem>>, %arg5: memref<1x128xf32, #tpu.memory_space<vmem>>, %arg6: memref<4x128xbf16, #tpu.memory_space<vmem>>, %arg7: memref<288x1xf32, #tpu.memory_space<vmem>>, %arg8: memref<1x288x128xbf16, #tpu.memory_space<vmem>>, %arg9: memref<342x128xbf16, #tpu.memory_space<vmem>>) attributes {dimension_semantics = [#tpu.dimension_semantics<parallel>], iteration_bounds = array<i64: 2>, scalar_prefetch = 0 : i64, scratch_operands = 1 : i64, tpu.core_type = #tpu.core_type<tc>, window_params = [{transform_indices = @transform_0, window_bounds = array<i64: 1, 1, 342, 4>}, {pipeline_mode = #tpu.pipeline_mode<synchronous>, transform_indices = @transform_1, window_bounds = array<i64: 9, 4, 128>}, {pipeline_mode = #tpu.pipeline_mode<synchronous>, transform_indices = @transform_2, window_bounds = array<i64: 1, 128>}, {pipeline_mode = #tpu.pipeline_mode<synchronous>, transform_indices = @transform_3, window_bounds = array<i64: 9, 128, 128>}, {pipeline_mode = #tpu.pipeline_mode<synchronous>, transform_indices = @transform_4, window_bounds = array<i64: 1, 128>}, {pipeline_mode = #tpu.pipeline_mode<synchronous>, transform_indices = @transform_5, window_bounds = array<i64: 4, 128>}, {pipeline_mode = #tpu.pipeline_mode<synchronous>, transform_indices = @transform_6, window_bounds = array<i64: 288, 1>}, {transform_indices = @transform_7, window_bounds = array<i64: 1, 288, 128>}]} {
    %c0 = arith.constant 0 : index
    %c0_0 = arith.constant 0 : index
    %c0_1 = arith.constant 0 : index
    %c0_2 = arith.constant 0 : index
    %0 = vector.load %arg1[%c0, %c0_0, %c0_1, %c0_2] : memref<1x1x342x4xbf16, #tpu.memory_space<vmem>>, vector<1x1x288x4xbf16>
    %1 = vector.shape_cast %0 : vector<1x1x288x4xbf16> to vector<288x4xbf16>
    %c0_3 = arith.constant 0 : index
    %c0_4 = arith.constant 0 : index
    %c0_5 = arith.constant 0 : index
    %2 = vector.load %arg2[%c0_3, %c0_4, %c0_5] : memref<9x4x128xbf16, #tpu.memory_space<vmem>>, vector<1x4x128xbf16>
    %3 = vector.shape_cast %2 : vector<1x4x128xbf16> to vector<4x128xbf16>
    %cst = arith.constant dense<0.000000e+00> : vector<288x128xf32>
    %4 = tpu.matmul %1, %3, %cst {dimension_numbers = #tpu.dot_dimension_numbers<[1], [0], [0], [1], [0, 0, 1, 1], [], []>} : vector<288x4xbf16>, vector<4x128xbf16>, vector<288x128xf32> -> vector<288x128xf32>
    %c0_6 = arith.constant 0 : index
    %c0_7 = arith.constant 0 : index
    %c1 = arith.constant 1 : index
    %c0_8 = arith.constant 0 : index
    %5 = vector.load %arg1[%c0_6, %c0_7, %c1, %c0_8] : memref<1x1x342x4xbf16, #tpu.memory_space<vmem>>, vector<1x1x288x4xbf16>
    %6 = vector.shape_cast %5 : vector<1x1x288x4xbf16> to vector<288x4xbf16>
    %c1_9 = arith.constant 1 : index
    %c0_10 = arith.constant 0 : index
    %c0_11 = arith.constant 0 : index
    %7 = vector.load %arg2[%c1_9, %c0_10, %c0_11] : memref<9x4x128xbf16, #tpu.memory_space<vmem>>, vector<1x4x128xbf16>
    %8 = vector.shape_cast %7 : vector<1x4x128xbf16> to vector<4x128xbf16>
    %cst_12 = arith.constant dense<0.000000e+00> : vector<288x128xf32>
    %9 = tpu.matmul %6, %8, %cst_12 {dimension_numbers = #tpu.dot_dimension_numbers<[1], [0], [0], [1], [0, 0, 1, 1], [], []>} : vector<288x4xbf16>, vector<4x128xbf16>, vector<288x128xf32> -> vector<288x128xf32>
    %10 = arith.addf %4, %9 : vector<288x128xf32>
    %c0_13 = arith.constant 0 : index
    %c0_14 = arith.constant 0 : index
    %c2 = arith.constant 2 : index
    %c0_15 = arith.constant 0 : index
    %11 = vector.load %arg1[%c0_13, %c0_14, %c2, %c0_15] : memref<1x1x342x4xbf16, #tpu.memory_space<vmem>>, vector<1x1x288x4xbf16>
    %12 = vector.shape_cast %11 : vector<1x1x288x4xbf16> to vector<288x4xbf16>
    %c2_16 = arith.constant 2 : index
    %c0_17 = arith.constant 0 : index
    %c0_18 = arith.constant 0 : index
    %13 = vector.load %arg2[%c2_16, %c0_17, %c0_18] : memref<9x4x128xbf16, #tpu.memory_space<vmem>>, vector<1x4x128xbf16>
    %14 = vector.shape_cast %13 : vector<1x4x128xbf16> to vector<4x128xbf16>
    %cst_19 = arith.constant dense<0.000000e+00> : vector<288x128xf32>
    %15 = tpu.matmul %12, %14, %cst_19 {dimension_numbers = #tpu.dot_dimension_numbers<[1], [0], [0], [1], [0, 0, 1, 1], [], []>} : vector<288x4xbf16>, vector<4x128xbf16>, vector<288x128xf32> -> vector<288x128xf32>
    %16 = arith.addf %10, %15 : vector<288x128xf32>
    %c0_20 = arith.constant 0 : index
    %c0_21 = arith.constant 0 : index
    %c18 = arith.constant 18 : index
    %c0_22 = arith.constant 0 : index
    %17 = vector.load %arg1[%c0_20, %c0_21, %c18, %c0_22] : memref<1x1x342x4xbf16, #tpu.memory_space<vmem>>, vector<1x1x288x4xbf16>
    %18 = vector.shape_cast %17 : vector<1x1x288x4xbf16> to vector<288x4xbf16>
    %c3 = arith.constant 3 : index
    %c0_23 = arith.constant 0 : index
    %c0_24 = arith.constant 0 : index
    %19 = vector.load %arg2[%c3, %c0_23, %c0_24] : memref<9x4x128xbf16, #tpu.memory_space<vmem>>, vector<1x4x128xbf16>
    %20 = vector.shape_cast %19 : vector<1x4x128xbf16> to vector<4x128xbf16>
    %cst_25 = arith.constant dense<0.000000e+00> : vector<288x128xf32>
    %21 = tpu.matmul %18, %20, %cst_25 {dimension_numbers = #tpu.dot_dimension_numbers<[1], [0], [0], [1], [0, 0, 1, 1], [], []>} : vector<288x4xbf16>, vector<4x128xbf16>, vector<288x128xf32> -> vector<288x128xf32>
    %22 = arith.addf %16, %21 : vector<288x128xf32>
    %c0_26 = arith.constant 0 : index
    %c0_27 = arith.constant 0 : index
    %c19 = arith.constant 19 : index
    %c0_28 = arith.constant 0 : index
    %23 = vector.load %arg1[%c0_26, %c0_27, %c19, %c0_28] : memref<1x1x342x4xbf16, #tpu.memory_space<vmem>>, vector<1x1x288x4xbf16>
    %24 = vector.shape_cast %23 : vector<1x1x288x4xbf16> to vector<288x4xbf16>
    %c4 = arith.constant 4 : index
    %c0_29 = arith.constant 0 : index
    %c0_30 = arith.constant 0 : index
    %25 = vector.load %arg2[%c4, %c0_29, %c0_30] : memref<9x4x128xbf16, #tpu.memory_space<vmem>>, vector<1x4x128xbf16>
    %26 = vector.shape_cast %25 : vector<1x4x128xbf16> to vector<4x128xbf16>
    %cst_31 = arith.constant dense<0.000000e+00> : vector<288x128xf32>
    %27 = tpu.matmul %24, %26, %cst_31 {dimension_numbers = #tpu.dot_dimension_numbers<[1], [0], [0], [1], [0, 0, 1, 1], [], []>} : vector<288x4xbf16>, vector<4x128xbf16>, vector<288x128xf32> -> vector<288x128xf32>
    %28 = arith.addf %22, %27 : vector<288x128xf32>
    %c0_32 = arith.constant 0 : index
    %c0_33 = arith.constant 0 : index
    %c20 = arith.constant 20 : index
    %c0_34 = arith.constant 0 : index
    %29 = vector.load %arg1[%c0_32, %c0_33, %c20, %c0_34] : memref<1x1x342x4xbf16, #tpu.memory_space<vmem>>, vector<1x1x288x4xbf16>
    %30 = vector.shape_cast %29 : vector<1x1x288x4xbf16> to vector<288x4xbf16>
    %c5 = arith.constant 5 : index
    %c0_35 = arith.constant 0 : index
    %c0_36 = arith.constant 0 : index
    %31 = vector.load %arg2[%c5, %c0_35, %c0_36] : memref<9x4x128xbf16, #tpu.memory_space<vmem>>, vector<1x4x128xbf16>
    %32 = vector.shape_cast %31 : vector<1x4x128xbf16> to vector<4x128xbf16>
    %cst_37 = arith.constant dense<0.000000e+00> : vector<288x128xf32>
    %33 = tpu.matmul %30, %32, %cst_37 {dimension_numbers = #tpu.dot_dimension_numbers<[1], [0], [0], [1], [0, 0, 1, 1], [], []>} : vector<288x4xbf16>, vector<4x128xbf16>, vector<288x128xf32> -> vector<288x128xf32>
    %34 = arith.addf %28, %33 : vector<288x128xf32>
    %c0_38 = arith.constant 0 : index
    %c0_39 = arith.constant 0 : index
    %c36 = arith.constant 36 : index
    %c0_40 = arith.constant 0 : index
    %35 = vector.load %arg1[%c0_38, %c0_39, %c36, %c0_40] : memref<1x1x342x4xbf16, #tpu.memory_space<vmem>>, vector<1x1x288x4xbf16>
    %36 = vector.shape_cast %35 : vector<1x1x288x4xbf16> to vector<288x4xbf16>
    %c6 = arith.constant 6 : index
    %c0_41 = arith.constant 0 : index
    %c0_42 = arith.constant 0 : index
    %37 = vector.load %arg2[%c6, %c0_41, %c0_42] : memref<9x4x128xbf16, #tpu.memory_space<vmem>>, vector<1x4x128xbf16>
    %38 = vector.shape_cast %37 : vector<1x4x128xbf16> to vector<4x128xbf16>
    %cst_43 = arith.constant dense<0.000000e+00> : vector<288x128xf32>
    %39 = tpu.matmul %36, %38, %cst_43 {dimension_numbers = #tpu.dot_dimension_numbers<[1], [0], [0], [1], [0, 0, 1, 1], [], []>} : vector<288x4xbf16>, vector<4x128xbf16>, vector<288x128xf32> -> vector<288x128xf32>
    %40 = arith.addf %34, %39 : vector<288x128xf32>
    %c0_44 = arith.constant 0 : index
    %c0_45 = arith.constant 0 : index
    %c37 = arith.constant 37 : index
    %c0_46 = arith.constant 0 : index
    %41 = vector.load %arg1[%c0_44, %c0_45, %c37, %c0_46] : memref<1x1x342x4xbf16, #tpu.memory_space<vmem>>, vector<1x1x288x4xbf16>
    %42 = vector.shape_cast %41 : vector<1x1x288x4xbf16> to vector<288x4xbf16>
    %c7 = arith.constant 7 : index
    %c0_47 = arith.constant 0 : index
    %c0_48 = arith.constant 0 : index
    %43 = vector.load %arg2[%c7, %c0_47, %c0_48] : memref<9x4x128xbf16, #tpu.memory_space<vmem>>, vector<1x4x128xbf16>
    %44 = vector.shape_cast %43 : vector<1x4x128xbf16> to vector<4x128xbf16>
    %cst_49 = arith.constant dense<0.000000e+00> : vector<288x128xf32>
    %45 = tpu.matmul %42, %44, %cst_49 {dimension_numbers = #tpu.dot_dimension_numbers<[1], [0], [0], [1], [0, 0, 1, 1], [], []>} : vector<288x4xbf16>, vector<4x128xbf16>, vector<288x128xf32> -> vector<288x128xf32>
    %46 = arith.addf %40, %45 : vector<288x128xf32>
    %c0_50 = arith.constant 0 : index
    %c0_51 = arith.constant 0 : index
    %c38 = arith.constant 38 : index
    %c0_52 = arith.constant 0 : index
    %47 = vector.load %arg1[%c0_50, %c0_51, %c38, %c0_52] : memref<1x1x342x4xbf16, #tpu.memory_space<vmem>>, vector<1x1x288x4xbf16>
    %48 = vector.shape_cast %47 : vector<1x1x288x4xbf16> to vector<288x4xbf16>
    %c8 = arith.constant 8 : index
    %c0_53 = arith.constant 0 : index
    %c0_54 = arith.constant 0 : index
    %49 = vector.load %arg2[%c8, %c0_53, %c0_54] : memref<9x4x128xbf16, #tpu.memory_space<vmem>>, vector<1x4x128xbf16>
    %50 = vector.shape_cast %49 : vector<1x4x128xbf16> to vector<4x128xbf16>
    %cst_55 = arith.constant dense<0.000000e+00> : vector<288x128xf32>
    %51 = tpu.matmul %48, %50, %cst_55 {dimension_numbers = #tpu.dot_dimension_numbers<[1], [0], [0], [1], [0, 0, 1, 1], [], []>} : vector<288x4xbf16>, vector<4x128xbf16>, vector<288x128xf32> -> vector<288x128xf32>
    %52 = arith.addf %46, %51 : vector<288x128xf32>
    %c0_56 = arith.constant 0 : index
    %c0_57 = arith.constant 0 : index
    %53 = vector.load %arg3[%c0_56, %c0_57] : memref<1x128xf32, #tpu.memory_space<vmem>>, vector<1x128xf32>
    %54 = vector.broadcast %53 : vector<1x128xf32> to vector<288x128xf32>
    %55 = arith.addf %52, %54 : vector<288x128xf32>
    %cst_58 = arith.constant 0.000000e+00 : f32
    %56 = vector.broadcast %cst_58 : f32 to vector<288x128xf32>
    %57 = arith.maximumf %55, %56 : vector<288x128xf32>
    %c0_59 = arith.constant 0 : index
    %c0_60 = arith.constant 0 : index
    %58 = vector.load %arg7[%c0_59, %c0_60] : memref<288x1xf32, #tpu.memory_space<vmem>>, vector<288x1xf32>
    %59 = vector.broadcast %58 : vector<288x1xf32> to vector<288x128xf32>
    %60 = arith.mulf %57, %59 : vector<288x128xf32>
    %cst_61 = arith.constant 0.000000e+00 : bf16
    %61 = vector.broadcast %cst_61 : bf16 to vector<342x128xbf16>
    %c0_62 = arith.constant 0 : index
    %c0_63 = arith.constant 0 : index
    %62 = vector.load %arg9[%c0_62, %c0_63] : memref<342x128xbf16, #tpu.memory_space<vmem>>, vector<342x128xbf16>
    tpu.vector_store %arg9[%c0_62, %c0_63], %61 {strides = array<i32>} : memref<342x128xbf16, #tpu.memory_space<vmem>>, vector<342x128xbf16>,
    %63 = arith.truncf %60 : vector<288x128xf32> to vector<288x128xbf16>
    %c19_64 = arith.constant 19 : index
    %c0_65 = arith.constant 0 : index
    %64 = vector.load %arg9[%c19_64, %c0_65] : memref<342x128xbf16, #tpu.memory_space<vmem>>, vector<288x128xbf16>
    tpu.vector_store %arg9[%c19_64, %c0_65], %63 {strides = array<i32>} : memref<342x128xbf16, #tpu.memory_space<vmem>>, vector<288x128xbf16>,
    %c0_66 = arith.constant 0 : index
    %c0_67 = arith.constant 0 : index
    %65 = vector.load %arg9[%c0_66, %c0_67] : memref<342x128xbf16, #tpu.memory_space<vmem>>, vector<288x128xbf16>
    %c0_68 = arith.constant 0 : index
    %c0_69 = arith.constant 0 : index
    %c0_70 = arith.constant 0 : index
    %66 = vector.load %arg4[%c0_68, %c0_69, %c0_70] : memref<9x128x128xbf16, #tpu.memory_space<vmem>>, vector<1x128x128xbf16>
    %67 = vector.shape_cast %66 : vector<1x128x128xbf16> to vector<128x128xbf16>
    %cst_71 = arith.constant dense<0.000000e+00> : vector<288x128xf32>
    %68 = tpu.matmul %65, %67, %cst_71 {dimension_numbers = #tpu.dot_dimension_numbers<[1], [0], [0], [1], [0, 0, 1, 1], [], []>} : vector<288x128xbf16>, vector<128x128xbf16>, vector<288x128xf32> -> vector<288x128xf32>
    %c1_72 = arith.constant 1 : index
    %c0_73 = arith.constant 0 : index
    %69 = vector.load %arg9[%c1_72, %c0_73] : memref<342x128xbf16, #tpu.memory_space<vmem>>, vector<288x128xbf16>
    %c1_74 = arith.constant 1 : index
    %c0_75 = arith.constant 0 : index
    %c0_76 = arith.constant 0 : index
    %70 = vector.load %arg4[%c1_74, %c0_75, %c0_76] : memref<9x128x128xbf16, #tpu.memory_space<vmem>>, vector<1x128x128xbf16>
    %71 = vector.shape_cast %70 : vector<1x128x128xbf16> to vector<128x128xbf16>
    %cst_77 = arith.constant dense<0.000000e+00> : vector<288x128xf32>
    %72 = tpu.matmul %69, %71, %cst_77 {dimension_numbers = #tpu.dot_dimension_numbers<[1], [0], [0], [1], [0, 0, 1, 1], [], []>} : vector<288x128xbf16>, vector<128x128xbf16>, vector<288x128xf32> -> vector<288x128xf32>
    %73 = arith.addf %68, %72 : vector<288x128xf32>
    %c2_78 = arith.constant 2 : index
    %c0_79 = arith.constant 0 : index
    %74 = vector.load %arg9[%c2_78, %c0_79] : memref<342x128xbf16, #tpu.memory_space<vmem>>, vector<288x128xbf16>
    %c2_80 = arith.constant 2 : index
    %c0_81 = arith.constant 0 : index
    %c0_82 = arith.constant 0 : index
    %75 = vector.load %arg4[%c2_80, %c0_81, %c0_82] : memref<9x128x128xbf16, #tpu.memory_space<vmem>>, vector<1x128x128xbf16>
    %76 = vector.shape_cast %75 : vector<1x128x128xbf16> to vector<128x128xbf16>
    %cst_83 = arith.constant dense<0.000000e+00> : vector<288x128xf32>
    %77 = tpu.matmul %74, %76, %cst_83 {dimension_numbers = #tpu.dot_dimension_numbers<[1], [0], [0], [1], [0, 0, 1, 1], [], []>} : vector<288x128xbf16>, vector<128x128xbf16>, vector<288x128xf32> -> vector<288x128xf32>
    %78 = arith.addf %73, %77 : vector<288x128xf32>
    %c18_84 = arith.constant 18 : index
    %c0_85 = arith.constant 0 : index
    %79 = vector.load %arg9[%c18_84, %c0_85] : memref<342x128xbf16, #tpu.memory_space<vmem>>, vector<288x128xbf16>
    %c3_86 = arith.constant 3 : index
    %c0_87 = arith.constant 0 : index
    %c0_88 = arith.constant 0 : index
    %80 = vector.load %arg4[%c3_86, %c0_87, %c0_88] : memref<9x128x128xbf16, #tpu.memory_space<vmem>>, vector<1x128x128xbf16>
    %81 = vector.shape_cast %80 : vector<1x128x128xbf16> to vector<128x128xbf16>
    %cst_89 = arith.constant dense<0.000000e+00> : vector<288x128xf32>
    %82 = tpu.matmul %79, %81, %cst_89 {dimension_numbers = #tpu.dot_dimension_numbers<[1], [0], [0], [1], [0, 0, 1, 1], [], []>} : vector<288x128xbf16>, vector<128x128xbf16>, vector<288x128xf32> -> vector<288x128xf32>
    %83 = arith.addf %78, %82 : vector<288x128xf32>
    %c19_90 = arith.constant 19 : index
    %c0_91 = arith.constant 0 : index
    %84 = vector.load %arg9[%c19_90, %c0_91] : memref<342x128xbf16, #tpu.memory_space<vmem>>, vector<288x128xbf16>
    %c4_92 = arith.constant 4 : index
    %c0_93 = arith.constant 0 : index
    %c0_94 = arith.constant 0 : index
    %85 = vector.load %arg4[%c4_92, %c0_93, %c0_94] : memref<9x128x128xbf16, #tpu.memory_space<vmem>>, vector<1x128x128xbf16>
    %86 = vector.shape_cast %85 : vector<1x128x128xbf16> to vector<128x128xbf16>
    %cst_95 = arith.constant dense<0.000000e+00> : vector<288x128xf32>
    %87 = tpu.matmul %84, %86, %cst_95 {dimension_numbers = #tpu.dot_dimension_numbers<[1], [0], [0], [1], [0, 0, 1, 1], [], []>} : vector<288x128xbf16>, vector<128x128xbf16>, vector<288x128xf32> -> vector<288x128xf32>
    %88 = arith.addf %83, %87 : vector<288x128xf32>
    %c20_96 = arith.constant 20 : index
    %c0_97 = arith.constant 0 : index
    %89 = vector.load %arg9[%c20_96, %c0_97] : memref<342x128xbf16, #tpu.memory_space<vmem>>, vector<288x128xbf16>
    %c5_98 = arith.constant 5 : index
    %c0_99 = arith.constant 0 : index
    %c0_100 = arith.constant 0 : index
    %90 = vector.load %arg4[%c5_98, %c0_99, %c0_100] : memref<9x128x128xbf16, #tpu.memory_space<vmem>>, vector<1x128x128xbf16>
    %91 = vector.shape_cast %90 : vector<1x128x128xbf16> to vector<128x128xbf16>
    %cst_101 = arith.constant dense<0.000000e+00> : vector<288x128xf32>
    %92 = tpu.matmul %89, %91, %cst_101 {dimension_numbers = #tpu.dot_dimension_numbers<[1], [0], [0], [1], [0, 0, 1, 1], [], []>} : vector<288x128xbf16>, vector<128x128xbf16>, vector<288x128xf32> -> vector<288x128xf32>
    %93 = arith.addf %88, %92 : vector<288x128xf32>
    %c36_102 = arith.constant 36 : index
    %c0_103 = arith.constant 0 : index
    %94 = vector.load %arg9[%c36_102, %c0_103] : memref<342x128xbf16, #tpu.memory_space<vmem>>, vector<288x128xbf16>
    %c6_104 = arith.constant 6 : index
    %c0_105 = arith.constant 0 : index
    %c0_106 = arith.constant 0 : index
    %95 = vector.load %arg4[%c6_104, %c0_105, %c0_106] : memref<9x128x128xbf16, #tpu.memory_space<vmem>>, vector<1x128x128xbf16>
    %96 = vector.shape_cast %95 : vector<1x128x128xbf16> to vector<128x128xbf16>
    %cst_107 = arith.constant dense<0.000000e+00> : vector<288x128xf32>
    %97 = tpu.matmul %94, %96, %cst_107 {dimension_numbers = #tpu.dot_dimension_numbers<[1], [0], [0], [1], [0, 0, 1, 1], [], []>} : vector<288x128xbf16>, vector<128x128xbf16>, vector<288x128xf32> -> vector<288x128xf32>
    %98 = arith.addf %93, %97 : vector<288x128xf32>
    %c37_108 = arith.constant 37 : index
    %c0_109 = arith.constant 0 : index
    %99 = vector.load %arg9[%c37_108, %c0_109] : memref<342x128xbf16, #tpu.memory_space<vmem>>, vector<288x128xbf16>
    %c7_110 = arith.constant 7 : index
    %c0_111 = arith.constant 0 : index
    %c0_112 = arith.constant 0 : index
    %100 = vector.load %arg4[%c7_110, %c0_111, %c0_112] : memref<9x128x128xbf16, #tpu.memory_space<vmem>>, vector<1x128x128xbf16>
    %101 = vector.shape_cast %100 : vector<1x128x128xbf16> to vector<128x128xbf16>
    %cst_113 = arith.constant dense<0.000000e+00> : vector<288x128xf32>
    %102 = tpu.matmul %99, %101, %cst_113 {dimension_numbers = #tpu.dot_dimension_numbers<[1], [0], [0], [1], [0, 0, 1, 1], [], []>} : vector<288x128xbf16>, vector<128x128xbf16>, vector<288x128xf32> -> vector<288x128xf32>
    %103 = arith.addf %98, %102 : vector<288x128xf32>
    %c38_114 = arith.constant 38 : index
    %c0_115 = arith.constant 0 : index
    %104 = vector.load %arg9[%c38_114, %c0_115] : memref<342x128xbf16, #tpu.memory_space<vmem>>, vector<288x128xbf16>
    %c8_116 = arith.constant 8 : index
    %c0_117 = arith.constant 0 : index
    %c0_118 = arith.constant 0 : index
    %105 = vector.load %arg4[%c8_116, %c0_117, %c0_118] : memref<9x128x128xbf16, #tpu.memory_space<vmem>>, vector<1x128x128xbf16>
    %106 = vector.shape_cast %105 : vector<1x128x128xbf16> to vector<128x128xbf16>
    %cst_119 = arith.constant dense<0.000000e+00> : vector<288x128xf32>
    %107 = tpu.matmul %104, %106, %cst_119 {dimension_numbers = #tpu.dot_dimension_numbers<[1], [0], [0], [1], [0, 0, 1, 1], [], []>} : vector<288x128xbf16>, vector<128x128xbf16>, vector<288x128xf32> -> vector<288x128xf32>
    %108 = arith.addf %103, %107 : vector<288x128xf32>
    %c0_120 = arith.constant 0 : index
    %c0_121 = arith.constant 0 : index
    %c19_122 = arith.constant 19 : index
    %c0_123 = arith.constant 0 : index
    %109 = vector.load %arg1[%c0_120, %c0_121, %c19_122, %c0_123] : memref<1x1x342x4xbf16, #tpu.memory_space<vmem>>, vector<1x1x288x4xbf16>
    %110 = vector.shape_cast %109 : vector<1x1x288x4xbf16> to vector<288x4xbf16>
    %c0_124 = arith.constant 0 : index
    %c0_125 = arith.constant 0 : index
    %111 = vector.load %arg6[%c0_124, %c0_125] : memref<4x128xbf16, #tpu.memory_space<vmem>>, vector<4x128xbf16>
    %cst_126 = arith.constant dense<0.000000e+00> : vector<288x128xf32>
    %112 = tpu.matmul %110, %111, %cst_126 {dimension_numbers = #tpu.dot_dimension_numbers<[1], [0], [0], [1], [0, 0, 1, 1], [], []>} : vector<288x4xbf16>, vector<4x128xbf16>, vector<288x128xf32> -> vector<288x128xf32>
    %c0_127 = arith.constant 0 : index
    %c0_128 = arith.constant 0 : index
    %113 = vector.load %arg5[%c0_127, %c0_128] : memref<1x128xf32, #tpu.memory_space<vmem>>, vector<1x128xf32>
    %114 = vector.broadcast %113 : vector<1x128xf32> to vector<288x128xf32>
    %115 = arith.addf %108, %114 : vector<288x128xf32>
    %116 = arith.addf %115, %112 : vector<288x128xf32>
    %cst_129 = arith.constant 0.000000e+00 : f32
    %117 = vector.broadcast %cst_129 : f32 to vector<288x128xf32>
    %118 = arith.maximumf %116, %117 : vector<288x128xf32>
    %119 = arith.truncf %118 : vector<288x128xf32> to vector<288x128xbf16>
    %c0_130 = arith.constant 0 : index
    %c0_131 = arith.constant 0 : index
    %c0_132 = arith.constant 0 : index
    %120 = vector.load %arg8[%c0_130, %c0_131, %c0_132] : memref<1x288x128xbf16, #tpu.memory_space<vmem>>, vector<1x288x128xbf16>
    %121 = vector.shape_cast %120 : vector<1x288x128xbf16> to vector<288x128xbf16>
    %122 = vector.shape_cast %119 : vector<288x128xbf16> to vector<1x288x128xbf16>
    tpu.vector_store %arg8[%c0_130, %c0_131, %c0_132], %122 {strides = array<i32>} : memref<1x288x128xbf16, #tpu.memory_space<vmem>>, vector<1x288x128xbf16>,
    return
  }
  func.func @transform_0(%arg0: i32) -> (i32, i32, i32, i32) {
    %c0_i32 = arith.constant 0 : i32
    %c0_i32_0 = arith.constant 0 : i32
    %c0_i32_1 = arith.constant 0 : i32
    %c0_i32_2 = arith.constant 0 : i32
    return %arg0, %c0_i32, %c0_i32_0, %c0_i32_1 : i32, i32, i32, i32
  }
  func.func @transform_1(%arg0: i32) -> (i32, i32, i32) {
    %c0_i32 = arith.constant 0 : i32
    %c0_i32_0 = arith.constant 0 : i32
    %c0_i32_1 = arith.constant 0 : i32
    %c0_i32_2 = arith.constant 0 : i32
    return %c0_i32, %c0_i32_0, %c0_i32_1 : i32, i32, i32
  }
  func.func @transform_2(%arg0: i32) -> (i32, i32) {
    %c0_i32 = arith.constant 0 : i32
    %c0_i32_0 = arith.constant 0 : i32
    %c0_i32_1 = arith.constant 0 : i32
    return %c0_i32, %c0_i32_0 : i32, i32
  }
  func.func @transform_3(%arg0: i32) -> (i32, i32, i32) {
    %c0_i32 = arith.constant 0 : i32
    %c0_i32_0 = arith.constant 0 : i32
    %c0_i32_1 = arith.constant 0 : i32
    %c0_i32_2 = arith.constant 0 : i32
    return %c0_i32, %c0_i32_0, %c0_i32_1 : i32, i32, i32
  }
  func.func @transform_4(%arg0: i32) -> (i32, i32) {
    %c0_i32 = arith.constant 0 : i32
    %c0_i32_0 = arith.constant 0 : i32
    %c0_i32_1 = arith.constant 0 : i32
    return %c0_i32, %c0_i32_0 : i32, i32
  }
  func.func @transform_5(%arg0: i32) -> (i32, i32) {
    %c0_i32 = arith.constant 0 : i32
    %c0_i32_0 = arith.constant 0 : i32
    %c0_i32_1 = arith.constant 0 : i32
    return %c0_i32, %c0_i32_0 : i32, i32
  }
  func.func @transform_6(%arg0: i32) -> (i32, i32) {
    %c0_i32 = arith.constant 0 : i32
    %c0_i32_0 = arith.constant 0 : i32
    %c0_i32_1 = arith.constant 0 : i32
    return %c0_i32, %c0_i32_0 : i32, i32
  }
  func.func @transform_7(%arg0: i32) -> (i32, i32, i32) {
    %c0_i32 = arith.constant 0 : i32
    %c0_i32_0 = arith.constant 0 : i32
    %c0_i32_1 = arith.constant 0 : i32
    return %arg0, %c0_i32, %c0_i32_0 : i32, i32, i32
  }
}

</mosaic_0001>

<llo_original>
// kernel: basic_block_forward.1
$region0: #{basic_block_forward.1}
  #allocation0 [shape = 'u32[]', space=smem, size = 0x4, offset = 0x4, fixed_abs, tag = 'smem constant byte address 0x4 - core index']
  #allocation1 [shape = 'u32[144,128]{1,0:T(1,128)}', space=vmem, size = 0x12000, scoped, tag = 'internal scratch']
  #allocation2 [shape = 'bf16[342,128]{1,0:T(8,128)(2,1)}', space=vmem, size = 0x15800, scoped, tag = 'scratch operand']
  %s0 = inlined_call_operand.vmem [shape: bf16[2,1,342,4], index: 0, kind: input, shape index: {}]
  %s1 = inlined_call_operand.vmem [shape: bf16[9,4,128], index: 1, kind: input, shape index: {}]
  %s2 = inlined_call_operand.vmem [shape: f32[1,128], index: 2, kind: input, shape index: {}]
  %s3 = inlined_call_operand.vmem [shape: bf16[9,128,128], index: 3, kind: input, shape index: {}]
  %s4 = inlined_call_operand.vmem [shape: f32[1,128], index: 4, kind: input, shape index: {}]
  %s5 = inlined_call_operand.vmem [shape: bf16[4,128], index: 5, kind: input, shape index: {}]
  %s6 = inlined_call_operand.hbm [shape: f32[288,1], index: 6, kind: input, shape index: {}]
  %s7 = inlined_call_operand.vmem [shape: bf16[2,288,128], index: 7, kind: output, shape index: {}]
  %s8 = sld [smem:[#allocation0]]
  $region65: #{basic_block_forward.1} parent=0
    _
  %s10 = ssub.s32 1, %s8
  %s11 = scalar_select 0, %s10, %s8
  $region1: #{basic_block_forward.1} parent=0
    #allocation3 [shape = 'u8[147456]{0}', space=vmem, size = 0x24000, scoped, tag = 'input window, operand 6, single buffered']
    #allocation4 [shape = 's32[2]{0}', space=sflag, size = 0x8, scoped, tag = 'scoped memory for basic_block_forward.1']
    %12 = vsyncpa [#allocation4], 0
    loop: start=0, step=1, limit=4
    $region2: #{basic_block_forward.1} parent=1 // loop_pre_header
      _
    $region3: #{basic_block_forward.1} parent=1 // loop_header
      %s14 = sphi 0, %s18
      %p15 = scmp.ge.s32.totalorder %s14, 4
      %s24 = sphi 0, %s26
      %s27 = sphi 0, %s24
      %s28 = sphi 0, %s27
      %s44 = sphi 0, %s28
      %s48 = sphi 0, %s48
      %s50 = sphi 0, %s48
      %s51 = sphi 0, %s50
      %s65 = sphi 0, %s51
      %s69 = sphi 0, %s69
      %s71 = sphi 0, %s69
      %s72 = sphi 0, %s71
      %s86 = sphi 0, %s72
      %s90 = sphi 0, %s90
      %s92 = sphi 0, %s90
      %s93 = sphi 0, %s92
      %s107 = sphi 0, %s93
      %s111 = sphi 0, %s111
      %s113 = sphi 0, %s111
      %s114 = sphi 0, %s113
      %s128 = sphi 0, %s114
      %s132 = sphi 0, %s132
      %s134 = sphi 0, %s132
      %s135 = sphi 0, %s134
      %s149 = sphi 0, %s135
      %s153 = sphi 0, %s153
      %s155 = sphi 0, %s153
      %s156 = sphi 0, %s155
      %s170 = sphi 0, %s156
      %s176 = sphi 0, %s178
      %s179 = sphi 0, %s176
      %s180 = sphi 0, %s179
      %s196 = sphi 0, %s180
    $region4: #{basic_block_forward.1} parent=1 // loop_header_branch
      %17 = sbr.rel (%p15) target = $region8
    $region5: #{basic_block_forward.1} parent=1 // loop_body
      %s19 = ssub.s32 %s14, 1
      %s20 = ssub.s32 %s14, 2
      %s21 = sadd.s32 %s14, 1
      %s22 = ssub.s32 %s14, %s21
      %p23 = scmp.eq.s32.totalorder %s22, 0
      %s25 = sadd.s32 %s24, 1
      %s26 = scalar_select %p23, %s24, %s25
      %p29 = pneg %p23
      %p30 = scmp.eq.s32.totalorder %s14, 1
      %p31 = por %p29, %p30
      %p32 = scmp.ne.s32.totalorder %s24, %s27
      %p33 = scmp.eq.s32.totalorder %s14, 0
      %p34 = por %p32, %p33
      %p35 = scmp.ne.s32.totalorder %s24, %s27
      %p36 = scmp.eq.s32.totalorder %s19, 1
      %p37 = por %p35, %p36
      %p38 = scmp.ne.s32.totalorder %s27, %s28
      %p39 = scmp.eq.s32.totalorder %s19, 0
      %p40 = por %p38, %p39
      %p41 = scmp.ne.s32.totalorder %s27, %s28
      %p42 = scmp.eq.s32.totalorder %s20, 1
      %p43 = por %p41, %p42
      %p45 = scmp.ne.s32.totalorder %s28, %s44
      %p46 = scmp.eq.s32.totalorder %s20, 0
      %p47 = por %p45, %p46
      %s49 = sadd.s32 %s48, 1
      %p52 = scmp.eq.s32.totalorder %s14, 1
      %p53 = scmp.ne.s32.totalorder %s48, %s50
      %p54 = scmp.eq.s32.totalorder %s14, 0
      %p55 = por %p53, %p54
      %p56 = scmp.ne.s32.totalorder %s48, %s50
      %p57 = scmp.eq.s32.totalorder %s19, 1
      %p58 = por %p56, %p57
      %p59 = scmp.ne.s32.totalorder %s50, %s51
      %p60 = scmp.eq.s32.totalorder %s19, 0
      %p61 = por %p59, %p60
      %p62 = scmp.ne.s32.totalorder %s50, %s51
      %p63 = scmp.eq.s32.totalorder %s20, 1
      %p64 = por %p62, %p63
      %p66 = scmp.ne.s32.totalorder %s51, %s65
      %p67 = scmp.eq.s32.totalorder %s20, 0
      %p68 = por %p66, %p67
      %s70 = sadd.s32 %s69, 1
      %p73 = scmp.eq.s32.totalorder %s14, 1
      %p74 = scmp.ne.s32.totalorder %s69, %s71
      %p75 = scmp.eq.s32.totalorder %s14, 0
      %p76 = por %p74, %p75
      %p77 = scmp.ne.s32.totalorder %s69, %s71
      %p78 = scmp.eq.s32.totalorder %s19, 1
      %p79 = por %p77, %p78
      %p80 = scmp.ne.s32.totalorder %s71, %s72
      %p81 = scmp.eq.s32.totalorder %s19, 0
      %p82 = por %p80, %p81
      %p83 = scmp.ne.s32.totalorder %s71, %s72
      %p84 = scmp.eq.s32.totalorder %s20, 1
      %p85 = por %p83, %p84
      %p87 = scmp.ne.s32.totalorder %s72, %s86
      %p88 = scmp.eq.s32.totalorder %s20, 0
      %p89 = por %p87, %p88
      %s91 = sadd.s32 %s90, 1
      %p94 = scmp.eq.s32.totalorder %s14, 1
      %p95 = scmp.ne.s32.totalorder %s90, %s92
      %p96 = scmp.eq.s32.totalorder %s14, 0
      %p97 = por %p95, %p96
      %p98 = scmp.ne.s32.totalorder %s90, %s92
      %p99 = scmp.eq.s32.totalorder %s19, 1
      %p100 = por %p98, %p99
      %p101 = scmp.ne.s32.totalorder %s92, %s93
      %p102 = scmp.eq.s32.totalorder %s19, 0
      %p103 = por %p101, %p102
      %p104 = scmp.ne.s32.totalorder %s92, %s93
      %p105 = scmp.eq.s32.totalorder %s20, 1
      %p106 = por %p104, %p105
      %p108 = scmp.ne.s32.totalorder %s93, %s107
      %p109 = scmp.eq.s32.totalorder %s20, 0
      %p110 = por %p108, %p109
      %s112 = sadd.s32 %s111, 1
      %p115 = scmp.eq.s32.totalorder %s14, 1
      %p116 = scmp.ne.s32.totalorder %s111, %s113
      %p117 = scmp.eq.s32.totalorder %s14, 0
      %p118 = por %p116, %p117
      %p119 = scmp.ne.s32.totalorder %s111, %s113
      %p120 = scmp.eq.s32.totalorder %s19, 1
      %p121 = por %p119, %p120
      %p122 = scmp.ne.s32.totalorder %s113, %s114
      %p123 = scmp.eq.s32.totalorder %s19, 0
      %p124 = por %p122, %p123
      %p125 = scmp.ne.s32.totalorder %s113, %s114
      %p126 = scmp.eq.s32.totalorder %s20, 1
      %p127 = por %p125, %p126
      %p129 = scmp.ne.s32.totalorder %s114, %s128
      %p130 = scmp.eq.s32.totalorder %s20, 0
      %p131 = por %p129, %p130
      %s133 = sadd.s32 %s132, 1
      %p136 = scmp.eq.s32.totalorder %s14, 1
      %p137 = scmp.ne.s32.totalorder %s132, %s134
      %p138 = scmp.eq.s32.totalorder %s14, 0
      %p139 = por %p137, %p138
      %p140 = scmp.ne.s32.totalorder %s132, %s134
      %p141 = scmp.eq.s32.totalorder %s19, 1
      %p142 = por %p140, %p141
      %p143 = scmp.ne.s32.totalorder %s134, %s135
      %p144 = scmp.eq.s32.totalorder %s19, 0
      %p145 = por %p143, %p144
      %p146 = scmp.ne.s32.totalorder %s134, %s135
      %p147 = scmp.eq.s32.totalorder %s20, 1
      %p148 = por %p146, %p147
      %p150 = scmp.ne.s32.totalorder %s135, %s149
      %p151 = scmp.eq.s32.totalorder %s20, 0
      %p152 = por %p150, %p151
      %s154 = sadd.s32 %s153, 1
      %p157 = scmp.eq.s32.totalorder %s14, 1
      %p158 = scmp.ne.s32.totalorder %s153, %s155
      %p159 = scmp.eq.s32.totalorder %s14, 0
      %p160 = por %p158, %p159
      %p161 = scmp.ne.s32.totalorder %s153, %s155
      %p162 = scmp.eq.s32.totalorder %s19, 1
      %p163 = por %p161, %p162
      %p164 = scmp.ne.s32.totalorder %s155, %s156
      %p165 = scmp.eq.s32.totalorder %s19, 0
      %p166 = por %p164, %p165
      %p167 = scmp.ne.s32.totalorder %s155, %s156
      %p168 = scmp.eq.s32.totalorder %s20, 1
      %p169 = por %p167, %p168
      %p171 = scmp.ne.s32.totalorder %s156, %s170
      %p172 = scmp.eq.s32.totalorder %s20, 0
      %p173 = por %p171, %p172
      %s174 = ssub.s32 %s14, %s21
      %p175 = scmp.eq.s32.totalorder %s174, 0
      %s177 = sadd.s32 %s176, 1
      %s178 = scalar_select %p175, %s176, %s177
      %p181 = pneg %p175
      %p182 = scmp.eq.s32.totalorder %s14, 1
      %p183 = por %p181, %p182
      %p184 = scmp.ne.s32.totalorder %s176, %s179
      %p185 = scmp.eq.s32.totalorder %s14, 0
      %p186 = por %p184, %p185
      %p187 = scmp.ne.s32.totalorder %s176, %s179
      %p188 = scmp.eq.s32.totalorder %s19, 1
      %p189 = por %p187, %p188
      %p190 = scmp.ne.s32.totalorder %s179, %s180
      %p191 = scmp.eq.s32.totalorder %s19, 0
      %p192 = por %p190, %p191
      %p193 = scmp.ne.s32.totalorder %s179, %s180
      %p194 = scmp.eq.s32.totalorder %s20, 1
      %p195 = por %p193, %p194
      %p197 = scmp.ne.s32.totalorder %s180, %s196
      %p198 = scmp.eq.s32.totalorder %s20, 0
      %p199 = por %p197, %p198
      %p200 = scmp.le.s32.totalorder 1, %s14
      %p201 = scmp.lt.s32.totalorder %s14, 3
      %p202 = pnand %p200, %p201
      %p203 = pneg %p202
      // Predicated region
      $region9: #{basic_block_forward.1} parent=5 // pred_check
        _
      $region10: #{basic_block_forward.1} parent=5 // pred_check_branch
        %205 = sbr.rel (%p202) target = $region12
      $region11: #{basic_block_forward.1} parent=5 // pred_region
        %s206 = ssub.s32 %s14, 1
        // Predicated region
        $region13: #{basic_block_forward.1} parent=11 // pred_check
          %p207 = pneg %p61
        $region14: #{basic_block_forward.1} parent=11 // pred_check_branch
          %209 = sbr.rel (%p207) target = $region16
        $region15: #{basic_block_forward.1} parent=11 // pred_region
          _
        $region16: #{basic_block_forward.1} parent=11 // pred_fallthru
          _
        // Predicated region
        $region17: #{basic_block_forward.1} parent=11 // pred_check
          %p210 = pneg %p82
        $region18: #{basic_block_forward.1} parent=11 // pred_check_branch
          %212 = sbr.rel (%p210) target = $region20
        $region19: #{basic_block_forward.1} parent=11 // pred_region
          _
        $region20: #{basic_block_forward.1} parent=11 // pred_fallthru
          _
        // Predicated region
        $region21: #{basic_block_forward.1} parent=11 // pred_check
          %p213 = pneg %p103
        $region22: #{basic_block_forward.1} parent=11 // pred_check_branch
          %215 = sbr.rel (%p213) target = $region24
        $region23: #{basic_block_forward.1} parent=11 // pred_region
          _
        $region24: #{basic_block_forward.1} parent=11 // pred_fallthru
          _
        // Predicated region
        $region25: #{basic_block_forward.1} parent=11 // pred_check
          %p216 = pneg %p124
        $region26: #{basic_block_forward.1} parent=11 // pred_check_branch
          %218 = sbr.rel (%p216) target = $region28
        $region27: #{basic_block_forward.1} parent=11 // pred_region
          _
        $region28: #{basic_block_forward.1} parent=11 // pred_fallthru
          _
        // Predicated region
        $region29: #{basic_block_forward.1} parent=11 // pred_check
          %p219 = pneg %p145
        $region30: #{basic_block_forward.1} parent=11 // pred_check_branch
          %221 = sbr.rel (%p219) target = $region32
        $region31: #{basic_block_forward.1} parent=11 // pred_region
          _
        $region32: #{basic_block_forward.1} parent=11 // pred_fallthru
          _
        // Predicated region
        $region33: #{basic_block_forward.1} parent=11 // pred_check
          %p222 = pneg %p166
        $region34: #{basic_block_forward.1} parent=11 // pred_check_branch
          %224 = sbr.rel (%p222) target = $region36
        $region35: #{basic_block_forward.1} parent=11 // pred_region
          %s226 = ssub.s32 4608, 4608
          %227 = vsyncadd [#allocation4], %s226
          %s228 = sshll.u32 [#allocation3], 4
          %s229 = int_to_ptr.vmem [resolvable:$true] %s228
          %234 = dma.hbm_to_vmem [thread:$0]  %s6, 4608, %s229, [#allocation4], 128, 128, 8
        $region36: #{basic_block_forward.1} parent=11 // pred_fallthru
          _
      $region12: #{basic_block_forward.1} parent=5 // pred_fallthru
        _
      %p235 = scmp.lt.s32.totalorder %s14, 2
      // Predicated region
      $region37: #{basic_block_forward.1} parent=5 // pred_check
        %p236 = pneg %p235
      $region38: #{basic_block_forward.1} parent=5 // pred_check_branch
        %238 = sbr.rel (%p236) target = $region40
      $region39: #{basic_block_forward.1} parent=5 // pred_region
        // Predicated region
        $region41: #{basic_block_forward.1} parent=39 // pred_check
          %p239 = pneg %p34
        $region42: #{basic_block_forward.1} parent=39 // pred_check_branch
          %241 = sbr.rel (%p239) target = $region44
        $region43: #{basic_block_forward.1} parent=39 // pred_region
          %p242 = scmp.lt.s32.totalorder %s14, 1
          %s243 = scalar_select %p242, %s14, 1
          %s244 = smul.addr %s243, 43
          %s245 = smul.addr %s244, 4
          %s246 = scalar_lea.vmem %s0, %s245
        $region44: #{basic_block_forward.1} parent=39 // pred_fallthru
          _
      $region40: #{basic_block_forward.1} parent=5 // pred_fallthru
        _
      %p247 = scmp.le.s32.totalorder 1, %s14
      %p248 = scmp.lt.s32.totalorder %s14, 3
      %p249 = pnand %p247, %p248
      %p250 = pneg %p249
      // Predicated region
      $region45: #{basic_block_forward.1} parent=5 // pred_check
        _
      $region46: #{basic_block_forward.1} parent=5 // pred_check_branch
        %252 = sbr.rel (%p249) target = $region48
      $region47: #{basic_block_forward.1} parent=5 // pred_region
        %s253 = ssub.s32 %s14, 1
        // Predicated region
        $region49: #{basic_block_forward.1} parent=47 // pred_check
          %p254 = pneg %p166
        $region50: #{basic_block_forward.1} parent=47 // pred_check_branch
          %256 = sbr.rel (%p254) target = $region52
        $region51: #{basic_block_forward.1} parent=47 // pred_region
          %257 = dma.done [#allocation4], 4608
        $region52: #{basic_block_forward.1} parent=47 // pred_fallthru
          _
        %p258 = scmp.lt.s32.totalorder %s19, 1
        %s259 = scalar_select %p258, %s19, 1
        %s260 = smul.addr %s259, 43
        %s261 = smul.addr %s260, 4
        %s262 = scalar_lea.vmem %s0, %s261
        %p263 = pneg %p40
        %p264 = pneg %p37
        %p265 = pneg %p61
        %p266 = pneg %p58
        %p267 = pneg %p82
        %p268 = pneg %p79
        %p269 = pneg %p103
        %p270 = pneg %p100
        %p271 = pneg %p124
        %p272 = pneg %p121
        %p273 = pneg %p145
        %p274 = pneg %p142
        %p275 = pneg %p166
        %p276 = pneg %p163
        %p277 = pneg %p192
        %p278 = pneg %p189
        %p279 = scmp.lt.s32.totalorder %s19, 1
        %s280 = scalar_select %p279, %s19, 1
        %s281 = smul.addr %s280, 36
        %s282 = smul.addr %s281, 4
        %s283 = scalar_lea.vmem %s7, %s282
        %p284 = scmp.lt.s32.totalorder %s19, 1
        %s285 = scalar_select %p284, %s19, 1
        %s286 = smul.addr %s285, 43
        %s287 = smul.addr %s286, 4
        %s288 = scalar_lea.vmem %s0, %s287
        %p289 = scmp.lt.s32.totalorder %s19, 1
        %s290 = scalar_select %p289, %s19, 1
        %s291 = smul.addr %s290, 36
        %s292 = smul.addr %s291, 4
        %s293 = scalar_lea.vmem %s7, %s292
        %v295 = vld [vmem:[%s288] sm:$0xf]
        %v296 = vld [vmem:[%s288 + $0x4] sm:$0xf]
        %v297 = vld [vmem:[%s288 + $0x8] sm:$0xf]
        %v298 = vld [vmem:[%s288 + $0xc] sm:$0xf]
        %v299 = vld [vmem:[%s288 + $0x10] sm:$0xf]
        %v300 = vld [vmem:[%s288 + $0x14] sm:$0xf]
        %v301 = vld [vmem:[%s288 + $0x18] sm:$0xf]
        %v302 = vld [vmem:[%s288 + $0x1c] sm:$0xf]
        %v303 = vld [vmem:[%s288 + $0x20] sm:$0xf]
        %v304 = vld [vmem:[%s288 + $0x24] sm:$0xf]
        %v305 = vld [vmem:[%s288 + $0x28] sm:$0xf]
        %v306 = vld [vmem:[%s288 + $0x2c] sm:$0xf]
        %v307 = vld [vmem:[%s288 + $0x30] sm:$0xf]
        %v308 = vld [vmem:[%s288 + $0x34] sm:$0xf]
        %v309 = vld [vmem:[%s288 + $0x38] sm:$0xf]
        %v310 = vld [vmem:[%s288 + $0x3c] sm:$0xf]
        %v311 = vld [vmem:[%s288 + $0x40] sm:$0xf]
        %v312 = vld [vmem:[%s288 + $0x44] sm:$0xf]
        %v313 = vld [vmem:[%s288 + $0x48] sm:$0xf]
        %v314 = vld [vmem:[%s288 + $0x4c] sm:$0xf]
        %v315 = vld [vmem:[%s288 + $0x50] sm:$0xf]
        %v316 = vld [vmem:[%s288 + $0x54] sm:$0xf]
        %v317 = vld [vmem:[%s288 + $0x58] sm:$0xf]
        %v318 = vld [vmem:[%s288 + $0x5c] sm:$0xf]
        %v319 = vld [vmem:[%s288 + $0x60] sm:$0xf]
        %v320 = vld [vmem:[%s288 + $0x64] sm:$0xf]
        %v321 = vld [vmem:[%s288 + $0x68] sm:$0xf]
        %v322 = vld [vmem:[%s288 + $0x6c] sm:$0xf]
        %v323 = vld [vmem:[%s288 + $0x70] sm:$0xf]
        %v324 = vld [vmem:[%s288 + $0x74] sm:$0xf]
        %v325 = vld [vmem:[%s288 + $0x78] sm:$0xf]
        %v326 = vld [vmem:[%s288 + $0x7c] sm:$0xf]
        %v327 = vld [vmem:[%s288 + $0x80] sm:$0xf]
        %v328 = vld [vmem:[%s288 + $0x84] sm:$0xf]
        %v329 = vld [vmem:[%s288 + $0x88] sm:$0xf]
        %v330 = vld [vmem:[%s288 + $0x8c] sm:$0xf]
        %v331 = vld [vmem:[%s1] sm:$0x3]
        %v332 = vld [vmem:[%s288 + $0x90] sm:$0x1]
        %s333 = scalar_lea.vmem %s1, 2
        %v334 = vld [vmem:[%s333] sm:$0x3]
        %v372 = vunpack.c.l.b16 %v295
        %v373 = vunpack.c.l.b16 %v296
        %v374 = vunpack.c.l.b16 %v297
        %v375 = vunpack.c.l.b16 %v298
        %v376 = vunpack.c.l.b16 %v299
        %v377 = vunpack.c.l.b16 %v300
        %v378 = vunpack.c.l.b16 %v301
        %v379 = vunpack.c.l.b16 %v302
        %v380 = vunpack.c.l.b16 %v303
        %v381 = vunpack.c.l.b16 %v304
        %v382 = vunpack.c.l.b16 %v305
        %v383 = vunpack.c.l.b16 %v306
        %v384 = vunpack.c.l.b16 %v307
        %v385 = vunpack.c.l.b16 %v308
        %v386 = vunpack.c.l.b16 %v309
        %v387 = vunpack.c.l.b16 %v310
        %v388 = vunpack.c.l.b16 %v311
        %v389 = vunpack.c.l.b16 %v312
        %v390 = vunpack.c.l.b16 %v313
        %v391 = vunpack.c.l.b16 %v314
        %v392 = vunpack.c.l.b16 %v315
        %v393 = vunpack.c.l.b16 %v316
        %v394 = vunpack.c.l.b16 %v317
        %v395 = vunpack.c.l.b16 %v318
        %v396 = vunpack.c.l.b16 %v319
        %v397 = vunpack.c.l.b16 %v320
        %v398 = vunpack.c.l.b16 %v321
        %v399 = vunpack.c.l.b16 %v322
        %v400 = vunpack.c.l.b16 %v323
        %v401 = vunpack.c.l.b16 %v324
        %v402 = vunpack.c.l.b16 %v325
        %v403 = vunpack.c.l.b16 %v326
        %v404 = vunpack.c.l.b16 %v327
        %v405 = vunpack.c.l.b16 %v328
        %v406 = vunpack.c.l.b16 %v329
        %v407 = vunpack.c.l.b16 %v330
        %v408 = vunpack.c.l.b16 %v332
        %v409 = vpack.c.b16 %v373, %v372
        %v410 = vpack.c.b16 %v375, %v374
        %v411 = vpack.c.b16 %v377, %v376
        %v412 = vpack.c.b16 %v379, %v378
        %v413 = vpack.c.b16 %v381, %v380
        %v414 = vpack.c.b16 %v383, %v382
        %v415 = vpack.c.b16 %v385, %v384
        %v416 = vpack.c.b16 %v387, %v386
        %v417 = vpack.c.b16 %v389, %v388
        %v418 = vpack.c.b16 %v391, %v390
        %v419 = vpack.c.b16 %v393, %v392
        %v420 = vpack.c.b16 %v395, %v394
        %v421 = vpack.c.b16 %v397, %v396
        %v422 = vpack.c.b16 %v399, %v398
        %v423 = vpack.c.b16 %v401, %v400
        %v424 = vpack.c.b16 %v403, %v402
        %v425 = vpack.c.b16 %v405, %v404
        %v426 = vpack.c.b16 %v407, %v406
        %v427 = vpack.c.b16 %v408, %v408
        %vm428 = vsmask.f32 7424
        %v430 = vshrl.u32 %v409, 16
        %v432 = vshll.u32 %v409, 16
        %v434 = vrot.slane %v432, 1
        %v435 = vor.u32 %v430, %v434
        %v437 = vshll.u32 %v410, 16
        %v439 = vrot.slane %v437, 1
        %v440 = vsel %vm428, %v435, %v439
        %v441 = vshrl.u32 %v410, 16
        %v443 = vor.u32 %v441, %v439
        %v445 = vshll.u32 %v411, 16
        %v447 = vrot.slane %v445, 1
        %v448 = vsel %vm428, %v443, %v447
        %v449 = vshrl.u32 %v411, 16
        %v451 = vor.u32 %v449, %v447
        %v453 = vshll.u32 %v412, 16
        %v455 = vrot.slane %v453, 1
        %v456 = vsel %vm428, %v451, %v455
        %v457 = vshrl.u32 %v412, 16
        %v459 = vor.u32 %v457, %v455
        %v461 = vshll.u32 %v413, 16
        %v463 = vrot.slane %v461, 1
        %v464 = vsel %vm428, %v459, %v463
        %v465 = vshrl.u32 %v413, 16
        %v467 = vor.u32 %v465, %v463
        %v469 = vshll.u32 %v414, 16
        %v471 = vrot.slane %v469, 1
        %v472 = vsel %vm428, %v467, %v471
        %v473 = vshrl.u32 %v414, 16
        %v475 = vor.u32 %v473, %v471
        %v477 = vshll.u32 %v415, 16
        %v479 = vrot.slane %v477, 1
        %v480 = vsel %vm428, %v475, %v479
        %v481 = vshrl.u32 %v415, 16
        %v483 = vor.u32 %v481, %v479
        %v485 = vshll.u32 %v416, 16
        %v487 = vrot.slane %v485, 1
        %v488 = vsel %vm428, %v483, %v487
        %v489 = vshrl.u32 %v416, 16
        %v491 = vor.u32 %v489, %v487
        %v493 = vshll.u32 %v417, 16
        %v495 = vrot.slane %v493, 1
        %v496 = vsel %vm428, %v491, %v495
        %v497 = vshrl.u32 %v417, 16
        %v499 = vor.u32 %v497, %v495
        %v501 = vshll.u32 %v418, 16
        %v503 = vrot.slane %v501, 1
        %v504 = vsel %vm428, %v499, %v503
        %v505 = vshrl.u32 %v418, 16
        %v507 = vor.u32 %v505, %v503
        %v509 = vshll.u32 %v419, 16
        %v511 = vrot.slane %v509, 1
        %v512 = vsel %vm428, %v507, %v511
        %v513 = vshrl.u32 %v419, 16
        %v515 = vor.u32 %v513, %v511
        %v517 = vshll.u32 %v420, 16
        %v519 = vrot.slane %v517, 1
        %v520 = vsel %vm428, %v515, %v519
        %v521 = vshrl.u32 %v420, 16
        %v523 = vor.u32 %v521, %v519
        %v525 = vshll.u32 %v421, 16
        %v527 = vrot.slane %v525, 1
        %v528 = vsel %vm428, %v523, %v527
        %v529 = vshrl.u32 %v421, 16
        %v531 = vor.u32 %v529, %v527
        %v533 = vshll.u32 %v422, 16
        %v535 = vrot.slane %v533, 1
        %v536 = vsel %vm428, %v531, %v535
        %v537 = vshrl.u32 %v422, 16
        %v539 = vor.u32 %v537, %v535
        %v541 = vshll.u32 %v423, 16
        %v543 = vrot.slane %v541, 1
        %v544 = vsel %vm428, %v539, %v543
        %v545 = vshrl.u32 %v423, 16
        %v547 = vor.u32 %v545, %v543
        %v549 = vshll.u32 %v424, 16
        %v551 = vrot.slane %v549, 1
        %v552 = vsel %vm428, %v547, %v551
        %v553 = vshrl.u32 %v424, 16
        %v555 = vor.u32 %v553, %v551
        %v557 = vshll.u32 %v425, 16
        %v559 = vrot.slane %v557, 1
        %v560 = vsel %vm428, %v555, %v559
        %v561 = vshrl.u32 %v425, 16
        %v563 = vor.u32 %v561, %v559
        %v565 = vshll.u32 %v426, 16
        %v567 = vrot.slane %v565, 1
        %v568 = vsel %vm428, %v563, %v567
        %v569 = vshrl.u32 %v426, 16
        %v571 = vor.u32 %v569, %v567
        %v573 = vshll.u32 %v427, 16
        %v575 = vrot.slane %v573, 1
        %v576 = vsel %vm428, %v571, %v575
        %vm577 = vcmask 31744
        %v579 = vsel %vm577, %v440, 0
        %v582 = vsel %vm577, %v448, 0
        %v585 = vsel %vm577, %v456, 0
        %v588 = vsel %vm577, %v464, 0
        %v591 = vsel %vm577, %v472, 0
        %v594 = vsel %vm577, %v480, 0
        %v597 = vsel %vm577, %v488, 0
        %v600 = vsel %vm577, %v496, 0
        %v603 = vsel %vm577, %v504, 0
        %v606 = vsel %vm577, %v512, 0
        %v609 = vsel %vm577, %v520, 0
        %v612 = vsel %vm577, %v528, 0
        %v615 = vsel %vm577, %v536, 0
        %v618 = vsel %vm577, %v544, 0
        %v621 = vsel %vm577, %v552, 0
        %v624 = vsel %vm577, %v560, 0
        %v627 = vsel %vm577, %v568, 0
        %v630 = vsel %vm577, %v576, 0
        %vm632 = vcmask 1041408
        %v634 = vsel %vm632, %v334, 0
        %636 = vmatprep.subr.bf16.mxu0 0
        %637 = vmatpush1.bf16.msra.mxu0 %v634
        %638 = vmatprep.subr.bf16.mxu0 0
        %639 = vmatpush1.bf16.msra.mxu0 0
        %640 = vmatprep.subr.bf16.mxu0 0
        %641 = vmatpush1.bf16.msra.mxu0 0
        %642 = vmatprep.subr.bf16.mxu0 0
        %643 = vmatpush1.bf16.msra.mxu0 0
        %644 = vmatprep.subr.bf16.mxu0 0
        %645 = vmatpush1.bf16.msra.mxu0 0
        %646 = vmatprep.subr.bf16.mxu0 0
        %647 = vmatpush1.bf16.msra.mxu0 0
        %648 = vmatprep.subr.bf16.mxu0 0
        %649 = vmatpush1.bf16.msra.mxu0 0
        %650 = vmatprep.subr.bf16.mxu0 0
        %651 = vmatpush1.bf16.msra.mxu0 0
        %652 = vmatprep.subr.bf16.mxu0 0
        %653 = vmatpush1.bf16.msra.mxu0 0
        %654 = vmatprep.subr.bf16.mxu0 0
        %655 = vmatpush1.bf16.msra.mxu0 0
        %656 = vmatprep.subr.bf16.mxu0 0
        %657 = vmatpush1.bf16.msra.mxu0 0
        %658 = vmatprep.subr.bf16.mxu0 0
        %659 = vmatpush1.bf16.msra.mxu0 0
        %660 = vmatprep.subr.bf16.mxu0 0
        %661 = vmatpush1.bf16.msra.mxu0 0
        %662 = vmatprep.subr.bf16.mxu0 0
        %663 = vmatpush1.bf16.msra.mxu0 0
        %664 = vmatprep.subr.bf16.mxu0 0
        %665 = vmatpush1.bf16.msra.mxu0 0
        %666 = vmatprep.subr.bf16.mxu0 0
        %667 = vmatpush1.bf16.msra.mxu0 0
        %668 = vmatprep.mubr.bf16.mxu0 0
        %669 = vmatmul.mubr.bf16.gmra.mrb[0].mxu0 %v579
        %v670 = vpop.f32.mrb[0].mxu0
        %v671 = vadd.f32 0.0, %v670
        %v672 = vpop.f32.mrb[0].mxu0
        %v673 = vpop.f32.mrb[0].mxu0
        %v674 = vadd.f32 0.0, %v673
        %v675 = vpop.f32.mrb[0].mxu0
        %676 = vmatprep.mubr.bf16.mxu0 0
        %677 = vmatmul.mubr.bf16.gmra.mrb[0].mxu0 %v582
        %v678 = vpop.f32.mrb[0].mxu0
        %v679 = vadd.f32 0.0, %v678
        %v680 = vpop.f32.mrb[0].mxu0
        %v681 = vpop.f32.mrb[0].mxu0
        %v682 = vadd.f32 0.0, %v681
        %v683 = vpop.f32.mrb[0].mxu0
        %684 = vmatprep.mubr.bf16.mxu0 0
        %685 = vmatmul.mubr.bf16.gmra.mrb[0].mxu0 %v585
        %v686 = vpop.f32.mrb[0].mxu0
        %v687 = vadd.f32 0.0, %v686
        %v688 = vpop.f32.mrb[0].mxu0
        %v689 = vpop.f32.mrb[0].mxu0
        %v690 = vadd.f32 0.0, %v689
        %v691 = vpop.f32.mrb[0].mxu0
        %692 = vmatprep.mubr.bf16.mxu0 0
        %693 = vmatmul.mubr.bf16.gmra.mrb[0].mxu0 %v588
        %v694 = vpop.f32.mrb[0].mxu0
        %v695 = vadd.f32 0.0, %v694
        %v696 = vpop.f32.mrb[0].mxu0
        %v697 = vpop.f32.mrb[0].mxu0
        %v698 = vadd.f32 0.0, %v697
        %v699 = vpop.f32.mrb[0].mxu0
        %700 = vmatprep.mubr.bf16.mxu0 0
        %701 = vmatmul.mubr.bf16.gmra.mrb[0].mxu0 %v591
        %v702 = vpop.f32.mrb[0].mxu0
        %v703 = vadd.f32 0.0, %v702
        %v704 = vpop.f32.mrb[0].mxu0
        %v705 = vpop.f32.mrb[0].mxu0
        %v706 = vadd.f32 0.0, %v705
        %v707 = vpop.f32.mrb[0].mxu0
        %708 = vmatprep.mubr.bf16.mxu0 0
        %709 = vmatmul.mubr.bf16.gmra.mrb[0].mxu0 %v594
        %v710 = vpop.f32.mrb[0].mxu0
        %v711 = vadd.f32 0.0, %v710
        %v712 = vpop.f32.mrb[0].mxu0
        %v713 = vpop.f32.mrb[0].mxu0
        %v714 = vadd.f32 0.0, %v713
        %v715 = vpop.f32.mrb[0].mxu0
        %716 = vmatprep.mubr.bf16.mxu0 0
        %717 = vmatmul.mubr.bf16.gmra.mrb[0].mxu0 %v597
        %v718 = vpop.f32.mrb[0].mxu0
        %v719 = vadd.f32 0.0, %v718
        %v720 = vpop.f32.mrb[0].mxu0
        %v721 = vpop.f32.mrb[0].mxu0
        %v722 = vadd.f32 0.0, %v721
        %v723 = vpop.f32.mrb[0].mxu0
        %724 = vmatprep.mubr.bf16.mxu0 0
        %725 = vmatmul.mubr.bf16.gmra.mrb[0].mxu0 %v600
        %v726 = vpop.f32.mrb[0].mxu0
        %v727 = vadd.f32 0.0, %v726
        %v728 = vpop.f32.mrb[0].mxu0
        %v729 = vpop.f32.mrb[0].mxu0
        %v730 = vadd.f32 0.0, %v729
        %v731 = vpop.f32.mrb[0].mxu0
        %732 = vmatprep.mubr.bf16.mxu0 0
        %733 = vmatmul.mubr.bf16.gmra.mrb[0].mxu0 %v603
        %v734 = vpop.f32.mrb[0].mxu0
        %v735 = vadd.f32 0.0, %v734
        %v736 = vpop.f32.mrb[0].mxu0
        %v737 = vpop.f32.mrb[0].mxu0
        %v738 = vadd.f32 0.0, %v737
        %v739 = vpop.f32.mrb[0].mxu0
        %740 = vmatprep.mubr.bf16.mxu0 0
        %741 = vmatmul.mubr.bf16.gmra.mrb[0].mxu0 %v606
        %v742 = vpop.f32.mrb[0].mxu0
        %v743 = vadd.f32 0.0, %v742
        %v744 = vpop.f32.mrb[0].mxu0
        %v745 = vpop.f32.mrb[0].mxu0
        %v746 = vadd.f32 0.0, %v745
        %v747 = vpop.f32.mrb[0].mxu0
        %748 = vmatprep.mubr.bf16.mxu0 0
        %749 = vmatmul.mubr.bf16.gmra.mrb[0].mxu0 %v609
        %v750 = vpop.f32.mrb[0].mxu0
        %v751 = vadd.f32 0.0, %v750
        %v752 = vpop.f32.mrb[0].mxu0
        %v753 = vpop.f32.mrb[0].mxu0
        %v754 = vadd.f32 0.0, %v753
        %v755 = vpop.f32.mrb[0].mxu0
        %756 = vmatprep.mubr.bf16.mxu0 0
        %757 = vmatmul.mubr.bf16.gmra.mrb[0].mxu0 %v612
        %v758 = vpop.f32.mrb[0].mxu0
        %v759 = vadd.f32 0.0, %v758
        %v760 = vpop.f32.mrb[0].mxu0
        %v761 = vpop.f32.mrb[0].mxu0
        %v762 = vadd.f32 0.0, %v761
        %v763 = vpop.f32.mrb[0].mxu0
        %764 = vmatprep.mubr.bf16.mxu0 0
        %765 = vmatmul.mubr.bf16.gmra.mrb[0].mxu0 %v615
        %v766 = vpop.f32.mrb[0].mxu0
        %v767 = vadd.f32 0.0, %v766
        %v768 = vpop.f32.mrb[0].mxu0
        %v769 = vpop.f32.mrb[0].mxu0
        %v770 = vadd.f32 0.0, %v769
        %v771 = vpop.f32.mrb[0].mxu0
        %772 = vmatprep.mubr.bf16.mxu0 0
        %773 = vmatmul.mubr.bf16.gmra.mrb[0].mxu0 %v618
        %v774 = vpop.f32.mrb[0].mxu0
        %v775 = vadd.f32 0.0, %v774
        %v776 = vpop.f32.mrb[0].mxu0
        %v777 = vpop.f32.mrb[0].mxu0
        %v778 = vadd.f32 0.0, %v777
        %v779 = vpop.f32.mrb[0].mxu0
        %780 = vmatprep.mubr.bf16.mxu0 0
        %781 = vmatmul.mubr.bf16.gmra.mrb[0].mxu0 %v621
        %v782 = vpop.f32.mrb[0].mxu0
        %v783 = vadd.f32 0.0, %v782
        %v784 = vpop.f32.mrb[0].mxu0
        %v785 = vpop.f32.mrb[0].mxu0
        %v786 = vadd.f32 0.0, %v785
        %v787 = vpop.f32.mrb[0].mxu0
        %788 = vmatprep.mubr.bf16.mxu0 0
        %789 = vmatmul.mubr.bf16.gmra.mrb[0].mxu0 %v624
        %v790 = vpop.f32.mrb[0].mxu0
        %v791 = vadd.f32 0.0, %v790
        %v792 = vpop.f32.mrb[0].mxu0
        %v793 = vpop.f32.mrb[0].mxu0
        %v794 = vadd.f32 0.0, %v793
        %v795 = vpop.f32.mrb[0].mxu0
        %796 = vmatprep.mubr.bf16.mxu0 0
        %797 = vmatmul.mubr.bf16.gmra.mrb[0].mxu0 %v627
        %v798 = vpop.f32.mrb[0].mxu0
        %v799 = vadd.f32 0.0, %v798
        %v800 = vpop.f32.mrb[0].mxu0
        %v801 = vpop.f32.mrb[0].mxu0
        %v802 = vadd.f32 0.0, %v801
        %v803 = vpop.f32.mrb[0].mxu0
        %804 = vmatprep.mubr.bf16.mxu0 0
        %805 = vmatmul.mubr.bf16.gmra.mrb[0].mxu0 %v630
        %v806 = vpop.f32.mrb[0].mxu0
        %v807 = vadd.f32 0.0, %v806
        %v808 = vpop.f32.mrb[0].mxu0
        %v809 = vpop.f32.mrb[0].mxu0
        %v810 = vadd.f32 0.0, %v809
        %v811 = vpop.f32.mrb[0].mxu0
        %812 = vdwg.mxu0
        %v813 = vsel %vm577, %v409, 0
        %v815 = vsel %vm577, %v410, 0
        %v817 = vsel %vm577, %v411, 0
        %v819 = vsel %vm577, %v412, 0
        %v821 = vsel %vm577, %v413, 0
        %v823 = vsel %vm577, %v414, 0
        %v825 = vsel %vm577, %v415, 0
        %v827 = vsel %vm577, %v416, 0
        %v829 = vsel %vm577, %v417, 0
        %v831 = vsel %vm577, %v418, 0
        %v833 = vsel %vm577, %v419, 0
        %v835 = vsel %vm577, %v420, 0
        %v837 = vsel %vm577, %v421, 0
        %v839 = vsel %vm577, %v422, 0
        %v841 = vsel %vm577, %v423, 0
        %v843 = vsel %vm577, %v424, 0
        %v845 = vsel %vm577, %v425, 0
        %v847 = vsel %vm577, %v426, 0
        %v850 = vsel %vm632, %v331, 0
        %852 = vmatprep.subr.bf16.mxu0 0
        %853 = vmatpush1.bf16.msra.mxu0 %v850
        %854 = vmatprep.subr.bf16.mxu0 0
        %855 = vmatpush1.bf16.msra.mxu0 0
        %856 = vmatprep.subr.bf16.mxu0 0
        %857 = vmatpush1.bf16.msra.mxu0 0
        %858 = vmatprep.subr.bf16.mxu0 0
        %859 = vmatpush1.bf16.msra.mxu0 0
        %860 = vmatprep.subr.bf16.mxu0 0
        %861 = vmatpush1.bf16.msra.mxu0 0
        %862 = vmatprep.subr.bf16.mxu0 0
        %863 = vmatpush1.bf16.msra.mxu0 0
        %864 = vmatprep.subr.bf16.mxu0 0
        %865 = vmatpush1.bf16.msra.mxu0 0
        %866 = vmatprep.subr.bf16.mxu0 0
        %867 = vmatpush1.bf16.msra.mxu0 0
        %868 = vmatprep.subr.bf16.mxu0 0
        %869 = vmatpush1.bf16.msra.mxu0 0
        %870 = vmatprep.subr.bf16.mxu0 0
        %871 = vmatpush1.bf16.msra.mxu0 0
        %872 = vmatprep.subr.bf16.mxu0 0
        %873 = vmatpush1.bf16.msra.mxu0 0
        %874 = vmatprep.subr.bf16.mxu0 0
        %875 = vmatpush1.bf16.msra.mxu0 0
        %876 = vmatprep.subr.bf16.mxu0 0
        %877 = vmatpush1.bf16.msra.mxu0 0
        %878 = vmatprep.subr.bf16.mxu0 0
        %879 = vmatpush1.bf16.msra.mxu0 0
        %880 = vmatprep.subr.bf16.mxu0 0
        %881 = vmatpush1.bf16.msra.mxu0 0
        %882 = vmatprep.subr.bf16.mxu0 0
        %883 = vmatpush1.bf16.msra.mxu0 0
        %884 = vmatprep.mubr.bf16.mxu0 0
        %885 = vmatmul.mubr.bf16.gmra.mrb[0].mxu0 %v813
        %v886 = vpop.f32.mrb[0].mxu0
        %v887 = vadd.f32 %v671, %v886
        %v888 = vpop.f32.mrb[0].mxu0
        %v889 = vpop.f32.mrb[0].mxu0
        %v890 = vadd.f32 %v674, %v889
        %v891 = vpop.f32.mrb[0].mxu0
        %892 = vmatprep.mubr.bf16.mxu0 0
        %893 = vmatmul.mubr.bf16.gmra.mrb[0].mxu0 %v815
        %v894 = vpop.f32.mrb[0].mxu0
        %v895 = vadd.f32 %v679, %v894
        %v896 = vpop.f32.mrb[0].mxu0
        %v897 = vpop.f32.mrb[0].mxu0
        %v898 = vadd.f32 %v682, %v897
        %v899 = vpop.f32.mrb[0].mxu0
        %900 = vmatprep.mubr.bf16.mxu0 0
        %901 = vmatmul.mubr.bf16.gmra.mrb[0].mxu0 %v817
        %v902 = vpop.f32.mrb[0].mxu0
        %v903 = vadd.f32 %v687, %v902
        %v904 = vpop.f32.mrb[0].mxu0
        %v905 = vpop.f32.mrb[0].mxu0
        %v906 = vadd.f32 %v690, %v905
        %v907 = vpop.f32.mrb[0].mxu0
        %908 = vmatprep.mubr.bf16.mxu0 0
        %909 = vmatmul.mubr.bf16.gmra.mrb[0].mxu0 %v819
        %v910 = vpop.f32.mrb[0].mxu0
        %v911 = vadd.f32 %v695, %v910
        %v912 = vpop.f32.mrb[0].mxu0
        %v913 = vpop.f32.mrb[0].mxu0
        %v914 = vadd.f32 %v698, %v913
        %v915 = vpop.f32.mrb[0].mxu0
        %916 = vmatprep.mubr.bf16.mxu0 0
        %917 = vmatmul.mubr.bf16.gmra.mrb[0].mxu0 %v821
        %v918 = vpop.f32.mrb[0].mxu0
        %v919 = vadd.f32 %v703, %v918
        %v920 = vpop.f32.mrb[0].mxu0
        %v921 = vpop.f32.mrb[0].mxu0
        %v922 = vadd.f32 %v706, %v921
        %v923 = vpop.f32.mrb[0].mxu0
        %924 = vmatprep.mubr.bf16.mxu0 0
        %925 = vmatmul.mubr.bf16.gmra.mrb[0].mxu0 %v823
        %v926 = vpop.f32.mrb[0].mxu0
        %v927 = vadd.f32 %v711, %v926
        %v928 = vpop.f32.mrb[0].mxu0
        %v929 = vpop.f32.mrb[0].mxu0
        %v930 = vadd.f32 %v714, %v929
        %v931 = vpop.f32.mrb[0].mxu0
        %932 = vmatprep.mubr.bf16.mxu0 0
        %933 = vmatmul.mubr.bf16.gmra.mrb[0].mxu0 %v825
        %v934 = vpop.f32.mrb[0].mxu0
        %v935 = vadd.f32 %v719, %v934
        %v936 = vpop.f32.mrb[0].mxu0
        %v937 = vpop.f32.mrb[0].mxu0
        %v938 = vadd.f32 %v722, %v937
        %v939 = vpop.f32.mrb[0].mxu0
        %940 = vmatprep.mubr.bf16.mxu0 0
        %941 = vmatmul.mubr.bf16.gmra.mrb[0].mxu0 %v827
        %v942 = vpop.f32.mrb[0].mxu0
        %v943 = vadd.f32 %v727, %v942
        %v944 = vpop.f32.mrb[0].mxu0
        %v945 = vpop.f32.mrb[0].mxu0
        %v946 = vadd.f32 %v730, %v945
        %v947 = vpop.f32.mrb[0].mxu0
        %948 = vmatprep.mubr.bf16.mxu0 0
        %949 = vmatmul.mubr.bf16.gmra.mrb[0].mxu0 %v829
        %v950 = vpop.f32.mrb[0].mxu0
        %v951 = vadd.f32 %v735, %v950
        %v952 = vpop.f32.mrb[0].mxu0
        %v953 = vpop.f32.mrb[0].mxu0
        %v954 = vadd.f32 %v738, %v953
        %v955 = vpop.f32.mrb[0].mxu0
        %956 = vmatprep.mubr.bf16.mxu0 0
        %957 = vmatmul.mubr.bf16.gmra.mrb[0].mxu0 %v831
        %v958 = vpop.f32.mrb[0].mxu0
        %v959 = vadd.f32 %v743, %v958
        %v960 = vpop.f32.mrb[0].mxu0
        %v961 = vpop.f32.mrb[0].mxu0
        %v962 = vadd.f32 %v746, %v961
        %v963 = vpop.f32.mrb[0].mxu0
        %964 = vmatprep.mubr.bf16.mxu0 0
        %965 = vmatmul.mubr.bf16.gmra.mrb[0].mxu0 %v833
        %v966 = vpop.f32.mrb[0].mxu0
        %v967 = vadd.f32 %v751, %v966
        %v968 = vpop.f32.mrb[0].mxu0
        %v969 = vpop.f32.mrb[0].mxu0
        %v970 = vadd.f32 %v754, %v969
        %v971 = vpop.f32.mrb[0].mxu0
        %972 = vmatprep.mubr.bf16.mxu0 0
        %973 = vmatmul.mubr.bf16.gmra.mrb[0].mxu0 %v835
        %v974 = vpop.f32.mrb[0].mxu0
        %v975 = vadd.f32 %v759, %v974
        %v976 = vpop.f32.mrb[0].mxu0
        %v977 = vpop.f32.mrb[0].mxu0
        %v978 = vadd.f32 %v762, %v977
        %v979 = vpop.f32.mrb[0].mxu0
        %980 = vmatprep.mubr.bf16.mxu0 0
        %981 = vmatmul.mubr.bf16.gmra.mrb[0].mxu0 %v837
        %v982 = vpop.f32.mrb[0].mxu0
        %v983 = vadd.f32 %v767, %v982
        %v984 = vpop.f32.mrb[0].mxu0
        %v985 = vpop.f32.mrb[0].mxu0
        %v986 = vadd.f32 %v770, %v985
        %v987 = vpop.f32.mrb[0].mxu0
        %988 = vmatprep.mubr.bf16.mxu0 0
        %989 = vmatmul.mubr.bf16.gmra.mrb[0].mxu0 %v839
        %v990 = vpop.f32.mrb[0].mxu0
        %v991 = vadd.f32 %v775, %v990
        %v992 = vpop.f32.mrb[0].mxu0
        %v993 = vpop.f32.mrb[0].mxu0
        %v994 = vadd.f32 %v778, %v993
        %v995 = vpop.f32.mrb[0].mxu0
        %996 = vmatprep.mubr.bf16.mxu0 0
        %997 = vmatmul.mubr.bf16.gmra.mrb[0].mxu0 %v841
        %v998 = vpop.f32.mrb[0].mxu0
        %v999 = vadd.f32 %v783, %v998
        %v1000 = vpop.f32.mrb[0].mxu0
        %v1001 = vpop.f32.mrb[0].mxu0
        %v1002 = vadd.f32 %v786, %v1001
        %v1003 = vpop.f32.mrb[0].mxu0
        %1004 = vmatprep.mubr.bf16.mxu0 0
        %1005 = vmatmul.mubr.bf16.gmra.mrb[0].mxu0 %v843
        %v1006 = vpop.f32.mrb[0].mxu0
        %v1007 = vadd.f32 %v791, %v1006
        %v1008 = vpop.f32.mrb[0].mxu0
        %v1009 = vpop.f32.mrb[0].mxu0
        %v1010 = vadd.f32 %v794, %v1009
        %v1011 = vpop.f32.mrb[0].mxu0
        %1012 = vmatprep.mubr.bf16.mxu0 0
        %1013 = vmatmul.mubr.bf16.gmra.mrb[0].mxu0 %v845
        %v1014 = vpop.f32.mrb[0].mxu0
        %v1015 = vadd.f32 %v799, %v1014
        %v1016 = vpop.f32.mrb[0].mxu0
        %v1017 = vpop.f32.mrb[0].mxu0
        %v1018 = vadd.f32 %v802, %v1017
        %v1019 = vpop.f32.mrb[0].mxu0
        %1020 = vmatprep.mubr.bf16.mxu0 0
        %1021 = vmatmul.mubr.bf16.gmra.mrb[0].mxu0 %v847
        %v1022 = vpop.f32.mrb[0].mxu0
        %v1023 = vadd.f32 %v807, %v1022
        %v1024 = vpop.f32.mrb[0].mxu0
        %v1025 = vpop.f32.mrb[0].mxu0
        %v1026 = vadd.f32 %v810, %v1025
        %v1027 = vpop.f32.mrb[0].mxu0
        %1028 = vdwg.mxu0
        %v1029 = vld [vmem:[%s288] sm:$0xe]
        %s1030 = scalar_lea.vmem %s1, 4
        %v1031 = vld [vmem:[%s1030] sm:$0x3]
        %v1033 = vunpack.c.l.b16 %v1029
        %v1034 = vpack.c.b16 %v373, %v1033
        %vm1035 = vcmask 1046528
        %v1036 = vrot.slane %v1034, 1
        %v1037 = vrot.slane %v410, 1
        %v1038 = vsel %vm1035, %v1036, %v1037
        %v1039 = vrot.slane %v411, 1
        %v1040 = vsel %vm1035, %v1037, %v1039
        %v1041 = vrot.slane %v412, 1
        %v1042 = vsel %vm1035, %v1039, %v1041
        %v1043 = vrot.slane %v413, 1
        %v1044 = vsel %vm1035, %v1041, %v1043
        %v1045 = vrot.slane %v414, 1
        %v1046 = vsel %vm1035, %v1043, %v1045
        %v1047 = vrot.slane %v415, 1
        %v1048 = vsel %vm1035, %v1045, %v1047
        %v1049 = vrot.slane %v416, 1
        %v1050 = vsel %vm1035, %v1047, %v1049
        %v1051 = vrot.slane %v417, 1
        %v1052 = vsel %vm1035, %v1049, %v1051
        %v1053 = vrot.slane %v418, 1
        %v1054 = vsel %vm1035, %v1051, %v1053
        %v1055 = vrot.slane %v419, 1
        %v1056 = vsel %vm1035, %v1053, %v1055
        %v1057 = vrot.slane %v420, 1
        %v1058 = vsel %vm1035, %v1055, %v1057
        %v1059 = vrot.slane %v421, 1
        %v1060 = vsel %vm1035, %v1057, %v1059
        %v1061 = vrot.slane %v422, 1
        %v1062 = vsel %vm1035, %v1059, %v1061
        %v1063 = vrot.slane %v423, 1
        %v1064 = vsel %vm1035, %v1061, %v1063
        %v1065 = vrot.slane %v424, 1
        %v1066 = vsel %vm1035, %v1063, %v1065
        %v1067 = vrot.slane %v425, 1
        %v1068 = vsel %vm1035, %v1065, %v1067
        %v1069 = vrot.slane %v426, 1
        %v1070 = vsel %vm1035, %v1067, %v1069
        %v1071 = vrot.slane %v427, 1
        %v1072 = vsel %vm1035, %v1069, %v1071
        %v1074 = vsel %vm577, %v1038, 0
        %v1077 = vsel %vm577, %v1040, 0
        %v1080 = vsel %vm577, %v1042, 0
        %v1083 = vsel %vm577, %v1044, 0
        %v1086 = vsel %vm577, %v1046, 0
        %v1089 = vsel %vm577, %v1048, 0
        %v1092 = vsel %vm577, %v1050, 0
        %v1095 = vsel %vm577, %v1052, 0
        %v1098 = vsel %vm577, %v1054, 0
        %v1101 = vsel %vm577, %v1056, 0
        %v1104 = vsel %vm577, %v1058, 0
        %v1107 = vsel %vm577, %v1060, 0
        %v1110 = vsel %vm577, %v1062, 0
        %v1113 = vsel %vm577, %v1064, 0
        %v1116 = vsel %vm577, %v1066, 0
        %v1119 = vsel %vm577, %v1068, 0
        %v1122 = vsel %vm577, %v1070, 0
        %v1125 = vsel %vm577, %v1072, 0
        %v1128 = vsel %vm632, %v1031, 0
        %1130 = vmatprep.subr.bf16.mxu0 0
        %1131 = vmatpush1.bf16.msra.mxu0 %v1128
        %1132 = vmatprep.subr.bf16.mxu0 0
        %1133 = vmatpush1.bf16.msra.mxu0 0
        %1134 = vmatprep.subr.bf16.mxu0 0
        %1135 = vmatpush1.bf16.msra.mxu0 0
        %1136 = vmatprep.subr.bf16.mxu0 0
        %1137 = vmatpush1.bf16.msra.mxu0 0
        %1138 = vmatprep.subr.bf16.mxu0 0
        %1139 = vmatpush1.bf16.msra.mxu0 0
        %1140 = vmatprep.subr.bf16.mxu0 0
        %1141 = vmatpush1.bf16.msra.mxu0 0
        %1142 = vmatprep.subr.bf16.mxu0 0
        %1143 = vmatpush1.bf16.msra.mxu0 0
        %1144 = vmatprep.subr.bf16.mxu0 0
        %1145 = vmatpush1.bf16.msra.mxu0 0
        %1146 = vmatprep.subr.bf16.mxu0 0
        %1147 = vmatpush1.bf16.msra.mxu0 0
        %1148 = vmatprep.subr.bf16.mxu0 0
        %1149 = vmatpush1.bf16.msra.mxu0 0
        %1150 = vmatprep.subr.bf16.mxu0 0
        %1151 = vmatpush1.bf16.msra.mxu0 0
        %1152 = vmatprep.subr.bf16.mxu0 0
        %1153 = vmatpush1.bf16.msra.mxu0 0
        %1154 = vmatprep.subr.bf16.mxu0 0
        %1155 = vmatpush1.bf16.msra.mxu0 0
        %1156 = vmatprep.subr.bf16.mxu0 0
        %1157 = vmatpush1.bf16.msra.mxu0 0
        %1158 = vmatprep.subr.bf16.mxu0 0
        %1159 = vmatpush1.bf16.msra.mxu0 0
        %1160 = vmatprep.subr.bf16.mxu0 0
        %1161 = vmatpush1.bf16.msra.mxu0 0
        %1162 = vmatprep.mubr.bf16.mxu0 0
        %1163 = vmatmul.mubr.bf16.gmra.mrb[0].mxu0 %v1074
        %v1164 = vpop.f32.mrb[0].mxu0
        %v1165 = vadd.f32 0.0, %v1164
        %v1166 = vpop.f32.mrb[0].mxu0
        %v1167 = vpop.f32.mrb[0].mxu0
        %v1168 = vadd.f32 0.0, %v1167
        %v1169 = vpop.f32.mrb[0].mxu0
        %1170 = vmatprep.mubr.bf16.mxu0 0
        %1171 = vmatmul.mubr.bf16.gmra.mrb[0].mxu0 %v1077
        %v1172 = vpop.f32.mrb[0].mxu0
        %v1173 = vadd.f32 0.0, %v1172
        %v1174 = vpop.f32.mrb[0].mxu0
        %v1175 = vpop.f32.mrb[0].mxu0
        %v1176 = vadd.f32 0.0, %v1175
        %v1177 = vpop.f32.mrb[0].mxu0
        %1178 = vmatprep.mubr.bf16.mxu0 0
        %1179 = vmatmul.mubr.bf16.gmra.mrb[0].mxu0 %v1080
        %v1180 = vpop.f32.mrb[0].mxu0
        %v1181 = vadd.f32 0.0, %v1180
        %v1182 = vpop.f32.mrb[0].mxu0
        %v1183 = vpop.f32.mrb[0].mxu0
        %v1184 = vadd.f32 0.0, %v1183
        %v1185 = vpop.f32.mrb[0].mxu0
        %1186 = vmatprep.mubr.bf16.mxu0 0
        %1187 = vmatmul.mubr.bf16.gmra.mrb[0].mxu0 %v1083
        %v1188 = vpop.f32.mrb[0].mxu0
        %v1189 = vadd.f32 0.0, %v1188
        %v1190 = vpop.f32.mrb[0].mxu0
        %v1191 = vpop.f32.mrb[0].mxu0
        %v1192 = vadd.f32 0.0, %v1191
        %v1193 = vpop.f32.mrb[0].mxu0
        %1194 = vmatprep.mubr.bf16.mxu0 0
        %1195 = vmatmul.mubr.bf16.gmra.mrb[0].mxu0 %v1086
        %v1196 = vpop.f32.mrb[0].mxu0
        %v1197 = vadd.f32 0.0, %v1196
        %v1198 = vpop.f32.mrb[0].mxu0
        %v1199 = vpop.f32.mrb[0].mxu0
        %v1200 = vadd.f32 0.0, %v1199
        %v1201 = vpop.f32.mrb[0].mxu0
        %1202 = vmatprep.mubr.bf16.mxu0 0
        %1203 = vmatmul.mubr.bf16.gmra.mrb[0].mxu0 %v1089
        %v1204 = vpop.f32.mrb[0].mxu0
        %v1205 = vadd.f32 0.0, %v1204
        %v1206 = vpop.f32.mrb[0].mxu0
        %v1207 = vpop.f32.mrb[0].mxu0
        %v1208 = vadd.f32 0.0, %v1207
        %v1209 = vpop.f32.mrb[0].mxu0
        %1210 = vmatprep.mubr.bf16.mxu0 0
        %1211 = vmatmul.mubr.bf16.gmra.mrb[0].mxu0 %v1092
        %v1212 = vpop.f32.mrb[0].mxu0
        %v1213 = vadd.f32 0.0, %v1212
        %v1214 = vpop.f32.mrb[0].mxu0
        %v1215 = vpop.f32.mrb[0].mxu0
        %v1216 = vadd.f32 0.0, %v1215
        %v1217 = vpop.f32.mrb[0].mxu0
        %1218 = vmatprep.mubr.bf16.mxu0 0
        %1219 = vmatmul.mubr.bf16.gmra.mrb[0].mxu0 %v1095
        %v1220 = vpop.f32.mrb[0].mxu0
        %v1221 = vadd.f32 0.0, %v1220
        %v1222 = vpop.f32.mrb[0].mxu0
        %v1223 = vpop.f32.mrb[0].mxu0
        %v1224 = vadd.f32 0.0, %v1223
        %v1225 = vpop.f32.mrb[0].mxu0
        %1226 = vmatprep.mubr.bf16.mxu0 0
        %1227 = vmatmul.mubr.bf16.gmra.mrb[0].mxu0 %v1098
        %v1228 = vpop.f32.mrb[0].mxu0
        %v1229 = vadd.f32 0.0, %v1228
        %v1230 = vpop.f32.mrb[0].mxu0
        %v1231 = vpop.f32.mrb[0].mxu0
        %v1232 = vadd.f32 0.0, %v1231
        %v1233 = vpop.f32.mrb[0].mxu0
        %1234 = vmatprep.mubr.bf16.mxu0 0
        %1235 = vmatmul.mubr.bf16.gmra.mrb[0].mxu0 %v1101
        %v1236 = vpop.f32.mrb[0].mxu0
        %v1237 = vadd.f32 0.0, %v1236
        %v1238 = vpop.f32.mrb[0].mxu0
        %v1239 = vpop.f32.mrb[0].mxu0
        %v1240 = vadd.f32 0.0, %v1239
        %v1241 = vpop.f32.mrb[0].mxu0
        %1242 = vmatprep.mubr.bf16.mxu0 0
        %1243 = vmatmul.mubr.bf16.gmra.mrb[0].mxu0 %v1104
        %v1244 = vpop.f32.mrb[0].mxu0
        %v1245 = vadd.f32 0.0, %v1244
        %v1246 = vpop.f32.mrb[0].mxu0
        %v1247 = vpop.f32.mrb[0].mxu0
        %v1248 = vadd.f32 0.0, %v1247
        %v1249 = vpop.f32.mrb[0].mxu0
        %1250 = vmatprep.mubr.bf16.mxu0 0
        %1251 = vmatmul.mubr.bf16.gmra.mrb[0].mxu0 %v1107
        %v1252 = vpop.f32.mrb[0].mxu0
        %v1253 = vadd.f32 0.0, %v1252
        %v1254 = vpop.f32.mrb[0].mxu0
        %v1255 = vpop.f32.mrb[0].mxu0
        %v1256 = vadd.f32 0.0, %v1255
        %v1257 = vpop.f32.mrb[0].mxu0
        %1258 = vmatprep.mubr.bf16.mxu0 0
        %1259 = vmatmul.mubr.bf16.gmra.mrb[0].mxu0 %v1110
        %v1260 = vpop.f32.mrb[0].mxu0
        %v1261 = vadd.f32 0.0, %v1260
        %v1262 = vpop.f32.mrb[0].mxu0
        %v1263 = vpop.f32.mrb[0].mxu0
        %v1264 = vadd.f32 0.0, %v1263
        %v1265 = vpop.f32.mrb[0].mxu0
        %1266 = vmatprep.mubr.bf16.mxu0 0
        %1267 = vmatmul.mubr.bf16.gmra.mrb[0].mxu0 %v1113
        %v1268 = vpop.f32.mrb[0].mxu0
        %v1269 = vadd.f32 0.0, %v1268
        %v1270 = vpop.f32.mrb[0].mxu0
        %v1271 = vpop.f32.mrb[0].mxu0
        %v1272 = vadd.f32 0.0, %v1271
        %v1273 = vpop.f32.mrb[0].mxu0
        %1274 = vmatprep.mubr.bf16.mxu0 0
        %1275 = vmatmul.mubr.bf16.gmra.mrb[0].mxu0 %v1116
        %v1276 = vpop.f32.mrb[0].mxu0
        %v1277 = vadd.f32 0.0, %v1276
        %v1278 = vpop.f32.mrb[0].mxu0
        %v1279 = vpop.f32.mrb[0].mxu0
        %v1280 = vadd.f32 0.0, %v1279
        %v1281 = vpop.f32.mrb[0].mxu0
        %1282 = vmatprep.mubr.bf16.mxu0 0
        %1283 = vmatmul.mubr.bf16.gmra.mrb[0].mxu0 %v1119
        %v1284 = vpop.f32.mrb[0].mxu0
        %v1285 = vadd.f32 0.0, %v1284
        %v1286 = vpop.f32.mrb[0].mxu0
        %v1287 = vpop.f32.mrb[0].mxu0
        %v1288 = vadd.f32 0.0, %v1287
        %v1289 = vpop.f32.mrb[0].mxu0
        %1290 = vmatprep.mubr.bf16.mxu0 0
        %1291 = vmatmul.mubr.bf16.gmra.mrb[0].mxu0 %v1122
        %v1292 = vpop.f32.mrb[0].mxu0
        %v1293 = vadd.f32 0.0, %v1292
        %v1294 = vpop.f32.mrb[0].mxu0
        %v1295 = vpop.f32.mrb[0].mxu0
        %v1296 = vadd.f32 0.0, %v1295
        %v1297 = vpop.f32.mrb[0].mxu0
        %1298 = vmatprep.mubr.bf16.mxu0 0
        %1299 = vmatmul.mubr.bf16.gmra.mrb[0].mxu0 %v1125
        %v1300 = vpop.f32.mrb[0].mxu0
        %v1301 = vadd.f32 0.0, %v1300
        %v1302 = vpop.f32.mrb[0].mxu0
        %v1303 = vpop.f32.mrb[0].mxu0
        %v1304 = vadd.f32 0.0, %v1303
        %v1305 = vpop.f32.mrb[0].mxu0
        %1306 = vdwg.mxu0
        %v1307 = vadd.f32 %v887, %v1165
        %v1308 = vadd.f32 %v890, %v1168
        %v1309 = vadd.f32 %v895, %v1173
        %v1310 = vadd.f32 %v898, %v1176
        %v1311 = vadd.f32 %v903, %v1181
        %v1312 = vadd.f32 %v906, %v1184
        %v1313 = vadd.f32 %v911, %v1189
        %v1314 = vadd.f32 %v914, %v1192
        %v1315 = vadd.f32 %v919, %v1197
        %v1316 = vadd.f32 %v922, %v1200
        %v1317 = vadd.f32 %v927, %v1205
        %v1318 = vadd.f32 %v930, %v1208
        %v1319 = vadd.f32 %v935, %v1213
        %v1320 = vadd.f32 %v938, %v1216
        %v1321 = vadd.f32 %v943, %v1221
        %v1322 = vadd.f32 %v946, %v1224
        %v1323 = vadd.f32 %v951, %v1229
        %v1324 = vadd.f32 %v954, %v1232
        %v1325 = vadd.f32 %v959, %v1237
        %v1326 = vadd.f32 %v962, %v1240
        %v1327 = vadd.f32 %v967, %v1245
        %v1328 = vadd.f32 %v970, %v1248
        %v1329 = vadd.f32 %v975, %v1253
        %v1330 = vadd.f32 %v978, %v1256
        %v1331 = vadd.f32 %v983, %v1261
        %v1332 = vadd.f32 %v986, %v1264
        %v1333 = vadd.f32 %v991, %v1269
        %v1334 = vadd.f32 %v994, %v1272
        %v1335 = vadd.f32 %v999, %v1277
        %v1336 = vadd.f32 %v1002, %v1280
        %v1337 = vadd.f32 %v1007, %v1285
        %v1338 = vadd.f32 %v1010, %v1288
        %v1339 = vadd.f32 %v1015, %v1293
        %v1340 = vadd.f32 %v1018, %v1296
        %v1341 = vadd.f32 %v1023, %v1301
        %v1342 = vadd.f32 %v1026, %v1304
        %v1343 = vld [vmem:[%s288 + $0x8] sm:$0xe]
        %v1344 = vld [vmem:[%s288 + $0xc] sm:$0xf]
        %v1345 = vld [vmem:[%s288 + $0x10] sm:$0xf]
        %v1346 = vld [vmem:[%s288 + $0x14] sm:$0xf]
        %v1347 = vld [vmem:[%s288 + $0x18] sm:$0xf]
        %v1348 = vld [vmem:[%s288 + $0x1c] sm:$0xf]
        %v1349 = vld [vmem:[%s288 + $0x20] sm:$0xf]
        %v1350 = vld [vmem:[%s288 + $0x24] sm:$0xf]
        %v1351 = vld [vmem:[%s288 + $0x28] sm:$0xf]
        %v1352 = vld [vmem:[%s288 + $0x2c] sm:$0xf]
        %v1353 = vld [vmem:[%s288 + $0x30] sm:$0xf]
        %v1354 = vld [vmem:[%s288 + $0x34] sm:$0xf]
        %v1355 = vld [vmem:[%s288 + $0x38] sm:$0xf]
        %v1356 = vld [vmem:[%s288 + $0x3c] sm:$0xf]
        %v1357 = vld [vmem:[%s288 + $0x40] sm:$0xf]
        %v1358 = vld [vmem:[%s288 + $0x44] sm:$0xf]
        %v1359 = vld [vmem:[%s288 + $0x48] sm:$0xf]
        %v1360 = vld [vmem:[%s288 + $0x4c] sm:$0xf]
        %v1361 = vld [vmem:[%s288 + $0x50] sm:$0xf]
        %v1362 = vld [vmem:[%s288 + $0x54] sm:$0xf]
        %v1363 = vld [vmem:[%s288 + $0x58] sm:$0xf]
        %v1364 = vld [vmem:[%s288 + $0x5c] sm:$0xf]
        %v1365 = vld [vmem:[%s288 + $0x60] sm:$0xf]
        %v1366 = vld [vmem:[%s288 + $0x64] sm:$0xf]
        %v1367 = vld [vmem:[%s288 + $0x68] sm:$0xf]
        %v1368 = vld [vmem:[%s288 + $0x6c] sm:$0xf]
        %v1369 = vld [vmem:[%s288 + $0x70] sm:$0xf]
        %v1370 = vld [vmem:[%s288 + $0x74] sm:$0xf]
        %v1371 = vld [vmem:[%s288 + $0x78] sm:$0xf]
        %v1372 = vld [vmem:[%s288 + $0x7c] sm:$0xf]
        %v1373 = vld [vmem:[%s288 + $0x80] sm:$0xf]
        %v1374 = vld [vmem:[%s288 + $0x84] sm:$0xf]
        %v1375 = vld [vmem:[%s288 + $0x88] sm:$0xf]
        %v1376 = vld [vmem:[%s288 + $0x8c] sm:$0xf]
        %v1377 = vld [vmem:[%s288 + $0x90] sm:$0xf]
        %v1378 = vld [vmem:[%s288 + $0x94] sm:$0xf]
        %v1379 = vld [vmem:[%s288 + $0x98] sm:$0x1]
        %s1380 = scalar_lea.vmem %s1, 6
        %v1381 = vld [vmem:[%s1380] sm:$0x3]
        %v1419 = vunpack.c.l.b16 %v1343
        %v1420 = vunpack.c.l.b16 %v1344
        %v1421 = vunpack.c.l.b16 %v1345
        %v1422 = vunpack.c.l.b16 %v1346
        %v1423 = vunpack.c.l.b16 %v1347
        %v1424 = vunpack.c.l.b16 %v1348
        %v1425 = vunpack.c.l.b16 %v1349
        %v1426 = vunpack.c.l.b16 %v1350
        %v1427 = vunpack.c.l.b16 %v1351
        %v1428 = vunpack.c.l.b16 %v1352
        %v1429 = vunpack.c.l.b16 %v1353
        %v1430 = vunpack.c.l.b16 %v1354
        %v1431 = vunpack.c.l.b16 %v1355
        %v1432 = vunpack.c.l.b16 %v1356
        %v1433 = vunpack.c.l.b16 %v1357
        %v1434 = vunpack.c.l.b16 %v1358
        %v1435 = vunpack.c.l.b16 %v1359
        %v1436 = vunpack.c.l.b16 %v1360
        %v1437 = vunpack.c.l.b16 %v1361
        %v1438 = vunpack.c.l.b16 %v1362
        %v1439 = vunpack.c.l.b16 %v1363
        %v1440 = vunpack.c.l.b16 %v1364
        %v1441 = vunpack.c.l.b16 %v1365
        %v1442 = vunpack.c.l.b16 %v1366
        %v1443 = vunpack.c.l.b16 %v1367
        %v1444 = vunpack.c.l.b16 %v1368
        %v1445 = vunpack.c.l.b16 %v1369
        %v1446 = vunpack.c.l.b16 %v1370
        %v1447 = vunpack.c.l.b16 %v1371
        %v1448 = vunpack.c.l.b16 %v1372
        %v1449 = vunpack.c.l.b16 %v1373
        %v1450 = vunpack.c.l.b16 %v1374
        %v1451 = vunpack.c.l.b16 %v1375
        %v1452 = vunpack.c.l.b16 %v1376
        %v1453 = vunpack.c.l.b16 %v1377
        %v1454 = vunpack.c.l.b16 %v1378
        %v1455 = vunpack.c.l.b16 %v1379
        %v1456 = vpack.c.b16 %v1420, %v1419
        %v1457 = vpack.c.b16 %v1422, %v1421
        %v1458 = vpack.c.b16 %v1424, %v1423
        %v1459 = vpack.c.b16 %v1426, %v1425
        %v1460 = vpack.c.b16 %v1428, %v1427
        %v1461 = vpack.c.b16 %v1430, %v1429
        %v1462 = vpack.c.b16 %v1432, %v1431
        %v1463 = vpack.c.b16 %v1434, %v1433
        %v1464 = vpack.c.b16 %v1436, %v1435
        %v1465 = vpack.c.b16 %v1438, %v1437
        %v1466 = vpack.c.b16 %v1440, %v1439
        %v1467 = vpack.c.b16 %v1442, %v1441
        %v1468 = vpack.c.b16 %v1444, %v1443
        %v1469 = vpack.c.b16 %v1446, %v1445
        %v1470 = vpack.c.b16 %v1448, %v1447
        %v1471 = vpack.c.b16 %v1450, %v1449
        %v1472 = vpack.c.b16 %v1452, %v1451
        %v1473 = vpack.c.b16 %v1454, %v1453
        %v1474 = vpack.c.b16 %v1455, %v1455
        %v1475 = vrot.slane %v1456, 1
        %v1476 = vrot.slane %v1457, 1
        %v1477 = vsel %vm1035, %v1475, %v1476
        %v1478 = vrot.slane %v1458, 1
        %v1479 = vsel %vm1035, %v1476, %v1478
        %v1480 = vrot.slane %v1459, 1
        %v1481 = vsel %vm1035, %v1478, %v1480
        %v1482 = vrot.slane %v1460, 1
        %v1483 = vsel %vm1035, %v1480, %v1482
        %v1484 = vrot.slane %v1461, 1
        %v1485 = vsel %vm1035, %v1482, %v1484
        %v1486 = vrot.slane %v1462, 1
        %v1487 = vsel %vm1035, %v1484, %v1486
        %v1488 = vrot.slane %v1463, 1
        %v1489 = vsel %vm1035, %v1486, %v1488
        %v1490 = vrot.slane %v1464, 1
        %v1491 = vsel %vm1035, %v1488, %v1490
        %v1492 = vrot.slane %v1465, 1
        %v1493 = vsel %vm1035, %v1490, %v1492
        %v1494 = vrot.slane %v1466, 1
        %v1495 = vsel %vm1035, %v1492, %v1494
        %v1496 = vrot.slane %v1467, 1
        %v1497 = vsel %vm1035, %v1494, %v1496
        %v1498 = vrot.slane %v1468, 1
        %v1499 = vsel %vm1035, %v1496, %v1498
        %v1500 = vrot.slane %v1469, 1
        %v1501 = vsel %vm1035, %v1498, %v1500
        %v1502 = vrot.slane %v1470, 1
        %v1503 = vsel %vm1035, %v1500, %v1502
        %v1504 = vrot.slane %v1471, 1
        %v1505 = vsel %vm1035, %v1502, %v1504
        %v1506 = vrot.slane %v1472, 1
        %v1507 = vsel %vm1035, %v1504, %v1506
        %v1508 = vrot.slane %v1473, 1
        %v1509 = vsel %vm1035, %v1506, %v1508
        %v1510 = vrot.slane %v1474, 1
        %v1511 = vsel %vm1035, %v1508, %v1510
        %v1513 = vsel %vm577, %v1477, 0
        %v1516 = vsel %vm577, %v1479, 0
        %v1519 = vsel %vm577, %v1481, 0
        %v1522 = vsel %vm577, %v1483, 0
        %v1525 = vsel %vm577, %v1485, 0
        %v1528 = vsel %vm577, %v1487, 0
        %v1531 = vsel %vm577, %v1489, 0
        %v1534 = vsel %vm577, %v1491, 0
        %v1537 = vsel %vm577, %v1493, 0
        %v1540 = vsel %vm577, %v1495, 0
        %v1543 = vsel %vm577, %v1497, 0
        %v1546 = vsel %vm577, %v1499, 0
        %v1549 = vsel %vm577, %v1501, 0
        %v1552 = vsel %vm577, %v1503, 0
        %v1555 = vsel %vm577, %v1505, 0
        %v1558 = vsel %vm577, %v1507, 0
        %v1561 = vsel %vm577, %v1509, 0
        %v1564 = vsel %vm577, %v1511, 0
        %v1567 = vsel %vm632, %v1381, 0
        %1569 = vmatprep.subr.bf16.mxu0 0
        %1570 = vmatpush1.bf16.msra.mxu0 %v1567
        %1571 = vmatprep.subr.bf16.mxu0 0
        %1572 = vmatpush1.bf16.msra.mxu0 0
        %1573 = vmatprep.subr.bf16.mxu0 0
        %1574 = vmatpush1.bf16.msra.mxu0 0
        %1575 = vmatprep.subr.bf16.mxu0 0
        %1576 = vmatpush1.bf16.msra.mxu0 0
        %1577 = vmatprep.subr.bf16.mxu0 0
        %1578 = vmatpush1.bf16.msra.mxu0 0
        %1579 = vmatprep.subr.bf16.mxu0 0
        %1580 = vmatpush1.bf16.msra.mxu0 0
        %1581 = vmatprep.subr.bf16.mxu0 0
        %1582 = vmatpush1.bf16.msra.mxu0 0
        %1583 = vmatprep.subr.bf16.mxu0 0
        %1584 = vmatpush1.bf16.msra.mxu0 0
        %1585 = vmatprep.subr.bf16.mxu0 0
        %1586 = vmatpush1.bf16.msra.mxu0 0
        %1587 = vmatprep.subr.bf16.mxu0 0
        %1588 = vmatpush1.bf16.msra.mxu0 0
        %1589 = vmatprep.subr.bf16.mxu0 0
        %1590 = vmatpush1.bf16.msra.mxu0 0
        %1591 = vmatprep.subr.bf16.mxu0 0
        %1592 = vmatpush1.bf16.msra.mxu0 0
        %1593 = vmatprep.subr.bf16.mxu0 0
        %1594 = vmatpush1.bf16.msra.mxu0 0
        %1595 = vmatprep.subr.bf16.mxu0 0
        %1596 = vmatpush1.bf16.msra.mxu0 0
        %1597 = vmatprep.subr.bf16.mxu0 0
        %1598 = vmatpush1.bf16.msra.mxu0 0
        %1599 = vmatprep.subr.bf16.mxu0 0
        %1600 = vmatpush1.bf16.msra.mxu0 0
        %1601 = vmatprep.mubr.bf16.mxu0 0
        %1602 = vmatmul.mubr.bf16.gmra.mrb[0].mxu0 %v1513
        %v1603 = vpop.f32.mrb[0].mxu0
        %v1604 = vadd.f32 0.0, %v1603
        %v1605 = vpop.f32.mrb[0].mxu0
        %v1606 = vpop.f32.mrb[0].mxu0
        %v1607 = vadd.f32 0.0, %v1606
        %v1608 = vpop.f32.mrb[0].mxu0
        %1609 = vmatprep.mubr.bf16.mxu0 0
        %1610 = vmatmul.mubr.bf16.gmra.mrb[0].mxu0 %v1516
        %v1611 = vpop.f32.mrb[0].mxu0
        %v1612 = vadd.f32 0.0, %v1611
        %v1613 = vpop.f32.mrb[0].mxu0
        %v1614 = vpop.f32.mrb[0].mxu0
        %v1615 = vadd.f32 0.0, %v1614
        %v1616 = vpop.f32.mrb[0].mxu0
        %1617 = vmatprep.mubr.bf16.mxu0 0
        %1618 = vmatmul.mubr.bf16.gmra.mrb[0].mxu0 %v1519
        %v1619 = vpop.f32.mrb[0].mxu0
        %v1620 = vadd.f32 0.0, %v1619
        %v1621 = vpop.f32.mrb[0].mxu0
        %v1622 = vpop.f32.mrb[0].mxu0
        %v1623 = vadd.f32 0.0, %v1622
        %v1624 = vpop.f32.mrb[0].mxu0
        %1625 = vmatprep.mubr.bf16.mxu0 0
        %1626 = vmatmul.mubr.bf16.gmra.mrb[0].mxu0 %v1522
        %v1627 = vpop.f32.mrb[0].mxu0
        %v1628 = vadd.f32 0.0, %v1627
        %v1629 = vpop.f32.mrb[0].mxu0
        %v1630 = vpop.f32.mrb[0].mxu0
        %v1631 = vadd.f32 0.0, %v1630
        %v1632 = vpop.f32.mrb[0].mxu0
        %1633 = vmatprep.mubr.bf16.mxu0 0
        %1634 = vmatmul.mubr.bf16.gmra.mrb[0].mxu0 %v1525
        %v1635 = vpop.f32.mrb[0].mxu0
        %v1636 = vadd.f32 0.0, %v1635
        %v1637 = vpop.f32.mrb[0].mxu0
        %v1638 = vpop.f32.mrb[0].mxu0
        %v1639 = vadd.f32 0.0, %v1638
        %v1640 = vpop.f32.mrb[0].mxu0
        %1641 = vmatprep.mubr.bf16.mxu0 0
        %1642 = vmatmul.mubr.bf16.gmra.mrb[0].mxu0 %v1528
        %v1643 = vpop.f32.mrb[0].mxu0
        %v1644 = vadd.f32 0.0, %v1643
        %v1645 = vpop.f32.mrb[0].mxu0
        %v1646 = vpop.f32.mrb[0].mxu0
        %v1647 = vadd.f32 0.0, %v1646
        %v1648 = vpop.f32.mrb[0].mxu0
        %1649 = vmatprep.mubr.bf16.mxu0 0
        %1650 = vmatmul.mubr.bf16.gmra.mrb[0].mxu0 %v1531
        %v1651 = vpop.f32.mrb[0].mxu0
        %v1652 = vadd.f32 0.0, %v1651
        %v1653 = vpop.f32.mrb[0].mxu0
        %v1654 = vpop.f32.mrb[0].mxu0
        %v1655 = vadd.f32 0.0, %v1654
        %v1656 = vpop.f32.mrb[0].mxu0
        %1657 = vmatprep.mubr.bf16.mxu0 0
        %1658 = vmatmul.mubr.bf16.gmra.mrb[0].mxu0 %v1534
        %v1659 = vpop.f32.mrb[0].mxu0
        %v1660 = vadd.f32 0.0, %v1659
        %v1661 = vpop.f32.mrb[0].mxu0
        %v1662 = vpop.f32.mrb[0].mxu0
        %v1663 = vadd.f32 0.0, %v1662
        %v1664 = vpop.f32.mrb[0].mxu0
        %1665 = vmatprep.mubr.bf16.mxu0 0
        %1666 = vmatmul.mubr.bf16.gmra.mrb[0].mxu0 %v1537
        %v1667 = vpop.f32.mrb[0].mxu0
        %v1668 = vadd.f32 0.0, %v1667
        %v1669 = vpop.f32.mrb[0].mxu0
        %v1670 = vpop.f32.mrb[0].mxu0
        %v1671 = vadd.f32 0.0, %v1670
        %v1672 = vpop.f32.mrb[0].mxu0
        %1673 = vmatprep.mubr.bf16.mxu0 0
        %1674 = vmatmul.mubr.bf16.gmra.mrb[0].mxu0 %v1540
        %v1675 = vpop.f32.mrb[0].mxu0
        %v1676 = vadd.f32 0.0, %v1675
        %v1677 = vpop.f32.mrb[0].mxu0
        %v1678 = vpop.f32.mrb[0].mxu0
        %v1679 = vadd.f32 0.0, %v1678
        %v1680 = vpop.f32.mrb[0].mxu0
        %1681 = vmatprep.mubr.bf16.mxu0 0
        %1682 = vmatmul.mubr.bf16.gmra.mrb[0].mxu0 %v1543
        %v1683 = vpop.f32.mrb[0].mxu0
        %v1684 = vadd.f32 0.0, %v1683
        %v1685 = vpop.f32.mrb[0].mxu0
        %v1686 = vpop.f32.mrb[0].mxu0
        %v1687 = vadd.f32 0.0, %v1686
        %v1688 = vpop.f32.mrb[0].mxu0
        %1689 = vmatprep.mubr.bf16.mxu0 0
        %1690 = vmatmul.mubr.bf16.gmra.mrb[0].mxu0 %v1546
        %v1691 = vpop.f32.mrb[0].mxu0
        %v1692 = vadd.f32 0.0, %v1691
        %v1693 = vpop.f32.mrb[0].mxu0
        %v1694 = vpop.f32.mrb[0].mxu0
        %v1695 = vadd.f32 0.0, %v1694
        %v1696 = vpop.f32.mrb[0].mxu0
        %1697 = vmatprep.mubr.bf16.mxu0 0
        %1698 = vmatmul.mubr.bf16.gmra.mrb[0].mxu0 %v1549
        %v1699 = vpop.f32.mrb[0].mxu0
        %v1700 = vadd.f32 0.0, %v1699
        %v1701 = vpop.f32.mrb[0].mxu0
        %v1702 = vpop.f32.mrb[0].mxu0
        %v1703 = vadd.f32 0.0, %v1702
        %v1704 = vpop.f32.mrb[0].mxu0
        %1705 = vmatprep.mubr.bf16.mxu0 0
        %1706 = vmatmul.mubr.bf16.gmra.mrb[0].mxu0 %v1552
        %v1707 = vpop.f32.mrb[0].mxu0
        %v1708 = vadd.f32 0.0, %v1707
        %v1709 = vpop.f32.mrb[0].mxu0
        %v1710 = vpop.f32.mrb[0].mxu0
        %v1711 = vadd.f32 0.0, %v1710
        %v1712 = vpop.f32.mrb[0].mxu0
        %1713 = vmatprep.mubr.bf16.mxu0 0
        %1714 = vmatmul.mubr.bf16.gmra.mrb[0].mxu0 %v1555
        %v1715 = vpop.f32.mrb[0].mxu0
        %v1716 = vadd.f32 0.0, %v1715
        %v1717 = vpop.f32.mrb[0].mxu0
        %v1718 = vpop.f32.mrb[0].mxu0
        %v1719 = vadd.f32 0.0, %v1718
        %v1720 = vpop.f32.mrb[0].mxu0
        %1721 = vmatprep.mubr.bf16.mxu0 0
        %1722 = vmatmul.mubr.bf16.gmra.mrb[0].mxu0 %v1558
        %v1723 = vpop.f32.mrb[0].mxu0
        %v1724 = vadd.f32 0.0, %v1723
        %v1725 = vpop.f32.mrb[0].mxu0
        %v1726 = vpop.f32.mrb[0].mxu0
        %v1727 = vadd.f32 0.0, %v1726
        %v1728 = vpop.f32.mrb[0].mxu0
        %1729 = vmatprep.mubr.bf16.mxu0 0
        %1730 = vmatmul.mubr.bf16.gmra.mrb[0].mxu0 %v1561
        %v1731 = vpop.f32.mrb[0].mxu0
        %v1732 = vadd.f32 0.0, %v1731
        %v1733 = vpop.f32.mrb[0].mxu0
        %v1734 = vpop.f32.mrb[0].mxu0
        %v1735 = vadd.f32 0.0, %v1734
        %v1736 = vpop.f32.mrb[0].mxu0
        %1737 = vmatprep.mubr.bf16.mxu0 0
        %1738 = vmatmul.mubr.bf16.gmra.mrb[0].mxu0 %v1564
        %v1739 = vpop.f32.mrb[0].mxu0
        %v1740 = vadd.f32 0.0, %v1739
        %v1741 = vpop.f32.mrb[0].mxu0
        %v1742 = vpop.f32.mrb[0].mxu0
        %v1743 = vadd.f32 0.0, %v1742
        %v1744 = vpop.f32.mrb[0].mxu0
        %1745 = vdwg.mxu0
        %v1746 = vadd.f32 %v1307, %v1604
        %v1747 = vadd.f32 %v1308, %v1607
        %v1748 = vadd.f32 %v1309, %v1612
        %v1749 = vadd.f32 %v1310, %v1615
        %v1750 = vadd.f32 %v1311, %v1620
        %v1751 = vadd.f32 %v1312, %v1623
        %v1752 = vadd.f32 %v1313, %v1628
        %v1753 = vadd.f32 %v1314, %v1631
        %v1754 = vadd.f32 %v1315, %v1636
        %v1755 = vadd.f32 %v1316, %v1639
        %v1756 = vadd.f32 %v1317, %v1644
        %v1757 = vadd.f32 %v1318, %v1647
        %v1758 = vadd.f32 %v1319, %v1652
        %v1759 = vadd.f32 %v1320, %v1655
        %v1760 = vadd.f32 %v1321, %v1660
        %v1761 = vadd.f32 %v1322, %v1663
        %v1762 = vadd.f32 %v1323, %v1668
        %v1763 = vadd.f32 %v1324, %v1671
        %v1764 = vadd.f32 %v1325, %v1676
        %v1765 = vadd.f32 %v1326, %v1679
        %v1766 = vadd.f32 %v1327, %v1684
        %v1767 = vadd.f32 %v1328, %v1687
        %v1768 = vadd.f32 %v1329, %v1692
        %v1769 = vadd.f32 %v1330, %v1695
        %v1770 = vadd.f32 %v1331, %v1700
        %v1771 = vadd.f32 %v1332, %v1703
        %v1772 = vadd.f32 %v1333, %v1708
        %v1773 = vadd.f32 %v1334, %v1711
        %v1774 = vadd.f32 %v1335, %v1716
        %v1775 = vadd.f32 %v1336, %v1719
        %v1776 = vadd.f32 %v1337, %v1724
        %v1777 = vadd.f32 %v1338, %v1727
        %v1778 = vadd.f32 %v1339, %v1732
        %v1779 = vadd.f32 %v1340, %v1735
        %v1780 = vadd.f32 %v1341, %v1740
        %v1781 = vadd.f32 %v1342, %v1743
        %v1782 = vld [vmem:[%s288 + $0x98] sm:$0x3]
        %s1783 = scalar_lea.vmem %s1, 8
        %v1784 = vld [vmem:[%s1783] sm:$0x3]
        %v1786 = vunpack.c.l.b16 %v1782
        %v1787 = vpack.c.b16 %v1786, %v1786
        %vm1788 = vsmask.f32 6400
        %v1790 = vshrl.u32 %v1456, 16
        %v1792 = vrot.slane %v1790, 1
        %v1793 = vshll.u32 %v1456, 16
        %v1795 = vrot.slane %v1793, 2
        %v1796 = vor.u32 %v1792, %v1795
        %v1798 = vshrl.u32 %v1457, 16
        %v1800 = vrot.slane %v1798, 1
        %v1801 = vshll.u32 %v1457, 16
        %v1803 = vrot.slane %v1801, 2
        %v1804 = vor.u32 %v1800, %v1803
        %v1805 = vsel %vm1788, %v1796, %v1804
        %v1807 = vshrl.u32 %v1458, 16
        %v1809 = vrot.slane %v1807, 1
        %v1810 = vshll.u32 %v1458, 16
        %v1812 = vrot.slane %v1810, 2
        %v1813 = vor.u32 %v1809, %v1812
        %v1814 = vsel %vm1788, %v1804, %v1813
        %v1816 = vshrl.u32 %v1459, 16
        %v1818 = vrot.slane %v1816, 1
        %v1819 = vshll.u32 %v1459, 16
        %v1821 = vrot.slane %v1819, 2
        %v1822 = vor.u32 %v1818, %v1821
        %v1823 = vsel %vm1788, %v1813, %v1822
        %v1825 = vshrl.u32 %v1460, 16
        %v1827 = vrot.slane %v1825, 1
        %v1828 = vshll.u32 %v1460, 16
        %v1830 = vrot.slane %v1828, 2
        %v1831 = vor.u32 %v1827, %v1830
        %v1832 = vsel %vm1788, %v1822, %v1831
        %v1834 = vshrl.u32 %v1461, 16
        %v1836 = vrot.slane %v1834, 1
        %v1837 = vshll.u32 %v1461, 16
        %v1839 = vrot.slane %v1837, 2
        %v1840 = vor.u32 %v1836, %v1839
        %v1841 = vsel %vm1788, %v1831, %v1840
        %v1843 = vshrl.u32 %v1462, 16
        %v1845 = vrot.slane %v1843, 1
        %v1846 = vshll.u32 %v1462, 16
        %v1848 = vrot.slane %v1846, 2
        %v1849 = vor.u32 %v1845, %v1848
        %v1850 = vsel %vm1788, %v1840, %v1849
        %v1852 = vshrl.u32 %v1463, 16
        %v1854 = vrot.slane %v1852, 1
        %v1855 = vshll.u32 %v1463, 16
        %v1857 = vrot.slane %v1855, 2
        %v1858 = vor.u32 %v1854, %v1857
        %v1859 = vsel %vm1788, %v1849, %v1858
        %v1861 = vshrl.u32 %v1464, 16
        %v1863 = vrot.slane %v1861, 1
        %v1864 = vshll.u32 %v1464, 16
        %v1866 = vrot.slane %v1864, 2
        %v1867 = vor.u32 %v1863, %v1866
        %v1868 = vsel %vm1788, %v1858, %v1867
        %v1870 = vshrl.u32 %v1465, 16
        %v1872 = vrot.slane %v1870, 1
        %v1873 = vshll.u32 %v1465, 16
        %v1875 = vrot.slane %v1873, 2
        %v1876 = vor.u32 %v1872, %v1875
        %v1877 = vsel %vm1788, %v1867, %v1876
        %v1879 = vshrl.u32 %v1466, 16
        %v1881 = vrot.slane %v1879, 1
        %v1882 = vshll.u32 %v1466, 16
        %v1884 = vrot.slane %v1882, 2
        %v1885 = vor.u32 %v1881, %v1884
        %v1886 = vsel %vm1788, %v1876, %v1885
        %v1888 = vshrl.u32 %v1467, 16
        %v1890 = vrot.slane %v1888, 1
        %v1891 = vshll.u32 %v1467, 16
        %v1893 = vrot.slane %v1891, 2
        %v1894 = vor.u32 %v1890, %v1893
        %v1895 = vsel %vm1788, %v1885, %v1894
        %v1897 = vshrl.u32 %v1468, 16
        %v1899 = vrot.slane %v1897, 1
        %v1900 = vshll.u32 %v1468, 16
        %v1902 = vrot.slane %v1900, 2
        %v1903 = vor.u32 %v1899, %v1902
        %v1904 = vsel %vm1788, %v1894, %v1903
        %v1906 = vshrl.u32 %v1469, 16
        %v1908 = vrot.slane %v1906, 1
        %v1909 = vshll.u32 %v1469, 16
        %v1911 = vrot.slane %v1909, 2
        %v1912 = vor.u32 %v1908, %v1911
        %v1913 = vsel %vm1788, %v1903, %v1912
        %v1915 = vshrl.u32 %v1470, 16
        %v1917 = vrot.slane %v1915, 1
        %v1918 = vshll.u32 %v1470, 16
        %v1920 = vrot.slane %v1918, 2
        %v1921 = vor.u32 %v1917, %v1920
        %v1922 = vsel %vm1788, %v1912, %v1921
        %v1924 = vshrl.u32 %v1471, 16
        %v1926 = vrot.slane %v1924, 1
        %v1927 = vshll.u32 %v1471, 16
        %v1929 = vrot.slane %v1927, 2
        %v1930 = vor.u32 %v1926, %v1929
        %v1931 = vsel %vm1788, %v1921, %v1930
        %v1933 = vshrl.u32 %v1472, 16
        %v1935 = vrot.slane %v1933, 1
        %v1936 = vshll.u32 %v1472, 16
        %v1938 = vrot.slane %v1936, 2
        %v1939 = vor.u32 %v1935, %v1938
        %v1940 = vsel %vm1788, %v1930, %v1939
        %v1942 = vshrl.u32 %v1473, 16
        %v1944 = vrot.slane %v1942, 1
        %v1945 = vshll.u32 %v1473, 16
        %v1947 = vrot.slane %v1945, 2
        %v1948 = vor.u32 %v1944, %v1947
        %v1949 = vsel %vm1788, %v1939, %v1948
        %v1951 = vshrl.u32 %v1787, 16
        %v1953 = vrot.slane %v1951, 1
        %v1954 = vshll.u32 %v1787, 16
        %v1956 = vrot.slane %v1954, 2
        %v1957 = vor.u32 %v1953, %v1956
        %v1958 = vsel %vm1788, %v1948, %v1957
        %v1960 = vsel %vm577, %v1805, 0
        %v1963 = vsel %vm577, %v1814, 0
        %v1966 = vsel %vm577, %v1823, 0
        %v1969 = vsel %vm577, %v1832, 0
        %v1972 = vsel %vm577, %v1841, 0
        %v1975 = vsel %vm577, %v1850, 0
        %v1978 = vsel %vm577, %v1859, 0
        %v1981 = vsel %vm577, %v1868, 0
        %v1984 = vsel %vm577, %v1877, 0
        %v1987 = vsel %vm577, %v1886, 0
        %v1990 = vsel %vm577, %v1895, 0
        %v1993 = vsel %vm577, %v1904, 0
        %v1996 = vsel %vm577, %v1913, 0
        %v1999 = vsel %vm577, %v1922, 0
        %v2002 = vsel %vm577, %v1931, 0
        %v2005 = vsel %vm577, %v1940, 0
        %v2008 = vsel %vm577, %v1949, 0
        %v2011 = vsel %vm577, %v1958, 0
        %v2014 = vsel %vm632, %v1784, 0
        %2016 = vmatprep.subr.bf16.mxu0 0
        %2017 = vmatpush1.bf16.msra.mxu0 %v2014
        %2018 = vmatprep.subr.bf16.mxu0 0
        %2019 = vmatpush1.bf16.msra.mxu0 0
        %2020 = vmatprep.subr.bf16.mxu0 0
        %2021 = vmatpush1.bf16.msra.mxu0 0
        %2022 = vmatprep.subr.bf16.mxu0 0
        %2023 = vmatpush1.bf16.msra.mxu0 0
        %2024 = vmatprep.subr.bf16.mxu0 0
        %2025 = vmatpush1.bf16.msra.mxu0 0
        %2026 = vmatprep.subr.bf16.mxu0 0
        %2027 = vmatpush1.bf16.msra.mxu0 0
        %2028 = vmatprep.subr.bf16.mxu0 0
        %2029 = vmatpush1.bf16.msra.mxu0 0
        %2030 = vmatprep.subr.bf16.mxu0 0
        %2031 = vmatpush1.bf16.msra.mxu0 0
        %2032 = vmatprep.subr.bf16.mxu0 0
        %2033 = vmatpush1.bf16.msra.mxu0 0
        %2034 = vmatprep.subr.bf16.mxu0 0
        %2035 = vmatpush1.bf16.msra.mxu0 0
        %2036 = vmatprep.subr.bf16.mxu0 0
        %2037 = vmatpush1.bf16.msra.mxu0 0
        %2038 = vmatprep.subr.bf16.mxu0 0
        %2039 = vmatpush1.bf16.msra.mxu0 0
        %2040 = vmatprep.subr.bf16.mxu0 0
        %2041 = vmatpush1.bf16.msra.mxu0 0
        %2042 = vmatprep.subr.bf16.mxu0 0
        %2043 = vmatpush1.bf16.msra.mxu0 0
        %2044 = vmatprep.subr.bf16.mxu0 0
        %2045 = vmatpush1.bf16.msra.mxu0 0
        %2046 = vmatprep.subr.bf16.mxu0 0
        %2047 = vmatpush1.bf16.msra.mxu0 0
        %2048 = vmatprep.mubr.bf16.mxu0 0
        %2049 = vmatmul.mubr.bf16.gmra.mrb[0].mxu0 %v1960
        %v2050 = vpop.f32.mrb[0].mxu0
        %v2051 = vadd.f32 0.0, %v2050
        %v2052 = vpop.f32.mrb[0].mxu0
        %v2053 = vpop.f32.mrb[0].mxu0
        %v2054 = vadd.f32 0.0, %v2053
        %v2055 = vpop.f32.mrb[0].mxu0
        %2056 = vmatprep.mubr.bf16.mxu0 0
        %2057 = vmatmul.mubr.bf16.gmra.mrb[0].mxu0 %v1963
        %v2058 = vpop.f32.mrb[0].mxu0
        %v2059 = vadd.f32 0.0, %v2058
        %v2060 = vpop.f32.mrb[0].mxu0
        %v2061 = vpop.f32.mrb[0].mxu0
        %v2062 = vadd.f32 0.0, %v2061
        %v2063 = vpop.f32.mrb[0].mxu0
        %2064 = vmatprep.mubr.bf16.mxu0 0
        %2065 = vmatmul.mubr.bf16.gmra.mrb[0].mxu0 %v1966
        %v2066 = vpop.f32.mrb[0].mxu0
        %v2067 = vadd.f32 0.0, %v2066
        %v2068 = vpop.f32.mrb[0].mxu0
        %v2069 = vpop.f32.mrb[0].mxu0
        %v2070 = vadd.f32 0.0, %v2069
        %v2071 = vpop.f32.mrb[0].mxu0
        %2072 = vmatprep.mubr.bf16.mxu0 0
        %2073 = vmatmul.mubr.bf16.gmra.mrb[0].mxu0 %v1969
        %v2074 = vpop.f32.mrb[0].mxu0
        %v2075 = vadd.f32 0.0, %v2074
        %v2076 = vpop.f32.mrb[0].mxu0
        %v2077 = vpop.f32.mrb[0].mxu0
        %v2078 = vadd.f32 0.0, %v2077
        %v2079 = vpop.f32.mrb[0].mxu0
        %2080 = vmatprep.mubr.bf16.mxu0 0
        %2081 = vmatmul.mubr.bf16.gmra.mrb[0].mxu0 %v1972
        %v2082 = vpop.f32.mrb[0].mxu0
        %v2083 = vadd.f32 0.0, %v2082
        %v2084 = vpop.f32.mrb[0].mxu0
        %v2085 = vpop.f32.mrb[0].mxu0
        %v2086 = vadd.f32 0.0, %v2085
        %v2087 = vpop.f32.mrb[0].mxu0
        %2088 = vmatprep.mubr.bf16.mxu0 0
        %2089 = vmatmul.mubr.bf16.gmra.mrb[0].mxu0 %v1975
        %v2090 = vpop.f32.mrb[0].mxu0
        %v2091 = vadd.f32 0.0, %v2090
        %v2092 = vpop.f32.mrb[0].mxu0
        %v2093 = vpop.f32.mrb[0].mxu0
        %v2094 = vadd.f32 0.0, %v2093
        %v2095 = vpop.f32.mrb[0].mxu0
        %2096 = vmatprep.mubr.bf16.mxu0 0
        %2097 = vmatmul.mubr.bf16.gmra.mrb[0].mxu0 %v1978
        %v2098 = vpop.f32.mrb[0].mxu0
        %v2099 = vadd.f32 0.0, %v2098
        %v2100 = vpop.f32.mrb[0].mxu0
        %v2101 = vpop.f32.mrb[0].mxu0
        %v2102 = vadd.f32 0.0, %v2101
        %v2103 = vpop.f32.mrb[0].mxu0
        %2104 = vmatprep.mubr.bf16.mxu0 0
        %2105 = vmatmul.mubr.bf16.gmra.mrb[0].mxu0 %v1981
        %v2106 = vpop.f32.mrb[0].mxu0
        %v2107 = vadd.f32 0.0, %v2106
        %v2108 = vpop.f32.mrb[0].mxu0
        %v2109 = vpop.f32.mrb[0].mxu0
        %v2110 = vadd.f32 0.0, %v2109
        %v2111 = vpop.f32.mrb[0].mxu0
        %2112 = vmatprep.mubr.bf16.mxu0 0
        %2113 = vmatmul.mubr.bf16.gmra.mrb[0].mxu0 %v1984
        %v2114 = vpop.f32.mrb[0].mxu0
        %v2115 = vadd.f32 0.0, %v2114
        %v2116 = vpop.f32.mrb[0].mxu0
        %v2117 = vpop.f32.mrb[0].mxu0
        %v2118 = vadd.f32 0.0, %v2117
        %v2119 = vpop.f32.mrb[0].mxu0
        %2120 = vmatprep.mubr.bf16.mxu0 0
        %2121 = vmatmul.mubr.bf16.gmra.mrb[0].mxu0 %v1987
        %v2122 = vpop.f32.mrb[0].mxu0
        %v2123 = vadd.f32 0.0, %v2122
        %v2124 = vpop.f32.mrb[0].mxu0
        %v2125 = vpop.f32.mrb[0].mxu0
        %v2126 = vadd.f32 0.0, %v2125
        %v2127 = vpop.f32.mrb[0].mxu0
        %2128 = vmatprep.mubr.bf16.mxu0 0
        %2129 = vmatmul.mubr.bf16.gmra.mrb[0].mxu0 %v1990
        %v2130 = vpop.f32.mrb[0].mxu0
        %v2131 = vadd.f32 0.0, %v2130
        %v2132 = vpop.f32.mrb[0].mxu0
        %v2133 = vpop.f32.mrb[0].mxu0
        %v2134 = vadd.f32 0.0, %v2133
        %v2135 = vpop.f32.mrb[0].mxu0
        %2136 = vmatprep.mubr.bf16.mxu0 0
        %2137 = vmatmul.mubr.bf16.gmra.mrb[0].mxu0 %v1993
        %v2138 = vpop.f32.mrb[0].mxu0
        %v2139 = vadd.f32 0.0, %v2138
        %v2140 = vpop.f32.mrb[0].mxu0
        %v2141 = vpop.f32.mrb[0].mxu0
        %v2142 = vadd.f32 0.0, %v2141
        %v2143 = vpop.f32.mrb[0].mxu0
        %2144 = vmatprep.mubr.bf16.mxu0 0
        %2145 = vmatmul.mubr.bf16.gmra.mrb[0].mxu0 %v1996
        %v2146 = vpop.f32.mrb[0].mxu0
        %v2147 = vadd.f32 0.0, %v2146
        %v2148 = vpop.f32.mrb[0].mxu0
        %v2149 = vpop.f32.mrb[0].mxu0
        %v2150 = vadd.f32 0.0, %v2149
        %v2151 = vpop.f32.mrb[0].mxu0
        %2152 = vmatprep.mubr.bf16.mxu0 0
        %2153 = vmatmul.mubr.bf16.gmra.mrb[0].mxu0 %v1999
        %v2154 = vpop.f32.mrb[0].mxu0
        %v2155 = vadd.f32 0.0, %v2154
        %v2156 = vpop.f32.mrb[0].mxu0
        %v2157 = vpop.f32.mrb[0].mxu0
        %v2158 = vadd.f32 0.0, %v2157
        %v2159 = vpop.f32.mrb[0].mxu0
        %2160 = vmatprep.mubr.bf16.mxu0 0
        %2161 = vmatmul.mubr.bf16.gmra.mrb[0].mxu0 %v2002
        %v2162 = vpop.f32.mrb[0].mxu0
        %v2163 = vadd.f32 0.0, %v2162
        %v2164 = vpop.f32.mrb[0].mxu0
        %v2165 = vpop.f32.mrb[0].mxu0
        %v2166 = vadd.f32 0.0, %v2165
        %v2167 = vpop.f32.mrb[0].mxu0
        %2168 = vmatprep.mubr.bf16.mxu0 0
        %2169 = vmatmul.mubr.bf16.gmra.mrb[0].mxu0 %v2005
        %v2170 = vpop.f32.mrb[0].mxu0
        %v2171 = vadd.f32 0.0, %v2170
        %v2172 = vpop.f32.mrb[0].mxu0
        %v2173 = vpop.f32.mrb[0].mxu0
        %v2174 = vadd.f32 0.0, %v2173
        %v2175 = vpop.f32.mrb[0].mxu0
        %2176 = vmatprep.mubr.bf16.mxu0 0
        %2177 = vmatmul.mubr.bf16.gmra.mrb[0].mxu0 %v2008
        %v2178 = vpop.f32.mrb[0].mxu0
        %v2179 = vadd.f32 0.0, %v2178
        %v2180 = vpop.f32.mrb[0].mxu0
        %v2181 = vpop.f32.mrb[0].mxu0
        %v2182 = vadd.f32 0.0, %v2181
        %v2183 = vpop.f32.mrb[0].mxu0
        %2184 = vmatprep.mubr.bf16.mxu0 0
        %2185 = vmatmul.mubr.bf16.gmra.mrb[0].mxu0 %v2011
        %v2186 = vpop.f32.mrb[0].mxu0
        %v2187 = vadd.f32 0.0, %v2186
        %v2188 = vpop.f32.mrb[0].mxu0
        %v2189 = vpop.f32.mrb[0].mxu0
        %v2190 = vadd.f32 0.0, %v2189
        %v2191 = vpop.f32.mrb[0].mxu0
        %2192 = vdwg.mxu0
        %v2193 = vadd.f32 %v1746, %v2051
        %v2194 = vadd.f32 %v1747, %v2054
        %v2195 = vadd.f32 %v1748, %v2059
        %v2196 = vadd.f32 %v1749, %v2062
        %v2197 = vadd.f32 %v1750, %v2067
        %v2198 = vadd.f32 %v1751, %v2070
        %v2199 = vadd.f32 %v1752, %v2075
        %v2200 = vadd.f32 %v1753, %v2078
        %v2201 = vadd.f32 %v1754, %v2083
        %v2202 = vadd.f32 %v1755, %v2086
        %v2203 = vadd.f32 %v1756, %v2091
        %v2204 = vadd.f32 %v1757, %v2094
        %v2205 = vadd.f32 %v1758, %v2099
        %v2206 = vadd.f32 %v1759, %v2102
        %v2207 = vadd.f32 %v1760, %v2107
        %v2208 = vadd.f32 %v1761, %v2110
        %v2209 = vadd.f32 %v1762, %v2115
        %v2210 = vadd.f32 %v1763, %v2118
        %v2211 = vadd.f32 %v1764, %v2123
        %v2212 = vadd.f32 %v1765, %v2126
        %v2213 = vadd.f32 %v1766, %v2131
        %v2214 = vadd.f32 %v1767, %v2134
        %v2215 = vadd.f32 %v1768, %v2139
        %v2216 = vadd.f32 %v1769, %v2142
        %v2217 = vadd.f32 %v1770, %v2147
        %v2218 = vadd.f32 %v1771, %v2150
        %v2219 = vadd.f32 %v1772, %v2155
        %v2220 = vadd.f32 %v1773, %v2158
        %v2221 = vadd.f32 %v1774, %v2163
        %v2222 = vadd.f32 %v1775, %v2166
        %v2223 = vadd.f32 %v1776, %v2171
        %v2224 = vadd.f32 %v1777, %v2174
        %v2225 = vadd.f32 %v1778, %v2179
        %v2226 = vadd.f32 %v1779, %v2182
        %v2227 = vadd.f32 %v1780, %v2187
        %v2228 = vadd.f32 %v1781, %v2190
        %v2229 = vld [vmem:[%s288 + $0x8] sm:$0xc]
        %s2230 = scalar_lea.vmem %s1, 10
        %v2231 = vld [vmem:[%s2230] sm:$0x3]
        %v2233 = vunpack.c.l.b16 %v2229
        %v2234 = vpack.c.b16 %v1420, %v2233
        %vm2235 = vcmask 1045504
        %v2236 = vrot.slane %v2234, 2
        %v2237 = vrot.slane %v1457, 2
        %v2238 = vsel %vm2235, %v2236, %v2237
        %v2239 = vrot.slane %v1458, 2
        %v2240 = vsel %vm2235, %v2237, %v2239
        %v2241 = vrot.slane %v1459, 2
        %v2242 = vsel %vm2235, %v2239, %v2241
        %v2243 = vrot.slane %v1460, 2
        %v2244 = vsel %vm2235, %v2241, %v2243
        %v2245 = vrot.slane %v1461, 2
        %v2246 = vsel %vm2235, %v2243, %v2245
        %v2247 = vrot.slane %v1462, 2
        %v2248 = vsel %vm2235, %v2245, %v2247
        %v2249 = vrot.slane %v1463, 2
        %v2250 = vsel %vm2235, %v2247, %v2249
        %v2251 = vrot.slane %v1464, 2
        %v2252 = vsel %vm2235, %v2249, %v2251
        %v2253 = vrot.slane %v1465, 2
        %v2254 = vsel %vm2235, %v2251, %v2253
        %v2255 = vrot.slane %v1466, 2
        %v2256 = vsel %vm2235, %v2253, %v2255
        %v2257 = vrot.slane %v1467, 2
        %v2258 = vsel %vm2235, %v2255, %v2257
        %v2259 = vrot.slane %v1468, 2
        %v2260 = vsel %vm2235, %v2257, %v2259
        %v2261 = vrot.slane %v1469, 2
        %v2262 = vsel %vm2235, %v2259, %v2261
        %v2263 = vrot.slane %v1470, 2
        %v2264 = vsel %vm2235, %v2261, %v2263
        %v2265 = vrot.slane %v1471, 2
        %v2266 = vsel %vm2235, %v2263, %v2265
        %v2267 = vrot.slane %v1472, 2
        %v2268 = vsel %vm2235, %v2265, %v2267
        %v2269 = vrot.slane %v1473, 2
        %v2270 = vsel %vm2235, %v2267, %v2269
        %v2271 = vrot.slane %v1787, 2
        %v2272 = vsel %vm2235, %v2269, %v2271
        %v2274 = vsel %vm577, %v2238, 0
        %v2277 = vsel %vm577, %v2240, 0
        %v2280 = vsel %vm577, %v2242, 0
        %v2283 = vsel %vm577, %v2244, 0
        %v2286 = vsel %vm577, %v2246, 0
        %v2289 = vsel %vm577, %v2248, 0
        %v2292 = vsel %vm577, %v2250, 0
        %v2295 = vsel %vm577, %v2252, 0
        %v2298 = vsel %vm577, %v2254, 0
        %v2301 = vsel %vm577, %v2256, 0
        %v2304 = vsel %vm577, %v2258, 0
        %v2307 = vsel %vm577, %v2260, 0
        %v2310 = vsel %vm577, %v2262, 0
        %v2313 = vsel %vm577, %v2264, 0
        %v2316 = vsel %vm577, %v2266, 0
        %v2319 = vsel %vm577, %v2268, 0
        %v2322 = vsel %vm577, %v2270, 0
        %v2325 = vsel %vm577, %v2272, 0
        %v2328 = vsel %vm632, %v2231, 0
        %2330 = vmatprep.subr.bf16.mxu0 0
        %2331 = vmatpush1.bf16.msra.mxu0 %v2328
        %2332 = vmatprep.subr.bf16.mxu0 0
        %2333 = vmatpush1.bf16.msra.mxu0 0
        %2334 = vmatprep.subr.bf16.mxu0 0
        %2335 = vmatpush1.bf16.msra.mxu0 0
        %2336 = vmatprep.subr.bf16.mxu0 0
        %2337 = vmatpush1.bf16.msra.mxu0 0
        %2338 = vmatprep.subr.bf16.mxu0 0
        %2339 = vmatpush1.bf16.msra.mxu0 0
        %2340 = vmatprep.subr.bf16.mxu0 0
        %2341 = vmatpush1.bf16.msra.mxu0 0
        %2342 = vmatprep.subr.bf16.mxu0 0
        %2343 = vmatpush1.bf16.msra.mxu0 0
        %2344 = vmatprep.subr.bf16.mxu0 0
        %2345 = vmatpush1.bf16.msra.mxu0 0
        %2346 = vmatprep.subr.bf16.mxu0 0
        %2347 = vmatpush1.bf16.msra.mxu0 0
        %2348 = vmatprep.subr.bf16.mxu0 0
        %2349 = vmatpush1.bf16.msra.mxu0 0
        %2350 = vmatprep.subr.bf16.mxu0 0
        %2351 = vmatpush1.bf16.msra.mxu0 0
        %2352 = vmatprep.subr.bf16.mxu0 0
        %2353 = vmatpush1.bf16.msra.mxu0 0
        %2354 = vmatprep.subr.bf16.mxu0 0
        %2355 = vmatpush1.bf16.msra.mxu0 0
        %2356 = vmatprep.subr.bf16.mxu0 0
        %2357 = vmatpush1.bf16.msra.mxu0 0
        %2358 = vmatprep.subr.bf16.mxu0 0
        %2359 = vmatpush1.bf16.msra.mxu0 0
        %2360 = vmatprep.subr.bf16.mxu0 0
        %2361 = vmatpush1.bf16.msra.mxu0 0
        %2362 = vmatprep.mubr.bf16.mxu0 0
        %2363 = vmatmul.mubr.bf16.gmra.mrb[0].mxu0 %v2274
        %v2364 = vpop.f32.mrb[0].mxu0
        %v2365 = vadd.f32 0.0, %v2364
        %v2366 = vpop.f32.mrb[0].mxu0
        %v2367 = vpop.f32.mrb[0].mxu0
        %v2368 = vadd.f32 0.0, %v2367
        %v2369 = vpop.f32.mrb[0].mxu0
        %2370 = vmatprep.mubr.bf16.mxu0 0
        %2371 = vmatmul.mubr.bf16.gmra.mrb[0].mxu0 %v2277
        %v2372 = vpop.f32.mrb[0].mxu0
        %v2373 = vadd.f32 0.0, %v2372
        %v2374 = vpop.f32.mrb[0].mxu0
        %v2375 = vpop.f32.mrb[0].mxu0
        %v2376 = vadd.f32 0.0, %v2375
        %v2377 = vpop.f32.mrb[0].mxu0
        %2378 = vmatprep.mubr.bf16.mxu0 0
        %2379 = vmatmul.mubr.bf16.gmra.mrb[0].mxu0 %v2280
        %v2380 = vpop.f32.mrb[0].mxu0
        %v2381 = vadd.f32 0.0, %v2380
        %v2382 = vpop.f32.mrb[0].mxu0
        %v2383 = vpop.f32.mrb[0].mxu0
        %v2384 = vadd.f32 0.0, %v2383
        %v2385 = vpop.f32.mrb[0].mxu0
        %2386 = vmatprep.mubr.bf16.mxu0 0
        %2387 = vmatmul.mubr.bf16.gmra.mrb[0].mxu0 %v2283
        %v2388 = vpop.f32.mrb[0].mxu0
        %v2389 = vadd.f32 0.0, %v2388
        %v2390 = vpop.f32.mrb[0].mxu0
        %v2391 = vpop.f32.mrb[0].mxu0
        %v2392 = vadd.f32 0.0, %v2391
        %v2393 = vpop.f32.mrb[0].mxu0
        %2394 = vmatprep.mubr.bf16.mxu0 0
        %2395 = vmatmul.mubr.bf16.gmra.mrb[0].mxu0 %v2286
        %v2396 = vpop.f32.mrb[0].mxu0
        %v2397 = vadd.f32 0.0, %v2396
        %v2398 = vpop.f32.mrb[0].mxu0
        %v2399 = vpop.f32.mrb[0].mxu0
        %v2400 = vadd.f32 0.0, %v2399
        %v2401 = vpop.f32.mrb[0].mxu0
        %2402 = vmatprep.mubr.bf16.mxu0 0
        %2403 = vmatmul.mubr.bf16.gmra.mrb[0].mxu0 %v2289
        %v2404 = vpop.f32.mrb[0].mxu0
        %v2405 = vadd.f32 0.0, %v2404
        %v2406 = vpop.f32.mrb[0].mxu0
        %v2407 = vpop.f32.mrb[0].mxu0
        %v2408 = vadd.f32 0.0, %v2407
        %v2409 = vpop.f32.mrb[0].mxu0
        %2410 = vmatprep.mubr.bf16.mxu0 0
        %2411 = vmatmul.mubr.bf16.gmra.mrb[0].mxu0 %v2292
        %v2412 = vpop.f32.mrb[0].mxu0
        %v2413 = vadd.f32 0.0, %v2412
        %v2414 = vpop.f32.mrb[0].mxu0
        %v2415 = vpop.f32.mrb[0].mxu0
        %v2416 = vadd.f32 0.0, %v2415
        %v2417 = vpop.f32.mrb[0].mxu0
        %2418 = vmatprep.mubr.bf16.mxu0 0
        %2419 = vmatmul.mubr.bf16.gmra.mrb[0].mxu0 %v2295
        %v2420 = vpop.f32.mrb[0].mxu0
        %v2421 = vadd.f32 0.0, %v2420
        %v2422 = vpop.f32.mrb[0].mxu0
        %v2423 = vpop.f32.mrb[0].mxu0
        %v2424 = vadd.f32 0.0, %v2423
        %v2425 = vpop.f32.mrb[0].mxu0
        %2426 = vmatprep.mubr.bf16.mxu0 0
        %2427 = vmatmul.mubr.bf16.gmra.mrb[0].mxu0 %v2298
        %v2428 = vpop.f32.mrb[0].mxu0
        %v2429 = vadd.f32 0.0, %v2428
        %v2430 = vpop.f32.mrb[0].mxu0
        %v2431 = vpop.f32.mrb[0].mxu0
        %v2432 = vadd.f32 0.0, %v2431
        %v2433 = vpop.f32.mrb[0].mxu0
        %2434 = vmatprep.mubr.bf16.mxu0 0
        %2435 = vmatmul.mubr.bf16.gmra.mrb[0].mxu0 %v2301
        %v2436 = vpop.f32.mrb[0].mxu0
        %v2437 = vadd.f32 0.0, %v2436
        %v2438 = vpop.f32.mrb[0].mxu0
        %v2439 = vpop.f32.mrb[0].mxu0
        %v2440 = vadd.f32 0.0, %v2439
        %v2441 = vpop.f32.mrb[0].mxu0
        %2442 = vmatprep.mubr.bf16.mxu0 0
        %2443 = vmatmul.mubr.bf16.gmra.mrb[0].mxu0 %v2304
        %v2444 = vpop.f32.mrb[0].mxu0
        %v2445 = vadd.f32 0.0, %v2444
        %v2446 = vpop.f32.mrb[0].mxu0
        %v2447 = vpop.f32.mrb[0].mxu0
        %v2448 = vadd.f32 0.0, %v2447
        %v2449 = vpop.f32.mrb[0].mxu0
        %2450 = vmatprep.mubr.bf16.mxu0 0
        %2451 = vmatmul.mubr.bf16.gmra.mrb[0].mxu0 %v2307
        %v2452 = vpop.f32.mrb[0].mxu0
        %v2453 = vadd.f32 0.0, %v2452
        %v2454 = vpop.f32.mrb[0].mxu0
        %v2455 = vpop.f32.mrb[0].mxu0
        %v2456 = vadd.f32 0.0, %v2455
        %v2457 = vpop.f32.mrb[0].mxu0
        %2458 = vmatprep.mubr.bf16.mxu0 0
        %2459 = vmatmul.mubr.bf16.gmra.mrb[0].mxu0 %v2310
        %v2460 = vpop.f32.mrb[0].mxu0
        %v2461 = vadd.f32 0.0, %v2460
        %v2462 = vpop.f32.mrb[0].mxu0
        %v2463 = vpop.f32.mrb[0].mxu0
        %v2464 = vadd.f32 0.0, %v2463
        %v2465 = vpop.f32.mrb[0].mxu0
        %2466 = vmatprep.mubr.bf16.mxu0 0
        %2467 = vmatmul.mubr.bf16.gmra.mrb[0].mxu0 %v2313
        %v2468 = vpop.f32.mrb[0].mxu0
        %v2469 = vadd.f32 0.0, %v2468
        %v2470 = vpop.f32.mrb[0].mxu0
        %v2471 = vpop.f32.mrb[0].mxu0
        %v2472 = vadd.f32 0.0, %v2471
        %v2473 = vpop.f32.mrb[0].mxu0
        %2474 = vmatprep.mubr.bf16.mxu0 0
        %2475 = vmatmul.mubr.bf16.gmra.mrb[0].mxu0 %v2316
        %v2476 = vpop.f32.mrb[0].mxu0
        %v2477 = vadd.f32 0.0, %v2476
        %v2478 = vpop.f32.mrb[0].mxu0
        %v2479 = vpop.f32.mrb[0].mxu0
        %v2480 = vadd.f32 0.0, %v2479
        %v2481 = vpop.f32.mrb[0].mxu0
        %2482 = vmatprep.mubr.bf16.mxu0 0
        %2483 = vmatmul.mubr.bf16.gmra.mrb[0].mxu0 %v2319
        %v2484 = vpop.f32.mrb[0].mxu0
        %v2485 = vadd.f32 0.0, %v2484
        %v2486 = vpop.f32.mrb[0].mxu0
        %v2487 = vpop.f32.mrb[0].mxu0
        %v2488 = vadd.f32 0.0, %v2487
        %v2489 = vpop.f32.mrb[0].mxu0
        %2490 = vmatprep.mubr.bf16.mxu0 0
        %2491 = vmatmul.mubr.bf16.gmra.mrb[0].mxu0 %v2322
        %v2492 = vpop.f32.mrb[0].mxu0
        %v2493 = vadd.f32 0.0, %v2492
        %v2494 = vpop.f32.mrb[0].mxu0
        %v2495 = vpop.f32.mrb[0].mxu0
        %v2496 = vadd.f32 0.0, %v2495
        %v2497 = vpop.f32.mrb[0].mxu0
        %2498 = vmatprep.mubr.bf16.mxu0 0
        %2499 = vmatmul.mubr.bf16.gmra.mrb[0].mxu0 %v2325
        %v2500 = vpop.f32.mrb[0].mxu0
        %v2501 = vadd.f32 0.0, %v2500
        %v2502 = vpop.f32.mrb[0].mxu0
        %v2503 = vpop.f32.mrb[0].mxu0
        %v2504 = vadd.f32 0.0, %v2503
        %v2505 = vpop.f32.mrb[0].mxu0
        %2506 = vdwg.mxu0
        %v2507 = vadd.f32 %v2193, %v2365
        %v2508 = vadd.f32 %v2194, %v2368
        %v2509 = vadd.f32 %v2195, %v2373
        %v2510 = vadd.f32 %v2196, %v2376
        %v2511 = vadd.f32 %v2197, %v2381
        %v2512 = vadd.f32 %v2198, %v2384
        %v2513 = vadd.f32 %v2199, %v2389
        %v2514 = vadd.f32 %v2200, %v2392
        %v2515 = vadd.f32 %v2201, %v2397
        %v2516 = vadd.f32 %v2202, %v2400
        %v2517 = vadd.f32 %v2203, %v2405
        %v2518 = vadd.f32 %v2204, %v2408
        %v2519 = vadd.f32 %v2205, %v2413
        %v2520 = vadd.f32 %v2206, %v2416
        %v2521 = vadd.f32 %v2207, %v2421
        %v2522 = vadd.f32 %v2208, %v2424
        %v2523 = vadd.f32 %v2209, %v2429
        %v2524 = vadd.f32 %v2210, %v2432
        %v2525 = vadd.f32 %v2211, %v2437
        %v2526 = vadd.f32 %v2212, %v2440
        %v2527 = vadd.f32 %v2213, %v2445
        %v2528 = vadd.f32 %v2214, %v2448
        %v2529 = vadd.f32 %v2215, %v2453
        %v2530 = vadd.f32 %v2216, %v2456
        %v2531 = vadd.f32 %v2217, %v2461
        %v2532 = vadd.f32 %v2218, %v2464
        %v2533 = vadd.f32 %v2219, %v2469
        %v2534 = vadd.f32 %v2220, %v2472
        %v2535 = vadd.f32 %v2221, %v2477
        %v2536 = vadd.f32 %v2222, %v2480
        %v2537 = vadd.f32 %v2223, %v2485
        %v2538 = vadd.f32 %v2224, %v2488
        %v2539 = vadd.f32 %v2225, %v2493
        %v2540 = vadd.f32 %v2226, %v2496
        %v2541 = vadd.f32 %v2227, %v2501
        %v2542 = vadd.f32 %v2228, %v2504
        %v2543 = vld [vmem:[%s288 + $0x10] sm:$0xc]
        %v2544 = vld [vmem:[%s288 + $0x14] sm:$0xf]
        %v2545 = vld [vmem:[%s288 + $0x18] sm:$0xf]
        %v2546 = vld [vmem:[%s288 + $0x1c] sm:$0xf]
        %v2547 = vld [vmem:[%s288 + $0x20] sm:$0xf]
        %v2548 = vld [vmem:[%s288 + $0x24] sm:$0xf]
        %v2549 = vld [vmem:[%s288 + $0x28] sm:$0xf]
        %v2550 = vld [vmem:[%s288 + $0x2c] sm:$0xf]
        %v2551 = vld [vmem:[%s288 + $0x30] sm:$0xf]
        %v2552 = vld [vmem:[%s288 + $0x34] sm:$0xf]
        %v2553 = vld [vmem:[%s288 + $0x38] sm:$0xf]
        %v2554 = vld [vmem:[%s288 + $0x3c] sm:$0xf]
        %v2555 = vld [vmem:[%s288 + $0x40] sm:$0xf]
        %v2556 = vld [vmem:[%s288 + $0x44] sm:$0xf]
        %v2557 = vld [vmem:[%s288 + $0x48] sm:$0xf]
        %v2558 = vld [vmem:[%s288 + $0x4c] sm:$0xf]
        %v2559 = vld [vmem:[%s288 + $0x50] sm:$0xf]
        %v2560 = vld [vmem:[%s288 + $0x54] sm:$0xf]
        %v2561 = vld [vmem:[%s288 + $0x58] sm:$0xf]
        %v2562 = vld [vmem:[%s288 + $0x5c] sm:$0xf]
        %v2563 = vld [vmem:[%s288 + $0x60] sm:$0xf]
        %v2564 = vld [vmem:[%s288 + $0x64] sm:$0xf]
        %v2565 = vld [vmem:[%s288 + $0x68] sm:$0xf]
        %v2566 = vld [vmem:[%s288 + $0x6c] sm:$0xf]
        %v2567 = vld [vmem:[%s288 + $0x70] sm:$0xf]
        %v2568 = vld [vmem:[%s288 + $0x74] sm:$0xf]
        %v2569 = vld [vmem:[%s288 + $0x78] sm:$0xf]
        %v2570 = vld [vmem:[%s288 + $0x7c] sm:$0xf]
        %v2571 = vld [vmem:[%s288 + $0x80] sm:$0xf]
        %v2572 = vld [vmem:[%s288 + $0x84] sm:$0xf]
        %v2573 = vld [vmem:[%s288 + $0x88] sm:$0xf]
        %v2574 = vld [vmem:[%s288 + $0x8c] sm:$0xf]
        %v2575 = vld [vmem:[%s288 + $0x90] sm:$0xf]
        %v2576 = vld [vmem:[%s288 + $0x94] sm:$0xf]
        %v2577 = vld [vmem:[%s288 + $0x98] sm:$0xf]
        %v2578 = vld [vmem:[%s288 + $0x9c] sm:$0xf]
        %v2579 = vld [vmem:[%s288 + $0xa0] sm:$0x3]
        %s2580 = scalar_lea.vmem %s1, 12
        %v2581 = vld [vmem:[%s2580] sm:$0x3]
        %v2619 = vunpack.c.l.b16 %v2543
        %v2620 = vunpack.c.l.b16 %v2544
        %v2621 = vunpack.c.l.b16 %v2545
        %v2622 = vunpack.c.l.b16 %v2546
        %v2623 = vunpack.c.l.b16 %v2547
        %v2624 = vunpack.c.l.b16 %v2548
        %v2625 = vunpack.c.l.b16 %v2549
        %v2626 = vunpack.c.l.b16 %v2550
        %v2627 = vunpack.c.l.b16 %v2551
        %v2628 = vunpack.c.l.b16 %v2552
        %v2629 = vunpack.c.l.b16 %v2553
        %v2630 = vunpack.c.l.b16 %v2554
        %v2631 = vunpack.c.l.b16 %v2555
        %v2632 = vunpack.c.l.b16 %v2556
        %v2633 = vunpack.c.l.b16 %v2557
        %v2634 = vunpack.c.l.b16 %v2558
        %v2635 = vunpack.c.l.b16 %v2559
        %v2636 = vunpack.c.l.b16 %v2560
        %v2637 = vunpack.c.l.b16 %v2561
        %v2638 = vunpack.c.l.b16 %v2562
        %v2639 = vunpack.c.l.b16 %v2563
        %v2640 = vunpack.c.l.b16 %v2564
        %v2641 = vunpack.c.l.b16 %v2565
        %v2642 = vunpack.c.l.b16 %v2566
        %v2643 = vunpack.c.l.b16 %v2567
        %v2644 = vunpack.c.l.b16 %v2568
        %v2645 = vunpack.c.l.b16 %v2569
        %v2646 = vunpack.c.l.b16 %v2570
        %v2647 = vunpack.c.l.b16 %v2571
        %v2648 = vunpack.c.l.b16 %v2572
        %v2649 = vunpack.c.l.b16 %v2573
        %v2650 = vunpack.c.l.b16 %v2574
        %v2651 = vunpack.c.l.b16 %v2575
        %v2652 = vunpack.c.l.b16 %v2576
        %v2653 = vunpack.c.l.b16 %v2577
        %v2654 = vunpack.c.l.b16 %v2578
        %v2655 = vunpack.c.l.b16 %v2579
        %v2656 = vpack.c.b16 %v2620, %v2619
        %v2657 = vpack.c.b16 %v2622, %v2621
        %v2658 = vpack.c.b16 %v2624, %v2623
        %v2659 = vpack.c.b16 %v2626, %v2625
        %v2660 = vpack.c.b16 %v2628, %v2627
        %v2661 = vpack.c.b16 %v2630, %v2629
        %v2662 = vpack.c.b16 %v2632, %v2631
        %v2663 = vpack.c.b16 %v2634, %v2633
        %v2664 = vpack.c.b16 %v2636, %v2635
        %v2665 = vpack.c.b16 %v2638, %v2637
        %v2666 = vpack.c.b16 %v2640, %v2639
        %v2667 = vpack.c.b16 %v2642, %v2641
        %v2668 = vpack.c.b16 %v2644, %v2643
        %v2669 = vpack.c.b16 %v2646, %v2645
        %v2670 = vpack.c.b16 %v2648, %v2647
        %v2671 = vpack.c.b16 %v2650, %v2649
        %v2672 = vpack.c.b16 %v2652, %v2651
        %v2673 = vpack.c.b16 %v2654, %v2653
        %v2674 = vpack.c.b16 %v2655, %v2655
        %v2675 = vrot.slane %v2656, 2
        %v2676 = vrot.slane %v2657, 2
        %v2677 = vsel %vm2235, %v2675, %v2676
        %v2678 = vrot.slane %v2658, 2
        %v2679 = vsel %vm2235, %v2676, %v2678
        %v2680 = vrot.slane %v2659, 2
        %v2681 = vsel %vm2235, %v2678, %v2680
        %v2682 = vrot.slane %v2660, 2
        %v2683 = vsel %vm2235, %v2680, %v2682
        %v2684 = vrot.slane %v2661, 2
        %v2685 = vsel %vm2235, %v2682, %v2684
        %v2686 = vrot.slane %v2662, 2
        %v2687 = vsel %vm2235, %v2684, %v2686
        %v2688 = vrot.slane %v2663, 2
        %v2689 = vsel %vm2235, %v2686, %v2688
        %v2690 = vrot.slane %v2664, 2
        %v2691 = vsel %vm2235, %v2688, %v2690
        %v2692 = vrot.slane %v2665, 2
        %v2693 = vsel %vm2235, %v2690, %v2692
        %v2694 = vrot.slane %v2666, 2
        %v2695 = vsel %vm2235, %v2692, %v2694
        %v2696 = vrot.slane %v2667, 2
        %v2697 = vsel %vm2235, %v2694, %v2696
        %v2698 = vrot.slane %v2668, 2
        %v2699 = vsel %vm2235, %v2696, %v2698
        %v2700 = vrot.slane %v2669, 2
        %v2701 = vsel %vm2235, %v2698, %v2700
        %v2702 = vrot.slane %v2670, 2
        %v2703 = vsel %vm2235, %v2700, %v2702
        %v2704 = vrot.slane %v2671, 2
        %v2705 = vsel %vm2235, %v2702, %v2704
        %v2706 = vrot.slane %v2672, 2
        %v2707 = vsel %vm2235, %v2704, %v2706
        %v2708 = vrot.slane %v2673, 2
        %v2709 = vsel %vm2235, %v2706, %v2708
        %v2710 = vrot.slane %v2674, 2
        %v2711 = vsel %vm2235, %v2708, %v2710
        %v2713 = vsel %vm577, %v2677, 0
        %v2716 = vsel %vm577, %v2679, 0
        %v2719 = vsel %vm577, %v2681, 0
        %v2722 = vsel %vm577, %v2683, 0
        %v2725 = vsel %vm577, %v2685, 0
        %v2728 = vsel %vm577, %v2687, 0
        %v2731 = vsel %vm577, %v2689, 0
        %v2734 = vsel %vm577, %v2691, 0
        %v2737 = vsel %vm577, %v2693, 0
        %v2740 = vsel %vm577, %v2695, 0
        %v2743 = vsel %vm577, %v2697, 0
        %v2746 = vsel %vm577, %v2699, 0
        %v2749 = vsel %vm577, %v2701, 0
        %v2752 = vsel %vm577, %v2703, 0
        %v2755 = vsel %vm577, %v2705, 0
        %v2758 = vsel %vm577, %v2707, 0
        %v2761 = vsel %vm577, %v2709, 0
        %v2764 = vsel %vm577, %v2711, 0
        %v2767 = vsel %vm632, %v2581, 0
        %2769 = vmatprep.subr.bf16.mxu0 0
        %2770 = vmatpush1.bf16.msra.mxu0 %v2767
        %2771 = vmatprep.subr.bf16.mxu0 0
        %2772 = vmatpush1.bf16.msra.mxu0 0
        %2773 = vmatprep.subr.bf16.mxu0 0
        %2774 = vmatpush1.bf16.msra.mxu0 0
        %2775 = vmatprep.subr.bf16.mxu0 0
        %2776 = vmatpush1.bf16.msra.mxu0 0
        %2777 = vmatprep.subr.bf16.mxu0 0
        %2778 = vmatpush1.bf16.msra.mxu0 0
        %2779 = vmatprep.subr.bf16.mxu0 0
        %2780 = vmatpush1.bf16.msra.mxu0 0
        %2781 = vmatprep.subr.bf16.mxu0 0
        %2782 = vmatpush1.bf16.msra.mxu0 0
        %2783 = vmatprep.subr.bf16.mxu0 0
        %2784 = vmatpush1.bf16.msra.mxu0 0
        %2785 = vmatprep.subr.bf16.mxu0 0
        %2786 = vmatpush1.bf16.msra.mxu0 0
        %2787 = vmatprep.subr.bf16.mxu0 0
        %2788 = vmatpush1.bf16.msra.mxu0 0
        %2789 = vmatprep.subr.bf16.mxu0 0
        %2790 = vmatpush1.bf16.msra.mxu0 0
        %2791 = vmatprep.subr.bf16.mxu0 0
        %2792 = vmatpush1.bf16.msra.mxu0 0
        %2793 = vmatprep.subr.bf16.mxu0 0
        %2794 = vmatpush1.bf16.msra.mxu0 0
        %2795 = vmatprep.subr.bf16.mxu0 0
        %2796 = vmatpush1.bf16.msra.mxu0 0
        %2797 = vmatprep.subr.bf16.mxu0 0
        %2798 = vmatpush1.bf16.msra.mxu0 0
        %2799 = vmatprep.subr.bf16.mxu0 0
        %2800 = vmatpush1.bf16.msra.mxu0 0
        %2801 = vmatprep.mubr.bf16.mxu0 0
        %2802 = vmatmul.mubr.bf16.gmra.mrb[0].mxu0 %v2713
        %v2803 = vpop.f32.mrb[0].mxu0
        %v2804 = vadd.f32 0.0, %v2803
        %v2805 = vpop.f32.mrb[0].mxu0
        %v2806 = vpop.f32.mrb[0].mxu0
        %v2807 = vadd.f32 0.0, %v2806
        %v2808 = vpop.f32.mrb[0].mxu0
        %2809 = vmatprep.mubr.bf16.mxu0 0
        %2810 = vmatmul.mubr.bf16.gmra.mrb[0].mxu0 %v2716
        %v2811 = vpop.f32.mrb[0].mxu0
        %v2812 = vadd.f32 0.0, %v2811
        %v2813 = vpop.f32.mrb[0].mxu0
        %v2814 = vpop.f32.mrb[0].mxu0
        %v2815 = vadd.f32 0.0, %v2814
        %v2816 = vpop.f32.mrb[0].mxu0
        %2817 = vmatprep.mubr.bf16.mxu0 0
        %2818 = vmatmul.mubr.bf16.gmra.mrb[0].mxu0 %v2719
        %v2819 = vpop.f32.mrb[0].mxu0
        %v2820 = vadd.f32 0.0, %v2819
        %v2821 = vpop.f32.mrb[0].mxu0
        %v2822 = vpop.f32.mrb[0].mxu0
        %v2823 = vadd.f32 0.0, %v2822
        %v2824 = vpop.f32.mrb[0].mxu0
        %2825 = vmatprep.mubr.bf16.mxu0 0
        %2826 = vmatmul.mubr.bf16.gmra.mrb[0].mxu0 %v2722
        %v2827 = vpop.f32.mrb[0].mxu0
        %v2828 = vadd.f32 0.0, %v2827
        %v2829 = vpop.f32.mrb[0].mxu0
        %v2830 = vpop.f32.mrb[0].mxu0
        %v2831 = vadd.f32 0.0, %v2830
        %v2832 = vpop.f32.mrb[0].mxu0
        %2833 = vmatprep.mubr.bf16.mxu0 0
        %2834 = vmatmul.mubr.bf16.gmra.mrb[0].mxu0 %v2725
        %v2835 = vpop.f32.mrb[0].mxu0
        %v2836 = vadd.f32 0.0, %v2835
        %v2837 = vpop.f32.mrb[0].mxu0
        %v2838 = vpop.f32.mrb[0].mxu0
        %v2839 = vadd.f32 0.0, %v2838
        %v2840 = vpop.f32.mrb[0].mxu0
        %2841 = vmatprep.mubr.bf16.mxu0 0
        %2842 = vmatmul.mubr.bf16.gmra.mrb[0].mxu0 %v2728
        %v2843 = vpop.f32.mrb[0].mxu0
        %v2844 = vadd.f32 0.0, %v2843
        %v2845 = vpop.f32.mrb[0].mxu0
        %v2846 = vpop.f32.mrb[0].mxu0
        %v2847 = vadd.f32 0.0, %v2846
        %v2848 = vpop.f32.mrb[0].mxu0
        %2849 = vmatprep.mubr.bf16.mxu0 0
        %2850 = vmatmul.mubr.bf16.gmra.mrb[0].mxu0 %v2731
        %v2851 = vpop.f32.mrb[0].mxu0
        %v2852 = vadd.f32 0.0, %v2851
        %v2853 = vpop.f32.mrb[0].mxu0
        %v2854 = vpop.f32.mrb[0].mxu0
        %v2855 = vadd.f32 0.0, %v2854
        %v2856 = vpop.f32.mrb[0].mxu0
        %2857 = vmatprep.mubr.bf16.mxu0 0
        %2858 = vmatmul.mubr.bf16.gmra.mrb[0].mxu0 %v2734
        %v2859 = vpop.f32.mrb[0].mxu0
        %v2860 = vadd.f32 0.0, %v2859
        %v2861 = vpop.f32.mrb[0].mxu0
        %v2862 = vpop.f32.mrb[0].mxu0
        %v2863 = vadd.f32 0.0, %v2862
        %v2864 = vpop.f32.mrb[0].mxu0
        %2865 = vmatprep.mubr.bf16.mxu0 0
        %2866 = vmatmul.mubr.bf16.gmra.mrb[0].mxu0 %v2737
        %v2867 = vpop.f32.mrb[0].mxu0
        %v2868 = vadd.f32 0.0, %v2867
        %v2869 = vpop.f32.mrb[0].mxu0
        %v2870 = vpop.f32.mrb[0].mxu0
        %v2871 = vadd.f32 0.0, %v2870
        %v2872 = vpop.f32.mrb[0].mxu0
        %2873 = vmatprep.mubr.bf16.mxu0 0
        %2874 = vmatmul.mubr.bf16.gmra.mrb[0].mxu0 %v2740
        %v2875 = vpop.f32.mrb[0].mxu0
        %v2876 = vadd.f32 0.0, %v2875
        %v2877 = vpop.f32.mrb[0].mxu0
        %v2878 = vpop.f32.mrb[0].mxu0
        %v2879 = vadd.f32 0.0, %v2878
        %v2880 = vpop.f32.mrb[0].mxu0
        %2881 = vmatprep.mubr.bf16.mxu0 0
        %2882 = vmatmul.mubr.bf16.gmra.mrb[0].mxu0 %v2743
        %v2883 = vpop.f32.mrb[0].mxu0
        %v2884 = vadd.f32 0.0, %v2883
        %v2885 = vpop.f32.mrb[0].mxu0
        %v2886 = vpop.f32.mrb[0].mxu0
        %v2887 = vadd.f32 0.0, %v2886
        %v2888 = vpop.f32.mrb[0].mxu0
        %2889 = vmatprep.mubr.bf16.mxu0 0
        %2890 = vmatmul.mubr.bf16.gmra.mrb[0].mxu0 %v2746
        %v2891 = vpop.f32.mrb[0].mxu0
        %v2892 = vadd.f32 0.0, %v2891
        %v2893 = vpop.f32.mrb[0].mxu0
        %v2894 = vpop.f32.mrb[0].mxu0
        %v2895 = vadd.f32 0.0, %v2894
        %v2896 = vpop.f32.mrb[0].mxu0
        %2897 = vmatprep.mubr.bf16.mxu0 0
        %2898 = vmatmul.mubr.bf16.gmra.mrb[0].mxu0 %v2749
        %v2899 = vpop.f32.mrb[0].mxu0
        %v2900 = vadd.f32 0.0, %v2899
        %v2901 = vpop.f32.mrb[0].mxu0
        %v2902 = vpop.f32.mrb[0].mxu0
        %v2903 = vadd.f32 0.0, %v2902
        %v2904 = vpop.f32.mrb[0].mxu0
        %2905 = vmatprep.mubr.bf16.mxu0 0
        %2906 = vmatmul.mubr.bf16.gmra.mrb[0].mxu0 %v2752
        %v2907 = vpop.f32.mrb[0].mxu0
        %v2908 = vadd.f32 0.0, %v2907
        %v2909 = vpop.f32.mrb[0].mxu0
        %v2910 = vpop.f32.mrb[0].mxu0
        %v2911 = vadd.f32 0.0, %v2910
        %v2912 = vpop.f32.mrb[0].mxu0
        %2913 = vmatprep.mubr.bf16.mxu0 0
        %2914 = vmatmul.mubr.bf16.gmra.mrb[0].mxu0 %v2755
        %v2915 = vpop.f32.mrb[0].mxu0
        %v2916 = vadd.f32 0.0, %v2915
        %v2917 = vpop.f32.mrb[0].mxu0
        %v2918 = vpop.f32.mrb[0].mxu0
        %v2919 = vadd.f32 0.0, %v2918
        %v2920 = vpop.f32.mrb[0].mxu0
        %2921 = vmatprep.mubr.bf16.mxu0 0
        %2922 = vmatmul.mubr.bf16.gmra.mrb[0].mxu0 %v2758
        %v2923 = vpop.f32.mrb[0].mxu0
        %v2924 = vadd.f32 0.0, %v2923
        %v2925 = vpop.f32.mrb[0].mxu0
        %v2926 = vpop.f32.mrb[0].mxu0
        %v2927 = vadd.f32 0.0, %v2926
        %v2928 = vpop.f32.mrb[0].mxu0
        %2929 = vmatprep.mubr.bf16.mxu0 0
        %2930 = vmatmul.mubr.bf16.gmra.mrb[0].mxu0 %v2761
        %v2931 = vpop.f32.mrb[0].mxu0
        %v2932 = vadd.f32 0.0, %v2931
        %v2933 = vpop.f32.mrb[0].mxu0
        %v2934 = vpop.f32.mrb[0].mxu0
        %v2935 = vadd.f32 0.0, %v2934
        %v2936 = vpop.f32.mrb[0].mxu0
        %2937 = vmatprep.mubr.bf16.mxu0 0
        %2938 = vmatmul.mubr.bf16.gmra.mrb[0].mxu0 %v2764
        %v2939 = vpop.f32.mrb[0].mxu0
        %v2940 = vadd.f32 0.0, %v2939
        %v2941 = vpop.f32.mrb[0].mxu0
        %v2942 = vpop.f32.mrb[0].mxu0
        %v2943 = vadd.f32 0.0, %v2942
        %v2944 = vpop.f32.mrb[0].mxu0
        %2945 = vdwg.mxu0
        %v2946 = vadd.f32 %v2507, %v2804
        %v2947 = vadd.f32 %v2508, %v2807
        %v2948 = vadd.f32 %v2509, %v2812
        %v2949 = vadd.f32 %v2510, %v2815
        %v2950 = vadd.f32 %v2511, %v2820
        %v2951 = vadd.f32 %v2512, %v2823
        %v2952 = vadd.f32 %v2513, %v2828
        %v2953 = vadd.f32 %v2514, %v2831
        %v2954 = vadd.f32 %v2515, %v2836
        %v2955 = vadd.f32 %v2516, %v2839
        %v2956 = vadd.f32 %v2517, %v2844
        %v2957 = vadd.f32 %v2518, %v2847
        %v2958 = vadd.f32 %v2519, %v2852
        %v2959 = vadd.f32 %v2520, %v2855
        %v2960 = vadd.f32 %v2521, %v2860
        %v2961 = vadd.f32 %v2522, %v2863
        %v2962 = vadd.f32 %v2523, %v2868
        %v2963 = vadd.f32 %v2524, %v2871
        %v2964 = vadd.f32 %v2525, %v2876
        %v2965 = vadd.f32 %v2526, %v2879
        %v2966 = vadd.f32 %v2527, %v2884
        %v2967 = vadd.f32 %v2528, %v2887
        %v2968 = vadd.f32 %v2529, %v2892
        %v2969 = vadd.f32 %v2530, %v2895
        %v2970 = vadd.f32 %v2531, %v2900
        %v2971 = vadd.f32 %v2532, %v2903
        %v2972 = vadd.f32 %v2533, %v2908
        %v2973 = vadd.f32 %v2534, %v2911
        %v2974 = vadd.f32 %v2535, %v2916
        %v2975 = vadd.f32 %v2536, %v2919
        %v2976 = vadd.f32 %v2537, %v2924
        %v2977 = vadd.f32 %v2538, %v2927
        %v2978 = vadd.f32 %v2539, %v2932
        %v2979 = vadd.f32 %v2540, %v2935
        %v2980 = vadd.f32 %v2541, %v2940
        %v2981 = vadd.f32 %v2542, %v2943
        %v2982 = vld [vmem:[%s288 + $0xa0] sm:$0x7]
        %s2983 = scalar_lea.vmem %s1, 14
        %v2984 = vld [vmem:[%s2983] sm:$0x3]
        %v2986 = vunpack.c.l.b16 %v2982
        %v2987 = vpack.c.b16 %v2986, %v2986
        %vm2988 = vsmask.f32 5376
        %v2990 = vshrl.u32 %v2656, 16
        %v2992 = vrot.slane %v2990, 2
        %v2993 = vshll.u32 %v2656, 16
        %v2995 = vrot.slane %v2993, 3
        %v2996 = vor.u32 %v2992, %v2995
        %v2998 = vshrl.u32 %v2657, 16
        %v3000 = vrot.slane %v2998, 2
        %v3001 = vshll.u32 %v2657, 16
        %v3003 = vrot.slane %v3001, 3
        %v3004 = vor.u32 %v3000, %v3003
        %v3005 = vsel %vm2988, %v2996, %v3004
        %v3007 = vshrl.u32 %v2658, 16
        %v3009 = vrot.slane %v3007, 2
        %v3010 = vshll.u32 %v2658, 16
        %v3012 = vrot.slane %v3010, 3
        %v3013 = vor.u32 %v3009, %v3012
        %v3014 = vsel %vm2988, %v3004, %v3013
        %v3016 = vshrl.u32 %v2659, 16
        %v3018 = vrot.slane %v3016, 2
        %v3019 = vshll.u32 %v2659, 16
        %v3021 = vrot.slane %v3019, 3
        %v3022 = vor.u32 %v3018, %v3021
        %v3023 = vsel %vm2988, %v3013, %v3022
        %v3025 = vshrl.u32 %v2660, 16
        %v3027 = vrot.slane %v3025, 2
        %v3028 = vshll.u32 %v2660, 16
        %v3030 = vrot.slane %v3028, 3
        %v3031 = vor.u32 %v3027, %v3030
        %v3032 = vsel %vm2988, %v3022, %v3031
        %v3034 = vshrl.u32 %v2661, 16
        %v3036 = vrot.slane %v3034, 2
        %v3037 = vshll.u32 %v2661, 16
        %v3039 = vrot.slane %v3037, 3
        %v3040 = vor.u32 %v3036, %v3039
        %v3041 = vsel %vm2988, %v3031, %v3040
        %v3043 = vshrl.u32 %v2662, 16
        %v3045 = vrot.slane %v3043, 2
        %v3046 = vshll.u32 %v2662, 16
        %v3048 = vrot.slane %v3046, 3
        %v3049 = vor.u32 %v3045, %v3048
        %v3050 = vsel %vm2988, %v3040, %v3049
        %v3052 = vshrl.u32 %v2663, 16
        %v3054 = vrot.slane %v3052, 2
        %v3055 = vshll.u32 %v2663, 16
        %v3057 = vrot.slane %v3055, 3
        %v3058 = vor.u32 %v3054, %v3057
        %v3059 = vsel %vm2988, %v3049, %v3058
        %v3061 = vshrl.u32 %v2664, 16
        %v3063 = vrot.slane %v3061, 2
        %v3064 = vshll.u32 %v2664, 16
        %v3066 = vrot.slane %v3064, 3
        %v3067 = vor.u32 %v3063, %v3066
        %v3068 = vsel %vm2988, %v3058, %v3067
        %v3070 = vshrl.u32 %v2665, 16
        %v3072 = vrot.slane %v3070, 2
        %v3073 = vshll.u32 %v2665, 16
        %v3075 = vrot.slane %v3073, 3
        %v3076 = vor.u32 %v3072, %v3075
        %v3077 = vsel %vm2988, %v3067, %v3076
        %v3079 = vshrl.u32 %v2666, 16
        %v3081 = vrot.slane %v3079, 2
        %v3082 = vshll.u32 %v2666, 16
        %v3084 = vrot.slane %v3082, 3
        %v3085 = vor.u32 %v3081, %v3084
        %v3086 = vsel %vm2988, %v3076, %v3085
        %v3088 = vshrl.u32 %v2667, 16
        %v3090 = vrot.slane %v3088, 2
        %v3091 = vshll.u32 %v2667, 16
        %v3093 = vrot.slane %v3091, 3
        %v3094 = vor.u32 %v3090, %v3093
        %v3095 = vsel %vm2988, %v3085, %v3094
        %v3097 = vshrl.u32 %v2668, 16
        %v3099 = vrot.slane %v3097, 2
        %v3100 = vshll.u32 %v2668, 16
        %v3102 = vrot.slane %v3100, 3
        %v3103 = vor.u32 %v3099, %v3102
        %v3104 = vsel %vm2988, %v3094, %v3103
        %v3106 = vshrl.u32 %v2669, 16
        %v3108 = vrot.slane %v3106, 2
        %v3109 = vshll.u32 %v2669, 16
        %v3111 = vrot.slane %v3109, 3
        %v3112 = vor.u32 %v3108, %v3111
        %v3113 = vsel %vm2988, %v3103, %v3112
        %v3115 = vshrl.u32 %v2670, 16
        %v3117 = vrot.slane %v3115, 2
        %v3118 = vshll.u32 %v2670, 16
        %v3120 = vrot.slane %v3118, 3
        %v3121 = vor.u32 %v3117, %v3120
        %v3122 = vsel %vm2988, %v3112, %v3121
        %v3124 = vshrl.u32 %v2671, 16
        %v3126 = vrot.slane %v3124, 2
        %v3127 = vshll.u32 %v2671, 16
        %v3129 = vrot.slane %v3127, 3
        %v3130 = vor.u32 %v3126, %v3129
        %v3131 = vsel %vm2988, %v3121, %v3130
        %v3133 = vshrl.u32 %v2672, 16
        %v3135 = vrot.slane %v3133, 2
        %v3136 = vshll.u32 %v2672, 16
        %v3138 = vrot.slane %v3136, 3
        %v3139 = vor.u32 %v3135, %v3138
        %v3140 = vsel %vm2988, %v3130, %v3139
        %v3142 = vshrl.u32 %v2673, 16
        %v3144 = vrot.slane %v3142, 2
        %v3145 = vshll.u32 %v2673, 16
        %v3147 = vrot.slane %v3145, 3
        %v3148 = vor.u32 %v3144, %v3147
        %v3149 = vsel %vm2988, %v3139, %v3148
        %v3151 = vshrl.u32 %v2987, 16
        %v3153 = vrot.slane %v3151, 2
        %v3154 = vshll.u32 %v2987, 16
        %v3156 = vrot.slane %v3154, 3
        %v3157 = vor.u32 %v3153, %v3156
        %v3158 = vsel %vm2988, %v3148, %v3157
        %v3160 = vsel %vm577, %v3005, 0
        %v3163 = vsel %vm577, %v3014, 0
        %v3166 = vsel %vm577, %v3023, 0
        %v3169 = vsel %vm577, %v3032, 0
        %v3172 = vsel %vm577, %v3041, 0
        %v3175 = vsel %vm577, %v3050, 0
        %v3178 = vsel %vm577, %v3059, 0
        %v3181 = vsel %vm577, %v3068, 0
        %v3184 = vsel %vm577, %v3077, 0
        %v3187 = vsel %vm577, %v3086, 0
        %v3190 = vsel %vm577, %v3095, 0
        %v3193 = vsel %vm577, %v3104, 0
        %v3196 = vsel %vm577, %v3113, 0
        %v3199 = vsel %vm577, %v3122, 0
        %v3202 = vsel %vm577, %v3131, 0
        %v3205 = vsel %vm577, %v3140, 0
        %v3208 = vsel %vm577, %v3149, 0
        %v3211 = vsel %vm577, %v3158, 0
        %v3214 = vsel %vm632, %v2984, 0
        %3216 = vmatprep.subr.bf16.mxu0 0
        %3217 = vmatpush1.bf16.msra.mxu0 %v3214
        %3218 = vmatprep.subr.bf16.mxu0 0
        %3219 = vmatpush1.bf16.msra.mxu0 0
        %3220 = vmatprep.subr.bf16.mxu0 0
        %3221 = vmatpush1.bf16.msra.mxu0 0
        %3222 = vmatprep.subr.bf16.mxu0 0
        %3223 = vmatpush1.bf16.msra.mxu0 0
        %3224 = vmatprep.subr.bf16.mxu0 0
        %3225 = vmatpush1.bf16.msra.mxu0 0
        %3226 = vmatprep.subr.bf16.mxu0 0
        %3227 = vmatpush1.bf16.msra.mxu0 0
        %3228 = vmatprep.subr.bf16.mxu0 0
        %3229 = vmatpush1.bf16.msra.mxu0 0
        %3230 = vmatprep.subr.bf16.mxu0 0
        %3231 = vmatpush1.bf16.msra.mxu0 0
        %3232 = vmatprep.subr.bf16.mxu0 0
        %3233 = vmatpush1.bf16.msra.mxu0 0
        %3234 = vmatprep.subr.bf16.mxu0 0
        %3235 = vmatpush1.bf16.msra.mxu0 0
        %3236 = vmatprep.subr.bf16.mxu0 0
        %3237 = vmatpush1.bf16.msra.mxu0 0
        %3238 = vmatprep.subr.bf16.mxu0 0
        %3239 = vmatpush1.bf16.msra.mxu0 0
        %3240 = vmatprep.subr.bf16.mxu0 0
        %3241 = vmatpush1.bf16.msra.mxu0 0
        %3242 = vmatprep.subr.bf16.mxu0 0
        %3243 = vmatpush1.bf16.msra.mxu0 0
        %3244 = vmatprep.subr.bf16.mxu0 0
        %3245 = vmatpush1.bf16.msra.mxu0 0
        %3246 = vmatprep.subr.bf16.mxu0 0
        %3247 = vmatpush1.bf16.msra.mxu0 0
        %3248 = vmatprep.mubr.bf16.mxu0 0
        %3249 = vmatmul.mubr.bf16.gmra.mrb[0].mxu0 %v3160
        %v3250 = vpop.f32.mrb[0].mxu0
        %v3251 = vadd.f32 0.0, %v3250
        %v3252 = vpop.f32.mrb[0].mxu0
        %v3253 = vpop.f32.mrb[0].mxu0
        %v3254 = vadd.f32 0.0, %v3253
        %v3255 = vpop.f32.mrb[0].mxu0
        %3256 = vmatprep.mubr.bf16.mxu0 0
        %3257 = vmatmul.mubr.bf16.gmra.mrb[0].mxu0 %v3163
        %v3258 = vpop.f32.mrb[0].mxu0
        %v3259 = vadd.f32 0.0, %v3258
        %v3260 = vpop.f32.mrb[0].mxu0
        %v3261 = vpop.f32.mrb[0].mxu0
        %v3262 = vadd.f32 0.0, %v3261
        %v3263 = vpop.f32.mrb[0].mxu0
        %3264 = vmatprep.mubr.bf16.mxu0 0
        %3265 = vmatmul.mubr.bf16.gmra.mrb[0].mxu0 %v3166
        %v3266 = vpop.f32.mrb[0].mxu0
        %v3267 = vadd.f32 0.0, %v3266
        %v3268 = vpop.f32.mrb[0].mxu0
        %v3269 = vpop.f32.mrb[0].mxu0
        %v3270 = vadd.f32 0.0, %v3269
        %v3271 = vpop.f32.mrb[0].mxu0
        %3272 = vmatprep.mubr.bf16.mxu0 0
        %3273 = vmatmul.mubr.bf16.gmra.mrb[0].mxu0 %v3169
        %v3274 = vpop.f32.mrb[0].mxu0
        %v3275 = vadd.f32 0.0, %v3274
        %v3276 = vpop.f32.mrb[0].mxu0
        %v3277 = vpop.f32.mrb[0].mxu0
        %v3278 = vadd.f32 0.0, %v3277
        %v3279 = vpop.f32.mrb[0].mxu0
        %3280 = vmatprep.mubr.bf16.mxu0 0
        %3281 = vmatmul.mubr.bf16.gmra.mrb[0].mxu0 %v3172
        %v3282 = vpop.f32.mrb[0].mxu0
        %v3283 = vadd.f32 0.0, %v3282
        %v3284 = vpop.f32.mrb[0].mxu0
        %v3285 = vpop.f32.mrb[0].mxu0
        %v3286 = vadd.f32 0.0, %v3285
        %v3287 = vpop.f32.mrb[0].mxu0
        %3288 = vmatprep.mubr.bf16.mxu0 0
        %3289 = vmatmul.mubr.bf16.gmra.mrb[0].mxu0 %v3175
        %v3290 = vpop.f32.mrb[0].mxu0
        %v3291 = vadd.f32 0.0, %v3290
        %v3292 = vpop.f32.mrb[0].mxu0
        %v3293 = vpop.f32.mrb[0].mxu0
        %v3294 = vadd.f32 0.0, %v3293
        %v3295 = vpop.f32.mrb[0].mxu0
        %3296 = vmatprep.mubr.bf16.mxu0 0
        %3297 = vmatmul.mubr.bf16.gmra.mrb[0].mxu0 %v3178
        %v3298 = vpop.f32.mrb[0].mxu0
        %v3299 = vadd.f32 0.0, %v3298
        %v3300 = vpop.f32.mrb[0].mxu0
        %v3301 = vpop.f32.mrb[0].mxu0
        %v3302 = vadd.f32 0.0, %v3301
        %v3303 = vpop.f32.mrb[0].mxu0
        %3304 = vmatprep.mubr.bf16.mxu0 0
        %3305 = vmatmul.mubr.bf16.gmra.mrb[0].mxu0 %v3181
        %v3306 = vpop.f32.mrb[0].mxu0
        %v3307 = vadd.f32 0.0, %v3306
        %v3308 = vpop.f32.mrb[0].mxu0
        %v3309 = vpop.f32.mrb[0].mxu0
        %v3310 = vadd.f32 0.0, %v3309
        %v3311 = vpop.f32.mrb[0].mxu0
        %3312 = vmatprep.mubr.bf16.mxu0 0
        %3313 = vmatmul.mubr.bf16.gmra.mrb[0].mxu0 %v3184
        %v3314 = vpop.f32.mrb[0].mxu0
        %v3315 = vadd.f32 0.0, %v3314
        %v3316 = vpop.f32.mrb[0].mxu0
        %v3317 = vpop.f32.mrb[0].mxu0
        %v3318 = vadd.f32 0.0, %v3317
        %v3319 = vpop.f32.mrb[0].mxu0
        %3320 = vmatprep.mubr.bf16.mxu0 0
        %3321 = vmatmul.mubr.bf16.gmra.mrb[0].mxu0 %v3187
        %v3322 = vpop.f32.mrb[0].mxu0
        %v3323 = vadd.f32 0.0, %v3322
        %v3324 = vpop.f32.mrb[0].mxu0
        %v3325 = vpop.f32.mrb[0].mxu0
        %v3326 = vadd.f32 0.0, %v3325
        %v3327 = vpop.f32.mrb[0].mxu0
        %3328 = vmatprep.mubr.bf16.mxu0 0
        %3329 = vmatmul.mubr.bf16.gmra.mrb[0].mxu0 %v3190
        %v3330 = vpop.f32.mrb[0].mxu0
        %v3331 = vadd.f32 0.0, %v3330
        %v3332 = vpop.f32.mrb[0].mxu0
        %v3333 = vpop.f32.mrb[0].mxu0
        %v3334 = vadd.f32 0.0, %v3333
        %v3335 = vpop.f32.mrb[0].mxu0
        %3336 = vmatprep.mubr.bf16.mxu0 0
        %3337 = vmatmul.mubr.bf16.gmra.mrb[0].mxu0 %v3193
        %v3338 = vpop.f32.mrb[0].mxu0
        %v3339 = vadd.f32 0.0, %v3338
        %v3340 = vpop.f32.mrb[0].mxu0
        %v3341 = vpop.f32.mrb[0].mxu0
        %v3342 = vadd.f32 0.0, %v3341
        %v3343 = vpop.f32.mrb[0].mxu0
        %3344 = vmatprep.mubr.bf16.mxu0 0
        %3345 = vmatmul.mubr.bf16.gmra.mrb[0].mxu0 %v3196
        %v3346 = vpop.f32.mrb[0].mxu0
        %v3347 = vadd.f32 0.0, %v3346
        %v3348 = vpop.f32.mrb[0].mxu0
        %v3349 = vpop.f32.mrb[0].mxu0
        %v3350 = vadd.f32 0.0, %v3349
        %v3351 = vpop.f32.mrb[0].mxu0
        %3352 = vmatprep.mubr.bf16.mxu0 0
        %3353 = vmatmul.mubr.bf16.gmra.mrb[0].mxu0 %v3199
        %v3354 = vpop.f32.mrb[0].mxu0
        %v3355 = vadd.f32 0.0, %v3354
        %v3356 = vpop.f32.mrb[0].mxu0
        %v3357 = vpop.f32.mrb[0].mxu0
        %v3358 = vadd.f32 0.0, %v3357
        %v3359 = vpop.f32.mrb[0].mxu0
        %3360 = vmatprep.mubr.bf16.mxu0 0
        %3361 = vmatmul.mubr.bf16.gmra.mrb[0].mxu0 %v3202
        %v3362 = vpop.f32.mrb[0].mxu0
        %v3363 = vadd.f32 0.0, %v3362
        %v3364 = vpop.f32.mrb[0].mxu0
        %v3365 = vpop.f32.mrb[0].mxu0
        %v3366 = vadd.f32 0.0, %v3365
        %v3367 = vpop.f32.mrb[0].mxu0
        %3368 = vmatprep.mubr.bf16.mxu0 0
        %3369 = vmatmul.mubr.bf16.gmra.mrb[0].mxu0 %v3205
        %v3370 = vpop.f32.mrb[0].mxu0
        %v3371 = vadd.f32 0.0, %v3370
        %v3372 = vpop.f32.mrb[0].mxu0
        %v3373 = vpop.f32.mrb[0].mxu0
        %v3374 = vadd.f32 0.0, %v3373
        %v3375 = vpop.f32.mrb[0].mxu0
        %3376 = vmatprep.mubr.bf16.mxu0 0
        %3377 = vmatmul.mubr.bf16.gmra.mrb[0].mxu0 %v3208
        %v3378 = vpop.f32.mrb[0].mxu0
        %v3379 = vadd.f32 0.0, %v3378
        %v3380 = vpop.f32.mrb[0].mxu0
        %v3381 = vpop.f32.mrb[0].mxu0
        %v3382 = vadd.f32 0.0, %v3381
        %v3383 = vpop.f32.mrb[0].mxu0
        %3384 = vmatprep.mubr.bf16.mxu0 0
        %3385 = vmatmul.mubr.bf16.gmra.mrb[0].mxu0 %v3211
        %v3386 = vpop.f32.mrb[0].mxu0
        %v3387 = vadd.f32 0.0, %v3386
        %v3388 = vpop.f32.mrb[0].mxu0
        %v3389 = vpop.f32.mrb[0].mxu0
        %v3390 = vadd.f32 0.0, %v3389
        %v3391 = vpop.f32.mrb[0].mxu0
        %3392 = vdwg.mxu0
        %v3393 = vadd.f32 %v2946, %v3251
        %v3394 = vadd.f32 %v2947, %v3254
        %v3395 = vadd.f32 %v2948, %v3259
        %v3396 = vadd.f32 %v2949, %v3262
        %v3397 = vadd.f32 %v2950, %v3267
        %v3398 = vadd.f32 %v2951, %v3270
        %v3399 = vadd.f32 %v2952, %v3275
        %v3400 = vadd.f32 %v2953, %v3278
        %v3401 = vadd.f32 %v2954, %v3283
        %v3402 = vadd.f32 %v2955, %v3286
        %v3403 = vadd.f32 %v2956, %v3291
        %v3404 = vadd.f32 %v2957, %v3294
        %v3405 = vadd.f32 %v2958, %v3299
        %v3406 = vadd.f32 %v2959, %v3302
        %v3407 = vadd.f32 %v2960, %v3307
        %v3408 = vadd.f32 %v2961, %v3310
        %v3409 = vadd.f32 %v2962, %v3315
        %v3410 = vadd.f32 %v2963, %v3318
        %v3411 = vadd.f32 %v2964, %v3323
        %v3412 = vadd.f32 %v2965, %v3326
        %v3413 = vadd.f32 %v2966, %v3331
        %v3414 = vadd.f32 %v2967, %v3334
        %v3415 = vadd.f32 %v2968, %v3339
        %v3416 = vadd.f32 %v2969, %v3342
        %v3417 = vadd.f32 %v2970, %v3347
        %v3418 = vadd.f32 %v2971, %v3350
        %v3419 = vadd.f32 %v2972, %v3355
        %v3420 = vadd.f32 %v2973, %v3358
        %v3421 = vadd.f32 %v2974, %v3363
        %v3422 = vadd.f32 %v2975, %v3366
        %v3423 = vadd.f32 %v2976, %v3371
        %v3424 = vadd.f32 %v2977, %v3374
        %v3425 = vadd.f32 %v2978, %v3379
        %v3426 = vadd.f32 %v2979, %v3382
        %v3427 = vadd.f32 %v2980, %v3387
        %v3428 = vadd.f32 %v2981, %v3390
        %v3429 = vld [vmem:[%s288 + $0x10] sm:$0x8]
        %s3430 = scalar_lea.vmem %s1, 16
        %v3431 = vld [vmem:[%s3430] sm:$0x3]
        %v3433 = vunpack.c.l.b16 %v3429
        %v3434 = vpack.c.b16 %v2620, %v3433
        %vm3435 = vcmask 1044480
        %v3436 = vrot.slane %v3434, 3
        %v3437 = vrot.slane %v2657, 3
        %v3438 = vsel %vm3435, %v3436, %v3437
        %v3439 = vrot.slane %v2658, 3
        %v3440 = vsel %vm3435, %v3437, %v3439
        %v3441 = vrot.slane %v2659, 3
        %v3442 = vsel %vm3435, %v3439, %v3441
        %v3443 = vrot.slane %v2660, 3
        %v3444 = vsel %vm3435, %v3441, %v3443
        %v3445 = vrot.slane %v2661, 3
        %v3446 = vsel %vm3435, %v3443, %v3445
        %v3447 = vrot.slane %v2662, 3
        %v3448 = vsel %vm3435, %v3445, %v3447
        %v3449 = vrot.slane %v2663, 3
        %v3450 = vsel %vm3435, %v3447, %v3449
        %v3451 = vrot.slane %v2664, 3
        %v3452 = vsel %vm3435, %v3449, %v3451
        %v3453 = vrot.slane %v2665, 3
        %v3454 = vsel %vm3435, %v3451, %v3453
        %v3455 = vrot.slane %v2666, 3
        %v3456 = vsel %vm3435, %v3453, %v3455
        %v3457 = vrot.slane %v2667, 3
        %v3458 = vsel %vm3435, %v3455, %v3457
        %v3459 = vrot.slane %v2668, 3
        %v3460 = vsel %vm3435, %v3457, %v3459
        %v3461 = vrot.slane %v2669, 3
        %v3462 = vsel %vm3435, %v3459, %v3461
        %v3463 = vrot.slane %v2670, 3
        %v3464 = vsel %vm3435, %v3461, %v3463
        %v3465 = vrot.slane %v2671, 3
        %v3466 = vsel %vm3435, %v3463, %v3465
        %v3467 = vrot.slane %v2672, 3
        %v3468 = vsel %vm3435, %v3465, %v3467
        %v3469 = vrot.slane %v2673, 3
        %v3470 = vsel %vm3435, %v3467, %v3469
        %v3471 = vrot.slane %v2987, 3
        %v3472 = vsel %vm3435, %v3469, %v3471
        %v3474 = vsel %vm577, %v3438, 0
        %v3477 = vsel %vm577, %v3440, 0
        %v3480 = vsel %vm577, %v3442, 0
        %v3483 = vsel %vm577, %v3444, 0
        %v3486 = vsel %vm577, %v3446, 0
        %v3489 = vsel %vm577, %v3448, 0
        %v3492 = vsel %vm577, %v3450, 0
        %v3495 = vsel %vm577, %v3452, 0
        %v3498 = vsel %vm577, %v3454, 0
        %v3501 = vsel %vm577, %v3456, 0
        %v3504 = vsel %vm577, %v3458, 0
        %v3507 = vsel %vm577, %v3460, 0
        %v3510 = vsel %vm577, %v3462, 0
        %v3513 = vsel %vm577, %v3464, 0
        %v3516 = vsel %vm577, %v3466, 0
        %v3519 = vsel %vm577, %v3468, 0
        %v3522 = vsel %vm577, %v3470, 0
        %v3525 = vsel %vm577, %v3472, 0
        %v3528 = vsel %vm632, %v3431, 0
        %3530 = vmatprep.subr.bf16.mxu0 0
        %3531 = vmatpush1.bf16.msra.mxu0 %v3528
        %3532 = vmatprep.subr.bf16.mxu0 0
        %3533 = vmatpush1.bf16.msra.mxu0 0
        %3534 = vmatprep.subr.bf16.mxu0 0
        %3535 = vmatpush1.bf16.msra.mxu0 0
        %3536 = vmatprep.subr.bf16.mxu0 0
        %3537 = vmatpush1.bf16.msra.mxu0 0
        %3538 = vmatprep.subr.bf16.mxu0 0
        %3539 = vmatpush1.bf16.msra.mxu0 0
        %3540 = vmatprep.subr.bf16.mxu0 0
        %3541 = vmatpush1.bf16.msra.mxu0 0
        %3542 = vmatprep.subr.bf16.mxu0 0
        %3543 = vmatpush1.bf16.msra.mxu0 0
        %3544 = vmatprep.subr.bf16.mxu0 0
        %3545 = vmatpush1.bf16.msra.mxu0 0
        %3546 = vmatprep.subr.bf16.mxu0 0
        %3547 = vmatpush1.bf16.msra.mxu0 0
        %3548 = vmatprep.subr.bf16.mxu0 0
        %3549 = vmatpush1.bf16.msra.mxu0 0
        %3550 = vmatprep.subr.bf16.mxu0 0
        %3551 = vmatpush1.bf16.msra.mxu0 0
        %3552 = vmatprep.subr.bf16.mxu0 0
        %3553 = vmatpush1.bf16.msra.mxu0 0
        %3554 = vmatprep.subr.bf16.mxu0 0
        %3555 = vmatpush1.bf16.msra.mxu0 0
        %3556 = vmatprep.subr.bf16.mxu0 0
        %3557 = vmatpush1.bf16.msra.mxu0 0
        %3558 = vmatprep.subr.bf16.mxu0 0
        %3559 = vmatpush1.bf16.msra.mxu0 0
        %3560 = vmatprep.subr.bf16.mxu0 0
        %3561 = vmatpush1.bf16.msra.mxu0 0
        %3562 = vmatprep.mubr.bf16.mxu0 0
        %3563 = vmatmul.mubr.bf16.gmra.mrb[0].mxu0 %v3474
        %v3564 = vpop.f32.mrb[0].mxu0
        %v3565 = vadd.f32 0.0, %v3564
        %v3566 = vpop.f32.mrb[0].mxu0
        %v3567 = vpop.f32.mrb[0].mxu0
        %v3568 = vadd.f32 0.0, %v3567
        %v3569 = vpop.f32.mrb[0].mxu0
        %3570 = vmatprep.mubr.bf16.mxu0 0
        %3571 = vmatmul.mubr.bf16.gmra.mrb[0].mxu0 %v3477
        %v3572 = vpop.f32.mrb[0].mxu0
        %v3573 = vadd.f32 0.0, %v3572
        %v3574 = vpop.f32.mrb[0].mxu0
        %v3575 = vpop.f32.mrb[0].mxu0
        %v3576 = vadd.f32 0.0, %v3575
        %v3577 = vpop.f32.mrb[0].mxu0
        %3578 = vmatprep.mubr.bf16.mxu0 0
        %3579 = vmatmul.mubr.bf16.gmra.mrb[0].mxu0 %v3480
        %v3580 = vpop.f32.mrb[0].mxu0
        %v3581 = vadd.f32 0.0, %v3580
        %v3582 = vpop.f32.mrb[0].mxu0
        %v3583 = vpop.f32.mrb[0].mxu0
        %v3584 = vadd.f32 0.0, %v3583
        %v3585 = vpop.f32.mrb[0].mxu0
        %3586 = vmatprep.mubr.bf16.mxu0 0
        %3587 = vmatmul.mubr.bf16.gmra.mrb[0].mxu0 %v3483
        %v3588 = vpop.f32.mrb[0].mxu0
        %v3589 = vadd.f32 0.0, %v3588
        %v3590 = vpop.f32.mrb[0].mxu0
        %v3591 = vpop.f32.mrb[0].mxu0
        %v3592 = vadd.f32 0.0, %v3591
        %v3593 = vpop.f32.mrb[0].mxu0
        %3594 = vmatprep.mubr.bf16.mxu0 0
        %3595 = vmatmul.mubr.bf16.gmra.mrb[0].mxu0 %v3486
        %v3596 = vpop.f32.mrb[0].mxu0
        %v3597 = vadd.f32 0.0, %v3596
        %v3598 = vpop.f32.mrb[0].mxu0
        %v3599 = vpop.f32.mrb[0].mxu0
        %v3600 = vadd.f32 0.0, %v3599
        %v3601 = vpop.f32.mrb[0].mxu0
        %3602 = vmatprep.mubr.bf16.mxu0 0
        %3603 = vmatmul.mubr.bf16.gmra.mrb[0].mxu0 %v3489
        %v3604 = vpop.f32.mrb[0].mxu0
        %v3605 = vadd.f32 0.0, %v3604
        %v3606 = vpop.f32.mrb[0].mxu0
        %v3607 = vpop.f32.mrb[0].mxu0
        %v3608 = vadd.f32 0.0, %v3607
        %v3609 = vpop.f32.mrb[0].mxu0
        %3610 = vmatprep.mubr.bf16.mxu0 0
        %3611 = vmatmul.mubr.bf16.gmra.mrb[0].mxu0 %v3492
        %v3612 = vpop.f32.mrb[0].mxu0
        %v3613 = vadd.f32 0.0, %v3612
        %v3614 = vpop.f32.mrb[0].mxu0
        %v3615 = vpop.f32.mrb[0].mxu0
        %v3616 = vadd.f32 0.0, %v3615
        %v3617 = vpop.f32.mrb[0].mxu0
        %3618 = vmatprep.mubr.bf16.mxu0 0
        %3619 = vmatmul.mubr.bf16.gmra.mrb[0].mxu0 %v3495
        %v3620 = vpop.f32.mrb[0].mxu0
        %v3621 = vadd.f32 0.0, %v3620
        %v3622 = vpop.f32.mrb[0].mxu0
        %v3623 = vpop.f32.mrb[0].mxu0
        %v3624 = vadd.f32 0.0, %v3623
        %v3625 = vpop.f32.mrb[0].mxu0
        %3626 = vmatprep.mubr.bf16.mxu0 0
        %3627 = vmatmul.mubr.bf16.gmra.mrb[0].mxu0 %v3498
        %v3628 = vpop.f32.mrb[0].mxu0
        %v3629 = vadd.f32 0.0, %v3628
        %v3630 = vpop.f32.mrb[0].mxu0
        %v3631 = vpop.f32.mrb[0].mxu0
        %v3632 = vadd.f32 0.0, %v3631
        %v3633 = vpop.f32.mrb[0].mxu0
        %3634 = vmatprep.mubr.bf16.mxu0 0
        %3635 = vmatmul.mubr.bf16.gmra.mrb[0].mxu0 %v3501
        %v3636 = vpop.f32.mrb[0].mxu0
        %v3637 = vadd.f32 0.0, %v3636
        %v3638 = vpop.f32.mrb[0].mxu0
        %v3639 = vpop.f32.mrb[0].mxu0
        %v3640 = vadd.f32 0.0, %v3639
        %v3641 = vpop.f32.mrb[0].mxu0
        %3642 = vmatprep.mubr.bf16.mxu0 0
        %3643 = vmatmul.mubr.bf16.gmra.mrb[0].mxu0 %v3504
        %v3644 = vpop.f32.mrb[0].mxu0
        %v3645 = vadd.f32 0.0, %v3644
        %v3646 = vpop.f32.mrb[0].mxu0
        %v3647 = vpop.f32.mrb[0].mxu0
        %v3648 = vadd.f32 0.0, %v3647
        %v3649 = vpop.f32.mrb[0].mxu0
        %3650 = vmatprep.mubr.bf16.mxu0 0
        %3651 = vmatmul.mubr.bf16.gmra.mrb[0].mxu0 %v3507
        %v3652 = vpop.f32.mrb[0].mxu0
        %v3653 = vadd.f32 0.0, %v3652
        %v3654 = vpop.f32.mrb[0].mxu0
        %v3655 = vpop.f32.mrb[0].mxu0
        %v3656 = vadd.f32 0.0, %v3655
        %v3657 = vpop.f32.mrb[0].mxu0
        %3658 = vmatprep.mubr.bf16.mxu0 0
        %3659 = vmatmul.mubr.bf16.gmra.mrb[0].mxu0 %v3510
        %v3660 = vpop.f32.mrb[0].mxu0
        %v3661 = vadd.f32 0.0, %v3660
        %v3662 = vpop.f32.mrb[0].mxu0
        %v3663 = vpop.f32.mrb[0].mxu0
        %v3664 = vadd.f32 0.0, %v3663
        %v3665 = vpop.f32.mrb[0].mxu0
        %3666 = vmatprep.mubr.bf16.mxu0 0
        %3667 = vmatmul.mubr.bf16.gmra.mrb[0].mxu0 %v3513
        %v3668 = vpop.f32.mrb[0].mxu0
        %v3669 = vadd.f32 0.0, %v3668
        %v3670 = vpop.f32.mrb[0].mxu0
        %v3671 = vpop.f32.mrb[0].mxu0
        %v3672 = vadd.f32 0.0, %v3671
        %v3673 = vpop.f32.mrb[0].mxu0
        %3674 = vmatprep.mubr.bf16.mxu0 0
        %3675 = vmatmul.mubr.bf16.gmra.mrb[0].mxu0 %v3516
        %v3676 = vpop.f32.mrb[0].mxu0
        %v3677 = vadd.f32 0.0, %v3676
        %v3678 = vpop.f32.mrb[0].mxu0
        %v3679 = vpop.f32.mrb[0].mxu0
        %v3680 = vadd.f32 0.0, %v3679
        %v3681 = vpop.f32.mrb[0].mxu0
        %3682 = vmatprep.mubr.bf16.mxu0 0
        %3683 = vmatmul.mubr.bf16.gmra.mrb[0].mxu0 %v3519
        %v3684 = vpop.f32.mrb[0].mxu0
        %v3685 = vadd.f32 0.0, %v3684
        %v3686 = vpop.f32.mrb[0].mxu0
        %v3687 = vpop.f32.mrb[0].mxu0
        %v3688 = vadd.f32 0.0, %v3687
        %v3689 = vpop.f32.mrb[0].mxu0
        %3690 = vmatprep.mubr.bf16.mxu0 0
        %3691 = vmatmul.mubr.bf16.gmra.mrb[0].mxu0 %v3522
        %v3692 = vpop.f32.mrb[0].mxu0
        %v3693 = vadd.f32 0.0, %v3692
        %v3694 = vpop.f32.mrb[0].mxu0
        %v3695 = vpop.f32.mrb[0].mxu0
        %v3696 = vadd.f32 0.0, %v3695
        %v3697 = vpop.f32.mrb[0].mxu0
        %3698 = vmatprep.mubr.bf16.mxu0 0
        %3699 = vmatmul.mubr.bf16.gmra.mrb[0].mxu0 %v3525
        %v3700 = vpop.f32.mrb[0].mxu0
        %v3701 = vadd.f32 0.0, %v3700
        %v3702 = vpop.f32.mrb[0].mxu0
        %v3703 = vpop.f32.mrb[0].mxu0
        %v3704 = vadd.f32 0.0, %v3703
        %v3705 = vpop.f32.mrb[0].mxu0
        %3706 = vdwg.mxu0
        %v3707 = vadd.f32 %v3393, %v3565
        %v3708 = vadd.f32 %v3394, %v3568
        %v3709 = vadd.f32 %v3395, %v3573
        %v3710 = vadd.f32 %v3396, %v3576
        %v3711 = vadd.f32 %v3397, %v3581
        %v3712 = vadd.f32 %v3398, %v3584
        %v3713 = vadd.f32 %v3399, %v3589
        %v3714 = vadd.f32 %v3400, %v3592
        %v3715 = vadd.f32 %v3401, %v3597
        %v3716 = vadd.f32 %v3402, %v3600
        %v3717 = vadd.f32 %v3403, %v3605
        %v3718 = vadd.f32 %v3404, %v3608
        %v3719 = vadd.f32 %v3405, %v3613
        %v3720 = vadd.f32 %v3406, %v3616
        %v3721 = vadd.f32 %v3407, %v3621
        %v3722 = vadd.f32 %v3408, %v3624
        %v3723 = vadd.f32 %v3409, %v3629
        %v3724 = vadd.f32 %v3410, %v3632
        %v3725 = vadd.f32 %v3411, %v3637
        %v3726 = vadd.f32 %v3412, %v3640
        %v3727 = vadd.f32 %v3413, %v3645
        %v3728 = vadd.f32 %v3414, %v3648
        %v3729 = vadd.f32 %v3415, %v3653
        %v3730 = vadd.f32 %v3416, %v3656
        %v3731 = vadd.f32 %v3417, %v3661
        %v3732 = vadd.f32 %v3418, %v3664
        %v3733 = vadd.f32 %v3419, %v3669
        %v3734 = vadd.f32 %v3420, %v3672
        %v3735 = vadd.f32 %v3421, %v3677
        %v3736 = vadd.f32 %v3422, %v3680
        %v3737 = vadd.f32 %v3423, %v3685
        %v3738 = vadd.f32 %v3424, %v3688
        %v3739 = vadd.f32 %v3425, %v3693
        %v3740 = vadd.f32 %v3426, %v3696
        %v3741 = vadd.f32 %v3427, %v3701
        %v3742 = vadd.f32 %v3428, %v3704
        %v3743 = vld [vmem:[%s2] sm:$0x1]
        %v3745 = vlaneseq
        %v3746 = vshrl.u32 %v3745, 7
        %v3747 = vsub.s32 0, %v3746
        %v3748 = vrot.slane %v3743, %v3747
        %v3750 = vadd.f32 %v3707, %v3748
        %v3751 = vadd.f32 %v3708, %v3748
        %v3752 = vadd.f32 %v3709, %v3748
        %v3753 = vadd.f32 %v3710, %v3748
        %v3754 = vadd.f32 %v3711, %v3748
        %v3755 = vadd.f32 %v3712, %v3748
        %v3756 = vadd.f32 %v3713, %v3748
        %v3757 = vadd.f32 %v3714, %v3748
        %v3758 = vadd.f32 %v3715, %v3748
        %v3759 = vadd.f32 %v3716, %v3748
        %v3760 = vadd.f32 %v3717, %v3748
        %v3761 = vadd.f32 %v3718, %v3748
        %v3762 = vadd.f32 %v3719, %v3748
        %v3763 = vadd.f32 %v3720, %v3748
        %v3764 = vadd.f32 %v3721, %v3748
        %v3765 = vadd.f32 %v3722, %v3748
        %v3766 = vadd.f32 %v3723, %v3748
        %v3767 = vadd.f32 %v3724, %v3748
        %v3768 = vadd.f32 %v3725, %v3748
        %v3769 = vadd.f32 %v3726, %v3748
        %v3770 = vadd.f32 %v3727, %v3748
        %v3771 = vadd.f32 %v3728, %v3748
        %v3772 = vadd.f32 %v3729, %v3748
        %v3773 = vadd.f32 %v3730, %v3748
        %v3774 = vadd.f32 %v3731, %v3748
        %v3775 = vadd.f32 %v3732, %v3748
        %v3776 = vadd.f32 %v3733, %v3748
        %v3777 = vadd.f32 %v3734, %v3748
        %v3778 = vadd.f32 %v3735, %v3748
        %v3779 = vadd.f32 %v3736, %v3748
        %v3780 = vadd.f32 %v3737, %v3748
        %v3781 = vadd.f32 %v3738, %v3748
        %v3782 = vadd.f32 %v3739, %v3748
        %v3783 = vadd.f32 %v3740, %v3748
        %v3784 = vadd.f32 %v3741, %v3748
        %v3785 = vadd.f32 %v3742, %v3748
        %v3786 = vmax.f32 %v3750, 0.0
        %v3787 = vmax.f32 %v3751, 0.0
        %v3788 = vmax.f32 %v3752, 0.0
        %v3789 = vmax.f32 %v3753, 0.0
        %v3790 = vmax.f32 %v3754, 0.0
        %v3791 = vmax.f32 %v3755, 0.0
        %v3792 = vmax.f32 %v3756, 0.0
        %v3793 = vmax.f32 %v3757, 0.0
        %v3794 = vmax.f32 %v3758, 0.0
        %v3795 = vmax.f32 %v3759, 0.0
        %v3796 = vmax.f32 %v3760, 0.0
        %v3797 = vmax.f32 %v3761, 0.0
        %v3798 = vmax.f32 %v3762, 0.0
        %v3799 = vmax.f32 %v3763, 0.0
        %v3800 = vmax.f32 %v3764, 0.0
        %v3801 = vmax.f32 %v3765, 0.0
        %v3802 = vmax.f32 %v3766, 0.0
        %v3803 = vmax.f32 %v3767, 0.0
        %v3804 = vmax.f32 %v3768, 0.0
        %v3805 = vmax.f32 %v3769, 0.0
        %v3806 = vmax.f32 %v3770, 0.0
        %v3807 = vmax.f32 %v3771, 0.0
        %v3808 = vmax.f32 %v3772, 0.0
        %v3809 = vmax.f32 %v3773, 0.0
        %v3810 = vmax.f32 %v3774, 0.0
        %v3811 = vmax.f32 %v3775, 0.0
        %v3812 = vmax.f32 %v3776, 0.0
        %v3813 = vmax.f32 %v3777, 0.0
        %v3814 = vmax.f32 %v3778, 0.0
        %v3815 = vmax.f32 %v3779, 0.0
        %v3816 = vmax.f32 %v3780, 0.0
        %v3817 = vmax.f32 %v3781, 0.0
        %v3818 = vmax.f32 %v3782, 0.0
        %v3819 = vmax.f32 %v3783, 0.0
        %v3820 = vmax.f32 %v3784, 0.0
        %v3821 = vmax.f32 %v3785, 0.0
        %v3822 = vld [vmem:[#allocation3] sm:$0xff]
        %v3823 = vld [vmem:[#allocation3 + $0x8] sm:$0xff]
        %v3824 = vld [vmem:[#allocation3 + $0x10] sm:$0xff]
        %v3825 = vld [vmem:[#allocation3 + $0x18] sm:$0xff]
        %v3826 = vld [vmem:[#allocation3 + $0x20] sm:$0xff]
        %v3827 = vld [vmem:[#allocation3 + $0x28] sm:$0xff]
        %v3828 = vld [vmem:[#allocation3 + $0x30] sm:$0xff]
        %v3829 = vld [vmem:[#allocation3 + $0x38] sm:$0xff]
        %v3830 = vld [vmem:[#allocation3 + $0x40] sm:$0xff]
        %v3831 = vld [vmem:[#allocation3 + $0x48] sm:$0xff]
        %v3832 = vld [vmem:[#allocation3 + $0x50] sm:$0xff]
        %v3833 = vld [vmem:[#allocation3 + $0x58] sm:$0xff]
        %v3834 = vld [vmem:[#allocation3 + $0x60] sm:$0xff]
        %v3835 = vld [vmem:[#allocation3 + $0x68] sm:$0xff]
        %v3836 = vld [vmem:[#allocation3 + $0x70] sm:$0xff]
        %v3837 = vld [vmem:[#allocation3 + $0x78] sm:$0xff]
        %v3838 = vld [vmem:[#allocation3 + $0x80] sm:$0xff]
        %v3839 = vld [vmem:[#allocation3 + $0x88] sm:$0xff]
        %v3840 = vld [vmem:[#allocation3 + $0x90] sm:$0xff]
        %v3841 = vld [vmem:[#allocation3 + $0x98] sm:$0xff]
        %v3842 = vld [vmem:[#allocation3 + $0xa0] sm:$0xff]
        %v3843 = vld [vmem:[#allocation3 + $0xa8] sm:$0xff]
        %v3844 = vld [vmem:[#allocation3 + $0xb0] sm:$0xff]
        %v3845 = vld [vmem:[#allocation3 + $0xb8] sm:$0xff]
        %v3846 = vld [vmem:[#allocation3 + $0xc0] sm:$0xff]
        %v3847 = vld [vmem:[#allocation3 + $0xc8] sm:$0xff]
        %v3848 = vld [vmem:[#allocation3 + $0xd0] sm:$0xff]
        %v3849 = vld [vmem:[#allocation3 + $0xd8] sm:$0xff]
        %v3850 = vld [vmem:[#allocation3 + $0xe0] sm:$0xff]
        %v3851 = vld [vmem:[#allocation3 + $0xe8] sm:$0xff]
        %v3852 = vld [vmem:[#allocation3 + $0xf0] sm:$0xff]
        %v3853 = vld [vmem:[#allocation3 + $0xf8] sm:$0xff]
        %v3854 = vld [vmem:[#allocation3 + $0x100] sm:$0xff]
        %v3855 = vld [vmem:[#allocation3 + $0x108] sm:$0xff]
        %v3856 = vld [vmem:[#allocation3 + $0x110] sm:$0xff]
        %v3857 = vld [vmem:[#allocation3 + $0x118] sm:$0xff]
        %3859 = vset.pattern.permute.xlu0 0
        %3860 = vperm.xlu0 %3859, %v3822
        %v3861 = vpop.permute.xlu0 %3860
        %3864 = vset.pattern.permute.xlu0 0
        %3865 = vperm.xlu0 %3864, %v3823
        %v3866 = vpop.permute.xlu0 %3865
        %3869 = vset.pattern.permute.xlu0 0
        %3870 = vperm.xlu0 %3869, %v3824
        %v3871 = vpop.permute.xlu0 %3870
        %3874 = vset.pattern.permute.xlu0 0
        %3875 = vperm.xlu0 %3874, %v3825
        %v3876 = vpop.permute.xlu0 %3875
        %3879 = vset.pattern.permute.xlu0 0
        %3880 = vperm.xlu0 %3879, %v3826
        %v3881 = vpop.permute.xlu0 %3880
        %3884 = vset.pattern.permute.xlu0 0
        %3885 = vperm.xlu0 %3884, %v3827
        %v3886 = vpop.permute.xlu0 %3885
        %3889 = vset.pattern.permute.xlu0 0
        %3890 = vperm.xlu0 %3889, %v3828
        %v3891 = vpop.permute.xlu0 %3890
        %3894 = vset.pattern.permute.xlu0 0
        %3895 = vperm.xlu0 %3894, %v3829
        %v3896 = vpop.permute.xlu0 %3895
        %3899 = vset.pattern.permute.xlu0 0
        %3900 = vperm.xlu0 %3899, %v3830
        %v3901 = vpop.permute.xlu0 %3900
        %3904 = vset.pattern.permute.xlu0 0
        %3905 = vperm.xlu0 %3904, %v3831
        %v3906 = vpop.permute.xlu0 %3905
        %3909 = vset.pattern.permute.xlu0 0
        %3910 = vperm.xlu0 %3909, %v3832
        %v3911 = vpop.permute.xlu0 %3910
        %3914 = vset.pattern.permute.xlu0 0
        %3915 = vperm.xlu0 %3914, %v3833
        %v3916 = vpop.permute.xlu0 %3915
        %3919 = vset.pattern.permute.xlu0 0
        %3920 = vperm.xlu0 %3919, %v3834
        %v3921 = vpop.permute.xlu0 %3920
        %3924 = vset.pattern.permute.xlu0 0
        %3925 = vperm.xlu0 %3924, %v3835
        %v3926 = vpop.permute.xlu0 %3925
        %3929 = vset.pattern.permute.xlu0 0
        %3930 = vperm.xlu0 %3929, %v3836
        %v3931 = vpop.permute.xlu0 %3930
        %3934 = vset.pattern.permute.xlu0 0
        %3935 = vperm.xlu0 %3934, %v3837
        %v3936 = vpop.permute.xlu0 %3935
        %3939 = vset.pattern.permute.xlu0 0
        %3940 = vperm.xlu0 %3939, %v3838
        %v3941 = vpop.permute.xlu0 %3940
        %3944 = vset.pattern.permute.xlu0 0
        %3945 = vperm.xlu0 %3944, %v3839
        %v3946 = vpop.permute.xlu0 %3945
        %3949 = vset.pattern.permute.xlu0 0
        %3950 = vperm.xlu0 %3949, %v3840
        %v3951 = vpop.permute.xlu0 %3950
        %3954 = vset.pattern.permute.xlu0 0
        %3955 = vperm.xlu0 %3954, %v3841
        %v3956 = vpop.permute.xlu0 %3955
        %3959 = vset.pattern.permute.xlu0 0
        %3960 = vperm.xlu0 %3959, %v3842
        %v3961 = vpop.permute.xlu0 %3960
        %3964 = vset.pattern.permute.xlu0 0
        %3965 = vperm.xlu0 %3964, %v3843
        %v3966 = vpop.permute.xlu0 %3965
        %3969 = vset.pattern.permute.xlu0 0
        %3970 = vperm.xlu0 %3969, %v3844
        %v3971 = vpop.permute.xlu0 %3970
        %3974 = vset.pattern.permute.xlu0 0
        %3975 = vperm.xlu0 %3974, %v3845
        %v3976 = vpop.permute.xlu0 %3975
        %3979 = vset.pattern.permute.xlu0 0
        %3980 = vperm.xlu0 %3979, %v3846
        %v3981 = vpop.permute.xlu0 %3980
        %3984 = vset.pattern.permute.xlu0 0
        %3985 = vperm.xlu0 %3984, %v3847
        %v3986 = vpop.permute.xlu0 %3985
        %3989 = vset.pattern.permute.xlu0 0
        %3990 = vperm.xlu0 %3989, %v3848
        %v3991 = vpop.permute.xlu0 %3990
        %3994 = vset.pattern.permute.xlu0 0
        %3995 = vperm.xlu0 %3994, %v3849
        %v3996 = vpop.permute.xlu0 %3995
        %3999 = vset.pattern.permute.xlu0 0
        %4000 = vperm.xlu0 %3999, %v3850
        %v4001 = vpop.permute.xlu0 %4000
        %4004 = vset.pattern.permute.xlu0 0
        %4005 = vperm.xlu0 %4004, %v3851
        %v4006 = vpop.permute.xlu0 %4005
        %4009 = vset.pattern.permute.xlu0 0
        %4010 = vperm.xlu0 %4009, %v3852
        %v4011 = vpop.permute.xlu0 %4010
        %4014 = vset.pattern.permute.xlu0 0
        %4015 = vperm.xlu0 %4014, %v3853
        %v4016 = vpop.permute.xlu0 %4015
        %4019 = vset.pattern.permute.xlu0 0
        %4020 = vperm.xlu0 %4019, %v3854
        %v4021 = vpop.permute.xlu0 %4020
        %4024 = vset.pattern.permute.xlu0 0
        %4025 = vperm.xlu0 %4024, %v3855
        %v4026 = vpop.permute.xlu0 %4025
        %4029 = vset.pattern.permute.xlu0 0
        %4030 = vperm.xlu0 %4029, %v3856
        %v4031 = vpop.permute.xlu0 %4030
        %4034 = vset.pattern.permute.xlu0 0
        %4035 = vperm.xlu0 %4034, %v3857
        %v4036 = vpop.permute.xlu0 %4035
        %v4038 = vmul.f32 %v3786, %v3861
        %v4039 = vmul.f32 %v3787, %v3866
        %v4040 = vmul.f32 %v3788, %v3871
        %v4041 = vmul.f32 %v3789, %v3876
        %v4042 = vmul.f32 %v3790, %v3881
        %v4043 = vmul.f32 %v3791, %v3886
        %v4044 = vmul.f32 %v3792, %v3891
        %v4045 = vmul.f32 %v3793, %v3896
        %v4046 = vmul.f32 %v3794, %v3901
        %v4047 = vmul.f32 %v3795, %v3906
        %v4048 = vmul.f32 %v3796, %v3911
        %v4049 = vmul.f32 %v3797, %v3916
        %v4050 = vmul.f32 %v3798, %v3921
        %v4051 = vmul.f32 %v3799, %v3926
        %v4052 = vmul.f32 %v3800, %v3931
        %v4053 = vmul.f32 %v3801, %v3936
        %v4054 = vmul.f32 %v3802, %v3941
        %v4055 = vmul.f32 %v3803, %v3946
        %v4056 = vmul.f32 %v3804, %v3951
        %v4057 = vmul.f32 %v3805, %v3956
        %v4058 = vmul.f32 %v3806, %v3961
        %v4059 = vmul.f32 %v3807, %v3966
        %v4060 = vmul.f32 %v3808, %v3971
        %v4061 = vmul.f32 %v3809, %v3976
        %v4062 = vmul.f32 %v3810, %v3981
        %v4063 = vmul.f32 %v3811, %v3986
        %v4064 = vmul.f32 %v3812, %v3991
        %v4065 = vmul.f32 %v3813, %v3996
        %v4066 = vmul.f32 %v3814, %v4001
        %v4067 = vmul.f32 %v3815, %v4006
        %v4068 = vmul.f32 %v3816, %v4011
        %v4069 = vmul.f32 %v3817, %v4016
        %v4070 = vmul.f32 %v3818, %v4021
        %v4071 = vmul.f32 %v3819, %v4026
        %v4072 = vmul.f32 %v3820, %v4031
        %v4073 = vmul.f32 %v3821, %v4036
        %4074 = vst [vmem:[#allocation2] sm:$0xf] 0
        %4075 = vst [vmem:[#allocation2 + $0x4] sm:$0xf] 0
        %4076 = vst [vmem:[#allocation2 + $0x8] sm:$0xf] 0
        %4077 = vst [vmem:[#allocation2 + $0xc] sm:$0xf] 0
        %4078 = vst [vmem:[#allocation2 + $0x10] sm:$0xf] 0
        %4079 = vst [vmem:[#allocation2 + $0x14] sm:$0xf] 0
        %4080 = vst [vmem:[#allocation2 + $0x18] sm:$0xf] 0
        %4081 = vst [vmem:[#allocation2 + $0x1c] sm:$0xf] 0
        %4082 = vst [vmem:[#allocation2 + $0x20] sm:$0xf] 0
        %4083 = vst [vmem:[#allocation2 + $0x24] sm:$0xf] 0
        %4084 = vst [vmem:[#allocation2 + $0x28] sm:$0xf] 0
        %4085 = vst [vmem:[#allocation2 + $0x2c] sm:$0xf] 0
        %4086 = vst [vmem:[#allocation2 + $0x30] sm:$0xf] 0
        %4087 = vst [vmem:[#allocation2 + $0x34] sm:$0xf] 0
        %4088 = vst [vmem:[#allocation2 + $0x38] sm:$0xf] 0
        %4089 = vst [vmem:[#allocation2 + $0x3c] sm:$0xf] 0
        %4090 = vst [vmem:[#allocation2 + $0x40] sm:$0xf] 0
        %4091 = vst [vmem:[#allocation2 + $0x44] sm:$0xf] 0
        %4092 = vst [vmem:[#allocation2 + $0x48] sm:$0xf] 0
        %4093 = vst [vmem:[#allocation2 + $0x4c] sm:$0xf] 0
        %4094 = vst [vmem:[#allocation2 + $0x50] sm:$0xf] 0
        %4095 = vst [vmem:[#allocation2 + $0x54] sm:$0xf] 0
        %4096 = vst [vmem:[#allocation2 + $0x58] sm:$0xf] 0
        %4097 = vst [vmem:[#allocation2 + $0x5c] sm:$0xf] 0
        %4098 = vst [vmem:[#allocation2 + $0x60] sm:$0xf] 0
        %4099 = vst [vmem:[#allocation2 + $0x64] sm:$0xf] 0
        %4100 = vst [vmem:[#allocation2 + $0x68] sm:$0xf] 0
        %4101 = vst [vmem:[#allocation2 + $0x6c] sm:$0xf] 0
        %4102 = vst [vmem:[#allocation2 + $0x70] sm:$0xf] 0
        %4103 = vst [vmem:[#allocation2 + $0x74] sm:$0xf] 0
        %4104 = vst [vmem:[#allocation2 + $0x78] sm:$0xf] 0
        %4105 = vst [vmem:[#allocation2 + $0x7c] sm:$0xf] 0
        %4106 = vst [vmem:[#allocation2 + $0x80] sm:$0xf] 0
        %4107 = vst [vmem:[#allocation2 + $0x84] sm:$0xf] 0
        %4108 = vst [vmem:[#allocation2 + $0x88] sm:$0xf] 0
        %4109 = vst [vmem:[#allocation2 + $0x8c] sm:$0xf] 0
        %4110 = vst [vmem:[#allocation2 + $0x90] sm:$0xf] 0
        %4111 = vst [vmem:[#allocation2 + $0x94] sm:$0xf] 0
        %4112 = vst [vmem:[#allocation2 + $0x98] sm:$0xf] 0
        %4113 = vst [vmem:[#allocation2 + $0x9c] sm:$0xf] 0
        %4114 = vst [vmem:[#allocation2 + $0xa0] sm:$0xf] 0
        %4115 = vst [vmem:[#allocation2 + $0xa4] sm:$0xf] 0
        %4116 = vst [vmem:[#allocation2 + $0xa8] sm:$0x7] 0
        %v4117 = vpack.c.bf16 %v4039, %v4038
        %v4118 = vpack.c.bf16 %v4041, %v4040
        %v4119 = vpack.c.bf16 %v4043, %v4042
        %v4120 = vpack.c.bf16 %v4045, %v4044
        %v4121 = vpack.c.bf16 %v4047, %v4046
        %v4122 = vpack.c.bf16 %v4049, %v4048
        %v4123 = vpack.c.bf16 %v4051, %v4050
        %v4124 = vpack.c.bf16 %v4053, %v4052
        %v4125 = vpack.c.bf16 %v4055, %v4054
        %v4126 = vpack.c.bf16 %v4057, %v4056
        %v4127 = vpack.c.bf16 %v4059, %v4058
        %v4128 = vpack.c.bf16 %v4061, %v4060
        %v4129 = vpack.c.bf16 %v4063, %v4062
        %v4130 = vpack.c.bf16 %v4065, %v4064
        %v4131 = vpack.c.bf16 %v4067, %v4066
        %v4132 = vpack.c.bf16 %v4069, %v4068
        %v4133 = vpack.c.bf16 %v4071, %v4070
        %v4134 = vpack.c.bf16 %v4073, %v4072
        %v4153 = vunpack.c.l.b16 %v4117
        %v4154 = vunpack.c.h.b16 %v4117
        %v4155 = vunpack.c.l.b16 %v4118
        %v4156 = vunpack.c.h.b16 %v4118
        %v4157 = vunpack.c.l.b16 %v4119
        %v4158 = vunpack.c.h.b16 %v4119
        %v4159 = vunpack.c.l.b16 %v4120
        %v4160 = vunpack.c.h.b16 %v4120
        %v4161 = vunpack.c.l.b16 %v4121
        %v4162 = vunpack.c.h.b16 %v4121
        %v4163 = vunpack.c.l.b16 %v4122
        %v4164 = vunpack.c.h.b16 %v4122
        %v4165 = vunpack.c.l.b16 %v4123
        %v4166 = vunpack.c.h.b16 %v4123
        %v4167 = vunpack.c.l.b16 %v4124
        %v4168 = vunpack.c.h.b16 %v4124
        %v4169 = vunpack.c.l.b16 %v4125
        %v4170 = vunpack.c.h.b16 %v4125
        %v4171 = vunpack.c.l.b16 %v4126
        %v4172 = vunpack.c.h.b16 %v4126
        %v4173 = vunpack.c.l.b16 %v4127
        %v4174 = vunpack.c.h.b16 %v4127
        %v4175 = vunpack.c.l.b16 %v4128
        %v4176 = vunpack.c.h.b16 %v4128
        %v4177 = vunpack.c.l.b16 %v4129
        %v4178 = vunpack.c.h.b16 %v4129
        %v4179 = vunpack.c.l.b16 %v4130
        %v4180 = vunpack.c.h.b16 %v4130
        %v4181 = vunpack.c.l.b16 %v4131
        %v4182 = vunpack.c.h.b16 %v4131
        %v4183 = vunpack.c.l.b16 %v4132
        %v4184 = vunpack.c.h.b16 %v4132
        %v4185 = vunpack.c.l.b16 %v4133
        %v4186 = vunpack.c.h.b16 %v4133
        %v4187 = vunpack.c.l.b16 %v4134
        %v4188 = vunpack.c.h.b16 %v4134
        %v4189 = vpack.c.b16 %v4153, %v4153
        %v4190 = vpack.c.b16 %v4154, %v4154
        %v4191 = vpack.c.b16 %v4155, %v4155
        %v4192 = vpack.c.b16 %v4156, %v4156
        %v4193 = vpack.c.b16 %v4157, %v4157
        %v4194 = vpack.c.b16 %v4158, %v4158
        %v4195 = vpack.c.b16 %v4159, %v4159
        %v4196 = vpack.c.b16 %v4160, %v4160
        %v4197 = vpack.c.b16 %v4161, %v4161
        %v4198 = vpack.c.b16 %v4162, %v4162
        %v4199 = vpack.c.b16 %v4163, %v4163
        %v4200 = vpack.c.b16 %v4164, %v4164
        %v4201 = vpack.c.b16 %v4165, %v4165
        %v4202 = vpack.c.b16 %v4166, %v4166
        %v4203 = vpack.c.b16 %v4167, %v4167
        %v4204 = vpack.c.b16 %v4168, %v4168
        %v4205 = vpack.c.b16 %v4169, %v4169
        %v4206 = vpack.c.b16 %v4170, %v4170
        %v4207 = vpack.c.b16 %v4171, %v4171
        %v4208 = vpack.c.b16 %v4172, %v4172
        %v4209 = vpack.c.b16 %v4173, %v4173
        %v4210 = vpack.c.b16 %v4174, %v4174
        %v4211 = vpack.c.b16 %v4175, %v4175
        %v4212 = vpack.c.b16 %v4176, %v4176
        %v4213 = vpack.c.b16 %v4177, %v4177
        %v4214 = vpack.c.b16 %v4178, %v4178
        %v4215 = vpack.c.b16 %v4179, %v4179
        %v4216 = vpack.c.b16 %v4180, %v4180
        %v4217 = vpack.c.b16 %v4181, %v4181
        %v4218 = vpack.c.b16 %v4182, %v4182
        %v4219 = vpack.c.b16 %v4183, %v4183
        %v4220 = vpack.c.b16 %v4184, %v4184
        %v4221 = vpack.c.b16 %v4185, %v4185
        %v4222 = vpack.c.b16 %v4186, %v4186
        %v4223 = vpack.c.b16 %v4187, %v4187
        %v4224 = vpack.c.b16 %v4188, %v4188
        %vm4225 = vsmask.f32 1280
        %vm4226 = vsmask.f32 5392
        %vm4227 = vmor %vm4225, %vm4226
        %v4229 = vshrl.u32 %v4189, 16
        %v4231 = vrot.slane %v4229, 6
        %v4232 = vshll.u32 %v4189, 16
        %v4234 = vrot.slane %v4232, 7
        %v4235 = vor.u32 %v4231, %v4234
        %v4236 = vrot.slane %v4235, 4
        %v4238 = vshrl.u32 %v4190, 16
        %v4240 = vrot.slane %v4238, 6
        %v4241 = vshll.u32 %v4190, 16
        %v4243 = vrot.slane %v4241, 7
        %v4244 = vor.u32 %v4240, %v4243
        %v4245 = vsel %vm4227, %v4236, %v4244
        %v4246 = vrot.slane %v4244, 4
        %v4248 = vshrl.u32 %v4191, 16
        %v4250 = vrot.slane %v4248, 6
        %v4251 = vshll.u32 %v4191, 16
        %v4253 = vrot.slane %v4251, 7
        %v4254 = vor.u32 %v4250, %v4253
        %v4255 = vsel %vm4227, %v4246, %v4254
        %v4256 = vrot.slane %v4254, 4
        %v4258 = vshrl.u32 %v4192, 16
        %v4260 = vrot.slane %v4258, 6
        %v4261 = vshll.u32 %v4192, 16
        %v4263 = vrot.slane %v4261, 7
        %v4264 = vor.u32 %v4260, %v4263
        %v4265 = vsel %vm4227, %v4256, %v4264
        %v4266 = vrot.slane %v4264, 4
        %v4268 = vshrl.u32 %v4193, 16
        %v4270 = vrot.slane %v4268, 6
        %v4271 = vshll.u32 %v4193, 16
        %v4273 = vrot.slane %v4271, 7
        %v4274 = vor.u32 %v4270, %v4273
        %v4275 = vsel %vm4227, %v4266, %v4274
        %v4276 = vrot.slane %v4274, 4
        %v4278 = vshrl.u32 %v4194, 16
        %v4280 = vrot.slane %v4278, 6
        %v4281 = vshll.u32 %v4194, 16
        %v4283 = vrot.slane %v4281, 7
        %v4284 = vor.u32 %v4280, %v4283
        %v4285 = vsel %vm4227, %v4276, %v4284
        %v4286 = vrot.slane %v4284, 4
        %v4288 = vshrl.u32 %v4195, 16
        %v4290 = vrot.slane %v4288, 6
        %v4291 = vshll.u32 %v4195, 16
        %v4293 = vrot.slane %v4291, 7
        %v4294 = vor.u32 %v4290, %v4293
        %v4295 = vsel %vm4227, %v4286, %v4294
        %v4296 = vrot.slane %v4294, 4
        %v4298 = vshrl.u32 %v4196, 16
        %v4300 = vrot.slane %v4298, 6
        %v4301 = vshll.u32 %v4196, 16
        %v4303 = vrot.slane %v4301, 7
        %v4304 = vor.u32 %v4300, %v4303
        %v4305 = vsel %vm4227, %v4296, %v4304
        %v4306 = vrot.slane %v4304, 4
        %v4308 = vshrl.u32 %v4197, 16
        %v4310 = vrot.slane %v4308, 6
        %v4311 = vshll.u32 %v4197, 16
        %v4313 = vrot.slane %v4311, 7
        %v4314 = vor.u32 %v4310, %v4313
        %v4315 = vsel %vm4227, %v4306, %v4314
        %v4316 = vrot.slane %v4314, 4
        %v4318 = vshrl.u32 %v4198, 16
        %v4320 = vrot.slane %v4318, 6
        %v4321 = vshll.u32 %v4198, 16
        %v4323 = vrot.slane %v4321, 7
        %v4324 = vor.u32 %v4320, %v4323
        %v4325 = vsel %vm4227, %v4316, %v4324
        %v4326 = vrot.slane %v4324, 4
        %v4328 = vshrl.u32 %v4199, 16
        %v4330 = vrot.slane %v4328, 6
        %v4331 = vshll.u32 %v4199, 16
        %v4333 = vrot.slane %v4331, 7
        %v4334 = vor.u32 %v4330, %v4333
        %v4335 = vsel %vm4227, %v4326, %v4334
        %v4336 = vrot.slane %v4334, 4
        %v4338 = vshrl.u32 %v4200, 16
        %v4340 = vrot.slane %v4338, 6
        %v4341 = vshll.u32 %v4200, 16
        %v4343 = vrot.slane %v4341, 7
        %v4344 = vor.u32 %v4340, %v4343
        %v4345 = vsel %vm4227, %v4336, %v4344
        %v4346 = vrot.slane %v4344, 4
        %v4348 = vshrl.u32 %v4201, 16
        %v4350 = vrot.slane %v4348, 6
        %v4351 = vshll.u32 %v4201, 16
        %v4353 = vrot.slane %v4351, 7
        %v4354 = vor.u32 %v4350, %v4353
        %v4355 = vsel %vm4227, %v4346, %v4354
        %v4356 = vrot.slane %v4354, 4
        %v4358 = vshrl.u32 %v4202, 16
        %v4360 = vrot.slane %v4358, 6
        %v4361 = vshll.u32 %v4202, 16
        %v4363 = vrot.slane %v4361, 7
        %v4364 = vor.u32 %v4360, %v4363
        %v4365 = vsel %vm4227, %v4356, %v4364
        %v4366 = vrot.slane %v4364, 4
        %v4368 = vshrl.u32 %v4203, 16
        %v4370 = vrot.slane %v4368, 6
        %v4371 = vshll.u32 %v4203, 16
        %v4373 = vrot.slane %v4371, 7
        %v4374 = vor.u32 %v4370, %v4373
        %v4375 = vsel %vm4227, %v4366, %v4374
        %v4376 = vrot.slane %v4374, 4
        %v4378 = vshrl.u32 %v4204, 16
        %v4380 = vrot.slane %v4378, 6
        %v4381 = vshll.u32 %v4204, 16
        %v4383 = vrot.slane %v4381, 7
        %v4384 = vor.u32 %v4380, %v4383
        %v4385 = vsel %vm4227, %v4376, %v4384
        %v4386 = vrot.slane %v4384, 4
        %v4388 = vshrl.u32 %v4205, 16
        %v4390 = vrot.slane %v4388, 6
        %v4391 = vshll.u32 %v4205, 16
        %v4393 = vrot.slane %v4391, 7
        %v4394 = vor.u32 %v4390, %v4393
        %v4395 = vsel %vm4227, %v4386, %v4394
        %v4396 = vrot.slane %v4394, 4
        %v4398 = vshrl.u32 %v4206, 16
        %v4400 = vrot.slane %v4398, 6
        %v4401 = vshll.u32 %v4206, 16
        %v4403 = vrot.slane %v4401, 7
        %v4404 = vor.u32 %v4400, %v4403
        %v4405 = vsel %vm4227, %v4396, %v4404
        %v4406 = vrot.slane %v4404, 4
        %v4408 = vshrl.u32 %v4207, 16
        %v4410 = vrot.slane %v4408, 6
        %v4411 = vshll.u32 %v4207, 16
        %v4413 = vrot.slane %v4411, 7
        %v4414 = vor.u32 %v4410, %v4413
        %v4415 = vsel %vm4227, %v4406, %v4414
        %v4416 = vrot.slane %v4414, 4
        %v4418 = vshrl.u32 %v4208, 16
        %v4420 = vrot.slane %v4418, 6
        %v4421 = vshll.u32 %v4208, 16
        %v4423 = vrot.slane %v4421, 7
        %v4424 = vor.u32 %v4420, %v4423
        %v4425 = vsel %vm4227, %v4416, %v4424
        %v4426 = vrot.slane %v4424, 4
        %v4428 = vshrl.u32 %v4209, 16
        %v4430 = vrot.slane %v4428, 6
        %v4431 = vshll.u32 %v4209, 16
        %v4433 = vrot.slane %v4431, 7
        %v4434 = vor.u32 %v4430, %v4433
        %v4435 = vsel %vm4227, %v4426, %v4434
        %v4436 = vrot.slane %v4434, 4
        %v4438 = vshrl.u32 %v4210, 16
        %v4440 = vrot.slane %v4438, 6
        %v4441 = vshll.u32 %v4210, 16
        %v4443 = vrot.slane %v4441, 7
        %v4444 = vor.u32 %v4440, %v4443
        %v4445 = vsel %vm4227, %v4436, %v4444
        %v4446 = vrot.slane %v4444, 4
        %v4448 = vshrl.u32 %v4211, 16
        %v4450 = vrot.slane %v4448, 6
        %v4451 = vshll.u32 %v4211, 16
        %v4453 = vrot.slane %v4451, 7
        %v4454 = vor.u32 %v4450, %v4453
        %v4455 = vsel %vm4227, %v4446, %v4454
        %v4456 = vrot.slane %v4454, 4
        %v4458 = vshrl.u32 %v4212, 16
        %v4460 = vrot.slane %v4458, 6
        %v4461 = vshll.u32 %v4212, 16
        %v4463 = vrot.slane %v4461, 7
        %v4464 = vor.u32 %v4460, %v4463
        %v4465 = vsel %vm4227, %v4456, %v4464
        %v4466 = vrot.slane %v4464, 4
        %v4468 = vshrl.u32 %v4213, 16
        %v4470 = vrot.slane %v4468, 6
        %v4471 = vshll.u32 %v4213, 16
        %v4473 = vrot.slane %v4471, 7
        %v4474 = vor.u32 %v4470, %v4473
        %v4475 = vsel %vm4227, %v4466, %v4474
        %v4476 = vrot.slane %v4474, 4
        %v4478 = vshrl.u32 %v4214, 16
        %v4480 = vrot.slane %v4478, 6
        %v4481 = vshll.u32 %v4214, 16
        %v4483 = vrot.slane %v4481, 7
        %v4484 = vor.u32 %v4480, %v4483
        %v4485 = vsel %vm4227, %v4476, %v4484
        %v4486 = vrot.slane %v4484, 4
        %v4488 = vshrl.u32 %v4215, 16
        %v4490 = vrot.slane %v4488, 6
        %v4491 = vshll.u32 %v4215, 16
        %v4493 = vrot.slane %v4491, 7
        %v4494 = vor.u32 %v4490, %v4493
        %v4495 = vsel %vm4227, %v4486, %v4494
        %v4496 = vrot.slane %v4494, 4
        %v4498 = vshrl.u32 %v4216, 16
        %v4500 = vrot.slane %v4498, 6
        %v4501 = vshll.u32 %v4216, 16
        %v4503 = vrot.slane %v4501, 7
        %v4504 = vor.u32 %v4500, %v4503
        %v4505 = vsel %vm4227, %v4496, %v4504
        %v4506 = vrot.slane %v4504, 4
        %v4508 = vshrl.u32 %v4217, 16
        %v4510 = vrot.slane %v4508, 6
        %v4511 = vshll.u32 %v4217, 16
        %v4513 = vrot.slane %v4511, 7
        %v4514 = vor.u32 %v4510, %v4513
        %v4515 = vsel %vm4227, %v4506, %v4514
        %v4516 = vrot.slane %v4514, 4
        %v4518 = vshrl.u32 %v4218, 16
        %v4520 = vrot.slane %v4518, 6
        %v4521 = vshll.u32 %v4218, 16
        %v4523 = vrot.slane %v4521, 7
        %v4524 = vor.u32 %v4520, %v4523
        %v4525 = vsel %vm4227, %v4516, %v4524
        %v4526 = vrot.slane %v4524, 4
        %v4528 = vshrl.u32 %v4219, 16
        %v4530 = vrot.slane %v4528, 6
        %v4531 = vshll.u32 %v4219, 16
        %v4533 = vrot.slane %v4531, 7
        %v4534 = vor.u32 %v4530, %v4533
        %v4535 = vsel %vm4227, %v4526, %v4534
        %v4536 = vrot.slane %v4534, 4
        %v4538 = vshrl.u32 %v4220, 16
        %v4540 = vrot.slane %v4538, 6
        %v4541 = vshll.u32 %v4220, 16
        %v4543 = vrot.slane %v4541, 7
        %v4544 = vor.u32 %v4540, %v4543
        %v4545 = vsel %vm4227, %v4536, %v4544
        %v4546 = vrot.slane %v4544, 4
        %v4548 = vshrl.u32 %v4221, 16
        %v4550 = vrot.slane %v4548, 6
        %v4551 = vshll.u32 %v4221, 16
        %v4553 = vrot.slane %v4551, 7
        %v4554 = vor.u32 %v4550, %v4553
        %v4555 = vsel %vm4227, %v4546, %v4554
        %v4556 = vrot.slane %v4554, 4
        %v4558 = vshrl.u32 %v4222, 16
        %v4560 = vrot.slane %v4558, 6
        %v4561 = vshll.u32 %v4222, 16
        %v4563 = vrot.slane %v4561, 7
        %v4564 = vor.u32 %v4560, %v4563
        %v4565 = vsel %vm4227, %v4556, %v4564
        %v4566 = vrot.slane %v4564, 4
        %v4568 = vshrl.u32 %v4223, 16
        %v4570 = vrot.slane %v4568, 6
        %v4571 = vshll.u32 %v4223, 16
        %v4573 = vrot.slane %v4571, 7
        %v4574 = vor.u32 %v4570, %v4573
        %v4575 = vsel %vm4227, %v4566, %v4574
        %v4576 = vrot.slane %v4574, 4
        %v4578 = vshrl.u32 %v4224, 16
        %v4580 = vrot.slane %v4578, 6
        %v4581 = vshll.u32 %v4224, 16
        %v4583 = vrot.slane %v4581, 7
        %v4584 = vor.u32 %v4580, %v4583
        %v4585 = vsel %vm4227, %v4576, %v4584
        %v4586 = vrot.slane %v4584, 4
        %vm4624 = vcmask 1043457
        %vm4625 = vsmask.f32 7942
        %vm4626 = vmand %vm4624, %vm4625
        %v4627 = vld [vmem:[#allocation2 + $0x8] sm:$0xe]
        %v4628 = vsel %vm4626, %v4235, %v4627
        %4629 = vst [vmem:[#allocation2 + $0x8] sm:$0xe] %v4628
        %4630 = vst [vmem:[#allocation2 + $0xc] sm:$0xf] %v4245
        %4631 = vst [vmem:[#allocation2 + $0x10] sm:$0xf] %v4255
        %4632 = vst [vmem:[#allocation2 + $0x14] sm:$0xf] %v4265
        %4633 = vst [vmem:[#allocation2 + $0x18] sm:$0xf] %v4275
        %4634 = vst [vmem:[#allocation2 + $0x1c] sm:$0xf] %v4285
        %4635 = vst [vmem:[#allocation2 + $0x20] sm:$0xf] %v4295
        %4636 = vst [vmem:[#allocation2 + $0x24] sm:$0xf] %v4305
        %4637 = vst [vmem:[#allocation2 + $0x28] sm:$0xf] %v4315
        %4638 = vst [vmem:[#allocation2 + $0x2c] sm:$0xf] %v4325
        %4639 = vst [vmem:[#allocation2 + $0x30] sm:$0xf] %v4335
        %4640 = vst [vmem:[#allocation2 + $0x34] sm:$0xf] %v4345
        %4641 = vst [vmem:[#allocation2 + $0x38] sm:$0xf] %v4355
        %4642 = vst [vmem:[#allocation2 + $0x3c] sm:$0xf] %v4365
        %4643 = vst [vmem:[#allocation2 + $0x40] sm:$0xf] %v4375
        %4644 = vst [vmem:[#allocation2 + $0x44] sm:$0xf] %v4385
        %4645 = vst [vmem:[#allocation2 + $0x48] sm:$0xf] %v4395
        %4646 = vst [vmem:[#allocation2 + $0x4c] sm:$0xf] %v4405
        %4647 = vst [vmem:[#allocation2 + $0x50] sm:$0xf] %v4415
        %4648 = vst [vmem:[#allocation2 + $0x54] sm:$0xf] %v4425
        %4649 = vst [vmem:[#allocation2 + $0x58] sm:$0xf] %v4435
        %4650 = vst [vmem:[#allocation2 + $0x5c] sm:$0xf] %v4445
        %4651 = vst [vmem:[#allocation2 + $0x60] sm:$0xf] %v4455
        %4652 = vst [vmem:[#allocation2 + $0x64] sm:$0xf] %v4465
        %4653 = vst [vmem:[#allocation2 + $0x68] sm:$0xf] %v4475
        %4654 = vst [vmem:[#allocation2 + $0x6c] sm:$0xf] %v4485
        %4655 = vst [vmem:[#allocation2 + $0x70] sm:$0xf] %v4495
        %4656 = vst [vmem:[#allocation2 + $0x74] sm:$0xf] %v4505
        %4657 = vst [vmem:[#allocation2 + $0x78] sm:$0xf] %v4515
        %4658 = vst [vmem:[#allocation2 + $0x7c] sm:$0xf] %v4525
        %4659 = vst [vmem:[#allocation2 + $0x80] sm:$0xf] %v4535
        %4660 = vst [vmem:[#allocation2 + $0x84] sm:$0xf] %v4545
        %4661 = vst [vmem:[#allocation2 + $0x88] sm:$0xf] %v4555
        %4662 = vst [vmem:[#allocation2 + $0x8c] sm:$0xf] %v4565
        %4663 = vst [vmem:[#allocation2 + $0x90] sm:$0xf] %v4575
        %4664 = vst [vmem:[#allocation2 + $0x94] sm:$0xf] %v4585
        %vm4665 = vcmask 1041408
        %vm4666 = vmand %vm4665, %vm4225
        %v4667 = vld [vmem:[#allocation2 + $0x98] sm:$0x3]
        %v4668 = vsel %vm4666, %v4586, %v4667
        %4669 = vst [vmem:[#allocation2 + $0x98] sm:$0x3] %v4668
        %v4670 = vld [vmem:[#allocation2] sm:$0xf]
        %v4671 = vld [vmem:[#allocation2 + $0x4] sm:$0xf]
        %v4672 = vld [vmem:[#allocation2 + $0x8] sm:$0xf]
        %v4673 = vld [vmem:[#allocation2 + $0xc] sm:$0xf]
        %v4674 = vld [vmem:[#allocation2 + $0x10] sm:$0xf]
        %v4675 = vld [vmem:[#allocation2 + $0x14] sm:$0xf]
        %v4676 = vld [vmem:[#allocation2 + $0x18] sm:$0xf]
        %v4677 = vld [vmem:[#allocation2 + $0x1c] sm:$0xf]
        %v4678 = vld [vmem:[#allocation2 + $0x20] sm:$0xf]
        %v4679 = vld [vmem:[#allocation2 + $0x24] sm:$0xf]
        %v4680 = vld [vmem:[#allocation2 + $0x28] sm:$0xf]
        %v4681 = vld [vmem:[#allocation2 + $0x2c] sm:$0xf]
        %v4682 = vld [vmem:[#allocation2 + $0x30] sm:$0xf]
        %v4683 = vld [vmem:[#allocation2 + $0x34] sm:$0xf]
        %v4684 = vld [vmem:[#allocation2 + $0x38] sm:$0xf]
        %v4685 = vld [vmem:[#allocation2 + $0x3c] sm:$0xf]
        %v4686 = vld [vmem:[#allocation2 + $0x40] sm:$0xf]
        %v4687 = vld [vmem:[#allocation2 + $0x44] sm:$0xf]
        %v4688 = vld [vmem:[#allocation2 + $0x48] sm:$0xf]
        %v4689 = vld [vmem:[#allocation2 + $0x4c] sm:$0xf]
        %v4690 = vld [vmem:[#allocation2 + $0x50] sm:$0xf]
        %v4691 = vld [vmem:[#allocation2 + $0x54] sm:$0xf]
        %v4692 = vld [vmem:[#allocation2 + $0x58] sm:$0xf]
        %v4693 = vld [vmem:[#allocation2 + $0x5c] sm:$0xf]
        %v4694 = vld [vmem:[#allocation2 + $0x60] sm:$0xf]
        %v4695 = vld [vmem:[#allocation2 + $0x64] sm:$0xf]
        %v4696 = vld [vmem:[#allocation2 + $0x68] sm:$0xf]
        %v4697 = vld [vmem:[#allocation2 + $0x6c] sm:$0xf]
        %v4698 = vld [vmem:[#allocation2 + $0x70] sm:$0xf]
        %v4699 = vld [vmem:[#allocation2 + $0x74] sm:$0xf]
        %v4700 = vld [vmem:[#allocation2 + $0x78] sm:$0xf]
        %v4701 = vld [vmem:[#allocation2 + $0x7c] sm:$0xf]
        %v4702 = vld [vmem:[#allocation2 + $0x80] sm:$0xf]
        %v4703 = vld [vmem:[#allocation2 + $0x84] sm:$0xf]
        %v4704 = vld [vmem:[#allocation2 + $0x88] sm:$0xf]
        %v4705 = vld [vmem:[#allocation2 + $0x8c] sm:$0xf]
        %v4706 = vld [vmem:[%s3] sm:$0xf]
        %v4707 = vld [vmem:[%s3 + $0x4] sm:$0xf]
        %v4708 = vld [vmem:[%s3 + $0x8] sm:$0xf]
        %v4709 = vld [vmem:[%s3 + $0xc] sm:$0xf]
        %v4710 = vld [vmem:[%s3 + $0x10] sm:$0xf]
        %v4711 = vld [vmem:[%s3 + $0x14] sm:$0xf]
        %v4712 = vld [vmem:[%s3 + $0x18] sm:$0xf]
        %v4713 = vld [vmem:[%s3 + $0x1c] sm:$0xf]
        %v4714 = vld [vmem:[%s3 + $0x20] sm:$0xf]
        %v4715 = vld [vmem:[%s3 + $0x24] sm:$0xf]
        %v4716 = vld [vmem:[%s3 + $0x28] sm:$0xf]
        %v4717 = vld [vmem:[%s3 + $0x2c] sm:$0xf]
        %v4718 = vld [vmem:[%s3 + $0x30] sm:$0xf]
        %v4719 = vld [vmem:[%s3 + $0x34] sm:$0xf]
        %v4720 = vld [vmem:[%s3 + $0x38] sm:$0xf]
        %v4721 = vld [vmem:[%s3 + $0x3c] sm:$0xf]
        %v4722 = vld [vmem:[#allocation2 + $0x90] sm:$0x1]
        %s4723 = scalar_lea.vmem %s3, 64
        %v4724 = vld [vmem:[%s4723] sm:$0xf]
        %v4725 = vld [vmem:[%s4723 + $0x4] sm:$0xf]
        %v4726 = vld [vmem:[%s4723 + $0x8] sm:$0xf]
        %v4727 = vld [vmem:[%s4723 + $0xc] sm:$0xf]
        %v4728 = vld [vmem:[%s4723 + $0x10] sm:$0xf]
        %v4729 = vld [vmem:[%s4723 + $0x14] sm:$0xf]
        %v4730 = vld [vmem:[%s4723 + $0x18] sm:$0xf]
        %v4731 = vld [vmem:[%s4723 + $0x1c] sm:$0xf]
        %v4732 = vld [vmem:[%s4723 + $0x20] sm:$0xf]
        %v4733 = vld [vmem:[%s4723 + $0x24] sm:$0xf]
        %v4734 = vld [vmem:[%s4723 + $0x28] sm:$0xf]
        %v4735 = vld [vmem:[%s4723 + $0x2c] sm:$0xf]
        %v4736 = vld [vmem:[%s4723 + $0x30] sm:$0xf]
        %v4737 = vld [vmem:[%s4723 + $0x34] sm:$0xf]
        %v4738 = vld [vmem:[%s4723 + $0x38] sm:$0xf]
        %v4739 = vld [vmem:[%s4723 + $0x3c] sm:$0xf]
        %v4777 = vunpack.c.l.b16 %v4670
        %v4778 = vunpack.c.l.b16 %v4671
        %v4779 = vunpack.c.l.b16 %v4672
        %v4780 = vunpack.c.l.b16 %v4673
        %v4781 = vunpack.c.l.b16 %v4674
        %v4782 = vunpack.c.l.b16 %v4675
        %v4783 = vunpack.c.l.b16 %v4676
        %v4784 = vunpack.c.l.b16 %v4677
        %v4785 = vunpack.c.l.b16 %v4678
        %v4786 = vunpack.c.l.b16 %v4679
        %v4787 = vunpack.c.l.b16 %v4680
        %v4788 = vunpack.c.l.b16 %v4681
        %v4789 = vunpack.c.l.b16 %v4682
        %v4790 = vunpack.c.l.b16 %v4683
        %v4791 = vunpack.c.l.b16 %v4684
        %v4792 = vunpack.c.l.b16 %v4685
        %v4793 = vunpack.c.l.b16 %v4686
        %v4794 = vunpack.c.l.b16 %v4687
        %v4795 = vunpack.c.l.b16 %v4688
        %v4796 = vunpack.c.l.b16 %v4689
        %v4797 = vunpack.c.l.b16 %v4690
        %v4798 = vunpack.c.l.b16 %v4691
        %v4799 = vunpack.c.l.b16 %v4692
        %v4800 = vunpack.c.l.b16 %v4693
        %v4801 = vunpack.c.l.b16 %v4694
        %v4802 = vunpack.c.l.b16 %v4695
        %v4803 = vunpack.c.l.b16 %v4696
        %v4804 = vunpack.c.l.b16 %v4697
        %v4805 = vunpack.c.l.b16 %v4698
        %v4806 = vunpack.c.l.b16 %v4699
        %v4807 = vunpack.c.l.b16 %v4700
        %v4808 = vunpack.c.l.b16 %v4701
        %v4809 = vunpack.c.l.b16 %v4702
        %v4810 = vunpack.c.l.b16 %v4703
        %v4811 = vunpack.c.l.b16 %v4704
        %v4812 = vunpack.c.l.b16 %v4705
        %v4813 = vunpack.c.l.b16 %v4722
        %v4814 = vpack.c.b16 %v4778, %v4777
        %v4815 = vpack.c.b16 %v4780, %v4779
        %v4816 = vpack.c.b16 %v4782, %v4781
        %v4817 = vpack.c.b16 %v4784, %v4783
        %v4818 = vpack.c.b16 %v4786, %v4785
        %v4819 = vpack.c.b16 %v4788, %v4787
        %v4820 = vpack.c.b16 %v4790, %v4789
        %v4821 = vpack.c.b16 %v4792, %v4791
        %v4822 = vpack.c.b16 %v4794, %v4793
        %v4823 = vpack.c.b16 %v4796, %v4795
        %v4824 = vpack.c.b16 %v4798, %v4797
        %v4825 = vpack.c.b16 %v4800, %v4799
        %v4826 = vpack.c.b16 %v4802, %v4801
        %v4827 = vpack.c.b16 %v4804, %v4803
        %v4828 = vpack.c.b16 %v4806, %v4805
        %v4829 = vpack.c.b16 %v4808, %v4807
        %v4830 = vpack.c.b16 %v4810, %v4809
        %v4831 = vpack.c.b16 %v4812, %v4811
        %v4832 = vpack.c.b16 %v4813, %v4813
        %v4834 = vshrl.u32 %v4814, 16
        %v4836 = vshll.u32 %v4814, 16
        %v4838 = vrot.slane %v4836, 1
        %v4839 = vor.u32 %v4834, %v4838
        %v4841 = vshll.u32 %v4815, 16
        %v4843 = vrot.slane %v4841, 1
        %v4844 = vsel %vm428, %v4839, %v4843
        %v4845 = vshrl.u32 %v4815, 16
        %v4847 = vor.u32 %v4845, %v4843
        %v4849 = vshll.u32 %v4816, 16
        %v4851 = vrot.slane %v4849, 1
        %v4852 = vsel %vm428, %v4847, %v4851
        %v4853 = vshrl.u32 %v4816, 16
        %v4855 = vor.u32 %v4853, %v4851
        %v4857 = vshll.u32 %v4817, 16
        %v4859 = vrot.slane %v4857, 1
        %v4860 = vsel %vm428, %v4855, %v4859
        %v4861 = vshrl.u32 %v4817, 16
        %v4863 = vor.u32 %v4861, %v4859
        %v4865 = vshll.u32 %v4818, 16
        %v4867 = vrot.slane %v4865, 1
        %v4868 = vsel %vm428, %v4863, %v4867
        %v4869 = vshrl.u32 %v4818, 16
        %v4871 = vor.u32 %v4869, %v4867
        %v4873 = vshll.u32 %v4819, 16
        %v4875 = vrot.slane %v4873, 1
        %v4876 = vsel %vm428, %v4871, %v4875
        %v4877 = vshrl.u32 %v4819, 16
        %v4879 = vor.u32 %v4877, %v4875
        %v4881 = vshll.u32 %v4820, 16
        %v4883 = vrot.slane %v4881, 1
        %v4884 = vsel %vm428, %v4879, %v4883
        %v4885 = vshrl.u32 %v4820, 16
        %v4887 = vor.u32 %v4885, %v4883
        %v4889 = vshll.u32 %v4821, 16
        %v4891 = vrot.slane %v4889, 1
        %v4892 = vsel %vm428, %v4887, %v4891
        %v4893 = vshrl.u32 %v4821, 16
        %v4895 = vor.u32 %v4893, %v4891
        %v4897 = vshll.u32 %v4822, 16
        %v4899 = vrot.slane %v4897, 1
        %v4900 = vsel %vm428, %v4895, %v4899
        %v4901 = vshrl.u32 %v4822, 16
        %v4903 = vor.u32 %v4901, %v4899
        %v4905 = vshll.u32 %v4823, 16
        %v4907 = vrot.slane %v4905, 1
        %v4908 = vsel %vm428, %v4903, %v4907
        %v4909 = vshrl.u32 %v4823, 16
        %v4911 = vor.u32 %v4909, %v4907
        %v4913 = vshll.u32 %v4824, 16
        %v4915 = vrot.slane %v4913, 1
        %v4916 = vsel %vm428, %v4911, %v4915
        %v4917 = vshrl.u32 %v4824, 16
        %v4919 = vor.u32 %v4917, %v4915
        %v4921 = vshll.u32 %v4825, 16
        %v4923 = vrot.slane %v4921, 1
        %v4924 = vsel %vm428, %v4919, %v4923
        %v4925 = vshrl.u32 %v4825, 16
        %v4927 = vor.u32 %v4925, %v4923
        %v4929 = vshll.u32 %v4826, 16
        %v4931 = vrot.slane %v4929, 1
        %v4932 = vsel %vm428, %v4927, %v4931
        %v4933 = vshrl.u32 %v4826, 16
        %v4935 = vor.u32 %v4933, %v4931
        %v4937 = vshll.u32 %v4827, 16
        %v4939 = vrot.slane %v4937, 1
        %v4940 = vsel %vm428, %v4935, %v4939
        %v4941 = vshrl.u32 %v4827, 16
        %v4943 = vor.u32 %v4941, %v4939
        %v4945 = vshll.u32 %v4828, 16
        %v4947 = vrot.slane %v4945, 1
        %v4948 = vsel %vm428, %v4943, %v4947
        %v4949 = vshrl.u32 %v4828, 16
        %v4951 = vor.u32 %v4949, %v4947
        %v4953 = vshll.u32 %v4829, 16
        %v4955 = vrot.slane %v4953, 1
        %v4956 = vsel %vm428, %v4951, %v4955
        %v4957 = vshrl.u32 %v4829, 16
        %v4959 = vor.u32 %v4957, %v4955
        %v4961 = vshll.u32 %v4830, 16
        %v4963 = vrot.slane %v4961, 1
        %v4964 = vsel %vm428, %v4959, %v4963
        %v4965 = vshrl.u32 %v4830, 16
        %v4967 = vor.u32 %v4965, %v4963
        %v4969 = vshll.u32 %v4831, 16
        %v4971 = vrot.slane %v4969, 1
        %v4972 = vsel %vm428, %v4967, %v4971
        %v4973 = vshrl.u32 %v4831, 16
        %v4975 = vor.u32 %v4973, %v4971
        %v4977 = vshll.u32 %v4832, 16
        %v4979 = vrot.slane %v4977, 1
        %v4980 = vsel %vm428, %v4975, %v4979
        %v5015 = vunpack.c.l.b16 %v4724
        %v5016 = vunpack.c.l.b16 %v4725
        %v5017 = vunpack.c.l.b16 %v4726
        %v5018 = vunpack.c.l.b16 %v4727
        %v5019 = vunpack.c.l.b16 %v4728
        %v5020 = vunpack.c.l.b16 %v4729
        %v5021 = vunpack.c.l.b16 %v4730
        %v5022 = vunpack.c.l.b16 %v4731
        %v5023 = vunpack.c.l.b16 %v4732
        %v5024 = vunpack.c.l.b16 %v4733
        %v5025 = vunpack.c.l.b16 %v4734
        %v5026 = vunpack.c.l.b16 %v4735
        %v5027 = vunpack.c.l.b16 %v4736
        %v5028 = vunpack.c.l.b16 %v4737
        %v5029 = vunpack.c.l.b16 %v4738
        %v5030 = vunpack.c.l.b16 %v4739
        %v5031 = vpack.c.b16 %v5016, %v5015
        %v5032 = vpack.c.b16 %v5018, %v5017
        %v5033 = vpack.c.b16 %v5020, %v5019
        %v5034 = vpack.c.b16 %v5022, %v5021
        %v5035 = vpack.c.b16 %v5024, %v5023
        %v5036 = vpack.c.b16 %v5026, %v5025
        %v5037 = vpack.c.b16 %v5028, %v5027
        %v5038 = vpack.c.b16 %v5030, %v5029
        %5047 = vmatprep.subr.bf16.mxu0 0
        %5048 = vmatpush1.bf16.msra.mxu0 %v5031
        %5049 = vmatprep.subr.bf16.mxu0 0
        %5050 = vmatpush1.bf16.msra.mxu0 %v5032
        %5051 = vmatprep.subr.bf16.mxu0 0
        %5052 = vmatpush1.bf16.msra.mxu0 %v5033
        %5053 = vmatprep.subr.bf16.mxu0 0
        %5054 = vmatpush1.bf16.msra.mxu0 %v5034
        %5055 = vmatprep.subr.bf16.mxu0 0
        %5056 = vmatpush1.bf16.msra.mxu0 %v5035
        %5057 = vmatprep.subr.bf16.mxu0 0
        %5058 = vmatpush1.bf16.msra.mxu0 %v5036
        %5059 = vmatprep.subr.bf16.mxu0 0
        %5060 = vmatpush1.bf16.msra.mxu0 %v5037
        %5061 = vmatprep.subr.bf16.mxu0 0
        %5062 = vmatpush1.bf16.msra.mxu0 %v5038
        %5063 = vmatprep.subr.bf16.mxu0 0
        %5064 = vmatpush1.bf16.msra.mxu0 0
        %5065 = vmatprep.subr.bf16.mxu0 0
        %5066 = vmatpush1.bf16.msra.mxu0 0
        %5067 = vmatprep.subr.bf16.mxu0 0
        %5068 = vmatpush1.bf16.msra.mxu0 0
        %5069 = vmatprep.subr.bf16.mxu0 0
        %5070 = vmatpush1.bf16.msra.mxu0 0
        %5071 = vmatprep.subr.bf16.mxu0 0
        %5072 = vmatpush1.bf16.msra.mxu0 0
        %5073 = vmatprep.subr.bf16.mxu0 0
        %5074 = vmatpush1.bf16.msra.mxu0 0
        %5075 = vmatprep.subr.bf16.mxu0 0
        %5076 = vmatpush1.bf16.msra.mxu0 0
        %5077 = vmatprep.subr.bf16.mxu0 0
        %5078 = vmatpush1.bf16.msra.mxu0 0
        %5079 = vmatprep.mubr.bf16.mxu0 0
        %5080 = vmatmul.mubr.bf16.gmra.mrb[0].mxu0 %v4844
        %v5081 = vpop.f32.mrb[0].mxu0
        %v5082 = vadd.f32 0.0, %v5081
        %v5083 = vpop.f32.mrb[0].mxu0
        %v5084 = vpop.f32.mrb[0].mxu0
        %v5085 = vadd.f32 0.0, %v5084
        %v5086 = vpop.f32.mrb[0].mxu0
        %5087 = vmatprep.mubr.bf16.mxu0 0
        %5088 = vmatmul.mubr.bf16.gmra.mrb[0].mxu0 %v4852
        %v5089 = vpop.f32.mrb[0].mxu0
        %v5090 = vadd.f32 0.0, %v5089
        %v5091 = vpop.f32.mrb[0].mxu0
        %v5092 = vpop.f32.mrb[0].mxu0
        %v5093 = vadd.f32 0.0, %v5092
        %v5094 = vpop.f32.mrb[0].mxu0
        %5095 = vmatprep.mubr.bf16.mxu0 0
        %5096 = vmatmul.mubr.bf16.gmra.mrb[0].mxu0 %v4860
        %v5097 = vpop.f32.mrb[0].mxu0
        %v5098 = vadd.f32 0.0, %v5097
        %v5099 = vpop.f32.mrb[0].mxu0
        %v5100 = vpop.f32.mrb[0].mxu0
        %v5101 = vadd.f32 0.0, %v5100
        %v5102 = vpop.f32.mrb[0].mxu0
        %5103 = vmatprep.mubr.bf16.mxu0 0
        %5104 = vmatmul.mubr.bf16.gmra.mrb[0].mxu0 %v4868
        %v5105 = vpop.f32.mrb[0].mxu0
        %v5106 = vadd.f32 0.0, %v5105
        %v5107 = vpop.f32.mrb[0].mxu0
        %v5108 = vpop.f32.mrb[0].mxu0
        %v5109 = vadd.f32 0.0, %v5108
        %v5110 = vpop.f32.mrb[0].mxu0
        %5111 = vmatprep.mubr.bf16.mxu0 0
        %5112 = vmatmul.mubr.bf16.gmra.mrb[0].mxu0 %v4876
        %v5113 = vpop.f32.mrb[0].mxu0
        %v5114 = vadd.f32 0.0, %v5113
        %v5115 = vpop.f32.mrb[0].mxu0
        %v5116 = vpop.f32.mrb[0].mxu0
        %v5117 = vadd.f32 0.0, %v5116
        %v5118 = vpop.f32.mrb[0].mxu0
        %5119 = vmatprep.mubr.bf16.mxu0 0
        %5120 = vmatmul.mubr.bf16.gmra.mrb[0].mxu0 %v4884
        %v5121 = vpop.f32.mrb[0].mxu0
        %v5122 = vadd.f32 0.0, %v5121
        %v5123 = vpop.f32.mrb[0].mxu0
        %v5124 = vpop.f32.mrb[0].mxu0
        %v5125 = vadd.f32 0.0, %v5124
        %v5126 = vpop.f32.mrb[0].mxu0
        %5127 = vmatprep.mubr.bf16.mxu0 0
        %5128 = vmatmul.mubr.bf16.gmra.mrb[0].mxu0 %v4892
        %v5129 = vpop.f32.mrb[0].mxu0
        %v5130 = vadd.f32 0.0, %v5129
        %v5131 = vpop.f32.mrb[0].mxu0
        %v5132 = vpop.f32.mrb[0].mxu0
        %v5133 = vadd.f32 0.0, %v5132
        %v5134 = vpop.f32.mrb[0].mxu0
        %5135 = vmatprep.mubr.bf16.mxu0 0
        %5136 = vmatmul.mubr.bf16.gmra.mrb[0].mxu0 %v4900
        %v5137 = vpop.f32.mrb[0].mxu0
        %v5138 = vadd.f32 0.0, %v5137
        %v5139 = vpop.f32.mrb[0].mxu0
        %v5140 = vpop.f32.mrb[0].mxu0
        %v5141 = vadd.f32 0.0, %v5140
        %v5142 = vpop.f32.mrb[0].mxu0
        %5143 = vmatprep.mubr.bf16.mxu0 0
        %5144 = vmatmul.mubr.bf16.gmra.mrb[0].mxu0 %v4908
        %v5145 = vpop.f32.mrb[0].mxu0
        %v5146 = vadd.f32 0.0, %v5145
        %v5147 = vpop.f32.mrb[0].mxu0
        %v5148 = vpop.f32.mrb[0].mxu0
        %v5149 = vadd.f32 0.0, %v5148
        %v5150 = vpop.f32.mrb[0].mxu0
        %5151 = vmatprep.mubr.bf16.mxu0 0
        %5152 = vmatmul.mubr.bf16.gmra.mrb[0].mxu0 %v4916
        %v5153 = vpop.f32.mrb[0].mxu0
        %v5154 = vadd.f32 0.0, %v5153
        %v5155 = vpop.f32.mrb[0].mxu0
        %v5156 = vpop.f32.mrb[0].mxu0
        %v5157 = vadd.f32 0.0, %v5156
        %v5158 = vpop.f32.mrb[0].mxu0
        %5159 = vmatprep.mubr.bf16.mxu0 0
        %5160 = vmatmul.mubr.bf16.gmra.mrb[0].mxu0 %v4924
        %v5161 = vpop.f32.mrb[0].mxu0
        %v5162 = vadd.f32 0.0, %v5161
        %v5163 = vpop.f32.mrb[0].mxu0
        %v5164 = vpop.f32.mrb[0].mxu0
        %v5165 = vadd.f32 0.0, %v5164
        %v5166 = vpop.f32.mrb[0].mxu0
        %5167 = vmatprep.mubr.bf16.mxu0 0
        %5168 = vmatmul.mubr.bf16.gmra.mrb[0].mxu0 %v4932
        %v5169 = vpop.f32.mrb[0].mxu0
        %v5170 = vadd.f32 0.0, %v5169
        %v5171 = vpop.f32.mrb[0].mxu0
        %v5172 = vpop.f32.mrb[0].mxu0
        %v5173 = vadd.f32 0.0, %v5172
        %v5174 = vpop.f32.mrb[0].mxu0
        %5175 = vmatprep.mubr.bf16.mxu0 0
        %5176 = vmatmul.mubr.bf16.gmra.mrb[0].mxu0 %v4940
        %v5177 = vpop.f32.mrb[0].mxu0
        %v5178 = vadd.f32 0.0, %v5177
        %v5179 = vpop.f32.mrb[0].mxu0
        %v5180 = vpop.f32.mrb[0].mxu0
        %v5181 = vadd.f32 0.0, %v5180
        %v5182 = vpop.f32.mrb[0].mxu0
        %5183 = vmatprep.mubr.bf16.mxu0 0
        %5184 = vmatmul.mubr.bf16.gmra.mrb[0].mxu0 %v4948
        %v5185 = vpop.f32.mrb[0].mxu0
        %v5186 = vadd.f32 0.0, %v5185
        %v5187 = vpop.f32.mrb[0].mxu0
        %v5188 = vpop.f32.mrb[0].mxu0
        %v5189 = vadd.f32 0.0, %v5188
        %v5190 = vpop.f32.mrb[0].mxu0
        %5191 = vmatprep.mubr.bf16.mxu0 0
        %5192 = vmatmul.mubr.bf16.gmra.mrb[0].mxu0 %v4956
        %v5193 = vpop.f32.mrb[0].mxu0
        %v5194 = vadd.f32 0.0, %v5193
        %v5195 = vpop.f32.mrb[0].mxu0
        %v5196 = vpop.f32.mrb[0].mxu0
        %v5197 = vadd.f32 0.0, %v5196
        %v5198 = vpop.f32.mrb[0].mxu0
        %5199 = vmatprep.mubr.bf16.mxu0 0
        %5200 = vmatmul.mubr.bf16.gmra.mrb[0].mxu0 %v4964
        %v5201 = vpop.f32.mrb[0].mxu0
        %v5202 = vadd.f32 0.0, %v5201
        %v5203 = vpop.f32.mrb[0].mxu0
        %v5204 = vpop.f32.mrb[0].mxu0
        %v5205 = vadd.f32 0.0, %v5204
        %v5206 = vpop.f32.mrb[0].mxu0
        %5207 = vmatprep.mubr.bf16.mxu0 0
        %5208 = vmatmul.mubr.bf16.gmra.mrb[0].mxu0 %v4972
        %v5209 = vpop.f32.mrb[0].mxu0
        %v5210 = vadd.f32 0.0, %v5209
        %v5211 = vpop.f32.mrb[0].mxu0
        %v5212 = vpop.f32.mrb[0].mxu0
        %v5213 = vadd.f32 0.0, %v5212
        %v5214 = vpop.f32.mrb[0].mxu0
        %5215 = vmatprep.mubr.bf16.mxu0 0
        %5216 = vmatmul.mubr.bf16.gmra.mrb[0].mxu0 %v4980
        %v5217 = vpop.f32.mrb[0].mxu0
        %v5218 = vadd.f32 0.0, %v5217
        %v5219 = vpop.f32.mrb[0].mxu0
        %v5220 = vpop.f32.mrb[0].mxu0
        %v5221 = vadd.f32 0.0, %v5220
        %v5222 = vpop.f32.mrb[0].mxu0
        %5223 = vdwg.mxu0
        %v5258 = vunpack.c.l.b16 %v4706
        %v5259 = vunpack.c.l.b16 %v4707
        %v5260 = vunpack.c.l.b16 %v4708
        %v5261 = vunpack.c.l.b16 %v4709
        %v5262 = vunpack.c.l.b16 %v4710
        %v5263 = vunpack.c.l.b16 %v4711
        %v5264 = vunpack.c.l.b16 %v4712
        %v5265 = vunpack.c.l.b16 %v4713
        %v5266 = vunpack.c.l.b16 %v4714
        %v5267 = vunpack.c.l.b16 %v4715
        %v5268 = vunpack.c.l.b16 %v4716
        %v5269 = vunpack.c.l.b16 %v4717
        %v5270 = vunpack.c.l.b16 %v4718
        %v5271 = vunpack.c.l.b16 %v4719
        %v5272 = vunpack.c.l.b16 %v4720
        %v5273 = vunpack.c.l.b16 %v4721
        %v5274 = vpack.c.b16 %v5259, %v5258
        %v5275 = vpack.c.b16 %v5261, %v5260
        %v5276 = vpack.c.b16 %v5263, %v5262
        %v5277 = vpack.c.b16 %v5265, %v5264
        %v5278 = vpack.c.b16 %v5267, %v5266
        %v5279 = vpack.c.b16 %v5269, %v5268
        %v5280 = vpack.c.b16 %v5271, %v5270
        %v5281 = vpack.c.b16 %v5273, %v5272
        %5290 = vmatprep.subr.bf16.mxu0 0
        %5291 = vmatpush1.bf16.msra.mxu0 %v5274
        %5292 = vmatprep.subr.bf16.mxu0 0
        %5293 = vmatpush1.bf16.msra.mxu0 %v5275
        %5294 = vmatprep.subr.bf16.mxu0 0
        %5295 = vmatpush1.bf16.msra.mxu0 %v5276
        %5296 = vmatprep.subr.bf16.mxu0 0
        %5297 = vmatpush1.bf16.msra.mxu0 %v5277
        %5298 = vmatprep.subr.bf16.mxu0 0
        %5299 = vmatpush1.bf16.msra.mxu0 %v5278
        %5300 = vmatprep.subr.bf16.mxu0 0
        %5301 = vmatpush1.bf16.msra.mxu0 %v5279
        %5302 = vmatprep.subr.bf16.mxu0 0
        %5303 = vmatpush1.bf16.msra.mxu0 %v5280
        %5304 = vmatprep.subr.bf16.mxu0 0
        %5305 = vmatpush1.bf16.msra.mxu0 %v5281
        %5306 = vmatprep.subr.bf16.mxu0 0
        %5307 = vmatpush1.bf16.msra.mxu0 0
        %5308 = vmatprep.subr.bf16.mxu0 0
        %5309 = vmatpush1.bf16.msra.mxu0 0
        %5310 = vmatprep.subr.bf16.mxu0 0
        %5311 = vmatpush1.bf16.msra.mxu0 0
        %5312 = vmatprep.subr.bf16.mxu0 0
        %5313 = vmatpush1.bf16.msra.mxu0 0
        %5314 = vmatprep.subr.bf16.mxu0 0
        %5315 = vmatpush1.bf16.msra.mxu0 0
        %5316 = vmatprep.subr.bf16.mxu0 0
        %5317 = vmatpush1.bf16.msra.mxu0 0
        %5318 = vmatprep.subr.bf16.mxu0 0
        %5319 = vmatpush1.bf16.msra.mxu0 0
        %5320 = vmatprep.subr.bf16.mxu0 0
        %5321 = vmatpush1.bf16.msra.mxu0 0
        %5322 = vmatprep.mubr.bf16.mxu0 0
        %5323 = vmatmul.mubr.bf16.gmra.mrb[0].mxu0 %v4814
        %v5324 = vpop.f32.mrb[0].mxu0
        %v5325 = vadd.f32 %v5082, %v5324
        %v5326 = vpop.f32.mrb[0].mxu0
        %v5327 = vpop.f32.mrb[0].mxu0
        %v5328 = vadd.f32 %v5085, %v5327
        %v5329 = vpop.f32.mrb[0].mxu0
        %5330 = vmatprep.mubr.bf16.mxu0 0
        %5331 = vmatmul.mubr.bf16.gmra.mrb[0].mxu0 %v4815
        %v5332 = vpop.f32.mrb[0].mxu0
        %v5333 = vadd.f32 %v5090, %v5332
        %v5334 = vpop.f32.mrb[0].mxu0
        %v5335 = vpop.f32.mrb[0].mxu0
        %v5336 = vadd.f32 %v5093, %v5335
        %v5337 = vpop.f32.mrb[0].mxu0
        %5338 = vmatprep.mubr.bf16.mxu0 0
        %5339 = vmatmul.mubr.bf16.gmra.mrb[0].mxu0 %v4816
        %v5340 = vpop.f32.mrb[0].mxu0
        %v5341 = vadd.f32 %v5098, %v5340
        %v5342 = vpop.f32.mrb[0].mxu0
        %v5343 = vpop.f32.mrb[0].mxu0
        %v5344 = vadd.f32 %v5101, %v5343
        %v5345 = vpop.f32.mrb[0].mxu0
        %5346 = vmatprep.mubr.bf16.mxu0 0
        %5347 = vmatmul.mubr.bf16.gmra.mrb[0].mxu0 %v4817
        %v5348 = vpop.f32.mrb[0].mxu0
        %v5349 = vadd.f32 %v5106, %v5348
        %v5350 = vpop.f32.mrb[0].mxu0
        %v5351 = vpop.f32.mrb[0].mxu0
        %v5352 = vadd.f32 %v5109, %v5351
        %v5353 = vpop.f32.mrb[0].mxu0
        %5354 = vmatprep.mubr.bf16.mxu0 0
        %5355 = vmatmul.mubr.bf16.gmra.mrb[0].mxu0 %v4818
        %v5356 = vpop.f32.mrb[0].mxu0
        %v5357 = vadd.f32 %v5114, %v5356
        %v5358 = vpop.f32.mrb[0].mxu0
        %v5359 = vpop.f32.mrb[0].mxu0
        %v5360 = vadd.f32 %v5117, %v5359
        %v5361 = vpop.f32.mrb[0].mxu0
        %5362 = vmatprep.mubr.bf16.mxu0 0
        %5363 = vmatmul.mubr.bf16.gmra.mrb[0].mxu0 %v4819
        %v5364 = vpop.f32.mrb[0].mxu0
        %v5365 = vadd.f32 %v5122, %v5364
        %v5366 = vpop.f32.mrb[0].mxu0
        %v5367 = vpop.f32.mrb[0].mxu0
        %v5368 = vadd.f32 %v5125, %v5367
        %v5369 = vpop.f32.mrb[0].mxu0
        %5370 = vmatprep.mubr.bf16.mxu0 0
        %5371 = vmatmul.mubr.bf16.gmra.mrb[0].mxu0 %v4820
        %v5372 = vpop.f32.mrb[0].mxu0
        %v5373 = vadd.f32 %v5130, %v5372
        %v5374 = vpop.f32.mrb[0].mxu0
        %v5375 = vpop.f32.mrb[0].mxu0
        %v5376 = vadd.f32 %v5133, %v5375
        %v5377 = vpop.f32.mrb[0].mxu0
        %5378 = vmatprep.mubr.bf16.mxu0 0
        %5379 = vmatmul.mubr.bf16.gmra.mrb[0].mxu0 %v4821
        %v5380 = vpop.f32.mrb[0].mxu0
        %v5381 = vadd.f32 %v5138, %v5380
        %v5382 = vpop.f32.mrb[0].mxu0
        %v5383 = vpop.f32.mrb[0].mxu0
        %v5384 = vadd.f32 %v5141, %v5383
        %v5385 = vpop.f32.mrb[0].mxu0
        %5386 = vmatprep.mubr.bf16.mxu0 0
        %5387 = vmatmul.mubr.bf16.gmra.mrb[0].mxu0 %v4822
        %v5388 = vpop.f32.mrb[0].mxu0
        %v5389 = vadd.f32 %v5146, %v5388
        %v5390 = vpop.f32.mrb[0].mxu0
        %v5391 = vpop.f32.mrb[0].mxu0
        %v5392 = vadd.f32 %v5149, %v5391
        %v5393 = vpop.f32.mrb[0].mxu0
        %5394 = vmatprep.mubr.bf16.mxu0 0
        %5395 = vmatmul.mubr.bf16.gmra.mrb[0].mxu0 %v4823
        %v5396 = vpop.f32.mrb[0].mxu0
        %v5397 = vadd.f32 %v5154, %v5396
        %v5398 = vpop.f32.mrb[0].mxu0
        %v5399 = vpop.f32.mrb[0].mxu0
        %v5400 = vadd.f32 %v5157, %v5399
        %v5401 = vpop.f32.mrb[0].mxu0
        %5402 = vmatprep.mubr.bf16.mxu0 0
        %5403 = vmatmul.mubr.bf16.gmra.mrb[0].mxu0 %v4824
        %v5404 = vpop.f32.mrb[0].mxu0
        %v5405 = vadd.f32 %v5162, %v5404
        %v5406 = vpop.f32.mrb[0].mxu0
        %v5407 = vpop.f32.mrb[0].mxu0
        %v5408 = vadd.f32 %v5165, %v5407
        %v5409 = vpop.f32.mrb[0].mxu0
        %5410 = vmatprep.mubr.bf16.mxu0 0
        %5411 = vmatmul.mubr.bf16.gmra.mrb[0].mxu0 %v4825
        %v5412 = vpop.f32.mrb[0].mxu0
        %v5413 = vadd.f32 %v5170, %v5412
        %v5414 = vpop.f32.mrb[0].mxu0
        %v5415 = vpop.f32.mrb[0].mxu0
        %v5416 = vadd.f32 %v5173, %v5415
        %v5417 = vpop.f32.mrb[0].mxu0
        %5418 = vmatprep.mubr.bf16.mxu0 0
        %5419 = vmatmul.mubr.bf16.gmra.mrb[0].mxu0 %v4826
        %v5420 = vpop.f32.mrb[0].mxu0
        %v5421 = vadd.f32 %v5178, %v5420
        %v5422 = vpop.f32.mrb[0].mxu0
        %v5423 = vpop.f32.mrb[0].mxu0
        %v5424 = vadd.f32 %v5181, %v5423
        %v5425 = vpop.f32.mrb[0].mxu0
        %5426 = vmatprep.mubr.bf16.mxu0 0
        %5427 = vmatmul.mubr.bf16.gmra.mrb[0].mxu0 %v4827
        %v5428 = vpop.f32.mrb[0].mxu0
        %v5429 = vadd.f32 %v5186, %v5428
        %v5430 = vpop.f32.mrb[0].mxu0
        %v5431 = vpop.f32.mrb[0].mxu0
        %v5432 = vadd.f32 %v5189, %v5431
        %v5433 = vpop.f32.mrb[0].mxu0
        %5434 = vmatprep.mubr.bf16.mxu0 0
        %5435 = vmatmul.mubr.bf16.gmra.mrb[0].mxu0 %v4828
        %v5436 = vpop.f32.mrb[0].mxu0
        %v5437 = vadd.f32 %v5194, %v5436
        %v5438 = vpop.f32.mrb[0].mxu0
        %v5439 = vpop.f32.mrb[0].mxu0
        %v5440 = vadd.f32 %v5197, %v5439
        %v5441 = vpop.f32.mrb[0].mxu0
        %5442 = vmatprep.mubr.bf16.mxu0 0
        %5443 = vmatmul.mubr.bf16.gmra.mrb[0].mxu0 %v4829
        %v5444 = vpop.f32.mrb[0].mxu0
        %v5445 = vadd.f32 %v5202, %v5444
        %v5446 = vpop.f32.mrb[0].mxu0
        %v5447 = vpop.f32.mrb[0].mxu0
        %v5448 = vadd.f32 %v5205, %v5447
        %v5449 = vpop.f32.mrb[0].mxu0
        %5450 = vmatprep.mubr.bf16.mxu0 0
        %5451 = vmatmul.mubr.bf16.gmra.mrb[0].mxu0 %v4830
        %v5452 = vpop.f32.mrb[0].mxu0
        %v5453 = vadd.f32 %v5210, %v5452
        %v5454 = vpop.f32.mrb[0].mxu0
        %v5455 = vpop.f32.mrb[0].mxu0
        %v5456 = vadd.f32 %v5213, %v5455
        %v5457 = vpop.f32.mrb[0].mxu0
        %5458 = vmatprep.mubr.bf16.mxu0 0
        %5459 = vmatmul.mubr.bf16.gmra.mrb[0].mxu0 %v4831
        %v5460 = vpop.f32.mrb[0].mxu0
        %v5461 = vadd.f32 %v5218, %v5460
        %v5462 = vpop.f32.mrb[0].mxu0
        %v5463 = vpop.f32.mrb[0].mxu0
        %v5464 = vadd.f32 %v5221, %v5463
        %v5465 = vpop.f32.mrb[0].mxu0
        %5466 = vdwg.mxu0
        %v5467 = vld [vmem:[#allocation2] sm:$0xe]
        %s5468 = scalar_lea.vmem %s3, 128
        %v5469 = vld [vmem:[%s5468] sm:$0xf]
        %v5470 = vld [vmem:[%s5468 + $0x4] sm:$0xf]
        %v5471 = vld [vmem:[%s5468 + $0x8] sm:$0xf]
        %v5472 = vld [vmem:[%s5468 + $0xc] sm:$0xf]
        %v5473 = vld [vmem:[%s5468 + $0x10] sm:$0xf]
        %v5474 = vld [vmem:[%s5468 + $0x14] sm:$0xf]
        %v5475 = vld [vmem:[%s5468 + $0x18] sm:$0xf]
        %v5476 = vld [vmem:[%s5468 + $0x1c] sm:$0xf]
        %v5477 = vld [vmem:[%s5468 + $0x20] sm:$0xf]
        %v5478 = vld [vmem:[%s5468 + $0x24] sm:$0xf]
        %v5479 = vld [vmem:[%s5468 + $0x28] sm:$0xf]
        %v5480 = vld [vmem:[%s5468 + $0x2c] sm:$0xf]
        %v5481 = vld [vmem:[%s5468 + $0x30] sm:$0xf]
        %v5482 = vld [vmem:[%s5468 + $0x34] sm:$0xf]
        %v5483 = vld [vmem:[%s5468 + $0x38] sm:$0xf]
        %v5484 = vld [vmem:[%s5468 + $0x3c] sm:$0xf]
        %v5486 = vunpack.c.l.b16 %v5467
        %v5487 = vpack.c.b16 %v4778, %v5486
        %v5488 = vrot.slane %v5487, 1
        %v5489 = vrot.slane %v4815, 1
        %v5490 = vsel %vm1035, %v5488, %v5489
        %v5491 = vrot.slane %v4816, 1
        %v5492 = vsel %vm1035, %v5489, %v5491
        %v5493 = vrot.slane %v4817, 1
        %v5494 = vsel %vm1035, %v5491, %v5493
        %v5495 = vrot.slane %v4818, 1
        %v5496 = vsel %vm1035, %v5493, %v5495
        %v5497 = vrot.slane %v4819, 1
        %v5498 = vsel %vm1035, %v5495, %v5497
        %v5499 = vrot.slane %v4820, 1
        %v5500 = vsel %vm1035, %v5497, %v5499
        %v5501 = vrot.slane %v4821, 1
        %v5502 = vsel %vm1035, %v5499, %v5501
        %v5503 = vrot.slane %v4822, 1
        %v5504 = vsel %vm1035, %v5501, %v5503
        %v5505 = vrot.slane %v4823, 1
        %v5506 = vsel %vm1035, %v5503, %v5505
        %v5507 = vrot.slane %v4824, 1
        %v5508 = vsel %vm1035, %v5505, %v5507
        %v5509 = vrot.slane %v4825, 1
        %v5510 = vsel %vm1035, %v5507, %v5509
        %v5511 = vrot.slane %v4826, 1
        %v5512 = vsel %vm1035, %v5509, %v5511
        %v5513 = vrot.slane %v4827, 1
        %v5514 = vsel %vm1035, %v5511, %v5513
        %v5515 = vrot.slane %v4828, 1
        %v5516 = vsel %vm1035, %v5513, %v5515
        %v5517 = vrot.slane %v4829, 1
        %v5518 = vsel %vm1035, %v5515, %v5517
        %v5519 = vrot.slane %v4830, 1
        %v5520 = vsel %vm1035, %v5517, %v5519
        %v5521 = vrot.slane %v4831, 1
        %v5522 = vsel %vm1035, %v5519, %v5521
        %v5523 = vrot.slane %v4832, 1
        %v5524 = vsel %vm1035, %v5521, %v5523
        %v5559 = vunpack.c.l.b16 %v5469
        %v5560 = vunpack.c.l.b16 %v5470
        %v5561 = vunpack.c.l.b16 %v5471
        %v5562 = vunpack.c.l.b16 %v5472
        %v5563 = vunpack.c.l.b16 %v5473
        %v5564 = vunpack.c.l.b16 %v5474
        %v5565 = vunpack.c.l.b16 %v5475
        %v5566 = vunpack.c.l.b16 %v5476
        %v5567 = vunpack.c.l.b16 %v5477
        %v5568 = vunpack.c.l.b16 %v5478
        %v5569 = vunpack.c.l.b16 %v5479
        %v5570 = vunpack.c.l.b16 %v5480
        %v5571 = vunpack.c.l.b16 %v5481
        %v5572 = vunpack.c.l.b16 %v5482
        %v5573 = vunpack.c.l.b16 %v5483
        %v5574 = vunpack.c.l.b16 %v5484
        %v5575 = vpack.c.b16 %v5560, %v5559
        %v5576 = vpack.c.b16 %v5562, %v5561
        %v5577 = vpack.c.b16 %v5564, %v5563
        %v5578 = vpack.c.b16 %v5566, %v5565
        %v5579 = vpack.c.b16 %v5568, %v5567
        %v5580 = vpack.c.b16 %v5570, %v5569
        %v5581 = vpack.c.b16 %v5572, %v5571
        %v5582 = vpack.c.b16 %v5574, %v5573
        %5591 = vmatprep.subr.bf16.mxu0 0
        %5592 = vmatpush1.bf16.msra.mxu0 %v5575
        %5593 = vmatprep.subr.bf16.mxu0 0
        %5594 = vmatpush1.bf16.msra.mxu0 %v5576
        %5595 = vmatprep.subr.bf16.mxu0 0
        %5596 = vmatpush1.bf16.msra.mxu0 %v5577
        %5597 = vmatprep.subr.bf16.mxu0 0
        %5598 = vmatpush1.bf16.msra.mxu0 %v5578
        %5599 = vmatprep.subr.bf16.mxu0 0
        %5600 = vmatpush1.bf16.msra.mxu0 %v5579
        %5601 = vmatprep.subr.bf16.mxu0 0
        %5602 = vmatpush1.bf16.msra.mxu0 %v5580
        %5603 = vmatprep.subr.bf16.mxu0 0
        %5604 = vmatpush1.bf16.msra.mxu0 %v5581
        %5605 = vmatprep.subr.bf16.mxu0 0
        %5606 = vmatpush1.bf16.msra.mxu0 %v5582
        %5607 = vmatprep.subr.bf16.mxu0 0
        %5608 = vmatpush1.bf16.msra.mxu0 0
        %5609 = vmatprep.subr.bf16.mxu0 0
        %5610 = vmatpush1.bf16.msra.mxu0 0
        %5611 = vmatprep.subr.bf16.mxu0 0
        %5612 = vmatpush1.bf16.msra.mxu0 0
        %5613 = vmatprep.subr.bf16.mxu0 0
        %5614 = vmatpush1.bf16.msra.mxu0 0
        %5615 = vmatprep.subr.bf16.mxu0 0
        %5616 = vmatpush1.bf16.msra.mxu0 0
        %5617 = vmatprep.subr.bf16.mxu0 0
        %5618 = vmatpush1.bf16.msra.mxu0 0
        %5619 = vmatprep.subr.bf16.mxu0 0
        %5620 = vmatpush1.bf16.msra.mxu0 0
        %5621 = vmatprep.subr.bf16.mxu0 0
        %5622 = vmatpush1.bf16.msra.mxu0 0
        %5623 = vmatprep.mubr.bf16.mxu0 0
        %5624 = vmatmul.mubr.bf16.gmra.mrb[0].mxu0 %v5490
        %v5625 = vpop.f32.mrb[0].mxu0
        %v5626 = vadd.f32 0.0, %v5625
        %v5627 = vpop.f32.mrb[0].mxu0
        %v5628 = vpop.f32.mrb[0].mxu0
        %v5629 = vadd.f32 0.0, %v5628
        %v5630 = vpop.f32.mrb[0].mxu0
        %5631 = vmatprep.mubr.bf16.mxu0 0
        %5632 = vmatmul.mubr.bf16.gmra.mrb[0].mxu0 %v5492
        %v5633 = vpop.f32.mrb[0].mxu0
        %v5634 = vadd.f32 0.0, %v5633
        %v5635 = vpop.f32.mrb[0].mxu0
        %v5636 = vpop.f32.mrb[0].mxu0
        %v5637 = vadd.f32 0.0, %v5636
        %v5638 = vpop.f32.mrb[0].mxu0
        %5639 = vmatprep.mubr.bf16.mxu0 0
        %5640 = vmatmul.mubr.bf16.gmra.mrb[0].mxu0 %v5494
        %v5641 = vpop.f32.mrb[0].mxu0
        %v5642 = vadd.f32 0.0, %v5641
        %v5643 = vpop.f32.mrb[0].mxu0
        %v5644 = vpop.f32.mrb[0].mxu0
        %v5645 = vadd.f32 0.0, %v5644
        %v5646 = vpop.f32.mrb[0].mxu0
        %5647 = vmatprep.mubr.bf16.mxu0 0
        %5648 = vmatmul.mubr.bf16.gmra.mrb[0].mxu0 %v5496
        %v5649 = vpop.f32.mrb[0].mxu0
        %v5650 = vadd.f32 0.0, %v5649
        %v5651 = vpop.f32.mrb[0].mxu0
        %v5652 = vpop.f32.mrb[0].mxu0
        %v5653 = vadd.f32 0.0, %v5652
        %v5654 = vpop.f32.mrb[0].mxu0
        %5655 = vmatprep.mubr.bf16.mxu0 0
        %5656 = vmatmul.mubr.bf16.gmra.mrb[0].mxu0 %v5498
        %v5657 = vpop.f32.mrb[0].mxu0
        %v5658 = vadd.f32 0.0, %v5657
        %v5659 = vpop.f32.mrb[0].mxu0
        %v5660 = vpop.f32.mrb[0].mxu0
        %v5661 = vadd.f32 0.0, %v5660
        %v5662 = vpop.f32.mrb[0].mxu0
        %5663 = vmatprep.mubr.bf16.mxu0 0
        %5664 = vmatmul.mubr.bf16.gmra.mrb[0].mxu0 %v5500
        %v5665 = vpop.f32.mrb[0].mxu0
        %v5666 = vadd.f32 0.0, %v5665
        %v5667 = vpop.f32.mrb[0].mxu0
        %v5668 = vpop.f32.mrb[0].mxu0
        %v5669 = vadd.f32 0.0, %v5668
        %v5670 = vpop.f32.mrb[0].mxu0
        %5671 = vmatprep.mubr.bf16.mxu0 0
        %5672 = vmatmul.mubr.bf16.gmra.mrb[0].mxu0 %v5502
        %v5673 = vpop.f32.mrb[0].mxu0
        %v5674 = vadd.f32 0.0, %v5673
        %v5675 = vpop.f32.mrb[0].mxu0
        %v5676 = vpop.f32.mrb[0].mxu0
        %v5677 = vadd.f32 0.0, %v5676
        %v5678 = vpop.f32.mrb[0].mxu0
        %5679 = vmatprep.mubr.bf16.mxu0 0
        %5680 = vmatmul.mubr.bf16.gmra.mrb[0].mxu0 %v5504
        %v5681 = vpop.f32.mrb[0].mxu0
        %v5682 = vadd.f32 0.0, %v5681
        %v5683 = vpop.f32.mrb[0].mxu0
        %v5684 = vpop.f32.mrb[0].mxu0
        %v5685 = vadd.f32 0.0, %v5684
        %v5686 = vpop.f32.mrb[0].mxu0
        %5687 = vmatprep.mubr.bf16.mxu0 0
        %5688 = vmatmul.mubr.bf16.gmra.mrb[0].mxu0 %v5506
        %v5689 = vpop.f32.mrb[0].mxu0
        %v5690 = vadd.f32 0.0, %v5689
        %v5691 = vpop.f32.mrb[0].mxu0
        %v5692 = vpop.f32.mrb[0].mxu0
        %v5693 = vadd.f32 0.0, %v5692
        %v5694 = vpop.f32.mrb[0].mxu0
        %5695 = vmatprep.mubr.bf16.mxu0 0
        %5696 = vmatmul.mubr.bf16.gmra.mrb[0].mxu0 %v5508
        %v5697 = vpop.f32.mrb[0].mxu0
        %v5698 = vadd.f32 0.0, %v5697
        %v5699 = vpop.f32.mrb[0].mxu0
        %v5700 = vpop.f32.mrb[0].mxu0
        %v5701 = vadd.f32 0.0, %v5700
        %v5702 = vpop.f32.mrb[0].mxu0
        %5703 = vmatprep.mubr.bf16.mxu0 0
        %5704 = vmatmul.mubr.bf16.gmra.mrb[0].mxu0 %v5510
        %v5705 = vpop.f32.mrb[0].mxu0
        %v5706 = vadd.f32 0.0, %v5705
        %v5707 = vpop.f32.mrb[0].mxu0
        %v5708 = vpop.f32.mrb[0].mxu0
        %v5709 = vadd.f32 0.0, %v5708
        %v5710 = vpop.f32.mrb[0].mxu0
        %5711 = vmatprep.mubr.bf16.mxu0 0
        %5712 = vmatmul.mubr.bf16.gmra.mrb[0].mxu0 %v5512
        %v5713 = vpop.f32.mrb[0].mxu0
        %v5714 = vadd.f32 0.0, %v5713
        %v5715 = vpop.f32.mrb[0].mxu0
        %v5716 = vpop.f32.mrb[0].mxu0
        %v5717 = vadd.f32 0.0, %v5716
        %v5718 = vpop.f32.mrb[0].mxu0
        %5719 = vmatprep.mubr.bf16.mxu0 0
        %5720 = vmatmul.mubr.bf16.gmra.mrb[0].mxu0 %v5514
        %v5721 = vpop.f32.mrb[0].mxu0
        %v5722 = vadd.f32 0.0, %v5721
        %v5723 = vpop.f32.mrb[0].mxu0
        %v5724 = vpop.f32.mrb[0].mxu0
        %v5725 = vadd.f32 0.0, %v5724
        %v5726 = vpop.f32.mrb[0].mxu0
        %5727 = vmatprep.mubr.bf16.mxu0 0
        %5728 = vmatmul.mubr.bf16.gmra.mrb[0].mxu0 %v5516
        %v5729 = vpop.f32.mrb[0].mxu0
        %v5730 = vadd.f32 0.0, %v5729
        %v5731 = vpop.f32.mrb[0].mxu0
        %v5732 = vpop.f32.mrb[0].mxu0
        %v5733 = vadd.f32 0.0, %v5732
        %v5734 = vpop.f32.mrb[0].mxu0
        %5735 = vmatprep.mubr.bf16.mxu0 0
        %5736 = vmatmul.mubr.bf16.gmra.mrb[0].mxu0 %v5518
        %v5737 = vpop.f32.mrb[0].mxu0
        %v5738 = vadd.f32 0.0, %v5737
        %v5739 = vpop.f32.mrb[0].mxu0
        %v5740 = vpop.f32.mrb[0].mxu0
        %v5741 = vadd.f32 0.0, %v5740
        %v5742 = vpop.f32.mrb[0].mxu0
        %5743 = vmatprep.mubr.bf16.mxu0 0
        %5744 = vmatmul.mubr.bf16.gmra.mrb[0].mxu0 %v5520
        %v5745 = vpop.f32.mrb[0].mxu0
        %v5746 = vadd.f32 0.0, %v5745
        %v5747 = vpop.f32.mrb[0].mxu0
        %v5748 = vpop.f32.mrb[0].mxu0
        %v5749 = vadd.f32 0.0, %v5748
        %v5750 = vpop.f32.mrb[0].mxu0
        %5751 = vmatprep.mubr.bf16.mxu0 0
        %5752 = vmatmul.mubr.bf16.gmra.mrb[0].mxu0 %v5522
        %v5753 = vpop.f32.mrb[0].mxu0
        %v5754 = vadd.f32 0.0, %v5753
        %v5755 = vpop.f32.mrb[0].mxu0
        %v5756 = vpop.f32.mrb[0].mxu0
        %v5757 = vadd.f32 0.0, %v5756
        %v5758 = vpop.f32.mrb[0].mxu0
        %5759 = vmatprep.mubr.bf16.mxu0 0
        %5760 = vmatmul.mubr.bf16.gmra.mrb[0].mxu0 %v5524
        %v5761 = vpop.f32.mrb[0].mxu0
        %v5762 = vadd.f32 0.0, %v5761
        %v5763 = vpop.f32.mrb[0].mxu0
        %v5764 = vpop.f32.mrb[0].mxu0
        %v5765 = vadd.f32 0.0, %v5764
        %v5766 = vpop.f32.mrb[0].mxu0
        %5767 = vdwg.mxu0
        %v5768 = vadd.f32 %v5325, %v5626
        %v5769 = vadd.f32 %v5328, %v5629
        %v5770 = vadd.f32 %v5333, %v5634
        %v5771 = vadd.f32 %v5336, %v5637
        %v5772 = vadd.f32 %v5341, %v5642
        %v5773 = vadd.f32 %v5344, %v5645
        %v5774 = vadd.f32 %v5349, %v5650
        %v5775 = vadd.f32 %v5352, %v5653
        %v5776 = vadd.f32 %v5357, %v5658
        %v5777 = vadd.f32 %v5360, %v5661
        %v5778 = vadd.f32 %v5365, %v5666
        %v5779 = vadd.f32 %v5368, %v5669
        %v5780 = vadd.f32 %v5373, %v5674
        %v5781 = vadd.f32 %v5376, %v5677
        %v5782 = vadd.f32 %v5381, %v5682
        %v5783 = vadd.f32 %v5384, %v5685
        %v5784 = vadd.f32 %v5389, %v5690
        %v5785 = vadd.f32 %v5392, %v5693
        %v5786 = vadd.f32 %v5397, %v5698
        %v5787 = vadd.f32 %v5400, %v5701
        %v5788 = vadd.f32 %v5405, %v5706
        %v5789 = vadd.f32 %v5408, %v5709
        %v5790 = vadd.f32 %v5413, %v5714
        %v5791 = vadd.f32 %v5416, %v5717
        %v5792 = vadd.f32 %v5421, %v5722
        %v5793 = vadd.f32 %v5424, %v5725
        %v5794 = vadd.f32 %v5429, %v5730
        %v5795 = vadd.f32 %v5432, %v5733
        %v5796 = vadd.f32 %v5437, %v5738
        %v5797 = vadd.f32 %v5440, %v5741
        %v5798 = vadd.f32 %v5445, %v5746
        %v5799 = vadd.f32 %v5448, %v5749
        %v5800 = vadd.f32 %v5453, %v5754
        %v5801 = vadd.f32 %v5456, %v5757
        %v5802 = vadd.f32 %v5461, %v5762
        %v5803 = vadd.f32 %v5464, %v5765
        %v5804 = vld [vmem:[#allocation2 + $0x8] sm:$0xe]
        %v5805 = vld [vmem:[#allocation2 + $0xc] sm:$0xf]
        %v5806 = vld [vmem:[#allocation2 + $0x10] sm:$0xf]
        %v5807 = vld [vmem:[#allocation2 + $0x14] sm:$0xf]
        %v5808 = vld [vmem:[#allocation2 + $0x18] sm:$0xf]
        %v5809 = vld [vmem:[#allocation2 + $0x1c] sm:$0xf]
        %v5810 = vld [vmem:[#allocation2 + $0x20] sm:$0xf]
        %v5811 = vld [vmem:[#allocation2 + $0x24] sm:$0xf]
        %v5812 = vld [vmem:[#allocation2 + $0x28] sm:$0xf]
        %v5813 = vld [vmem:[#allocation2 + $0x2c] sm:$0xf]
        %v5814 = vld [vmem:[#allocation2 + $0x30] sm:$0xf]
        %v5815 = vld [vmem:[#allocation2 + $0x34] sm:$0xf]
        %v5816 = vld [vmem:[#allocation2 + $0x38] sm:$0xf]
        %v5817 = vld [vmem:[#allocation2 + $0x3c] sm:$0xf]
        %v5818 = vld [vmem:[#allocation2 + $0x40] sm:$0xf]
        %v5819 = vld [vmem:[#allocation2 + $0x44] sm:$0xf]
        %v5820 = vld [vmem:[#allocation2 + $0x48] sm:$0xf]
        %v5821 = vld [vmem:[#allocation2 + $0x4c] sm:$0xf]
        %v5822 = vld [vmem:[#allocation2 + $0x50] sm:$0xf]
        %v5823 = vld [vmem:[#allocation2 + $0x54] sm:$0xf]
        %v5824 = vld [vmem:[#allocation2 + $0x58] sm:$0xf]
        %v5825 = vld [vmem:[#allocation2 + $0x5c] sm:$0xf]
        %v5826 = vld [vmem:[#allocation2 + $0x60] sm:$0xf]
        %v5827 = vld [vmem:[#allocation2 + $0x64] sm:$0xf]
        %v5828 = vld [vmem:[#allocation2 + $0x68] sm:$0xf]
        %v5829 = vld [vmem:[#allocation2 + $0x6c] sm:$0xf]
        %v5830 = vld [vmem:[#allocation2 + $0x70] sm:$0xf]
        %v5831 = vld [vmem:[#allocation2 + $0x74] sm:$0xf]
        %v5832 = vld [vmem:[#allocation2 + $0x78] sm:$0xf]
        %v5833 = vld [vmem:[#allocation2 + $0x7c] sm:$0xf]
        %v5834 = vld [vmem:[#allocation2 + $0x80] sm:$0xf]
        %v5835 = vld [vmem:[#allocation2 + $0x84] sm:$0xf]
        %v5836 = vld [vmem:[#allocation2 + $0x88] sm:$0xf]
        %v5837 = vld [vmem:[#allocation2 + $0x8c] sm:$0xf]
        %v5838 = vld [vmem:[#allocation2 + $0x90] sm:$0xf]
        %v5839 = vld [vmem:[#allocation2 + $0x94] sm:$0xf]
        %v5840 = vld [vmem:[#allocation2 + $0x98] sm:$0x1]
        %s5841 = scalar_lea.vmem %s3, 192
        %v5842 = vld [vmem:[%s5841] sm:$0xf]
        %v5843 = vld [vmem:[%s5841 + $0x4] sm:$0xf]
        %v5844 = vld [vmem:[%s5841 + $0x8] sm:$0xf]
        %v5845 = vld [vmem:[%s5841 + $0xc] sm:$0xf]
        %v5846 = vld [vmem:[%s5841 + $0x10] sm:$0xf]
        %v5847 = vld [vmem:[%s5841 + $0x14] sm:$0xf]
        %v5848 = vld [vmem:[%s5841 + $0x18] sm:$0xf]
        %v5849 = vld [vmem:[%s5841 + $0x1c] sm:$0xf]
        %v5850 = vld [vmem:[%s5841 + $0x20] sm:$0xf]
        %v5851 = vld [vmem:[%s5841 + $0x24] sm:$0xf]
        %v5852 = vld [vmem:[%s5841 + $0x28] sm:$0xf]
        %v5853 = vld [vmem:[%s5841 + $0x2c] sm:$0xf]
        %v5854 = vld [vmem:[%s5841 + $0x30] sm:$0xf]
        %v5855 = vld [vmem:[%s5841 + $0x34] sm:$0xf]
        %v5856 = vld [vmem:[%s5841 + $0x38] sm:$0xf]
        %v5857 = vld [vmem:[%s5841 + $0x3c] sm:$0xf]
        %v5895 = vunpack.c.l.b16 %v5804
        %v5896 = vunpack.c.l.b16 %v5805
        %v5897 = vunpack.c.l.b16 %v5806
        %v5898 = vunpack.c.l.b16 %v5807
        %v5899 = vunpack.c.l.b16 %v5808
        %v5900 = vunpack.c.l.b16 %v5809
        %v5901 = vunpack.c.l.b16 %v5810
        %v5902 = vunpack.c.l.b16 %v5811
        %v5903 = vunpack.c.l.b16 %v5812
        %v5904 = vunpack.c.l.b16 %v5813
        %v5905 = vunpack.c.l.b16 %v5814
        %v5906 = vunpack.c.l.b16 %v5815
        %v5907 = vunpack.c.l.b16 %v5816
        %v5908 = vunpack.c.l.b16 %v5817
        %v5909 = vunpack.c.l.b16 %v5818
        %v5910 = vunpack.c.l.b16 %v5819
        %v5911 = vunpack.c.l.b16 %v5820
        %v5912 = vunpack.c.l.b16 %v5821
        %v5913 = vunpack.c.l.b16 %v5822
        %v5914 = vunpack.c.l.b16 %v5823
        %v5915 = vunpack.c.l.b16 %v5824
        %v5916 = vunpack.c.l.b16 %v5825
        %v5917 = vunpack.c.l.b16 %v5826
        %v5918 = vunpack.c.l.b16 %v5827
        %v5919 = vunpack.c.l.b16 %v5828
        %v5920 = vunpack.c.l.b16 %v5829
        %v5921 = vunpack.c.l.b16 %v5830
        %v5922 = vunpack.c.l.b16 %v5831
        %v5923 = vunpack.c.l.b16 %v5832
        %v5924 = vunpack.c.l.b16 %v5833
        %v5925 = vunpack.c.l.b16 %v5834
        %v5926 = vunpack.c.l.b16 %v5835
        %v5927 = vunpack.c.l.b16 %v5836
        %v5928 = vunpack.c.l.b16 %v5837
        %v5929 = vunpack.c.l.b16 %v5838
        %v5930 = vunpack.c.l.b16 %v5839
        %v5931 = vunpack.c.l.b16 %v5840
        %v5932 = vpack.c.b16 %v5896, %v5895
        %v5933 = vpack.c.b16 %v5898, %v5897
        %v5934 = vpack.c.b16 %v5900, %v5899
        %v5935 = vpack.c.b16 %v5902, %v5901
        %v5936 = vpack.c.b16 %v5904, %v5903
        %v5937 = vpack.c.b16 %v5906, %v5905
        %v5938 = vpack.c.b16 %v5908, %v5907
        %v5939 = vpack.c.b16 %v5910, %v5909
        %v5940 = vpack.c.b16 %v5912, %v5911
        %v5941 = vpack.c.b16 %v5914, %v5913
        %v5942 = vpack.c.b16 %v5916, %v5915
        %v5943 = vpack.c.b16 %v5918, %v5917
        %v5944 = vpack.c.b16 %v5920, %v5919
        %v5945 = vpack.c.b16 %v5922, %v5921
        %v5946 = vpack.c.b16 %v5924, %v5923
        %v5947 = vpack.c.b16 %v5926, %v5925
        %v5948 = vpack.c.b16 %v5928, %v5927
        %v5949 = vpack.c.b16 %v5930, %v5929
        %v5950 = vpack.c.b16 %v5931, %v5931
        %v5951 = vrot.slane %v5932, 1
        %v5952 = vrot.slane %v5933, 1
        %v5953 = vsel %vm1035, %v5951, %v5952
        %v5954 = vrot.slane %v5934, 1
        %v5955 = vsel %vm1035, %v5952, %v5954
        %v5956 = vrot.slane %v5935, 1
        %v5957 = vsel %vm1035, %v5954, %v5956
        %v5958 = vrot.slane %v5936, 1
        %v5959 = vsel %vm1035, %v5956, %v5958
        %v5960 = vrot.slane %v5937, 1
        %v5961 = vsel %vm1035, %v5958, %v5960
        %v5962 = vrot.slane %v5938, 1
        %v5963 = vsel %vm1035, %v5960, %v5962
        %v5964 = vrot.slane %v5939, 1
        %v5965 = vsel %vm1035, %v5962, %v5964
        %v5966 = vrot.slane %v5940, 1
        %v5967 = vsel %vm1035, %v5964, %v5966
        %v5968 = vrot.slane %v5941, 1
        %v5969 = vsel %vm1035, %v5966, %v5968
        %v5970 = vrot.slane %v5942, 1
        %v5971 = vsel %vm1035, %v5968, %v5970
        %v5972 = vrot.slane %v5943, 1
        %v5973 = vsel %vm1035, %v5970, %v5972
        %v5974 = vrot.slane %v5944, 1
        %v5975 = vsel %vm1035, %v5972, %v5974
        %v5976 = vrot.slane %v5945, 1
        %v5977 = vsel %vm1035, %v5974, %v5976
        %v5978 = vrot.slane %v5946, 1
        %v5979 = vsel %vm1035, %v5976, %v5978
        %v5980 = vrot.slane %v5947, 1
        %v5981 = vsel %vm1035, %v5978, %v5980
        %v5982 = vrot.slane %v5948, 1
        %v5983 = vsel %vm1035, %v5980, %v5982
        %v5984 = vrot.slane %v5949, 1
        %v5985 = vsel %vm1035, %v5982, %v5984
        %v5986 = vrot.slane %v5950, 1
        %v5987 = vsel %vm1035, %v5984, %v5986
        %v6022 = vunpack.c.l.b16 %v5842
        %v6023 = vunpack.c.l.b16 %v5843
        %v6024 = vunpack.c.l.b16 %v5844
        %v6025 = vunpack.c.l.b16 %v5845
        %v6026 = vunpack.c.l.b16 %v5846
        %v6027 = vunpack.c.l.b16 %v5847
        %v6028 = vunpack.c.l.b16 %v5848
        %v6029 = vunpack.c.l.b16 %v5849
        %v6030 = vunpack.c.l.b16 %v5850
        %v6031 = vunpack.c.l.b16 %v5851
        %v6032 = vunpack.c.l.b16 %v5852
        %v6033 = vunpack.c.l.b16 %v5853
        %v6034 = vunpack.c.l.b16 %v5854
        %v6035 = vunpack.c.l.b16 %v5855
        %v6036 = vunpack.c.l.b16 %v5856
        %v6037 = vunpack.c.l.b16 %v5857
        %v6038 = vpack.c.b16 %v6023, %v6022
        %v6039 = vpack.c.b16 %v6025, %v6024
        %v6040 = vpack.c.b16 %v6027, %v6026
        %v6041 = vpack.c.b16 %v6029, %v6028
        %v6042 = vpack.c.b16 %v6031, %v6030
        %v6043 = vpack.c.b16 %v6033, %v6032
        %v6044 = vpack.c.b16 %v6035, %v6034
        %v6045 = vpack.c.b16 %v6037, %v6036
        %6054 = vmatprep.subr.bf16.mxu0 0
        %6055 = vmatpush1.bf16.msra.mxu0 %v6038
        %6056 = vmatprep.subr.bf16.mxu0 0
        %6057 = vmatpush1.bf16.msra.mxu0 %v6039
        %6058 = vmatprep.subr.bf16.mxu0 0
        %6059 = vmatpush1.bf16.msra.mxu0 %v6040
        %6060 = vmatprep.subr.bf16.mxu0 0
        %6061 = vmatpush1.bf16.msra.mxu0 %v6041
        %6062 = vmatprep.subr.bf16.mxu0 0
        %6063 = vmatpush1.bf16.msra.mxu0 %v6042
        %6064 = vmatprep.subr.bf16.mxu0 0
        %6065 = vmatpush1.bf16.msra.mxu0 %v6043
        %6066 = vmatprep.subr.bf16.mxu0 0
        %6067 = vmatpush1.bf16.msra.mxu0 %v6044
        %6068 = vmatprep.subr.bf16.mxu0 0
        %6069 = vmatpush1.bf16.msra.mxu0 %v6045
        %6070 = vmatprep.subr.bf16.mxu0 0
        %6071 = vmatpush1.bf16.msra.mxu0 0
        %6072 = vmatprep.subr.bf16.mxu0 0
        %6073 = vmatpush1.bf16.msra.mxu0 0
        %6074 = vmatprep.subr.bf16.mxu0 0
        %6075 = vmatpush1.bf16.msra.mxu0 0
        %6076 = vmatprep.subr.bf16.mxu0 0
        %6077 = vmatpush1.bf16.msra.mxu0 0
        %6078 = vmatprep.subr.bf16.mxu0 0
        %6079 = vmatpush1.bf16.msra.mxu0 0
        %6080 = vmatprep.subr.bf16.mxu0 0
        %6081 = vmatpush1.bf16.msra.mxu0 0
        %6082 = vmatprep.subr.bf16.mxu0 0
        %6083 = vmatpush1.bf16.msra.mxu0 0
        %6084 = vmatprep.subr.bf16.mxu0 0
        %6085 = vmatpush1.bf16.msra.mxu0 0
        %6086 = vmatprep.mubr.bf16.mxu0 0
        %6087 = vmatmul.mubr.bf16.gmra.mrb[0].mxu0 %v5953
        %v6088 = vpop.f32.mrb[0].mxu0
        %v6089 = vadd.f32 0.0, %v6088
        %v6090 = vpop.f32.mrb[0].mxu0
        %v6091 = vpop.f32.mrb[0].mxu0
        %v6092 = vadd.f32 0.0, %v6091
        %v6093 = vpop.f32.mrb[0].mxu0
        %6094 = vmatprep.mubr.bf16.mxu0 0
        %6095 = vmatmul.mubr.bf16.gmra.mrb[0].mxu0 %v5955
        %v6096 = vpop.f32.mrb[0].mxu0
        %v6097 = vadd.f32 0.0, %v6096
        %v6098 = vpop.f32.mrb[0].mxu0
        %v6099 = vpop.f32.mrb[0].mxu0
        %v6100 = vadd.f32 0.0, %v6099
        %v6101 = vpop.f32.mrb[0].mxu0
        %6102 = vmatprep.mubr.bf16.mxu0 0
        %6103 = vmatmul.mubr.bf16.gmra.mrb[0].mxu0 %v5957
        %v6104 = vpop.f32.mrb[0].mxu0
        %v6105 = vadd.f32 0.0, %v6104
        %v6106 = vpop.f32.mrb[0].mxu0
        %v6107 = vpop.f32.mrb[0].mxu0
        %v6108 = vadd.f32 0.0, %v6107
        %v6109 = vpop.f32.mrb[0].mxu0
        %6110 = vmatprep.mubr.bf16.mxu0 0
        %6111 = vmatmul.mubr.bf16.gmra.mrb[0].mxu0 %v5959
        %v6112 = vpop.f32.mrb[0].mxu0
        %v6113 = vadd.f32 0.0, %v6112
        %v6114 = vpop.f32.mrb[0].mxu0
        %v6115 = vpop.f32.mrb[0].mxu0
        %v6116 = vadd.f32 0.0, %v6115
        %v6117 = vpop.f32.mrb[0].mxu0
        %6118 = vmatprep.mubr.bf16.mxu0 0
        %6119 = vmatmul.mubr.bf16.gmra.mrb[0].mxu0 %v5961
        %v6120 = vpop.f32.mrb[0].mxu0
        %v6121 = vadd.f32 0.0, %v6120
        %v6122 = vpop.f32.mrb[0].mxu0
        %v6123 = vpop.f32.mrb[0].mxu0
        %v6124 = vadd.f32 0.0, %v6123
        %v6125 = vpop.f32.mrb[0].mxu0
        %6126 = vmatprep.mubr.bf16.mxu0 0
        %6127 = vmatmul.mubr.bf16.gmra.mrb[0].mxu0 %v5963
        %v6128 = vpop.f32.mrb[0].mxu0
        %v6129 = vadd.f32 0.0, %v6128
        %v6130 = vpop.f32.mrb[0].mxu0
        %v6131 = vpop.f32.mrb[0].mxu0
        %v6132 = vadd.f32 0.0, %v6131
        %v6133 = vpop.f32.mrb[0].mxu0
        %6134 = vmatprep.mubr.bf16.mxu0 0
        %6135 = vmatmul.mubr.bf16.gmra.mrb[0].mxu0 %v5965
        %v6136 = vpop.f32.mrb[0].mxu0
        %v6137 = vadd.f32 0.0, %v6136
        %v6138 = vpop.f32.mrb[0].mxu0
        %v6139 = vpop.f32.mrb[0].mxu0
        %v6140 = vadd.f32 0.0, %v6139
        %v6141 = vpop.f32.mrb[0].mxu0
        %6142 = vmatprep.mubr.bf16.mxu0 0
        %6143 = vmatmul.mubr.bf16.gmra.mrb[0].mxu0 %v5967
        %v6144 = vpop.f32.mrb[0].mxu0
        %v6145 = vadd.f32 0.0, %v6144
        %v6146 = vpop.f32.mrb[0].mxu0
        %v6147 = vpop.f32.mrb[0].mxu0
        %v6148 = vadd.f32 0.0, %v6147
        %v6149 = vpop.f32.mrb[0].mxu0
        %6150 = vmatprep.mubr.bf16.mxu0 0
        %6151 = vmatmul.mubr.bf16.gmra.mrb[0].mxu0 %v5969
        %v6152 = vpop.f32.mrb[0].mxu0
        %v6153 = vadd.f32 0.0, %v6152
        %v6154 = vpop.f32.mrb[0].mxu0
        %v6155 = vpop.f32.mrb[0].mxu0
        %v6156 = vadd.f32 0.0, %v6155
        %v6157 = vpop.f32.mrb[0].mxu0
        %6158 = vmatprep.mubr.bf16.mxu0 0
        %6159 = vmatmul.mubr.bf16.gmra.mrb[0].mxu0 %v5971
        %v6160 = vpop.f32.mrb[0].mxu0
        %v6161 = vadd.f32 0.0, %v6160
        %v6162 = vpop.f32.mrb[0].mxu0
        %v6163 = vpop.f32.mrb[0].mxu0
        %v6164 = vadd.f32 0.0, %v6163
        %v6165 = vpop.f32.mrb[0].mxu0
        %6166 = vmatprep.mubr.bf16.mxu0 0
        %6167 = vmatmul.mubr.bf16.gmra.mrb[0].mxu0 %v5973
        %v6168 = vpop.f32.mrb[0].mxu0
        %v6169 = vadd.f32 0.0, %v6168
        %v6170 = vpop.f32.mrb[0].mxu0
        %v6171 = vpop.f32.mrb[0].mxu0
        %v6172 = vadd.f32 0.0, %v6171
        %v6173 = vpop.f32.mrb[0].mxu0
        %6174 = vmatprep.mubr.bf16.mxu0 0
        %6175 = vmatmul.mubr.bf16.gmra.mrb[0].mxu0 %v5975
        %v6176 = vpop.f32.mrb[0].mxu0
        %v6177 = vadd.f32 0.0, %v6176
        %v6178 = vpop.f32.mrb[0].mxu0
        %v6179 = vpop.f32.mrb[0].mxu0
        %v6180 = vadd.f32 0.0, %v6179
        %v6181 = vpop.f32.mrb[0].mxu0
        %6182 = vmatprep.mubr.bf16.mxu0 0
        %6183 = vmatmul.mubr.bf16.gmra.mrb[0].mxu0 %v5977
        %v6184 = vpop.f32.mrb[0].mxu0
        %v6185 = vadd.f32 0.0, %v6184
        %v6186 = vpop.f32.mrb[0].mxu0
        %v6187 = vpop.f32.mrb[0].mxu0
        %v6188 = vadd.f32 0.0, %v6187
        %v6189 = vpop.f32.mrb[0].mxu0
        %6190 = vmatprep.mubr.bf16.mxu0 0
        %6191 = vmatmul.mubr.bf16.gmra.mrb[0].mxu0 %v5979
        %v6192 = vpop.f32.mrb[0].mxu0
        %v6193 = vadd.f32 0.0, %v6192
        %v6194 = vpop.f32.mrb[0].mxu0
        %v6195 = vpop.f32.mrb[0].mxu0
        %v6196 = vadd.f32 0.0, %v6195
        %v6197 = vpop.f32.mrb[0].mxu0
        %6198 = vmatprep.mubr.bf16.mxu0 0
        %6199 = vmatmul.mubr.bf16.gmra.mrb[0].mxu0 %v5981
        %v6200 = vpop.f32.mrb[0].mxu0
        %v6201 = vadd.f32 0.0, %v6200
        %v6202 = vpop.f32.mrb[0].mxu0
        %v6203 = vpop.f32.mrb[0].mxu0
        %v6204 = vadd.f32 0.0, %v6203
        %v6205 = vpop.f32.mrb[0].mxu0
        %6206 = vmatprep.mubr.bf16.mxu0 0
        %6207 = vmatmul.mubr.bf16.gmra.mrb[0].mxu0 %v5983
        %v6208 = vpop.f32.mrb[0].mxu0
        %v6209 = vadd.f32 0.0, %v6208
        %v6210 = vpop.f32.mrb[0].mxu0
        %v6211 = vpop.f32.mrb[0].mxu0
        %v6212 = vadd.f32 0.0, %v6211
        %v6213 = vpop.f32.mrb[0].mxu0
        %6214 = vmatprep.mubr.bf16.mxu0 0
        %6215 = vmatmul.mubr.bf16.gmra.mrb[0].mxu0 %v5985
        %v6216 = vpop.f32.mrb[0].mxu0
        %v6217 = vadd.f32 0.0, %v6216
        %v6218 = vpop.f32.mrb[0].mxu0
        %v6219 = vpop.f32.mrb[0].mxu0
        %v6220 = vadd.f32 0.0, %v6219
        %v6221 = vpop.f32.mrb[0].mxu0
        %6222 = vmatprep.mubr.bf16.mxu0 0
        %6223 = vmatmul.mubr.bf16.gmra.mrb[0].mxu0 %v5987
        %v6224 = vpop.f32.mrb[0].mxu0
        %v6225 = vadd.f32 0.0, %v6224
        %v6226 = vpop.f32.mrb[0].mxu0
        %v6227 = vpop.f32.mrb[0].mxu0
        %v6228 = vadd.f32 0.0, %v6227
        %v6229 = vpop.f32.mrb[0].mxu0
        %6230 = vdwg.mxu0
        %v6231 = vadd.f32 %v5768, %v6089
        %v6232 = vadd.f32 %v5769, %v6092
        %v6233 = vadd.f32 %v5770, %v6097
        %v6234 = vadd.f32 %v5771, %v6100
        %v6235 = vadd.f32 %v5772, %v6105
        %v6236 = vadd.f32 %v5773, %v6108
        %v6237 = vadd.f32 %v5774, %v6113
        %v6238 = vadd.f32 %v5775, %v6116
        %v6239 = vadd.f32 %v5776, %v6121
        %v6240 = vadd.f32 %v5777, %v6124
        %v6241 = vadd.f32 %v5778, %v6129
        %v6242 = vadd.f32 %v5779, %v6132
        %v6243 = vadd.f32 %v5780, %v6137
        %v6244 = vadd.f32 %v5781, %v6140
        %v6245 = vadd.f32 %v5782, %v6145
        %v6246 = vadd.f32 %v5783, %v6148
        %v6247 = vadd.f32 %v5784, %v6153
        %v6248 = vadd.f32 %v5785, %v6156
        %v6249 = vadd.f32 %v5786, %v6161
        %v6250 = vadd.f32 %v5787, %v6164
        %v6251 = vadd.f32 %v5788, %v6169
        %v6252 = vadd.f32 %v5789, %v6172
        %v6253 = vadd.f32 %v5790, %v6177
        %v6254 = vadd.f32 %v5791, %v6180
        %v6255 = vadd.f32 %v5792, %v6185
        %v6256 = vadd.f32 %v5793, %v6188
        %v6257 = vadd.f32 %v5794, %v6193
        %v6258 = vadd.f32 %v5795, %v6196
        %v6259 = vadd.f32 %v5796, %v6201
        %v6260 = vadd.f32 %v5797, %v6204
        %v6261 = vadd.f32 %v5798, %v6209
        %v6262 = vadd.f32 %v5799, %v6212
        %v6263 = vadd.f32 %v5800, %v6217
        %v6264 = vadd.f32 %v5801, %v6220
        %v6265 = vadd.f32 %v5802, %v6225
        %v6266 = vadd.f32 %v5803, %v6228
        %v6267 = vld [vmem:[#allocation2 + $0x98] sm:$0x3]
        %s6268 = scalar_lea.vmem %s3, 256
        %v6269 = vld [vmem:[%s6268] sm:$0xf]
        %v6270 = vld [vmem:[%s6268 + $0x4] sm:$0xf]
        %v6271 = vld [vmem:[%s6268 + $0x8] sm:$0xf]
        %v6272 = vld [vmem:[%s6268 + $0xc] sm:$0xf]
        %v6273 = vld [vmem:[%s6268 + $0x10] sm:$0xf]
        %v6274 = vld [vmem:[%s6268 + $0x14] sm:$0xf]
        %v6275 = vld [vmem:[%s6268 + $0x18] sm:$0xf]
        %v6276 = vld [vmem:[%s6268 + $0x1c] sm:$0xf]
        %v6277 = vld [vmem:[%s6268 + $0x20] sm:$0xf]
        %v6278 = vld [vmem:[%s6268 + $0x24] sm:$0xf]
        %v6279 = vld [vmem:[%s6268 + $0x28] sm:$0xf]
        %v6280 = vld [vmem:[%s6268 + $0x2c] sm:$0xf]
        %v6281 = vld [vmem:[%s6268 + $0x30] sm:$0xf]
        %v6282 = vld [vmem:[%s6268 + $0x34] sm:$0xf]
        %v6283 = vld [vmem:[%s6268 + $0x38] sm:$0xf]
        %v6284 = vld [vmem:[%s6268 + $0x3c] sm:$0xf]
        %v6286 = vunpack.c.l.b16 %v6267
        %v6287 = vpack.c.b16 %v6286, %v6286
        %v6289 = vshrl.u32 %v5932, 16
        %v6291 = vrot.slane %v6289, 1
        %v6292 = vshll.u32 %v5932, 16
        %v6294 = vrot.slane %v6292, 2
        %v6295 = vor.u32 %v6291, %v6294
        %v6297 = vshrl.u32 %v5933, 16
        %v6299 = vrot.slane %v6297, 1
        %v6300 = vshll.u32 %v5933, 16
        %v6302 = vrot.slane %v6300, 2
        %v6303 = vor.u32 %v6299, %v6302
        %v6304 = vsel %vm1788, %v6295, %v6303
        %v6306 = vshrl.u32 %v5934, 16
        %v6308 = vrot.slane %v6306, 1
        %v6309 = vshll.u32 %v5934, 16
        %v6311 = vrot.slane %v6309, 2
        %v6312 = vor.u32 %v6308, %v6311
        %v6313 = vsel %vm1788, %v6303, %v6312
        %v6315 = vshrl.u32 %v5935, 16
        %v6317 = vrot.slane %v6315, 1
        %v6318 = vshll.u32 %v5935, 16
        %v6320 = vrot.slane %v6318, 2
        %v6321 = vor.u32 %v6317, %v6320
        %v6322 = vsel %vm1788, %v6312, %v6321
        %v6324 = vshrl.u32 %v5936, 16
        %v6326 = vrot.slane %v6324, 1
        %v6327 = vshll.u32 %v5936, 16
        %v6329 = vrot.slane %v6327, 2
        %v6330 = vor.u32 %v6326, %v6329
        %v6331 = vsel %vm1788, %v6321, %v6330
        %v6333 = vshrl.u32 %v5937, 16
        %v6335 = vrot.slane %v6333, 1
        %v6336 = vshll.u32 %v5937, 16
        %v6338 = vrot.slane %v6336, 2
        %v6339 = vor.u32 %v6335, %v6338
        %v6340 = vsel %vm1788, %v6330, %v6339
        %v6342 = vshrl.u32 %v5938, 16
        %v6344 = vrot.slane %v6342, 1
        %v6345 = vshll.u32 %v5938, 16
        %v6347 = vrot.slane %v6345, 2
        %v6348 = vor.u32 %v6344, %v6347
        %v6349 = vsel %vm1788, %v6339, %v6348
        %v6351 = vshrl.u32 %v5939, 16
        %v6353 = vrot.slane %v6351, 1
        %v6354 = vshll.u32 %v5939, 16
        %v6356 = vrot.slane %v6354, 2
        %v6357 = vor.u32 %v6353, %v6356
        %v6358 = vsel %vm1788, %v6348, %v6357
        %v6360 = vshrl.u32 %v5940, 16
        %v6362 = vrot.slane %v6360, 1
        %v6363 = vshll.u32 %v5940, 16
        %v6365 = vrot.slane %v6363, 2
        %v6366 = vor.u32 %v6362, %v6365
        %v6367 = vsel %vm1788, %v6357, %v6366
        %v6369 = vshrl.u32 %v5941, 16
        %v6371 = vrot.slane %v6369, 1
        %v6372 = vshll.u32 %v5941, 16
        %v6374 = vrot.slane %v6372, 2
        %v6375 = vor.u32 %v6371, %v6374
        %v6376 = vsel %vm1788, %v6366, %v6375
        %v6378 = vshrl.u32 %v5942, 16
        %v6380 = vrot.slane %v6378, 1
        %v6381 = vshll.u32 %v5942, 16
        %v6383 = vrot.slane %v6381, 2
        %v6384 = vor.u32 %v6380, %v6383
        %v6385 = vsel %vm1788, %v6375, %v6384
        %v6387 = vshrl.u32 %v5943, 16
        %v6389 = vrot.slane %v6387, 1
        %v6390 = vshll.u32 %v5943, 16
        %v6392 = vrot.slane %v6390, 2
        %v6393 = vor.u32 %v6389, %v6392
        %v6394 = vsel %vm1788, %v6384, %v6393
        %v6396 = vshrl.u32 %v5944, 16
        %v6398 = vrot.slane %v6396, 1
        %v6399 = vshll.u32 %v5944, 16
        %v6401 = vrot.slane %v6399, 2
        %v6402 = vor.u32 %v6398, %v6401
        %v6403 = vsel %vm1788, %v6393, %v6402
        %v6405 = vshrl.u32 %v5945, 16
        %v6407 = vrot.slane %v6405, 1
        %v6408 = vshll.u32 %v5945, 16
        %v6410 = vrot.slane %v6408, 2
        %v6411 = vor.u32 %v6407, %v6410
        %v6412 = vsel %vm1788, %v6402, %v6411
        %v6414 = vshrl.u32 %v5946, 16
        %v6416 = vrot.slane %v6414, 1
        %v6417 = vshll.u32 %v5946, 16
        %v6419 = vrot.slane %v6417, 2
        %v6420 = vor.u32 %v6416, %v6419
        %v6421 = vsel %vm1788, %v6411, %v6420
        %v6423 = vshrl.u32 %v5947, 16
        %v6425 = vrot.slane %v6423, 1
        %v6426 = vshll.u32 %v5947, 16
        %v6428 = vrot.slane %v6426, 2
        %v6429 = vor.u32 %v6425, %v6428
        %v6430 = vsel %vm1788, %v6420, %v6429
        %v6432 = vshrl.u32 %v5948, 16
        %v6434 = vrot.slane %v6432, 1
        %v6435 = vshll.u32 %v5948, 16
        %v6437 = vrot.slane %v6435, 2
        %v6438 = vor.u32 %v6434, %v6437
        %v6439 = vsel %vm1788, %v6429, %v6438
        %v6441 = vshrl.u32 %v5949, 16
        %v6443 = vrot.slane %v6441, 1
        %v6444 = vshll.u32 %v5949, 16
        %v6446 = vrot.slane %v6444, 2
        %v6447 = vor.u32 %v6443, %v6446
        %v6448 = vsel %vm1788, %v6438, %v6447
        %v6450 = vshrl.u32 %v6287, 16
        %v6452 = vrot.slane %v6450, 1
        %v6453 = vshll.u32 %v6287, 16
        %v6455 = vrot.slane %v6453, 2
        %v6456 = vor.u32 %v6452, %v6455
        %v6457 = vsel %vm1788, %v6447, %v6456
        %v6492 = vunpack.c.l.b16 %v6269
        %v6493 = vunpack.c.l.b16 %v6270
        %v6494 = vunpack.c.l.b16 %v6271
        %v6495 = vunpack.c.l.b16 %v6272
        %v6496 = vunpack.c.l.b16 %v6273
        %v6497 = vunpack.c.l.b16 %v6274
        %v6498 = vunpack.c.l.b16 %v6275
        %v6499 = vunpack.c.l.b16 %v6276
        %v6500 = vunpack.c.l.b16 %v6277
        %v6501 = vunpack.c.l.b16 %v6278
        %v6502 = vunpack.c.l.b16 %v6279
        %v6503 = vunpack.c.l.b16 %v6280
        %v6504 = vunpack.c.l.b16 %v6281
        %v6505 = vunpack.c.l.b16 %v6282
        %v6506 = vunpack.c.l.b16 %v6283
        %v6507 = vunpack.c.l.b16 %v6284
        %v6508 = vpack.c.b16 %v6493, %v6492
        %v6509 = vpack.c.b16 %v6495, %v6494
        %v6510 = vpack.c.b16 %v6497, %v6496
        %v6511 = vpack.c.b16 %v6499, %v6498
        %v6512 = vpack.c.b16 %v6501, %v6500
        %v6513 = vpack.c.b16 %v6503, %v6502
        %v6514 = vpack.c.b16 %v6505, %v6504
        %v6515 = vpack.c.b16 %v6507, %v6506
        %6524 = vmatprep.subr.bf16.mxu0 0
        %6525 = vmatpush1.bf16.msra.mxu0 %v6508
        %6526 = vmatprep.subr.bf16.mxu0 0
        %6527 = vmatpush1.bf16.msra.mxu0 %v6509
        %6528 = vmatprep.subr.bf16.mxu0 0
        %6529 = vmatpush1.bf16.msra.mxu0 %v6510
        %6530 = vmatprep.subr.bf16.mxu0 0
        %6531 = vmatpush1.bf16.msra.mxu0 %v6511
        %6532 = vmatprep.subr.bf16.mxu0 0
        %6533 = vmatpush1.bf16.msra.mxu0 %v6512
        %6534 = vmatprep.subr.bf16.mxu0 0
        %6535 = vmatpush1.bf16.msra.mxu0 %v6513
        %6536 = vmatprep.subr.bf16.mxu0 0
        %6537 = vmatpush1.bf16.msra.mxu0 %v6514
        %6538 = vmatprep.subr.bf16.mxu0 0
        %6539 = vmatpush1.bf16.msra.mxu0 %v6515
        %6540 = vmatprep.subr.bf16.mxu0 0
        %6541 = vmatpush1.bf16.msra.mxu0 0
        %6542 = vmatprep.subr.bf16.mxu0 0
        %6543 = vmatpush1.bf16.msra.mxu0 0
        %6544 = vmatprep.subr.bf16.mxu0 0
        %6545 = vmatpush1.bf16.msra.mxu0 0
        %6546 = vmatprep.subr.bf16.mxu0 0
        %6547 = vmatpush1.bf16.msra.mxu0 0
        %6548 = vmatprep.subr.bf16.mxu0 0
        %6549 = vmatpush1.bf16.msra.mxu0 0
        %6550 = vmatprep.subr.bf16.mxu0 0
        %6551 = vmatpush1.bf16.msra.mxu0 0
        %6552 = vmatprep.subr.bf16.mxu0 0
        %6553 = vmatpush1.bf16.msra.mxu0 0
        %6554 = vmatprep.subr.bf16.mxu0 0
        %6555 = vmatpush1.bf16.msra.mxu0 0
        %6556 = vmatprep.mubr.bf16.mxu0 0
        %6557 = vmatmul.mubr.bf16.gmra.mrb[0].mxu0 %v6304
        %v6558 = vpop.f32.mrb[0].mxu0
        %v6559 = vadd.f32 0.0, %v6558
        %v6560 = vpop.f32.mrb[0].mxu0
        %v6561 = vpop.f32.mrb[0].mxu0
        %v6562 = vadd.f32 0.0, %v6561
        %v6563 = vpop.f32.mrb[0].mxu0
        %6564 = vmatprep.mubr.bf16.mxu0 0
        %6565 = vmatmul.mubr.bf16.gmra.mrb[0].mxu0 %v6313
        %v6566 = vpop.f32.mrb[0].mxu0
        %v6567 = vadd.f32 0.0, %v6566
        %v6568 = vpop.f32.mrb[0].mxu0
        %v6569 = vpop.f32.mrb[0].mxu0
        %v6570 = vadd.f32 0.0, %v6569
        %v6571 = vpop.f32.mrb[0].mxu0
        %6572 = vmatprep.mubr.bf16.mxu0 0
        %6573 = vmatmul.mubr.bf16.gmra.mrb[0].mxu0 %v6322
        %v6574 = vpop.f32.mrb[0].mxu0
        %v6575 = vadd.f32 0.0, %v6574
        %v6576 = vpop.f32.mrb[0].mxu0
        %v6577 = vpop.f32.mrb[0].mxu0
        %v6578 = vadd.f32 0.0, %v6577
        %v6579 = vpop.f32.mrb[0].mxu0
        %6580 = vmatprep.mubr.bf16.mxu0 0
        %6581 = vmatmul.mubr.bf16.gmra.mrb[0].mxu0 %v6331
        %v6582 = vpop.f32.mrb[0].mxu0
        %v6583 = vadd.f32 0.0, %v6582
        %v6584 = vpop.f32.mrb[0].mxu0
        %v6585 = vpop.f32.mrb[0].mxu0
        %v6586 = vadd.f32 0.0, %v6585
        %v6587 = vpop.f32.mrb[0].mxu0
        %6588 = vmatprep.mubr.bf16.mxu0 0
        %6589 = vmatmul.mubr.bf16.gmra.mrb[0].mxu0 %v6340
        %v6590 = vpop.f32.mrb[0].mxu0
        %v6591 = vadd.f32 0.0, %v6590
        %v6592 = vpop.f32.mrb[0].mxu0
        %v6593 = vpop.f32.mrb[0].mxu0
        %v6594 = vadd.f32 0.0, %v6593
        %v6595 = vpop.f32.mrb[0].mxu0
        %6596 = vmatprep.mubr.bf16.mxu0 0
        %6597 = vmatmul.mubr.bf16.gmra.mrb[0].mxu0 %v6349
        %v6598 = vpop.f32.mrb[0].mxu0
        %v6599 = vadd.f32 0.0, %v6598
        %v6600 = vpop.f32.mrb[0].mxu0
        %v6601 = vpop.f32.mrb[0].mxu0
        %v6602 = vadd.f32 0.0, %v6601
        %v6603 = vpop.f32.mrb[0].mxu0
        %6604 = vmatprep.mubr.bf16.mxu0 0
        %6605 = vmatmul.mubr.bf16.gmra.mrb[0].mxu0 %v6358
        %v6606 = vpop.f32.mrb[0].mxu0
        %v6607 = vadd.f32 0.0, %v6606
        %v6608 = vpop.f32.mrb[0].mxu0
        %v6609 = vpop.f32.mrb[0].mxu0
        %v6610 = vadd.f32 0.0, %v6609
        %v6611 = vpop.f32.mrb[0].mxu0
        %6612 = vmatprep.mubr.bf16.mxu0 0
        %6613 = vmatmul.mubr.bf16.gmra.mrb[0].mxu0 %v6367
        %v6614 = vpop.f32.mrb[0].mxu0
        %v6615 = vadd.f32 0.0, %v6614
        %v6616 = vpop.f32.mrb[0].mxu0
        %v6617 = vpop.f32.mrb[0].mxu0
        %v6618 = vadd.f32 0.0, %v6617
        %v6619 = vpop.f32.mrb[0].mxu0
        %6620 = vmatprep.mubr.bf16.mxu0 0
        %6621 = vmatmul.mubr.bf16.gmra.mrb[0].mxu0 %v6376
        %v6622 = vpop.f32.mrb[0].mxu0
        %v6623 = vadd.f32 0.0, %v6622
        %v6624 = vpop.f32.mrb[0].mxu0
        %v6625 = vpop.f32.mrb[0].mxu0
        %v6626 = vadd.f32 0.0, %v6625
        %v6627 = vpop.f32.mrb[0].mxu0
        %6628 = vmatprep.mubr.bf16.mxu0 0
        %6629 = vmatmul.mubr.bf16.gmra.mrb[0].mxu0 %v6385
        %v6630 = vpop.f32.mrb[0].mxu0
        %v6631 = vadd.f32 0.0, %v6630
        %v6632 = vpop.f32.mrb[0].mxu0
        %v6633 = vpop.f32.mrb[0].mxu0
        %v6634 = vadd.f32 0.0, %v6633
        %v6635 = vpop.f32.mrb[0].mxu0
        %6636 = vmatprep.mubr.bf16.mxu0 0
        %6637 = vmatmul.mubr.bf16.gmra.mrb[0].mxu0 %v6394
        %v6638 = vpop.f32.mrb[0].mxu0
        %v6639 = vadd.f32 0.0, %v6638
        %v6640 = vpop.f32.mrb[0].mxu0
        %v6641 = vpop.f32.mrb[0].mxu0
        %v6642 = vadd.f32 0.0, %v6641
        %v6643 = vpop.f32.mrb[0].mxu0
        %6644 = vmatprep.mubr.bf16.mxu0 0
        %6645 = vmatmul.mubr.bf16.gmra.mrb[0].mxu0 %v6403
        %v6646 = vpop.f32.mrb[0].mxu0
        %v6647 = vadd.f32 0.0, %v6646
        %v6648 = vpop.f32.mrb[0].mxu0
        %v6649 = vpop.f32.mrb[0].mxu0
        %v6650 = vadd.f32 0.0, %v6649
        %v6651 = vpop.f32.mrb[0].mxu0
        %6652 = vmatprep.mubr.bf16.mxu0 0
        %6653 = vmatmul.mubr.bf16.gmra.mrb[0].mxu0 %v6412
        %v6654 = vpop.f32.mrb[0].mxu0
        %v6655 = vadd.f32 0.0, %v6654
        %v6656 = vpop.f32.mrb[0].mxu0
        %v6657 = vpop.f32.mrb[0].mxu0
        %v6658 = vadd.f32 0.0, %v6657
        %v6659 = vpop.f32.mrb[0].mxu0
        %6660 = vmatprep.mubr.bf16.mxu0 0
        %6661 = vmatmul.mubr.bf16.gmra.mrb[0].mxu0 %v6421
        %v6662 = vpop.f32.mrb[0].mxu0
        %v6663 = vadd.f32 0.0, %v6662
        %v6664 = vpop.f32.mrb[0].mxu0
        %v6665 = vpop.f32.mrb[0].mxu0
        %v6666 = vadd.f32 0.0, %v6665
        %v6667 = vpop.f32.mrb[0].mxu0
        %6668 = vmatprep.mubr.bf16.mxu0 0
        %6669 = vmatmul.mubr.bf16.gmra.mrb[0].mxu0 %v6430
        %v6670 = vpop.f32.mrb[0].mxu0
        %v6671 = vadd.f32 0.0, %v6670
        %v6672 = vpop.f32.mrb[0].mxu0
        %v6673 = vpop.f32.mrb[0].mxu0
        %v6674 = vadd.f32 0.0, %v6673
        %v6675 = vpop.f32.mrb[0].mxu0
        %6676 = vmatprep.mubr.bf16.mxu0 0
        %6677 = vmatmul.mubr.bf16.gmra.mrb[0].mxu0 %v6439
        %v6678 = vpop.f32.mrb[0].mxu0
        %v6679 = vadd.f32 0.0, %v6678
        %v6680 = vpop.f32.mrb[0].mxu0
        %v6681 = vpop.f32.mrb[0].mxu0
        %v6682 = vadd.f32 0.0, %v6681
        %v6683 = vpop.f32.mrb[0].mxu0
        %6684 = vmatprep.mubr.bf16.mxu0 0
        %6685 = vmatmul.mubr.bf16.gmra.mrb[0].mxu0 %v6448
        %v6686 = vpop.f32.mrb[0].mxu0
        %v6687 = vadd.f32 0.0, %v6686
        %v6688 = vpop.f32.mrb[0].mxu0
        %v6689 = vpop.f32.mrb[0].mxu0
        %v6690 = vadd.f32 0.0, %v6689
        %v6691 = vpop.f32.mrb[0].mxu0
        %6692 = vmatprep.mubr.bf16.mxu0 0
        %6693 = vmatmul.mubr.bf16.gmra.mrb[0].mxu0 %v6457
        %v6694 = vpop.f32.mrb[0].mxu0
        %v6695 = vadd.f32 0.0, %v6694
        %v6696 = vpop.f32.mrb[0].mxu0
        %v6697 = vpop.f32.mrb[0].mxu0
        %v6698 = vadd.f32 0.0, %v6697
        %v6699 = vpop.f32.mrb[0].mxu0
        %6700 = vdwg.mxu0
        %v6701 = vadd.f32 %v6231, %v6559
        %v6702 = vadd.f32 %v6232, %v6562
        %v6703 = vadd.f32 %v6233, %v6567
        %v6704 = vadd.f32 %v6234, %v6570
        %v6705 = vadd.f32 %v6235, %v6575
        %v6706 = vadd.f32 %v6236, %v6578
        %v6707 = vadd.f32 %v6237, %v6583
        %v6708 = vadd.f32 %v6238, %v6586
        %v6709 = vadd.f32 %v6239, %v6591
        %v6710 = vadd.f32 %v6240, %v6594
        %v6711 = vadd.f32 %v6241, %v6599
        %v6712 = vadd.f32 %v6242, %v6602
        %v6713 = vadd.f32 %v6243, %v6607
        %v6714 = vadd.f32 %v6244, %v6610
        %v6715 = vadd.f32 %v6245, %v6615
        %v6716 = vadd.f32 %v6246, %v6618
        %v6717 = vadd.f32 %v6247, %v6623
        %v6718 = vadd.f32 %v6248, %v6626
        %v6719 = vadd.f32 %v6249, %v6631
        %v6720 = vadd.f32 %v6250, %v6634
        %v6721 = vadd.f32 %v6251, %v6639
        %v6722 = vadd.f32 %v6252, %v6642
        %v6723 = vadd.f32 %v6253, %v6647
        %v6724 = vadd.f32 %v6254, %v6650
        %v6725 = vadd.f32 %v6255, %v6655
        %v6726 = vadd.f32 %v6256, %v6658
        %v6727 = vadd.f32 %v6257, %v6663
        %v6728 = vadd.f32 %v6258, %v6666
        %v6729 = vadd.f32 %v6259, %v6671
        %v6730 = vadd.f32 %v6260, %v6674
        %v6731 = vadd.f32 %v6261, %v6679
        %v6732 = vadd.f32 %v6262, %v6682
        %v6733 = vadd.f32 %v6263, %v6687
        %v6734 = vadd.f32 %v6264, %v6690
        %v6735 = vadd.f32 %v6265, %v6695
        %v6736 = vadd.f32 %v6266, %v6698
        %v6737 = vld [vmem:[#allocation2 + $0x8] sm:$0xc]
        %s6738 = scalar_lea.vmem %s3, 320
        %v6739 = vld [vmem:[%s6738] sm:$0xf]
        %v6740 = vld [vmem:[%s6738 + $0x4] sm:$0xf]
        %v6741 = vld [vmem:[%s6738 + $0x8] sm:$0xf]
        %v6742 = vld [vmem:[%s6738 + $0xc] sm:$0xf]
        %v6743 = vld [vmem:[%s6738 + $0x10] sm:$0xf]
        %v6744 = vld [vmem:[%s6738 + $0x14] sm:$0xf]
        %v6745 = vld [vmem:[%s6738 + $0x18] sm:$0xf]
        %v6746 = vld [vmem:[%s6738 + $0x1c] sm:$0xf]
        %v6747 = vld [vmem:[%s6738 + $0x20] sm:$0xf]
        %v6748 = vld [vmem:[%s6738 + $0x24] sm:$0xf]
        %v6749 = vld [vmem:[%s6738 + $0x28] sm:$0xf]
        %v6750 = vld [vmem:[%s6738 + $0x2c] sm:$0xf]
        %v6751 = vld [vmem:[%s6738 + $0x30] sm:$0xf]
        %v6752 = vld [vmem:[%s6738 + $0x34] sm:$0xf]
        %v6753 = vld [vmem:[%s6738 + $0x38] sm:$0xf]
        %v6754 = vld [vmem:[%s6738 + $0x3c] sm:$0xf]
        %v6756 = vunpack.c.l.b16 %v6737
        %v6757 = vpack.c.b16 %v5896, %v6756
        %v6758 = vrot.slane %v6757, 2
        %v6759 = vrot.slane %v5933, 2
        %v6760 = vsel %vm2235, %v6758, %v6759
        %v6761 = vrot.slane %v5934, 2
        %v6762 = vsel %vm2235, %v6759, %v6761
        %v6763 = vrot.slane %v5935, 2
        %v6764 = vsel %vm2235, %v6761, %v6763
        %v6765 = vrot.slane %v5936, 2
        %v6766 = vsel %vm2235, %v6763, %v6765
        %v6767 = vrot.slane %v5937, 2
        %v6768 = vsel %vm2235, %v6765, %v6767
        %v6769 = vrot.slane %v5938, 2
        %v6770 = vsel %vm2235, %v6767, %v6769
        %v6771 = vrot.slane %v5939, 2
        %v6772 = vsel %vm2235, %v6769, %v6771
        %v6773 = vrot.slane %v5940, 2
        %v6774 = vsel %vm2235, %v6771, %v6773
        %v6775 = vrot.slane %v5941, 2
        %v6776 = vsel %vm2235, %v6773, %v6775
        %v6777 = vrot.slane %v5942, 2
        %v6778 = vsel %vm2235, %v6775, %v6777
        %v6779 = vrot.slane %v5943, 2
        %v6780 = vsel %vm2235, %v6777, %v6779
        %v6781 = vrot.slane %v5944, 2
        %v6782 = vsel %vm2235, %v6779, %v6781
        %v6783 = vrot.slane %v5945, 2
        %v6784 = vsel %vm2235, %v6781, %v6783
        %v6785 = vrot.slane %v5946, 2
        %v6786 = vsel %vm2235, %v6783, %v6785
        %v6787 = vrot.slane %v5947, 2
        %v6788 = vsel %vm2235, %v6785, %v6787
        %v6789 = vrot.slane %v5948, 2
        %v6790 = vsel %vm2235, %v6787, %v6789
        %v6791 = vrot.slane %v5949, 2
        %v6792 = vsel %vm2235, %v6789, %v6791
        %v6793 = vrot.slane %v6287, 2
        %v6794 = vsel %vm2235, %v6791, %v6793
        %v6829 = vunpack.c.l.b16 %v6739
        %v6830 = vunpack.c.l.b16 %v6740
        %v6831 = vunpack.c.l.b16 %v6741
        %v6832 = vunpack.c.l.b16 %v6742
        %v6833 = vunpack.c.l.b16 %v6743
        %v6834 = vunpack.c.l.b16 %v6744
        %v6835 = vunpack.c.l.b16 %v6745
        %v6836 = vunpack.c.l.b16 %v6746
        %v6837 = vunpack.c.l.b16 %v6747
        %v6838 = vunpack.c.l.b16 %v6748
        %v6839 = vunpack.c.l.b16 %v6749
        %v6840 = vunpack.c.l.b16 %v6750
        %v6841 = vunpack.c.l.b16 %v6751
        %v6842 = vunpack.c.l.b16 %v6752
        %v6843 = vunpack.c.l.b16 %v6753
        %v6844 = vunpack.c.l.b16 %v6754
        %v6845 = vpack.c.b16 %v6830, %v6829
        %v6846 = vpack.c.b16 %v6832, %v6831
        %v6847 = vpack.c.b16 %v6834, %v6833
        %v6848 = vpack.c.b16 %v6836, %v6835
        %v6849 = vpack.c.b16 %v6838, %v6837
        %v6850 = vpack.c.b16 %v6840, %v6839
        %v6851 = vpack.c.b16 %v6842, %v6841
        %v6852 = vpack.c.b16 %v6844, %v6843
        %6861 = vmatprep.subr.bf16.mxu0 0
        %6862 = vmatpush1.bf16.msra.mxu0 %v6845
        %6863 = vmatprep.subr.bf16.mxu0 0
        %6864 = vmatpush1.bf16.msra.mxu0 %v6846
        %6865 = vmatprep.subr.bf16.mxu0 0
        %6866 = vmatpush1.bf16.msra.mxu0 %v6847
        %6867 = vmatprep.subr.bf16.mxu0 0
        %6868 = vmatpush1.bf16.msra.mxu0 %v6848
        %6869 = vmatprep.subr.bf16.mxu0 0
        %6870 = vmatpush1.bf16.msra.mxu0 %v6849
        %6871 = vmatprep.subr.bf16.mxu0 0
        %6872 = vmatpush1.bf16.msra.mxu0 %v6850
        %6873 = vmatprep.subr.bf16.mxu0 0
        %6874 = vmatpush1.bf16.msra.mxu0 %v6851
        %6875 = vmatprep.subr.bf16.mxu0 0
        %6876 = vmatpush1.bf16.msra.mxu0 %v6852
        %6877 = vmatprep.subr.bf16.mxu0 0
        %6878 = vmatpush1.bf16.msra.mxu0 0
        %6879 = vmatprep.subr.bf16.mxu0 0
        %6880 = vmatpush1.bf16.msra.mxu0 0
        %6881 = vmatprep.subr.bf16.mxu0 0
        %6882 = vmatpush1.bf16.msra.mxu0 0
        %6883 = vmatprep.subr.bf16.mxu0 0
        %6884 = vmatpush1.bf16.msra.mxu0 0
        %6885 = vmatprep.subr.bf16.mxu0 0
        %6886 = vmatpush1.bf16.msra.mxu0 0
        %6887 = vmatprep.subr.bf16.mxu0 0
        %6888 = vmatpush1.bf16.msra.mxu0 0
        %6889 = vmatprep.subr.bf16.mxu0 0
        %6890 = vmatpush1.bf16.msra.mxu0 0
        %6891 = vmatprep.subr.bf16.mxu0 0
        %6892 = vmatpush1.bf16.msra.mxu0 0
        %6893 = vmatprep.mubr.bf16.mxu0 0
        %6894 = vmatmul.mubr.bf16.gmra.mrb[0].mxu0 %v6760
        %v6895 = vpop.f32.mrb[0].mxu0
        %v6896 = vadd.f32 0.0, %v6895
        %v6897 = vpop.f32.mrb[0].mxu0
        %v6898 = vpop.f32.mrb[0].mxu0
        %v6899 = vadd.f32 0.0, %v6898
        %v6900 = vpop.f32.mrb[0].mxu0
        %6901 = vmatprep.mubr.bf16.mxu0 0
        %6902 = vmatmul.mubr.bf16.gmra.mrb[0].mxu0 %v6762
        %v6903 = vpop.f32.mrb[0].mxu0
        %v6904 = vadd.f32 0.0, %v6903
        %v6905 = vpop.f32.mrb[0].mxu0
        %v6906 = vpop.f32.mrb[0].mxu0
        %v6907 = vadd.f32 0.0, %v6906
        %v6908 = vpop.f32.mrb[0].mxu0
        %6909 = vmatprep.mubr.bf16.mxu0 0
        %6910 = vmatmul.mubr.bf16.gmra.mrb[0].mxu0 %v6764
        %v6911 = vpop.f32.mrb[0].mxu0
        %v6912 = vadd.f32 0.0, %v6911
        %v6913 = vpop.f32.mrb[0].mxu0
        %v6914 = vpop.f32.mrb[0].mxu0
        %v6915 = vadd.f32 0.0, %v6914
        %v6916 = vpop.f32.mrb[0].mxu0
        %6917 = vmatprep.mubr.bf16.mxu0 0
        %6918 = vmatmul.mubr.bf16.gmra.mrb[0].mxu0 %v6766
        %v6919 = vpop.f32.mrb[0].mxu0
        %v6920 = vadd.f32 0.0, %v6919
        %v6921 = vpop.f32.mrb[0].mxu0
        %v6922 = vpop.f32.mrb[0].mxu0
        %v6923 = vadd.f32 0.0, %v6922
        %v6924 = vpop.f32.mrb[0].mxu0
        %6925 = vmatprep.mubr.bf16.mxu0 0
        %6926 = vmatmul.mubr.bf16.gmra.mrb[0].mxu0 %v6768
        %v6927 = vpop.f32.mrb[0].mxu0
        %v6928 = vadd.f32 0.0, %v6927
        %v6929 = vpop.f32.mrb[0].mxu0
        %v6930 = vpop.f32.mrb[0].mxu0
        %v6931 = vadd.f32 0.0, %v6930
        %v6932 = vpop.f32.mrb[0].mxu0
        %6933 = vmatprep.mubr.bf16.mxu0 0
        %6934 = vmatmul.mubr.bf16.gmra.mrb[0].mxu0 %v6770
        %v6935 = vpop.f32.mrb[0].mxu0
        %v6936 = vadd.f32 0.0, %v6935
        %v6937 = vpop.f32.mrb[0].mxu0
        %v6938 = vpop.f32.mrb[0].mxu0
        %v6939 = vadd.f32 0.0, %v6938
        %v6940 = vpop.f32.mrb[0].mxu0
        %6941 = vmatprep.mubr.bf16.mxu0 0
        %6942 = vmatmul.mubr.bf16.gmra.mrb[0].mxu0 %v6772
        %v6943 = vpop.f32.mrb[0].mxu0
        %v6944 = vadd.f32 0.0, %v6943
        %v6945 = vpop.f32.mrb[0].mxu0
        %v6946 = vpop.f32.mrb[0].mxu0
        %v6947 = vadd.f32 0.0, %v6946
        %v6948 = vpop.f32.mrb[0].mxu0
        %6949 = vmatprep.mubr.bf16.mxu0 0
        %6950 = vmatmul.mubr.bf16.gmra.mrb[0].mxu0 %v6774
        %v6951 = vpop.f32.mrb[0].mxu0
        %v6952 = vadd.f32 0.0, %v6951
        %v6953 = vpop.f32.mrb[0].mxu0
        %v6954 = vpop.f32.mrb[0].mxu0
        %v6955 = vadd.f32 0.0, %v6954
        %v6956 = vpop.f32.mrb[0].mxu0
        %6957 = vmatprep.mubr.bf16.mxu0 0
        %6958 = vmatmul.mubr.bf16.gmra.mrb[0].mxu0 %v6776
        %v6959 = vpop.f32.mrb[0].mxu0
        %v6960 = vadd.f32 0.0, %v6959
        %v6961 = vpop.f32.mrb[0].mxu0
        %v6962 = vpop.f32.mrb[0].mxu0
        %v6963 = vadd.f32 0.0, %v6962
        %v6964 = vpop.f32.mrb[0].mxu0
        %6965 = vmatprep.mubr.bf16.mxu0 0
        %6966 = vmatmul.mubr.bf16.gmra.mrb[0].mxu0 %v6778
        %v6967 = vpop.f32.mrb[0].mxu0
        %v6968 = vadd.f32 0.0, %v6967
        %v6969 = vpop.f32.mrb[0].mxu0
        %v6970 = vpop.f32.mrb[0].mxu0
        %v6971 = vadd.f32 0.0, %v6970
        %v6972 = vpop.f32.mrb[0].mxu0
        %6973 = vmatprep.mubr.bf16.mxu0 0
        %6974 = vmatmul.mubr.bf16.gmra.mrb[0].mxu0 %v6780
        %v6975 = vpop.f32.mrb[0].mxu0
        %v6976 = vadd.f32 0.0, %v6975
        %v6977 = vpop.f32.mrb[0].mxu0
        %v6978 = vpop.f32.mrb[0].mxu0
        %v6979 = vadd.f32 0.0, %v6978
        %v6980 = vpop.f32.mrb[0].mxu0
        %6981 = vmatprep.mubr.bf16.mxu0 0
        %6982 = vmatmul.mubr.bf16.gmra.mrb[0].mxu0 %v6782
        %v6983 = vpop.f32.mrb[0].mxu0
        %v6984 = vadd.f32 0.0, %v6983
        %v6985 = vpop.f32.mrb[0].mxu0
        %v6986 = vpop.f32.mrb[0].mxu0
        %v6987 = vadd.f32 0.0, %v6986
        %v6988 = vpop.f32.mrb[0].mxu0
        %6989 = vmatprep.mubr.bf16.mxu0 0
        %6990 = vmatmul.mubr.bf16.gmra.mrb[0].mxu0 %v6784
        %v6991 = vpop.f32.mrb[0].mxu0
        %v6992 = vadd.f32 0.0, %v6991
        %v6993 = vpop.f32.mrb[0].mxu0
        %v6994 = vpop.f32.mrb[0].mxu0
        %v6995 = vadd.f32 0.0, %v6994
        %v6996 = vpop.f32.mrb[0].mxu0
        %6997 = vmatprep.mubr.bf16.mxu0 0
        %6998 = vmatmul.mubr.bf16.gmra.mrb[0].mxu0 %v6786
        %v6999 = vpop.f32.mrb[0].mxu0
        %v7000 = vadd.f32 0.0, %v6999
        %v7001 = vpop.f32.mrb[0].mxu0
        %v7002 = vpop.f32.mrb[0].mxu0
        %v7003 = vadd.f32 0.0, %v7002
        %v7004 = vpop.f32.mrb[0].mxu0
        %7005 = vmatprep.mubr.bf16.mxu0 0
        %7006 = vmatmul.mubr.bf16.gmra.mrb[0].mxu0 %v6788
        %v7007 = vpop.f32.mrb[0].mxu0
        %v7008 = vadd.f32 0.0, %v7007
        %v7009 = vpop.f32.mrb[0].mxu0
        %v7010 = vpop.f32.mrb[0].mxu0
        %v7011 = vadd.f32 0.0, %v7010
        %v7012 = vpop.f32.mrb[0].mxu0
        %7013 = vmatprep.mubr.bf16.mxu0 0
        %7014 = vmatmul.mubr.bf16.gmra.mrb[0].mxu0 %v6790
        %v7015 = vpop.f32.mrb[0].mxu0
        %v7016 = vadd.f32 0.0, %v7015
        %v7017 = vpop.f32.mrb[0].mxu0
        %v7018 = vpop.f32.mrb[0].mxu0
        %v7019 = vadd.f32 0.0, %v7018
        %v7020 = vpop.f32.mrb[0].mxu0
        %7021 = vmatprep.mubr.bf16.mxu0 0
        %7022 = vmatmul.mubr.bf16.gmra.mrb[0].mxu0 %v6792
        %v7023 = vpop.f32.mrb[0].mxu0
        %v7024 = vadd.f32 0.0, %v7023
        %v7025 = vpop.f32.mrb[0].mxu0
        %v7026 = vpop.f32.mrb[0].mxu0
        %v7027 = vadd.f32 0.0, %v7026
        %v7028 = vpop.f32.mrb[0].mxu0
        %7029 = vmatprep.mubr.bf16.mxu0 0
        %7030 = vmatmul.mubr.bf16.gmra.mrb[0].mxu0 %v6794
        %v7031 = vpop.f32.mrb[0].mxu0
        %v7032 = vadd.f32 0.0, %v7031
        %v7033 = vpop.f32.mrb[0].mxu0
        %v7034 = vpop.f32.mrb[0].mxu0
        %v7035 = vadd.f32 0.0, %v7034
        %v7036 = vpop.f32.mrb[0].mxu0
        %7037 = vdwg.mxu0
        %v7038 = vadd.f32 %v6701, %v6896
        %v7039 = vadd.f32 %v6702, %v6899
        %v7040 = vadd.f32 %v6703, %v6904
        %v7041 = vadd.f32 %v6704, %v6907
        %v7042 = vadd.f32 %v6705, %v6912
        %v7043 = vadd.f32 %v6706, %v6915
        %v7044 = vadd.f32 %v6707, %v6920
        %v7045 = vadd.f32 %v6708, %v6923
        %v7046 = vadd.f32 %v6709, %v6928
        %v7047 = vadd.f32 %v6710, %v6931
        %v7048 = vadd.f32 %v6711, %v6936
        %v7049 = vadd.f32 %v6712, %v6939
        %v7050 = vadd.f32 %v6713, %v6944
        %v7051 = vadd.f32 %v6714, %v6947
        %v7052 = vadd.f32 %v6715, %v6952
        %v7053 = vadd.f32 %v6716, %v6955
        %v7054 = vadd.f32 %v6717, %v6960
        %v7055 = vadd.f32 %v6718, %v6963
        %v7056 = vadd.f32 %v6719, %v6968
        %v7057 = vadd.f32 %v6720, %v6971
        %v7058 = vadd.f32 %v6721, %v6976
        %v7059 = vadd.f32 %v6722, %v6979
        %v7060 = vadd.f32 %v6723, %v6984
        %v7061 = vadd.f32 %v6724, %v6987
        %v7062 = vadd.f32 %v6725, %v6992
        %v7063 = vadd.f32 %v6726, %v6995
        %v7064 = vadd.f32 %v6727, %v7000
        %v7065 = vadd.f32 %v6728, %v7003
        %v7066 = vadd.f32 %v6729, %v7008
        %v7067 = vadd.f32 %v6730, %v7011
        %v7068 = vadd.f32 %v6731, %v7016
        %v7069 = vadd.f32 %v6732, %v7019
        %v7070 = vadd.f32 %v6733, %v7024
        %v7071 = vadd.f32 %v6734, %v7027
        %v7072 = vadd.f32 %v6735, %v7032
        %v7073 = vadd.f32 %v6736, %v7035
        %v7074 = vld [vmem:[#allocation2 + $0x10] sm:$0xc]
        %v7075 = vld [vmem:[#allocation2 + $0x14] sm:$0xf]
        %v7076 = vld [vmem:[#allocation2 + $0x18] sm:$0xf]
        %v7077 = vld [vmem:[#allocation2 + $0x1c] sm:$0xf]
        %v7078 = vld [vmem:[#allocation2 + $0x20] sm:$0xf]
        %v7079 = vld [vmem:[#allocation2 + $0x24] sm:$0xf]
        %v7080 = vld [vmem:[#allocation2 + $0x28] sm:$0xf]
        %v7081 = vld [vmem:[#allocation2 + $0x2c] sm:$0xf]
        %v7082 = vld [vmem:[#allocation2 + $0x30] sm:$0xf]
        %v7083 = vld [vmem:[#allocation2 + $0x34] sm:$0xf]
        %v7084 = vld [vmem:[#allocation2 + $0x38] sm:$0xf]
        %v7085 = vld [vmem:[#allocation2 + $0x3c] sm:$0xf]
        %v7086 = vld [vmem:[#allocation2 + $0x40] sm:$0xf]
        %v7087 = vld [vmem:[#allocation2 + $0x44] sm:$0xf]
        %v7088 = vld [vmem:[#allocation2 + $0x48] sm:$0xf]
        %v7089 = vld [vmem:[#allocation2 + $0x4c] sm:$0xf]
        %v7090 = vld [vmem:[#allocation2 + $0x50] sm:$0xf]
        %v7091 = vld [vmem:[#allocation2 + $0x54] sm:$0xf]
        %v7092 = vld [vmem:[#allocation2 + $0x58] sm:$0xf]
        %v7093 = vld [vmem:[#allocation2 + $0x5c] sm:$0xf]
        %v7094 = vld [vmem:[#allocation2 + $0x60] sm:$0xf]
        %v7095 = vld [vmem:[#allocation2 + $0x64] sm:$0xf]
        %v7096 = vld [vmem:[#allocation2 + $0x68] sm:$0xf]
        %v7097 = vld [vmem:[#allocation2 + $0x6c] sm:$0xf]
        %v7098 = vld [vmem:[#allocation2 + $0x70] sm:$0xf]
        %v7099 = vld [vmem:[#allocation2 + $0x74] sm:$0xf]
        %v7100 = vld [vmem:[#allocation2 + $0x78] sm:$0xf]
        %v7101 = vld [vmem:[#allocation2 + $0x7c] sm:$0xf]
        %v7102 = vld [vmem:[#allocation2 + $0x80] sm:$0xf]
        %v7103 = vld [vmem:[#allocation2 + $0x84] sm:$0xf]
        %v7104 = vld [vmem:[#allocation2 + $0x88] sm:$0xf]
        %v7105 = vld [vmem:[#allocation2 + $0x8c] sm:$0xf]
        %v7106 = vld [vmem:[#allocation2 + $0x90] sm:$0xf]
        %v7107 = vld [vmem:[#allocation2 + $0x94] sm:$0xf]
        %v7108 = vld [vmem:[#allocation2 + $0x98] sm:$0xf]
        %v7109 = vld [vmem:[#allocation2 + $0x9c] sm:$0xf]
        %v7110 = vld [vmem:[#allocation2 + $0xa0] sm:$0x3]
        %s7111 = scalar_lea.vmem %s3, 384
        %v7112 = vld [vmem:[%s7111] sm:$0xf]
        %v7113 = vld [vmem:[%s7111 + $0x4] sm:$0xf]
        %v7114 = vld [vmem:[%s7111 + $0x8] sm:$0xf]
        %v7115 = vld [vmem:[%s7111 + $0xc] sm:$0xf]
        %v7116 = vld [vmem:[%s7111 + $0x10] sm:$0xf]
        %v7117 = vld [vmem:[%s7111 + $0x14] sm:$0xf]
        %v7118 = vld [vmem:[%s7111 + $0x18] sm:$0xf]
        %v7119 = vld [vmem:[%s7111 + $0x1c] sm:$0xf]
        %v7120 = vld [vmem:[%s7111 + $0x20] sm:$0xf]
        %v7121 = vld [vmem:[%s7111 + $0x24] sm:$0xf]
        %v7122 = vld [vmem:[%s7111 + $0x28] sm:$0xf]
        %v7123 = vld [vmem:[%s7111 + $0x2c] sm:$0xf]
        %v7124 = vld [vmem:[%s7111 + $0x30] sm:$0xf]
        %v7125 = vld [vmem:[%s7111 + $0x34] sm:$0xf]
        %v7126 = vld [vmem:[%s7111 + $0x38] sm:$0xf]
        %v7127 = vld [vmem:[%s7111 + $0x3c] sm:$0xf]
        %v7165 = vunpack.c.l.b16 %v7074
        %v7166 = vunpack.c.l.b16 %v7075
        %v7167 = vunpack.c.l.b16 %v7076
        %v7168 = vunpack.c.l.b16 %v7077
        %v7169 = vunpack.c.l.b16 %v7078
        %v7170 = vunpack.c.l.b16 %v7079
        %v7171 = vunpack.c.l.b16 %v7080
        %v7172 = vunpack.c.l.b16 %v7081
        %v7173 = vunpack.c.l.b16 %v7082
        %v7174 = vunpack.c.l.b16 %v7083
        %v7175 = vunpack.c.l.b16 %v7084
        %v7176 = vunpack.c.l.b16 %v7085
        %v7177 = vunpack.c.l.b16 %v7086
        %v7178 = vunpack.c.l.b16 %v7087
        %v7179 = vunpack.c.l.b16 %v7088
        %v7180 = vunpack.c.l.b16 %v7089
        %v7181 = vunpack.c.l.b16 %v7090
        %v7182 = vunpack.c.l.b16 %v7091
        %v7183 = vunpack.c.l.b16 %v7092
        %v7184 = vunpack.c.l.b16 %v7093
        %v7185 = vunpack.c.l.b16 %v7094
        %v7186 = vunpack.c.l.b16 %v7095
        %v7187 = vunpack.c.l.b16 %v7096
        %v7188 = vunpack.c.l.b16 %v7097
        %v7189 = vunpack.c.l.b16 %v7098
        %v7190 = vunpack.c.l.b16 %v7099
        %v7191 = vunpack.c.l.b16 %v7100
        %v7192 = vunpack.c.l.b16 %v7101
        %v7193 = vunpack.c.l.b16 %v7102
        %v7194 = vunpack.c.l.b16 %v7103
        %v7195 = vunpack.c.l.b16 %v7104
        %v7196 = vunpack.c.l.b16 %v7105
        %v7197 = vunpack.c.l.b16 %v7106
        %v7198 = vunpack.c.l.b16 %v7107
        %v7199 = vunpack.c.l.b16 %v7108
        %v7200 = vunpack.c.l.b16 %v7109
        %v7201 = vunpack.c.l.b16 %v7110
        %v7202 = vpack.c.b16 %v7166, %v7165
        %v7203 = vpack.c.b16 %v7168, %v7167
        %v7204 = vpack.c.b16 %v7170, %v7169
        %v7205 = vpack.c.b16 %v7172, %v7171
        %v7206 = vpack.c.b16 %v7174, %v7173
        %v7207 = vpack.c.b16 %v7176, %v7175
        %v7208 = vpack.c.b16 %v7178, %v7177
        %v7209 = vpack.c.b16 %v7180, %v7179
        %v7210 = vpack.c.b16 %v7182, %v7181
        %v7211 = vpack.c.b16 %v7184, %v7183
        %v7212 = vpack.c.b16 %v7186, %v7185
        %v7213 = vpack.c.b16 %v7188, %v7187
        %v7214 = vpack.c.b16 %v7190, %v7189
        %v7215 = vpack.c.b16 %v7192, %v7191
        %v7216 = vpack.c.b16 %v7194, %v7193
        %v7217 = vpack.c.b16 %v7196, %v7195
        %v7218 = vpack.c.b16 %v7198, %v7197
        %v7219 = vpack.c.b16 %v7200, %v7199
        %v7220 = vpack.c.b16 %v7201, %v7201
        %v7221 = vrot.slane %v7202, 2
        %v7222 = vrot.slane %v7203, 2
        %v7223 = vsel %vm2235, %v7221, %v7222
        %v7224 = vrot.slane %v7204, 2
        %v7225 = vsel %vm2235, %v7222, %v7224
        %v7226 = vrot.slane %v7205, 2
        %v7227 = vsel %vm2235, %v7224, %v7226
        %v7228 = vrot.slane %v7206, 2
        %v7229 = vsel %vm2235, %v7226, %v7228
        %v7230 = vrot.slane %v7207, 2
        %v7231 = vsel %vm2235, %v7228, %v7230
        %v7232 = vrot.slane %v7208, 2
        %v7233 = vsel %vm2235, %v7230, %v7232
        %v7234 = vrot.slane %v7209, 2
        %v7235 = vsel %vm2235, %v7232, %v7234
        %v7236 = vrot.slane %v7210, 2
        %v7237 = vsel %vm2235, %v7234, %v7236
        %v7238 = vrot.slane %v7211, 2
        %v7239 = vsel %vm2235, %v7236, %v7238
        %v7240 = vrot.slane %v7212, 2
        %v7241 = vsel %vm2235, %v7238, %v7240
        %v7242 = vrot.slane %v7213, 2
        %v7243 = vsel %vm2235, %v7240, %v7242
        %v7244 = vrot.slane %v7214, 2
        %v7245 = vsel %vm2235, %v7242, %v7244
        %v7246 = vrot.slane %v7215, 2
        %v7247 = vsel %vm2235, %v7244, %v7246
        %v7248 = vrot.slane %v7216, 2
        %v7249 = vsel %vm2235, %v7246, %v7248
        %v7250 = vrot.slane %v7217, 2
        %v7251 = vsel %vm2235, %v7248, %v7250
        %v7252 = vrot.slane %v7218, 2
        %v7253 = vsel %vm2235, %v7250, %v7252
        %v7254 = vrot.slane %v7219, 2
        %v7255 = vsel %vm2235, %v7252, %v7254
        %v7256 = vrot.slane %v7220, 2
        %v7257 = vsel %vm2235, %v7254, %v7256
        %v7292 = vunpack.c.l.b16 %v7112
        %v7293 = vunpack.c.l.b16 %v7113
        %v7294 = vunpack.c.l.b16 %v7114
        %v7295 = vunpack.c.l.b16 %v7115
        %v7296 = vunpack.c.l.b16 %v7116
        %v7297 = vunpack.c.l.b16 %v7117
        %v7298 = vunpack.c.l.b16 %v7118
        %v7299 = vunpack.c.l.b16 %v7119
        %v7300 = vunpack.c.l.b16 %v7120
        %v7301 = vunpack.c.l.b16 %v7121
        %v7302 = vunpack.c.l.b16 %v7122
        %v7303 = vunpack.c.l.b16 %v7123
        %v7304 = vunpack.c.l.b16 %v7124
        %v7305 = vunpack.c.l.b16 %v7125
        %v7306 = vunpack.c.l.b16 %v7126
        %v7307 = vunpack.c.l.b16 %v7127
        %v7308 = vpack.c.b16 %v7293, %v7292
        %v7309 = vpack.c.b16 %v7295, %v7294
        %v7310 = vpack.c.b16 %v7297, %v7296
        %v7311 = vpack.c.b16 %v7299, %v7298
        %v7312 = vpack.c.b16 %v7301, %v7300
        %v7313 = vpack.c.b16 %v7303, %v7302
        %v7314 = vpack.c.b16 %v7305, %v7304
        %v7315 = vpack.c.b16 %v7307, %v7306
        %7324 = vmatprep.subr.bf16.mxu0 0
        %7325 = vmatpush1.bf16.msra.mxu0 %v7308
        %7326 = vmatprep.subr.bf16.mxu0 0
        %7327 = vmatpush1.bf16.msra.mxu0 %v7309
        %7328 = vmatprep.subr.bf16.mxu0 0
        %7329 = vmatpush1.bf16.msra.mxu0 %v7310
        %7330 = vmatprep.subr.bf16.mxu0 0
        %7331 = vmatpush1.bf16.msra.mxu0 %v7311
        %7332 = vmatprep.subr.bf16.mxu0 0
        %7333 = vmatpush1.bf16.msra.mxu0 %v7312
        %7334 = vmatprep.subr.bf16.mxu0 0
        %7335 = vmatpush1.bf16.msra.mxu0 %v7313
        %7336 = vmatprep.subr.bf16.mxu0 0
        %7337 = vmatpush1.bf16.msra.mxu0 %v7314
        %7338 = vmatprep.subr.bf16.mxu0 0
        %7339 = vmatpush1.bf16.msra.mxu0 %v7315
        %7340 = vmatprep.subr.bf16.mxu0 0
        %7341 = vmatpush1.bf16.msra.mxu0 0
        %7342 = vmatprep.subr.bf16.mxu0 0
        %7343 = vmatpush1.bf16.msra.mxu0 0
        %7344 = vmatprep.subr.bf16.mxu0 0
        %7345 = vmatpush1.bf16.msra.mxu0 0
        %7346 = vmatprep.subr.bf16.mxu0 0
        %7347 = vmatpush1.bf16.msra.mxu0 0
        %7348 = vmatprep.subr.bf16.mxu0 0
        %7349 = vmatpush1.bf16.msra.mxu0 0
        %7350 = vmatprep.subr.bf16.mxu0 0
        %7351 = vmatpush1.bf16.msra.mxu0 0
        %7352 = vmatprep.subr.bf16.mxu0 0
        %7353 = vmatpush1.bf16.msra.mxu0 0
        %7354 = vmatprep.subr.bf16.mxu0 0
        %7355 = vmatpush1.bf16.msra.mxu0 0
        %7356 = vmatprep.mubr.bf16.mxu0 0
        %7357 = vmatmul.mubr.bf16.gmra.mrb[0].mxu0 %v7223
        %v7358 = vpop.f32.mrb[0].mxu0
        %v7359 = vadd.f32 0.0, %v7358
        %v7360 = vpop.f32.mrb[0].mxu0
        %v7361 = vpop.f32.mrb[0].mxu0
        %v7362 = vadd.f32 0.0, %v7361
        %v7363 = vpop.f32.mrb[0].mxu0
        %7364 = vmatprep.mubr.bf16.mxu0 0
        %7365 = vmatmul.mubr.bf16.gmra.mrb[0].mxu0 %v7225
        %v7366 = vpop.f32.mrb[0].mxu0
        %v7367 = vadd.f32 0.0, %v7366
        %v7368 = vpop.f32.mrb[0].mxu0
        %v7369 = vpop.f32.mrb[0].mxu0
        %v7370 = vadd.f32 0.0, %v7369
        %v7371 = vpop.f32.mrb[0].mxu0
        %7372 = vmatprep.mubr.bf16.mxu0 0
        %7373 = vmatmul.mubr.bf16.gmra.mrb[0].mxu0 %v7227
        %v7374 = vpop.f32.mrb[0].mxu0
        %v7375 = vadd.f32 0.0, %v7374
        %v7376 = vpop.f32.mrb[0].mxu0
        %v7377 = vpop.f32.mrb[0].mxu0
        %v7378 = vadd.f32 0.0, %v7377
        %v7379 = vpop.f32.mrb[0].mxu0
        %7380 = vmatprep.mubr.bf16.mxu0 0
        %7381 = vmatmul.mubr.bf16.gmra.mrb[0].mxu0 %v7229
        %v7382 = vpop.f32.mrb[0].mxu0
        %v7383 = vadd.f32 0.0, %v7382
        %v7384 = vpop.f32.mrb[0].mxu0
        %v7385 = vpop.f32.mrb[0].mxu0
        %v7386 = vadd.f32 0.0, %v7385
        %v7387 = vpop.f32.mrb[0].mxu0
        %7388 = vmatprep.mubr.bf16.mxu0 0
        %7389 = vmatmul.mubr.bf16.gmra.mrb[0].mxu0 %v7231
        %v7390 = vpop.f32.mrb[0].mxu0
        %v7391 = vadd.f32 0.0, %v7390
        %v7392 = vpop.f32.mrb[0].mxu0
        %v7393 = vpop.f32.mrb[0].mxu0
        %v7394 = vadd.f32 0.0, %v7393
        %v7395 = vpop.f32.mrb[0].mxu0
        %7396 = vmatprep.mubr.bf16.mxu0 0
        %7397 = vmatmul.mubr.bf16.gmra.mrb[0].mxu0 %v7233
        %v7398 = vpop.f32.mrb[0].mxu0
        %v7399 = vadd.f32 0.0, %v7398
        %v7400 = vpop.f32.mrb[0].mxu0
        %v7401 = vpop.f32.mrb[0].mxu0
        %v7402 = vadd.f32 0.0, %v7401
        %v7403 = vpop.f32.mrb[0].mxu0
        %7404 = vmatprep.mubr.bf16.mxu0 0
        %7405 = vmatmul.mubr.bf16.gmra.mrb[0].mxu0 %v7235
        %v7406 = vpop.f32.mrb[0].mxu0
        %v7407 = vadd.f32 0.0, %v7406
        %v7408 = vpop.f32.mrb[0].mxu0
        %v7409 = vpop.f32.mrb[0].mxu0
        %v7410 = vadd.f32 0.0, %v7409
        %v7411 = vpop.f32.mrb[0].mxu0
        %7412 = vmatprep.mubr.bf16.mxu0 0
        %7413 = vmatmul.mubr.bf16.gmra.mrb[0].mxu0 %v7237
        %v7414 = vpop.f32.mrb[0].mxu0
        %v7415 = vadd.f32 0.0, %v7414
        %v7416 = vpop.f32.mrb[0].mxu0
        %v7417 = vpop.f32.mrb[0].mxu0
        %v7418 = vadd.f32 0.0, %v7417
        %v7419 = vpop.f32.mrb[0].mxu0
        %7420 = vmatprep.mubr.bf16.mxu0 0
        %7421 = vmatmul.mubr.bf16.gmra.mrb[0].mxu0 %v7239
        %v7422 = vpop.f32.mrb[0].mxu0
        %v7423 = vadd.f32 0.0, %v7422
        %v7424 = vpop.f32.mrb[0].mxu0
        %v7425 = vpop.f32.mrb[0].mxu0
        %v7426 = vadd.f32 0.0, %v7425
        %v7427 = vpop.f32.mrb[0].mxu0
        %7428 = vmatprep.mubr.bf16.mxu0 0
        %7429 = vmatmul.mubr.bf16.gmra.mrb[0].mxu0 %v7241
        %v7430 = vpop.f32.mrb[0].mxu0
        %v7431 = vadd.f32 0.0, %v7430
        %v7432 = vpop.f32.mrb[0].mxu0
        %v7433 = vpop.f32.mrb[0].mxu0
        %v7434 = vadd.f32 0.0, %v7433
        %v7435 = vpop.f32.mrb[0].mxu0
        %7436 = vmatprep.mubr.bf16.mxu0 0
        %7437 = vmatmul.mubr.bf16.gmra.mrb[0].mxu0 %v7243
        %v7438 = vpop.f32.mrb[0].mxu0
        %v7439 = vadd.f32 0.0, %v7438
        %v7440 = vpop.f32.mrb[0].mxu0
        %v7441 = vpop.f32.mrb[0].mxu0
        %v7442 = vadd.f32 0.0, %v7441
        %v7443 = vpop.f32.mrb[0].mxu0
        %7444 = vmatprep.mubr.bf16.mxu0 0
        %7445 = vmatmul.mubr.bf16.gmra.mrb[0].mxu0 %v7245
        %v7446 = vpop.f32.mrb[0].mxu0
        %v7447 = vadd.f32 0.0, %v7446
        %v7448 = vpop.f32.mrb[0].mxu0
        %v7449 = vpop.f32.mrb[0].mxu0
        %v7450 = vadd.f32 0.0, %v7449
        %v7451 = vpop.f32.mrb[0].mxu0
        %7452 = vmatprep.mubr.bf16.mxu0 0
        %7453 = vmatmul.mubr.bf16.gmra.mrb[0].mxu0 %v7247
        %v7454 = vpop.f32.mrb[0].mxu0
        %v7455 = vadd.f32 0.0, %v7454
        %v7456 = vpop.f32.mrb[0].mxu0
        %v7457 = vpop.f32.mrb[0].mxu0
        %v7458 = vadd.f32 0.0, %v7457
        %v7459 = vpop.f32.mrb[0].mxu0
        %7460 = vmatprep.mubr.bf16.mxu0 0
        %7461 = vmatmul.mubr.bf16.gmra.mrb[0].mxu0 %v7249
        %v7462 = vpop.f32.mrb[0].mxu0
        %v7463 = vadd.f32 0.0, %v7462
        %v7464 = vpop.f32.mrb[0].mxu0
        %v7465 = vpop.f32.mrb[0].mxu0
        %v7466 = vadd.f32 0.0, %v7465
        %v7467 = vpop.f32.mrb[0].mxu0
        %7468 = vmatprep.mubr.bf16.mxu0 0
        %7469 = vmatmul.mubr.bf16.gmra.mrb[0].mxu0 %v7251
        %v7470 = vpop.f32.mrb[0].mxu0
        %v7471 = vadd.f32 0.0, %v7470
        %v7472 = vpop.f32.mrb[0].mxu0
        %v7473 = vpop.f32.mrb[0].mxu0
        %v7474 = vadd.f32 0.0, %v7473
        %v7475 = vpop.f32.mrb[0].mxu0
        %7476 = vmatprep.mubr.bf16.mxu0 0
        %7477 = vmatmul.mubr.bf16.gmra.mrb[0].mxu0 %v7253
        %v7478 = vpop.f32.mrb[0].mxu0
        %v7479 = vadd.f32 0.0, %v7478
        %v7480 = vpop.f32.mrb[0].mxu0
        %v7481 = vpop.f32.mrb[0].mxu0
        %v7482 = vadd.f32 0.0, %v7481
        %v7483 = vpop.f32.mrb[0].mxu0
        %7484 = vmatprep.mubr.bf16.mxu0 0
        %7485 = vmatmul.mubr.bf16.gmra.mrb[0].mxu0 %v7255
        %v7486 = vpop.f32.mrb[0].mxu0
        %v7487 = vadd.f32 0.0, %v7486
        %v7488 = vpop.f32.mrb[0].mxu0
        %v7489 = vpop.f32.mrb[0].mxu0
        %v7490 = vadd.f32 0.0, %v7489
        %v7491 = vpop.f32.mrb[0].mxu0
        %7492 = vmatprep.mubr.bf16.mxu0 0
        %7493 = vmatmul.mubr.bf16.gmra.mrb[0].mxu0 %v7257
        %v7494 = vpop.f32.mrb[0].mxu0
        %v7495 = vadd.f32 0.0, %v7494
        %v7496 = vpop.f32.mrb[0].mxu0
        %v7497 = vpop.f32.mrb[0].mxu0
        %v7498 = vadd.f32 0.0, %v7497
        %v7499 = vpop.f32.mrb[0].mxu0
        %7500 = vdwg.mxu0
        %v7501 = vadd.f32 %v7038, %v7359
        %v7502 = vadd.f32 %v7039, %v7362
        %v7503 = vadd.f32 %v7040, %v7367
        %v7504 = vadd.f32 %v7041, %v7370
        %v7505 = vadd.f32 %v7042, %v7375
        %v7506 = vadd.f32 %v7043, %v7378
        %v7507 = vadd.f32 %v7044, %v7383
        %v7508 = vadd.f32 %v7045, %v7386
        %v7509 = vadd.f32 %v7046, %v7391
        %v7510 = vadd.f32 %v7047, %v7394
        %v7511 = vadd.f32 %v7048, %v7399
        %v7512 = vadd.f32 %v7049, %v7402
        %v7513 = vadd.f32 %v7050, %v7407
        %v7514 = vadd.f32 %v7051, %v7410
        %v7515 = vadd.f32 %v7052, %v7415
        %v7516 = vadd.f32 %v7053, %v7418
        %v7517 = vadd.f32 %v7054, %v7423
        %v7518 = vadd.f32 %v7055, %v7426
        %v7519 = vadd.f32 %v7056, %v7431
        %v7520 = vadd.f32 %v7057, %v7434
        %v7521 = vadd.f32 %v7058, %v7439
        %v7522 = vadd.f32 %v7059, %v7442
        %v7523 = vadd.f32 %v7060, %v7447
        %v7524 = vadd.f32 %v7061, %v7450
        %v7525 = vadd.f32 %v7062, %v7455
        %v7526 = vadd.f32 %v7063, %v7458
        %v7527 = vadd.f32 %v7064, %v7463
        %v7528 = vadd.f32 %v7065, %v7466
        %v7529 = vadd.f32 %v7066, %v7471
        %v7530 = vadd.f32 %v7067, %v7474
        %v7531 = vadd.f32 %v7068, %v7479
        %v7532 = vadd.f32 %v7069, %v7482
        %v7533 = vadd.f32 %v7070, %v7487
        %v7534 = vadd.f32 %v7071, %v7490
        %v7535 = vadd.f32 %v7072, %v7495
        %v7536 = vadd.f32 %v7073, %v7498
        %v7537 = vld [vmem:[#allocation2 + $0xa0] sm:$0x7]
        %s7538 = scalar_lea.vmem %s3, 448
        %v7539 = vld [vmem:[%s7538] sm:$0xf]
        %v7540 = vld [vmem:[%s7538 + $0x4] sm:$0xf]
        %v7541 = vld [vmem:[%s7538 + $0x8] sm:$0xf]
        %v7542 = vld [vmem:[%s7538 + $0xc] sm:$0xf]
        %v7543 = vld [vmem:[%s7538 + $0x10] sm:$0xf]
        %v7544 = vld [vmem:[%s7538 + $0x14] sm:$0xf]
        %v7545 = vld [vmem:[%s7538 + $0x18] sm:$0xf]
        %v7546 = vld [vmem:[%s7538 + $0x1c] sm:$0xf]
        %v7547 = vld [vmem:[%s7538 + $0x20] sm:$0xf]
        %v7548 = vld [vmem:[%s7538 + $0x24] sm:$0xf]
        %v7549 = vld [vmem:[%s7538 + $0x28] sm:$0xf]
        %v7550 = vld [vmem:[%s7538 + $0x2c] sm:$0xf]
        %v7551 = vld [vmem:[%s7538 + $0x30] sm:$0xf]
        %v7552 = vld [vmem:[%s7538 + $0x34] sm:$0xf]
        %v7553 = vld [vmem:[%s7538 + $0x38] sm:$0xf]
        %v7554 = vld [vmem:[%s7538 + $0x3c] sm:$0xf]
        %v7556 = vunpack.c.l.b16 %v7537
        %v7557 = vpack.c.b16 %v7556, %v7556
        %v7559 = vshrl.u32 %v7202, 16
        %v7561 = vrot.slane %v7559, 2
        %v7562 = vshll.u32 %v7202, 16
        %v7564 = vrot.slane %v7562, 3
        %v7565 = vor.u32 %v7561, %v7564
        %v7567 = vshrl.u32 %v7203, 16
        %v7569 = vrot.slane %v7567, 2
        %v7570 = vshll.u32 %v7203, 16
        %v7572 = vrot.slane %v7570, 3
        %v7573 = vor.u32 %v7569, %v7572
        %v7574 = vsel %vm2988, %v7565, %v7573
        %v7576 = vshrl.u32 %v7204, 16
        %v7578 = vrot.slane %v7576, 2
        %v7579 = vshll.u32 %v7204, 16
        %v7581 = vrot.slane %v7579, 3
        %v7582 = vor.u32 %v7578, %v7581
        %v7583 = vsel %vm2988, %v7573, %v7582
        %v7585 = vshrl.u32 %v7205, 16
        %v7587 = vrot.slane %v7585, 2
        %v7588 = vshll.u32 %v7205, 16
        %v7590 = vrot.slane %v7588, 3
        %v7591 = vor.u32 %v7587, %v7590
        %v7592 = vsel %vm2988, %v7582, %v7591
        %v7594 = vshrl.u32 %v7206, 16
        %v7596 = vrot.slane %v7594, 2
        %v7597 = vshll.u32 %v7206, 16
        %v7599 = vrot.slane %v7597, 3
        %v7600 = vor.u32 %v7596, %v7599
        %v7601 = vsel %vm2988, %v7591, %v7600
        %v7603 = vshrl.u32 %v7207, 16
        %v7605 = vrot.slane %v7603, 2
        %v7606 = vshll.u32 %v7207, 16
        %v7608 = vrot.slane %v7606, 3
        %v7609 = vor.u32 %v7605, %v7608
        %v7610 = vsel %vm2988, %v7600, %v7609
        %v7612 = vshrl.u32 %v7208, 16
        %v7614 = vrot.slane %v7612, 2
        %v7615 = vshll.u32 %v7208, 16
        %v7617 = vrot.slane %v7615, 3
        %v7618 = vor.u32 %v7614, %v7617
        %v7619 = vsel %vm2988, %v7609, %v7618
        %v7621 = vshrl.u32 %v7209, 16
        %v7623 = vrot.slane %v7621, 2
        %v7624 = vshll.u32 %v7209, 16
        %v7626 = vrot.slane %v7624, 3
        %v7627 = vor.u32 %v7623, %v7626
        %v7628 = vsel %vm2988, %v7618, %v7627
        %v7630 = vshrl.u32 %v7210, 16
        %v7632 = vrot.slane %v7630, 2
        %v7633 = vshll.u32 %v7210, 16
        %v7635 = vrot.slane %v7633, 3
        %v7636 = vor.u32 %v7632, %v7635
        %v7637 = vsel %vm2988, %v7627, %v7636
        %v7639 = vshrl.u32 %v7211, 16
        %v7641 = vrot.slane %v7639, 2
        %v7642 = vshll.u32 %v7211, 16
        %v7644 = vrot.slane %v7642, 3
        %v7645 = vor.u32 %v7641, %v7644
        %v7646 = vsel %vm2988, %v7636, %v7645
        %v7648 = vshrl.u32 %v7212, 16
        %v7650 = vrot.slane %v7648, 2
        %v7651 = vshll.u32 %v7212, 16
        %v7653 = vrot.slane %v7651, 3
        %v7654 = vor.u32 %v7650, %v7653
        %v7655 = vsel %vm2988, %v7645, %v7654
        %v7657 = vshrl.u32 %v7213, 16
        %v7659 = vrot.slane %v7657, 2
        %v7660 = vshll.u32 %v7213, 16
        %v7662 = vrot.slane %v7660, 3
        %v7663 = vor.u32 %v7659, %v7662
        %v7664 = vsel %vm2988, %v7654, %v7663
        %v7666 = vshrl.u32 %v7214, 16
        %v7668 = vrot.slane %v7666, 2
        %v7669 = vshll.u32 %v7214, 16
        %v7671 = vrot.slane %v7669, 3
        %v7672 = vor.u32 %v7668, %v7671
        %v7673 = vsel %vm2988, %v7663, %v7672
        %v7675 = vshrl.u32 %v7215, 16
        %v7677 = vrot.slane %v7675, 2
        %v7678 = vshll.u32 %v7215, 16
        %v7680 = vrot.slane %v7678, 3
        %v7681 = vor.u32 %v7677, %v7680
        %v7682 = vsel %vm2988, %v7672, %v7681
        %v7684 = vshrl.u32 %v7216, 16
        %v7686 = vrot.slane %v7684, 2
        %v7687 = vshll.u32 %v7216, 16
        %v7689 = vrot.slane %v7687, 3
        %v7690 = vor.u32 %v7686, %v7689
        %v7691 = vsel %vm2988, %v7681, %v7690
        %v7693 = vshrl.u32 %v7217, 16
        %v7695 = vrot.slane %v7693, 2
        %v7696 = vshll.u32 %v7217, 16
        %v7698 = vrot.slane %v7696, 3
        %v7699 = vor.u32 %v7695, %v7698
        %v7700 = vsel %vm2988, %v7690, %v7699
        %v7702 = vshrl.u32 %v7218, 16
        %v7704 = vrot.slane %v7702, 2
        %v7705 = vshll.u32 %v7218, 16
        %v7707 = vrot.slane %v7705, 3
        %v7708 = vor.u32 %v7704, %v7707
        %v7709 = vsel %vm2988, %v7699, %v7708
        %v7711 = vshrl.u32 %v7219, 16
        %v7713 = vrot.slane %v7711, 2
        %v7714 = vshll.u32 %v7219, 16
        %v7716 = vrot.slane %v7714, 3
        %v7717 = vor.u32 %v7713, %v7716
        %v7718 = vsel %vm2988, %v7708, %v7717
        %v7720 = vshrl.u32 %v7557, 16
        %v7722 = vrot.slane %v7720, 2
        %v7723 = vshll.u32 %v7557, 16
        %v7725 = vrot.slane %v7723, 3
        %v7726 = vor.u32 %v7722, %v7725
        %v7727 = vsel %vm2988, %v7717, %v7726
        %v7762 = vunpack.c.l.b16 %v7539
        %v7763 = vunpack.c.l.b16 %v7540
        %v7764 = vunpack.c.l.b16 %v7541
        %v7765 = vunpack.c.l.b16 %v7542
        %v7766 = vunpack.c.l.b16 %v7543
        %v7767 = vunpack.c.l.b16 %v7544
        %v7768 = vunpack.c.l.b16 %v7545
        %v7769 = vunpack.c.l.b16 %v7546
        %v7770 = vunpack.c.l.b16 %v7547
        %v7771 = vunpack.c.l.b16 %v7548
        %v7772 = vunpack.c.l.b16 %v7549
        %v7773 = vunpack.c.l.b16 %v7550
        %v7774 = vunpack.c.l.b16 %v7551
        %v7775 = vunpack.c.l.b16 %v7552
        %v7776 = vunpack.c.l.b16 %v7553
        %v7777 = vunpack.c.l.b16 %v7554
        %v7778 = vpack.c.b16 %v7763, %v7762
        %v7779 = vpack.c.b16 %v7765, %v7764
        %v7780 = vpack.c.b16 %v7767, %v7766
        %v7781 = vpack.c.b16 %v7769, %v7768
        %v7782 = vpack.c.b16 %v7771, %v7770
        %v7783 = vpack.c.b16 %v7773, %v7772
        %v7784 = vpack.c.b16 %v7775, %v7774
        %v7785 = vpack.c.b16 %v7777, %v7776
        %7794 = vmatprep.subr.bf16.mxu0 0
        %7795 = vmatpush1.bf16.msra.mxu0 %v7778
        %7796 = vmatprep.subr.bf16.mxu0 0
        %7797 = vmatpush1.bf16.msra.mxu0 %v7779
        %7798 = vmatprep.subr.bf16.mxu0 0
        %7799 = vmatpush1.bf16.msra.mxu0 %v7780
        %7800 = vmatprep.subr.bf16.mxu0 0
        %7801 = vmatpush1.bf16.msra.mxu0 %v7781
        %7802 = vmatprep.subr.bf16.mxu0 0
        %7803 = vmatpush1.bf16.msra.mxu0 %v7782
        %7804 = vmatprep.subr.bf16.mxu0 0
        %7805 = vmatpush1.bf16.msra.mxu0 %v7783
        %7806 = vmatprep.subr.bf16.mxu0 0
        %7807 = vmatpush1.bf16.msra.mxu0 %v7784
        %7808 = vmatprep.subr.bf16.mxu0 0
        %7809 = vmatpush1.bf16.msra.mxu0 %v7785
        %7810 = vmatprep.subr.bf16.mxu0 0
        %7811 = vmatpush1.bf16.msra.mxu0 0
        %7812 = vmatprep.subr.bf16.mxu0 0
        %7813 = vmatpush1.bf16.msra.mxu0 0
        %7814 = vmatprep.subr.bf16.mxu0 0
        %7815 = vmatpush1.bf16.msra.mxu0 0
        %7816 = vmatprep.subr.bf16.mxu0 0
        %7817 = vmatpush1.bf16.msra.mxu0 0
        %7818 = vmatprep.subr.bf16.mxu0 0
        %7819 = vmatpush1.bf16.msra.mxu0 0
        %7820 = vmatprep.subr.bf16.mxu0 0
        %7821 = vmatpush1.bf16.msra.mxu0 0
        %7822 = vmatprep.subr.bf16.mxu0 0
        %7823 = vmatpush1.bf16.msra.mxu0 0
        %7824 = vmatprep.subr.bf16.mxu0 0
        %7825 = vmatpush1.bf16.msra.mxu0 0
        %7826 = vmatprep.mubr.bf16.mxu0 0
        %7827 = vmatmul.mubr.bf16.gmra.mrb[0].mxu0 %v7574
        %v7828 = vpop.f32.mrb[0].mxu0
        %v7829 = vadd.f32 0.0, %v7828
        %v7830 = vpop.f32.mrb[0].mxu0
        %v7831 = vpop.f32.mrb[0].mxu0
        %v7832 = vadd.f32 0.0, %v7831
        %v7833 = vpop.f32.mrb[0].mxu0
        %7834 = vmatprep.mubr.bf16.mxu0 0
        %7835 = vmatmul.mubr.bf16.gmra.mrb[0].mxu0 %v7583
        %v7836 = vpop.f32.mrb[0].mxu0
        %v7837 = vadd.f32 0.0, %v7836
        %v7838 = vpop.f32.mrb[0].mxu0
        %v7839 = vpop.f32.mrb[0].mxu0
        %v7840 = vadd.f32 0.0, %v7839
        %v7841 = vpop.f32.mrb[0].mxu0
        %7842 = vmatprep.mubr.bf16.mxu0 0
        %7843 = vmatmul.mubr.bf16.gmra.mrb[0].mxu0 %v7592
        %v7844 = vpop.f32.mrb[0].mxu0
        %v7845 = vadd.f32 0.0, %v7844
        %v7846 = vpop.f32.mrb[0].mxu0
        %v7847 = vpop.f32.mrb[0].mxu0
        %v7848 = vadd.f32 0.0, %v7847
        %v7849 = vpop.f32.mrb[0].mxu0
        %7850 = vmatprep.mubr.bf16.mxu0 0
        %7851 = vmatmul.mubr.bf16.gmra.mrb[0].mxu0 %v7601
        %v7852 = vpop.f32.mrb[0].mxu0
        %v7853 = vadd.f32 0.0, %v7852
        %v7854 = vpop.f32.mrb[0].mxu0
        %v7855 = vpop.f32.mrb[0].mxu0
        %v7856 = vadd.f32 0.0, %v7855
        %v7857 = vpop.f32.mrb[0].mxu0
        %7858 = vmatprep.mubr.bf16.mxu0 0
        %7859 = vmatmul.mubr.bf16.gmra.mrb[0].mxu0 %v7610
        %v7860 = vpop.f32.mrb[0].mxu0
        %v7861 = vadd.f32 0.0, %v7860
        %v7862 = vpop.f32.mrb[0].mxu0
        %v7863 = vpop.f32.mrb[0].mxu0
        %v7864 = vadd.f32 0.0, %v7863
        %v7865 = vpop.f32.mrb[0].mxu0
        %7866 = vmatprep.mubr.bf16.mxu0 0
        %7867 = vmatmul.mubr.bf16.gmra.mrb[0].mxu0 %v7619
        %v7868 = vpop.f32.mrb[0].mxu0
        %v7869 = vadd.f32 0.0, %v7868
        %v7870 = vpop.f32.mrb[0].mxu0
        %v7871 = vpop.f32.mrb[0].mxu0
        %v7872 = vadd.f32 0.0, %v7871
        %v7873 = vpop.f32.mrb[0].mxu0
        %7874 = vmatprep.mubr.bf16.mxu0 0
        %7875 = vmatmul.mubr.bf16.gmra.mrb[0].mxu0 %v7628
        %v7876 = vpop.f32.mrb[0].mxu0
        %v7877 = vadd.f32 0.0, %v7876
        %v7878 = vpop.f32.mrb[0].mxu0
        %v7879 = vpop.f32.mrb[0].mxu0
        %v7880 = vadd.f32 0.0, %v7879
        %v7881 = vpop.f32.mrb[0].mxu0
        %7882 = vmatprep.mubr.bf16.mxu0 0
        %7883 = vmatmul.mubr.bf16.gmra.mrb[0].mxu0 %v7637
        %v7884 = vpop.f32.mrb[0].mxu0
        %v7885 = vadd.f32 0.0, %v7884
        %v7886 = vpop.f32.mrb[0].mxu0
        %v7887 = vpop.f32.mrb[0].mxu0
        %v7888 = vadd.f32 0.0, %v7887
        %v7889 = vpop.f32.mrb[0].mxu0
        %7890 = vmatprep.mubr.bf16.mxu0 0
        %7891 = vmatmul.mubr.bf16.gmra.mrb[0].mxu0 %v7646
        %v7892 = vpop.f32.mrb[0].mxu0
        %v7893 = vadd.f32 0.0, %v7892
        %v7894 = vpop.f32.mrb[0].mxu0
        %v7895 = vpop.f32.mrb[0].mxu0
        %v7896 = vadd.f32 0.0, %v7895
        %v7897 = vpop.f32.mrb[0].mxu0
        %7898 = vmatprep.mubr.bf16.mxu0 0
        %7899 = vmatmul.mubr.bf16.gmra.mrb[0].mxu0 %v7655
        %v7900 = vpop.f32.mrb[0].mxu0
        %v7901 = vadd.f32 0.0, %v7900
        %v7902 = vpop.f32.mrb[0].mxu0
        %v7903 = vpop.f32.mrb[0].mxu0
        %v7904 = vadd.f32 0.0, %v7903
        %v7905 = vpop.f32.mrb[0].mxu0
        %7906 = vmatprep.mubr.bf16.mxu0 0
        %7907 = vmatmul.mubr.bf16.gmra.mrb[0].mxu0 %v7664
        %v7908 = vpop.f32.mrb[0].mxu0
        %v7909 = vadd.f32 0.0, %v7908
        %v7910 = vpop.f32.mrb[0].mxu0
        %v7911 = vpop.f32.mrb[0].mxu0
        %v7912 = vadd.f32 0.0, %v7911
        %v7913 = vpop.f32.mrb[0].mxu0
        %7914 = vmatprep.mubr.bf16.mxu0 0
        %7915 = vmatmul.mubr.bf16.gmra.mrb[0].mxu0 %v7673
        %v7916 = vpop.f32.mrb[0].mxu0
        %v7917 = vadd.f32 0.0, %v7916
        %v7918 = vpop.f32.mrb[0].mxu0
        %v7919 = vpop.f32.mrb[0].mxu0
        %v7920 = vadd.f32 0.0, %v7919
        %v7921 = vpop.f32.mrb[0].mxu0
        %7922 = vmatprep.mubr.bf16.mxu0 0
        %7923 = vmatmul.mubr.bf16.gmra.mrb[0].mxu0 %v7682
        %v7924 = vpop.f32.mrb[0].mxu0
        %v7925 = vadd.f32 0.0, %v7924
        %v7926 = vpop.f32.mrb[0].mxu0
        %v7927 = vpop.f32.mrb[0].mxu0
        %v7928 = vadd.f32 0.0, %v7927
        %v7929 = vpop.f32.mrb[0].mxu0
        %7930 = vmatprep.mubr.bf16.mxu0 0
        %7931 = vmatmul.mubr.bf16.gmra.mrb[0].mxu0 %v7691
        %v7932 = vpop.f32.mrb[0].mxu0
        %v7933 = vadd.f32 0.0, %v7932
        %v7934 = vpop.f32.mrb[0].mxu0
        %v7935 = vpop.f32.mrb[0].mxu0
        %v7936 = vadd.f32 0.0, %v7935
        %v7937 = vpop.f32.mrb[0].mxu0
        %7938 = vmatprep.mubr.bf16.mxu0 0
        %7939 = vmatmul.mubr.bf16.gmra.mrb[0].mxu0 %v7700
        %v7940 = vpop.f32.mrb[0].mxu0
        %v7941 = vadd.f32 0.0, %v7940
        %v7942 = vpop.f32.mrb[0].mxu0
        %v7943 = vpop.f32.mrb[0].mxu0
        %v7944 = vadd.f32 0.0, %v7943
        %v7945 = vpop.f32.mrb[0].mxu0
        %7946 = vmatprep.mubr.bf16.mxu0 0
        %7947 = vmatmul.mubr.bf16.gmra.mrb[0].mxu0 %v7709
        %v7948 = vpop.f32.mrb[0].mxu0
        %v7949 = vadd.f32 0.0, %v7948
        %v7950 = vpop.f32.mrb[0].mxu0
        %v7951 = vpop.f32.mrb[0].mxu0
        %v7952 = vadd.f32 0.0, %v7951
        %v7953 = vpop.f32.mrb[0].mxu0
        %7954 = vmatprep.mubr.bf16.mxu0 0
        %7955 = vmatmul.mubr.bf16.gmra.mrb[0].mxu0 %v7718
        %v7956 = vpop.f32.mrb[0].mxu0
        %v7957 = vadd.f32 0.0, %v7956
        %v7958 = vpop.f32.mrb[0].mxu0
        %v7959 = vpop.f32.mrb[0].mxu0
        %v7960 = vadd.f32 0.0, %v7959
        %v7961 = vpop.f32.mrb[0].mxu0
        %7962 = vmatprep.mubr.bf16.mxu0 0
        %7963 = vmatmul.mubr.bf16.gmra.mrb[0].mxu0 %v7727
        %v7964 = vpop.f32.mrb[0].mxu0
        %v7965 = vadd.f32 0.0, %v7964
        %v7966 = vpop.f32.mrb[0].mxu0
        %v7967 = vpop.f32.mrb[0].mxu0
        %v7968 = vadd.f32 0.0, %v7967
        %v7969 = vpop.f32.mrb[0].mxu0
        %7970 = vdwg.mxu0
        %v7971 = vadd.f32 %v7501, %v7829
        %v7972 = vadd.f32 %v7502, %v7832
        %v7973 = vadd.f32 %v7503, %v7837
        %v7974 = vadd.f32 %v7504, %v7840
        %v7975 = vadd.f32 %v7505, %v7845
        %v7976 = vadd.f32 %v7506, %v7848
        %v7977 = vadd.f32 %v7507, %v7853
        %v7978 = vadd.f32 %v7508, %v7856
        %v7979 = vadd.f32 %v7509, %v7861
        %v7980 = vadd.f32 %v7510, %v7864
        %v7981 = vadd.f32 %v7511, %v7869
        %v7982 = vadd.f32 %v7512, %v7872
        %v7983 = vadd.f32 %v7513, %v7877
        %v7984 = vadd.f32 %v7514, %v7880
        %v7985 = vadd.f32 %v7515, %v7885
        %v7986 = vadd.f32 %v7516, %v7888
        %v7987 = vadd.f32 %v7517, %v7893
        %v7988 = vadd.f32 %v7518, %v7896
        %v7989 = vadd.f32 %v7519, %v7901
        %v7990 = vadd.f32 %v7520, %v7904
        %v7991 = vadd.f32 %v7521, %v7909
        %v7992 = vadd.f32 %v7522, %v7912
        %v7993 = vadd.f32 %v7523, %v7917
        %v7994 = vadd.f32 %v7524, %v7920
        %v7995 = vadd.f32 %v7525, %v7925
        %v7996 = vadd.f32 %v7526, %v7928
        %v7997 = vadd.f32 %v7527, %v7933
        %v7998 = vadd.f32 %v7528, %v7936
        %v7999 = vadd.f32 %v7529, %v7941
        %v8000 = vadd.f32 %v7530, %v7944
        %v8001 = vadd.f32 %v7531, %v7949
        %v8002 = vadd.f32 %v7532, %v7952
        %v8003 = vadd.f32 %v7533, %v7957
        %v8004 = vadd.f32 %v7534, %v7960
        %v8005 = vadd.f32 %v7535, %v7965
        %v8006 = vadd.f32 %v7536, %v7968
        %v8007 = vld [vmem:[#allocation2 + $0x10] sm:$0x8]
        %s8008 = scalar_lea.vmem %s3, 512
        %v8009 = vld [vmem:[%s8008] sm:$0xf]
        %v8010 = vld [vmem:[%s8008 + $0x4] sm:$0xf]
        %v8011 = vld [vmem:[%s8008 + $0x8] sm:$0xf]
        %v8012 = vld [vmem:[%s8008 + $0xc] sm:$0xf]
        %v8013 = vld [vmem:[%s8008 + $0x10] sm:$0xf]
        %v8014 = vld [vmem:[%s8008 + $0x14] sm:$0xf]
        %v8015 = vld [vmem:[%s8008 + $0x18] sm:$0xf]
        %v8016 = vld [vmem:[%s8008 + $0x1c] sm:$0xf]
        %v8017 = vld [vmem:[%s8008 + $0x20] sm:$0xf]
        %v8018 = vld [vmem:[%s8008 + $0x24] sm:$0xf]
        %v8019 = vld [vmem:[%s8008 + $0x28] sm:$0xf]
        %v8020 = vld [vmem:[%s8008 + $0x2c] sm:$0xf]
        %v8021 = vld [vmem:[%s8008 + $0x30] sm:$0xf]
        %v8022 = vld [vmem:[%s8008 + $0x34] sm:$0xf]
        %v8023 = vld [vmem:[%s8008 + $0x38] sm:$0xf]
        %v8024 = vld [vmem:[%s8008 + $0x3c] sm:$0xf]
        %v8026 = vunpack.c.l.b16 %v8007
        %v8027 = vpack.c.b16 %v7166, %v8026
        %v8028 = vrot.slane %v8027, 3
        %v8029 = vrot.slane %v7203, 3
        %v8030 = vsel %vm3435, %v8028, %v8029
        %v8031 = vrot.slane %v7204, 3
        %v8032 = vsel %vm3435, %v8029, %v8031
        %v8033 = vrot.slane %v7205, 3
        %v8034 = vsel %vm3435, %v8031, %v8033
        %v8035 = vrot.slane %v7206, 3
        %v8036 = vsel %vm3435, %v8033, %v8035
        %v8037 = vrot.slane %v7207, 3
        %v8038 = vsel %vm3435, %v8035, %v8037
        %v8039 = vrot.slane %v7208, 3
        %v8040 = vsel %vm3435, %v8037, %v8039
        %v8041 = vrot.slane %v7209, 3
        %v8042 = vsel %vm3435, %v8039, %v8041
        %v8043 = vrot.slane %v7210, 3
        %v8044 = vsel %vm3435, %v8041, %v8043
        %v8045 = vrot.slane %v7211, 3
        %v8046 = vsel %vm3435, %v8043, %v8045
        %v8047 = vrot.slane %v7212, 3
        %v8048 = vsel %vm3435, %v8045, %v8047
        %v8049 = vrot.slane %v7213, 3
        %v8050 = vsel %vm3435, %v8047, %v8049
        %v8051 = vrot.slane %v7214, 3
        %v8052 = vsel %vm3435, %v8049, %v8051
        %v8053 = vrot.slane %v7215, 3
        %v8054 = vsel %vm3435, %v8051, %v8053
        %v8055 = vrot.slane %v7216, 3
        %v8056 = vsel %vm3435, %v8053, %v8055
        %v8057 = vrot.slane %v7217, 3
        %v8058 = vsel %vm3435, %v8055, %v8057
        %v8059 = vrot.slane %v7218, 3
        %v8060 = vsel %vm3435, %v8057, %v8059
        %v8061 = vrot.slane %v7219, 3
        %v8062 = vsel %vm3435, %v8059, %v8061
        %v8063 = vrot.slane %v7557, 3
        %v8064 = vsel %vm3435, %v8061, %v8063
        %v8099 = vunpack.c.l.b16 %v8009
        %v8100 = vunpack.c.l.b16 %v8010
        %v8101 = vunpack.c.l.b16 %v8011
        %v8102 = vunpack.c.l.b16 %v8012
        %v8103 = vunpack.c.l.b16 %v8013
        %v8104 = vunpack.c.l.b16 %v8014
        %v8105 = vunpack.c.l.b16 %v8015
        %v8106 = vunpack.c.l.b16 %v8016
        %v8107 = vunpack.c.l.b16 %v8017
        %v8108 = vunpack.c.l.b16 %v8018
        %v8109 = vunpack.c.l.b16 %v8019
        %v8110 = vunpack.c.l.b16 %v8020
        %v8111 = vunpack.c.l.b16 %v8021
        %v8112 = vunpack.c.l.b16 %v8022
        %v8113 = vunpack.c.l.b16 %v8023
        %v8114 = vunpack.c.l.b16 %v8024
        %v8115 = vpack.c.b16 %v8100, %v8099
        %v8116 = vpack.c.b16 %v8102, %v8101
        %v8117 = vpack.c.b16 %v8104, %v8103
        %v8118 = vpack.c.b16 %v8106, %v8105
        %v8119 = vpack.c.b16 %v8108, %v8107
        %v8120 = vpack.c.b16 %v8110, %v8109
        %v8121 = vpack.c.b16 %v8112, %v8111
        %v8122 = vpack.c.b16 %v8114, %v8113
        %8131 = vmatprep.subr.bf16.mxu0 0
        %8132 = vmatpush1.bf16.msra.mxu0 %v8115
        %8133 = vmatprep.subr.bf16.mxu0 0
        %8134 = vmatpush1.bf16.msra.mxu0 %v8116
        %8135 = vmatprep.subr.bf16.mxu0 0
        %8136 = vmatpush1.bf16.msra.mxu0 %v8117
        %8137 = vmatprep.subr.bf16.mxu0 0
        %8138 = vmatpush1.bf16.msra.mxu0 %v8118
        %8139 = vmatprep.subr.bf16.mxu0 0
        %8140 = vmatpush1.bf16.msra.mxu0 %v8119
        %8141 = vmatprep.subr.bf16.mxu0 0
        %8142 = vmatpush1.bf16.msra.mxu0 %v8120
        %8143 = vmatprep.subr.bf16.mxu0 0
        %8144 = vmatpush1.bf16.msra.mxu0 %v8121
        %8145 = vmatprep.subr.bf16.mxu0 0
        %8146 = vmatpush1.bf16.msra.mxu0 %v8122
        %8147 = vmatprep.subr.bf16.mxu0 0
        %8148 = vmatpush1.bf16.msra.mxu0 0
        %8149 = vmatprep.subr.bf16.mxu0 0
        %8150 = vmatpush1.bf16.msra.mxu0 0
        %8151 = vmatprep.subr.bf16.mxu0 0
        %8152 = vmatpush1.bf16.msra.mxu0 0
        %8153 = vmatprep.subr.bf16.mxu0 0
        %8154 = vmatpush1.bf16.msra.mxu0 0
        %8155 = vmatprep.subr.bf16.mxu0 0
        %8156 = vmatpush1.bf16.msra.mxu0 0
        %8157 = vmatprep.subr.bf16.mxu0 0
        %8158 = vmatpush1.bf16.msra.mxu0 0
        %8159 = vmatprep.subr.bf16.mxu0 0
        %8160 = vmatpush1.bf16.msra.mxu0 0
        %8161 = vmatprep.subr.bf16.mxu0 0
        %8162 = vmatpush1.bf16.msra.mxu0 0
        %8163 = vmatprep.mubr.bf16.mxu0 0
        %8164 = vmatmul.mubr.bf16.gmra.mrb[0].mxu0 %v8030
        %v8165 = vpop.f32.mrb[0].mxu0
        %v8166 = vadd.f32 0.0, %v8165
        %v8167 = vpop.f32.mrb[0].mxu0
        %v8168 = vpop.f32.mrb[0].mxu0
        %v8169 = vadd.f32 0.0, %v8168
        %v8170 = vpop.f32.mrb[0].mxu0
        %8171 = vmatprep.mubr.bf16.mxu0 0
        %8172 = vmatmul.mubr.bf16.gmra.mrb[0].mxu0 %v8032
        %v8173 = vpop.f32.mrb[0].mxu0
        %v8174 = vadd.f32 0.0, %v8173
        %v8175 = vpop.f32.mrb[0].mxu0
        %v8176 = vpop.f32.mrb[0].mxu0
        %v8177 = vadd.f32 0.0, %v8176
        %v8178 = vpop.f32.mrb[0].mxu0
        %8179 = vmatprep.mubr.bf16.mxu0 0
        %8180 = vmatmul.mubr.bf16.gmra.mrb[0].mxu0 %v8034
        %v8181 = vpop.f32.mrb[0].mxu0
        %v8182 = vadd.f32 0.0, %v8181
        %v8183 = vpop.f32.mrb[0].mxu0
        %v8184 = vpop.f32.mrb[0].mxu0
        %v8185 = vadd.f32 0.0, %v8184
        %v8186 = vpop.f32.mrb[0].mxu0
        %8187 = vmatprep.mubr.bf16.mxu0 0
        %8188 = vmatmul.mubr.bf16.gmra.mrb[0].mxu0 %v8036
        %v8189 = vpop.f32.mrb[0].mxu0
        %v8190 = vadd.f32 0.0, %v8189
        %v8191 = vpop.f32.mrb[0].mxu0
        %v8192 = vpop.f32.mrb[0].mxu0
        %v8193 = vadd.f32 0.0, %v8192
        %v8194 = vpop.f32.mrb[0].mxu0
        %8195 = vmatprep.mubr.bf16.mxu0 0
        %8196 = vmatmul.mubr.bf16.gmra.mrb[0].mxu0 %v8038
        %v8197 = vpop.f32.mrb[0].mxu0
        %v8198 = vadd.f32 0.0, %v8197
        %v8199 = vpop.f32.mrb[0].mxu0
        %v8200 = vpop.f32.mrb[0].mxu0
        %v8201 = vadd.f32 0.0, %v8200
        %v8202 = vpop.f32.mrb[0].mxu0
        %8203 = vmatprep.mubr.bf16.mxu0 0
        %8204 = vmatmul.mubr.bf16.gmra.mrb[0].mxu0 %v8040
        %v8205 = vpop.f32.mrb[0].mxu0
        %v8206 = vadd.f32 0.0, %v8205
        %v8207 = vpop.f32.mrb[0].mxu0
        %v8208 = vpop.f32.mrb[0].mxu0
        %v8209 = vadd.f32 0.0, %v8208
        %v8210 = vpop.f32.mrb[0].mxu0
        %8211 = vmatprep.mubr.bf16.mxu0 0
        %8212 = vmatmul.mubr.bf16.gmra.mrb[0].mxu0 %v8042
        %v8213 = vpop.f32.mrb[0].mxu0
        %v8214 = vadd.f32 0.0, %v8213
        %v8215 = vpop.f32.mrb[0].mxu0
        %v8216 = vpop.f32.mrb[0].mxu0
        %v8217 = vadd.f32 0.0, %v8216
        %v8218 = vpop.f32.mrb[0].mxu0
        %8219 = vmatprep.mubr.bf16.mxu0 0
        %8220 = vmatmul.mubr.bf16.gmra.mrb[0].mxu0 %v8044
        %v8221 = vpop.f32.mrb[0].mxu0
        %v8222 = vadd.f32 0.0, %v8221
        %v8223 = vpop.f32.mrb[0].mxu0
        %v8224 = vpop.f32.mrb[0].mxu0
        %v8225 = vadd.f32 0.0, %v8224
        %v8226 = vpop.f32.mrb[0].mxu0
        %8227 = vmatprep.mubr.bf16.mxu0 0
        %8228 = vmatmul.mubr.bf16.gmra.mrb[0].mxu0 %v8046
        %v8229 = vpop.f32.mrb[0].mxu0
        %v8230 = vadd.f32 0.0, %v8229
        %v8231 = vpop.f32.mrb[0].mxu0
        %v8232 = vpop.f32.mrb[0].mxu0
        %v8233 = vadd.f32 0.0, %v8232
        %v8234 = vpop.f32.mrb[0].mxu0
        %8235 = vmatprep.mubr.bf16.mxu0 0
        %8236 = vmatmul.mubr.bf16.gmra.mrb[0].mxu0 %v8048
        %v8237 = vpop.f32.mrb[0].mxu0
        %v8238 = vadd.f32 0.0, %v8237
        %v8239 = vpop.f32.mrb[0].mxu0
        %v8240 = vpop.f32.mrb[0].mxu0
        %v8241 = vadd.f32 0.0, %v8240
        %v8242 = vpop.f32.mrb[0].mxu0
        %8243 = vmatprep.mubr.bf16.mxu0 0
        %8244 = vmatmul.mubr.bf16.gmra.mrb[0].mxu0 %v8050
        %v8245 = vpop.f32.mrb[0].mxu0
        %v8246 = vadd.f32 0.0, %v8245
        %v8247 = vpop.f32.mrb[0].mxu0
        %v8248 = vpop.f32.mrb[0].mxu0
        %v8249 = vadd.f32 0.0, %v8248
        %v8250 = vpop.f32.mrb[0].mxu0
        %8251 = vmatprep.mubr.bf16.mxu0 0
        %8252 = vmatmul.mubr.bf16.gmra.mrb[0].mxu0 %v8052
        %v8253 = vpop.f32.mrb[0].mxu0
        %v8254 = vadd.f32 0.0, %v8253
        %v8255 = vpop.f32.mrb[0].mxu0
        %v8256 = vpop.f32.mrb[0].mxu0
        %v8257 = vadd.f32 0.0, %v8256
        %v8258 = vpop.f32.mrb[0].mxu0
        %8259 = vmatprep.mubr.bf16.mxu0 0
        %8260 = vmatmul.mubr.bf16.gmra.mrb[0].mxu0 %v8054
        %v8261 = vpop.f32.mrb[0].mxu0
        %v8262 = vadd.f32 0.0, %v8261
        %v8263 = vpop.f32.mrb[0].mxu0
        %v8264 = vpop.f32.mrb[0].mxu0
        %v8265 = vadd.f32 0.0, %v8264
        %v8266 = vpop.f32.mrb[0].mxu0
        %8267 = vmatprep.mubr.bf16.mxu0 0
        %8268 = vmatmul.mubr.bf16.gmra.mrb[0].mxu0 %v8056
        %v8269 = vpop.f32.mrb[0].mxu0
        %v8270 = vadd.f32 0.0, %v8269
        %v8271 = vpop.f32.mrb[0].mxu0
        %v8272 = vpop.f32.mrb[0].mxu0
        %v8273 = vadd.f32 0.0, %v8272
        %v8274 = vpop.f32.mrb[0].mxu0
        %8275 = vmatprep.mubr.bf16.mxu0 0
        %8276 = vmatmul.mubr.bf16.gmra.mrb[0].mxu0 %v8058
        %v8277 = vpop.f32.mrb[0].mxu0
        %v8278 = vadd.f32 0.0, %v8277
        %v8279 = vpop.f32.mrb[0].mxu0
        %v8280 = vpop.f32.mrb[0].mxu0
        %v8281 = vadd.f32 0.0, %v8280
        %v8282 = vpop.f32.mrb[0].mxu0
        %8283 = vmatprep.mubr.bf16.mxu0 0
        %8284 = vmatmul.mubr.bf16.gmra.mrb[0].mxu0 %v8060
        %v8285 = vpop.f32.mrb[0].mxu0
        %v8286 = vadd.f32 0.0, %v8285
        %v8287 = vpop.f32.mrb[0].mxu0
        %v8288 = vpop.f32.mrb[0].mxu0
        %v8289 = vadd.f32 0.0, %v8288
        %v8290 = vpop.f32.mrb[0].mxu0
        %8291 = vmatprep.mubr.bf16.mxu0 0
        %8292 = vmatmul.mubr.bf16.gmra.mrb[0].mxu0 %v8062
        %v8293 = vpop.f32.mrb[0].mxu0
        %v8294 = vadd.f32 0.0, %v8293
        %v8295 = vpop.f32.mrb[0].mxu0
        %v8296 = vpop.f32.mrb[0].mxu0
        %v8297 = vadd.f32 0.0, %v8296
        %v8298 = vpop.f32.mrb[0].mxu0
        %8299 = vmatprep.mubr.bf16.mxu0 0
        %8300 = vmatmul.mubr.bf16.gmra.mrb[0].mxu0 %v8064
        %v8301 = vpop.f32.mrb[0].mxu0
        %v8302 = vadd.f32 0.0, %v8301
        %v8303 = vpop.f32.mrb[0].mxu0
        %v8304 = vpop.f32.mrb[0].mxu0
        %v8305 = vadd.f32 0.0, %v8304
        %v8306 = vpop.f32.mrb[0].mxu0
        %8307 = vdwg.mxu0
        %v8308 = vadd.f32 %v7971, %v8166
        %v8309 = vadd.f32 %v7972, %v8169
        %v8310 = vadd.f32 %v7973, %v8174
        %v8311 = vadd.f32 %v7974, %v8177
        %v8312 = vadd.f32 %v7975, %v8182
        %v8313 = vadd.f32 %v7976, %v8185
        %v8314 = vadd.f32 %v7977, %v8190
        %v8315 = vadd.f32 %v7978, %v8193
        %v8316 = vadd.f32 %v7979, %v8198
        %v8317 = vadd.f32 %v7980, %v8201
        %v8318 = vadd.f32 %v7981, %v8206
        %v8319 = vadd.f32 %v7982, %v8209
        %v8320 = vadd.f32 %v7983, %v8214
        %v8321 = vadd.f32 %v7984, %v8217
        %v8322 = vadd.f32 %v7985, %v8222
        %v8323 = vadd.f32 %v7986, %v8225
        %v8324 = vadd.f32 %v7987, %v8230
        %v8325 = vadd.f32 %v7988, %v8233
        %v8326 = vadd.f32 %v7989, %v8238
        %v8327 = vadd.f32 %v7990, %v8241
        %v8328 = vadd.f32 %v7991, %v8246
        %v8329 = vadd.f32 %v7992, %v8249
        %v8330 = vadd.f32 %v7993, %v8254
        %v8331 = vadd.f32 %v7994, %v8257
        %v8332 = vadd.f32 %v7995, %v8262
        %v8333 = vadd.f32 %v7996, %v8265
        %v8334 = vadd.f32 %v7997, %v8270
        %v8335 = vadd.f32 %v7998, %v8273
        %v8336 = vadd.f32 %v7999, %v8278
        %v8337 = vadd.f32 %v8000, %v8281
        %v8338 = vadd.f32 %v8001, %v8286
        %v8339 = vadd.f32 %v8002, %v8289
        %v8340 = vadd.f32 %v8003, %v8294
        %v8341 = vadd.f32 %v8004, %v8297
        %v8342 = vadd.f32 %v8005, %v8302
        %v8343 = vadd.f32 %v8006, %v8305
        %v8344 = vld [vmem:[%s288 + $0x8] sm:$0xe]
        %v8345 = vld [vmem:[%s288 + $0xc] sm:$0xf]
        %v8346 = vld [vmem:[%s288 + $0x10] sm:$0xf]
        %v8347 = vld [vmem:[%s288 + $0x14] sm:$0xf]
        %v8348 = vld [vmem:[%s288 + $0x18] sm:$0xf]
        %v8349 = vld [vmem:[%s288 + $0x1c] sm:$0xf]
        %v8350 = vld [vmem:[%s288 + $0x20] sm:$0xf]
        %v8351 = vld [vmem:[%s288 + $0x24] sm:$0xf]
        %v8352 = vld [vmem:[%s288 + $0x28] sm:$0xf]
        %v8353 = vld [vmem:[%s288 + $0x2c] sm:$0xf]
        %v8354 = vld [vmem:[%s288 + $0x30] sm:$0xf]
        %v8355 = vld [vmem:[%s288 + $0x34] sm:$0xf]
        %v8356 = vld [vmem:[%s288 + $0x38] sm:$0xf]
        %v8357 = vld [vmem:[%s288 + $0x3c] sm:$0xf]
        %v8358 = vld [vmem:[%s288 + $0x40] sm:$0xf]
        %v8359 = vld [vmem:[%s288 + $0x44] sm:$0xf]
        %v8360 = vld [vmem:[%s288 + $0x48] sm:$0xf]
        %v8361 = vld [vmem:[%s288 + $0x4c] sm:$0xf]
        %v8362 = vld [vmem:[%s288 + $0x50] sm:$0xf]
        %v8363 = vld [vmem:[%s288 + $0x54] sm:$0xf]
        %v8364 = vld [vmem:[%s288 + $0x58] sm:$0xf]
        %v8365 = vld [vmem:[%s288 + $0x5c] sm:$0xf]
        %v8366 = vld [vmem:[%s288 + $0x60] sm:$0xf]
        %v8367 = vld [vmem:[%s288 + $0x64] sm:$0xf]
        %v8368 = vld [vmem:[%s288 + $0x68] sm:$0xf]
        %v8369 = vld [vmem:[%s288 + $0x6c] sm:$0xf]
        %v8370 = vld [vmem:[%s288 + $0x70] sm:$0xf]
        %v8371 = vld [vmem:[%s288 + $0x74] sm:$0xf]
        %v8372 = vld [vmem:[%s288 + $0x78] sm:$0xf]
        %v8373 = vld [vmem:[%s288 + $0x7c] sm:$0xf]
        %v8374 = vld [vmem:[%s288 + $0x80] sm:$0xf]
        %v8375 = vld [vmem:[%s288 + $0x84] sm:$0xf]
        %v8376 = vld [vmem:[%s288 + $0x88] sm:$0xf]
        %v8377 = vld [vmem:[%s288 + $0x8c] sm:$0xf]
        %v8378 = vld [vmem:[%s288 + $0x90] sm:$0xf]
        %v8379 = vld [vmem:[%s288 + $0x94] sm:$0xf]
        %v8380 = vld [vmem:[%s288 + $0x98] sm:$0x3]
        %v8381 = vld [vmem:[%s5] sm:$0x3]
        %v8419 = vunpack.c.l.b16 %v8344
        %v8420 = vunpack.c.l.b16 %v8345
        %v8421 = vunpack.c.l.b16 %v8346
        %v8422 = vunpack.c.l.b16 %v8347
        %v8423 = vunpack.c.l.b16 %v8348
        %v8424 = vunpack.c.l.b16 %v8349
        %v8425 = vunpack.c.l.b16 %v8350
        %v8426 = vunpack.c.l.b16 %v8351
        %v8427 = vunpack.c.l.b16 %v8352
        %v8428 = vunpack.c.l.b16 %v8353
        %v8429 = vunpack.c.l.b16 %v8354
        %v8430 = vunpack.c.l.b16 %v8355
        %v8431 = vunpack.c.l.b16 %v8356
        %v8432 = vunpack.c.l.b16 %v8357
        %v8433 = vunpack.c.l.b16 %v8358
        %v8434 = vunpack.c.l.b16 %v8359
        %v8435 = vunpack.c.l.b16 %v8360
        %v8436 = vunpack.c.l.b16 %v8361
        %v8437 = vunpack.c.l.b16 %v8362
        %v8438 = vunpack.c.l.b16 %v8363
        %v8439 = vunpack.c.l.b16 %v8364
        %v8440 = vunpack.c.l.b16 %v8365
        %v8441 = vunpack.c.l.b16 %v8366
        %v8442 = vunpack.c.l.b16 %v8367
        %v8443 = vunpack.c.l.b16 %v8368
        %v8444 = vunpack.c.l.b16 %v8369
        %v8445 = vunpack.c.l.b16 %v8370
        %v8446 = vunpack.c.l.b16 %v8371
        %v8447 = vunpack.c.l.b16 %v8372
        %v8448 = vunpack.c.l.b16 %v8373
        %v8449 = vunpack.c.l.b16 %v8374
        %v8450 = vunpack.c.l.b16 %v8375
        %v8451 = vunpack.c.l.b16 %v8376
        %v8452 = vunpack.c.l.b16 %v8377
        %v8453 = vunpack.c.l.b16 %v8378
        %v8454 = vunpack.c.l.b16 %v8379
        %v8455 = vunpack.c.l.b16 %v8380
        %v8456 = vpack.c.b16 %v8420, %v8419
        %v8457 = vpack.c.b16 %v8422, %v8421
        %v8458 = vpack.c.b16 %v8424, %v8423
        %v8459 = vpack.c.b16 %v8426, %v8425
        %v8460 = vpack.c.b16 %v8428, %v8427
        %v8461 = vpack.c.b16 %v8430, %v8429
        %v8462 = vpack.c.b16 %v8432, %v8431
        %v8463 = vpack.c.b16 %v8434, %v8433
        %v8464 = vpack.c.b16 %v8436, %v8435
        %v8465 = vpack.c.b16 %v8438, %v8437
        %v8466 = vpack.c.b16 %v8440, %v8439
        %v8467 = vpack.c.b16 %v8442, %v8441
        %v8468 = vpack.c.b16 %v8444, %v8443
        %v8469 = vpack.c.b16 %v8446, %v8445
        %v8470 = vpack.c.b16 %v8448, %v8447
        %v8471 = vpack.c.b16 %v8450, %v8449
        %v8472 = vpack.c.b16 %v8452, %v8451
        %v8473 = vpack.c.b16 %v8454, %v8453
        %v8474 = vpack.c.b16 %v8455, %v8455
        %v8476 = vshrl.u32 %v8456, 16
        %v8478 = vrot.slane %v8476, 1
        %v8479 = vshll.u32 %v8456, 16
        %v8481 = vrot.slane %v8479, 2
        %v8482 = vor.u32 %v8478, %v8481
        %v8484 = vshrl.u32 %v8457, 16
        %v8486 = vrot.slane %v8484, 1
        %v8487 = vshll.u32 %v8457, 16
        %v8489 = vrot.slane %v8487, 2
        %v8490 = vor.u32 %v8486, %v8489
        %v8491 = vsel %vm1788, %v8482, %v8490
        %v8493 = vshrl.u32 %v8458, 16
        %v8495 = vrot.slane %v8493, 1
        %v8496 = vshll.u32 %v8458, 16
        %v8498 = vrot.slane %v8496, 2
        %v8499 = vor.u32 %v8495, %v8498
        %v8500 = vsel %vm1788, %v8490, %v8499
        %v8502 = vshrl.u32 %v8459, 16
        %v8504 = vrot.slane %v8502, 1
        %v8505 = vshll.u32 %v8459, 16
        %v8507 = vrot.slane %v8505, 2
        %v8508 = vor.u32 %v8504, %v8507
        %v8509 = vsel %vm1788, %v8499, %v8508
        %v8511 = vshrl.u32 %v8460, 16
        %v8513 = vrot.slane %v8511, 1
        %v8514 = vshll.u32 %v8460, 16
        %v8516 = vrot.slane %v8514, 2
        %v8517 = vor.u32 %v8513, %v8516
        %v8518 = vsel %vm1788, %v8508, %v8517
        %v8520 = vshrl.u32 %v8461, 16
        %v8522 = vrot.slane %v8520, 1
        %v8523 = vshll.u32 %v8461, 16
        %v8525 = vrot.slane %v8523, 2
        %v8526 = vor.u32 %v8522, %v8525
        %v8527 = vsel %vm1788, %v8517, %v8526
        %v8529 = vshrl.u32 %v8462, 16
        %v8531 = vrot.slane %v8529, 1
        %v8532 = vshll.u32 %v8462, 16
        %v8534 = vrot.slane %v8532, 2
        %v8535 = vor.u32 %v8531, %v8534
        %v8536 = vsel %vm1788, %v8526, %v8535
        %v8538 = vshrl.u32 %v8463, 16
        %v8540 = vrot.slane %v8538, 1
        %v8541 = vshll.u32 %v8463, 16
        %v8543 = vrot.slane %v8541, 2
        %v8544 = vor.u32 %v8540, %v8543
        %v8545 = vsel %vm1788, %v8535, %v8544
        %v8547 = vshrl.u32 %v8464, 16
        %v8549 = vrot.slane %v8547, 1
        %v8550 = vshll.u32 %v8464, 16
        %v8552 = vrot.slane %v8550, 2
        %v8553 = vor.u32 %v8549, %v8552
        %v8554 = vsel %vm1788, %v8544, %v8553
        %v8556 = vshrl.u32 %v8465, 16
        %v8558 = vrot.slane %v8556, 1
        %v8559 = vshll.u32 %v8465, 16
        %v8561 = vrot.slane %v8559, 2
        %v8562 = vor.u32 %v8558, %v8561
        %v8563 = vsel %vm1788, %v8553, %v8562
        %v8565 = vshrl.u32 %v8466, 16
        %v8567 = vrot.slane %v8565, 1
        %v8568 = vshll.u32 %v8466, 16
        %v8570 = vrot.slane %v8568, 2
        %v8571 = vor.u32 %v8567, %v8570
        %v8572 = vsel %vm1788, %v8562, %v8571
        %v8574 = vshrl.u32 %v8467, 16
        %v8576 = vrot.slane %v8574, 1
        %v8577 = vshll.u32 %v8467, 16
        %v8579 = vrot.slane %v8577, 2
        %v8580 = vor.u32 %v8576, %v8579
        %v8581 = vsel %vm1788, %v8571, %v8580
        %v8583 = vshrl.u32 %v8468, 16
        %v8585 = vrot.slane %v8583, 1
        %v8586 = vshll.u32 %v8468, 16
        %v8588 = vrot.slane %v8586, 2
        %v8589 = vor.u32 %v8585, %v8588
        %v8590 = vsel %vm1788, %v8580, %v8589
        %v8592 = vshrl.u32 %v8469, 16
        %v8594 = vrot.slane %v8592, 1
        %v8595 = vshll.u32 %v8469, 16
        %v8597 = vrot.slane %v8595, 2
        %v8598 = vor.u32 %v8594, %v8597
        %v8599 = vsel %vm1788, %v8589, %v8598
        %v8601 = vshrl.u32 %v8470, 16
        %v8603 = vrot.slane %v8601, 1
        %v8604 = vshll.u32 %v8470, 16
        %v8606 = vrot.slane %v8604, 2
        %v8607 = vor.u32 %v8603, %v8606
        %v8608 = vsel %vm1788, %v8598, %v8607
        %v8610 = vshrl.u32 %v8471, 16
        %v8612 = vrot.slane %v8610, 1
        %v8613 = vshll.u32 %v8471, 16
        %v8615 = vrot.slane %v8613, 2
        %v8616 = vor.u32 %v8612, %v8615
        %v8617 = vsel %vm1788, %v8607, %v8616
        %v8619 = vshrl.u32 %v8472, 16
        %v8621 = vrot.slane %v8619, 1
        %v8622 = vshll.u32 %v8472, 16
        %v8624 = vrot.slane %v8622, 2
        %v8625 = vor.u32 %v8621, %v8624
        %v8626 = vsel %vm1788, %v8616, %v8625
        %v8628 = vshrl.u32 %v8473, 16
        %v8630 = vrot.slane %v8628, 1
        %v8631 = vshll.u32 %v8473, 16
        %v8633 = vrot.slane %v8631, 2
        %v8634 = vor.u32 %v8630, %v8633
        %v8635 = vsel %vm1788, %v8625, %v8634
        %v8637 = vshrl.u32 %v8474, 16
        %v8639 = vrot.slane %v8637, 1
        %v8640 = vshll.u32 %v8474, 16
        %v8642 = vrot.slane %v8640, 2
        %v8643 = vor.u32 %v8639, %v8642
        %v8644 = vsel %vm1788, %v8634, %v8643
        %v8646 = vsel %vm577, %v8491, 0
        %v8649 = vsel %vm577, %v8500, 0
        %v8652 = vsel %vm577, %v8509, 0
        %v8655 = vsel %vm577, %v8518, 0
        %v8658 = vsel %vm577, %v8527, 0
        %v8661 = vsel %vm577, %v8536, 0
        %v8664 = vsel %vm577, %v8545, 0
        %v8667 = vsel %vm577, %v8554, 0
        %v8670 = vsel %vm577, %v8563, 0
        %v8673 = vsel %vm577, %v8572, 0
        %v8676 = vsel %vm577, %v8581, 0
        %v8679 = vsel %vm577, %v8590, 0
        %v8682 = vsel %vm577, %v8599, 0
        %v8685 = vsel %vm577, %v8608, 0
        %v8688 = vsel %vm577, %v8617, 0
        %v8691 = vsel %vm577, %v8626, 0
        %v8694 = vsel %vm577, %v8635, 0
        %v8697 = vsel %vm577, %v8644, 0
        %v8700 = vsel %vm632, %v8381, 0
        %8702 = vmatprep.subr.bf16.mxu0 0
        %8703 = vmatpush1.bf16.msra.mxu0 %v8700
        %8704 = vmatprep.subr.bf16.mxu0 0
        %8705 = vmatpush1.bf16.msra.mxu0 0
        %8706 = vmatprep.subr.bf16.mxu0 0
        %8707 = vmatpush1.bf16.msra.mxu0 0
        %8708 = vmatprep.subr.bf16.mxu0 0
        %8709 = vmatpush1.bf16.msra.mxu0 0
        %8710 = vmatprep.subr.bf16.mxu0 0
        %8711 = vmatpush1.bf16.msra.mxu0 0
        %8712 = vmatprep.subr.bf16.mxu0 0
        %8713 = vmatpush1.bf16.msra.mxu0 0
        %8714 = vmatprep.subr.bf16.mxu0 0
        %8715 = vmatpush1.bf16.msra.mxu0 0
        %8716 = vmatprep.subr.bf16.mxu0 0
        %8717 = vmatpush1.bf16.msra.mxu0 0
        %8718 = vmatprep.subr.bf16.mxu0 0
        %8719 = vmatpush1.bf16.msra.mxu0 0
        %8720 = vmatprep.subr.bf16.mxu0 0
        %8721 = vmatpush1.bf16.msra.mxu0 0
        %8722 = vmatprep.subr.bf16.mxu0 0
        %8723 = vmatpush1.bf16.msra.mxu0 0
        %8724 = vmatprep.subr.bf16.mxu0 0
        %8725 = vmatpush1.bf16.msra.mxu0 0
        %8726 = vmatprep.subr.bf16.mxu0 0
        %8727 = vmatpush1.bf16.msra.mxu0 0
        %8728 = vmatprep.subr.bf16.mxu0 0
        %8729 = vmatpush1.bf16.msra.mxu0 0
        %8730 = vmatprep.subr.bf16.mxu0 0
        %8731 = vmatpush1.bf16.msra.mxu0 0
        %8732 = vmatprep.subr.bf16.mxu0 0
        %8733 = vmatpush1.bf16.msra.mxu0 0
        %8734 = vmatprep.mubr.bf16.mxu0 0
        %8735 = vmatmul.mubr.bf16.gmra.mrb[0].mxu0 %v8646
        %v8736 = vpop.f32.mrb[0].mxu0
        %v8737 = vadd.f32 0.0, %v8736
        %v8738 = vpop.f32.mrb[0].mxu0
        %v8739 = vpop.f32.mrb[0].mxu0
        %v8740 = vadd.f32 0.0, %v8739
        %v8741 = vpop.f32.mrb[0].mxu0
        %8742 = vmatprep.mubr.bf16.mxu0 0
        %8743 = vmatmul.mubr.bf16.gmra.mrb[0].mxu0 %v8649
        %v8744 = vpop.f32.mrb[0].mxu0
        %v8745 = vadd.f32 0.0, %v8744
        %v8746 = vpop.f32.mrb[0].mxu0
        %v8747 = vpop.f32.mrb[0].mxu0
        %v8748 = vadd.f32 0.0, %v8747
        %v8749 = vpop.f32.mrb[0].mxu0
        %8750 = vmatprep.mubr.bf16.mxu0 0
        %8751 = vmatmul.mubr.bf16.gmra.mrb[0].mxu0 %v8652
        %v8752 = vpop.f32.mrb[0].mxu0
        %v8753 = vadd.f32 0.0, %v8752
        %v8754 = vpop.f32.mrb[0].mxu0
        %v8755 = vpop.f32.mrb[0].mxu0
        %v8756 = vadd.f32 0.0, %v8755
        %v8757 = vpop.f32.mrb[0].mxu0
        %8758 = vmatprep.mubr.bf16.mxu0 0
        %8759 = vmatmul.mubr.bf16.gmra.mrb[0].mxu0 %v8655
        %v8760 = vpop.f32.mrb[0].mxu0
        %v8761 = vadd.f32 0.0, %v8760
        %v8762 = vpop.f32.mrb[0].mxu0
        %v8763 = vpop.f32.mrb[0].mxu0
        %v8764 = vadd.f32 0.0, %v8763
        %v8765 = vpop.f32.mrb[0].mxu0
        %8766 = vmatprep.mubr.bf16.mxu0 0
        %8767 = vmatmul.mubr.bf16.gmra.mrb[0].mxu0 %v8658
        %v8768 = vpop.f32.mrb[0].mxu0
        %v8769 = vadd.f32 0.0, %v8768
        %v8770 = vpop.f32.mrb[0].mxu0
        %v8771 = vpop.f32.mrb[0].mxu0
        %v8772 = vadd.f32 0.0, %v8771
        %v8773 = vpop.f32.mrb[0].mxu0
        %8774 = vmatprep.mubr.bf16.mxu0 0
        %8775 = vmatmul.mubr.bf16.gmra.mrb[0].mxu0 %v8661
        %v8776 = vpop.f32.mrb[0].mxu0
        %v8777 = vadd.f32 0.0, %v8776
        %v8778 = vpop.f32.mrb[0].mxu0
        %v8779 = vpop.f32.mrb[0].mxu0
        %v8780 = vadd.f32 0.0, %v8779
        %v8781 = vpop.f32.mrb[0].mxu0
        %8782 = vmatprep.mubr.bf16.mxu0 0
        %8783 = vmatmul.mubr.bf16.gmra.mrb[0].mxu0 %v8664
        %v8784 = vpop.f32.mrb[0].mxu0
        %v8785 = vadd.f32 0.0, %v8784
        %v8786 = vpop.f32.mrb[0].mxu0
        %v8787 = vpop.f32.mrb[0].mxu0
        %v8788 = vadd.f32 0.0, %v8787
        %v8789 = vpop.f32.mrb[0].mxu0
        %8790 = vmatprep.mubr.bf16.mxu0 0
        %8791 = vmatmul.mubr.bf16.gmra.mrb[0].mxu0 %v8667
        %v8792 = vpop.f32.mrb[0].mxu0
        %v8793 = vadd.f32 0.0, %v8792
        %v8794 = vpop.f32.mrb[0].mxu0
        %v8795 = vpop.f32.mrb[0].mxu0
        %v8796 = vadd.f32 0.0, %v8795
        %v8797 = vpop.f32.mrb[0].mxu0
        %8798 = vmatprep.mubr.bf16.mxu0 0
        %8799 = vmatmul.mubr.bf16.gmra.mrb[0].mxu0 %v8670
        %v8800 = vpop.f32.mrb[0].mxu0
        %v8801 = vadd.f32 0.0, %v8800
        %v8802 = vpop.f32.mrb[0].mxu0
        %v8803 = vpop.f32.mrb[0].mxu0
        %v8804 = vadd.f32 0.0, %v8803
        %v8805 = vpop.f32.mrb[0].mxu0
        %8806 = vmatprep.mubr.bf16.mxu0 0
        %8807 = vmatmul.mubr.bf16.gmra.mrb[0].mxu0 %v8673
        %v8808 = vpop.f32.mrb[0].mxu0
        %v8809 = vadd.f32 0.0, %v8808
        %v8810 = vpop.f32.mrb[0].mxu0
        %v8811 = vpop.f32.mrb[0].mxu0
        %v8812 = vadd.f32 0.0, %v8811
        %v8813 = vpop.f32.mrb[0].mxu0
        %8814 = vmatprep.mubr.bf16.mxu0 0
        %8815 = vmatmul.mubr.bf16.gmra.mrb[0].mxu0 %v8676
        %v8816 = vpop.f32.mrb[0].mxu0
        %v8817 = vadd.f32 0.0, %v8816
        %v8818 = vpop.f32.mrb[0].mxu0
        %v8819 = vpop.f32.mrb[0].mxu0
        %v8820 = vadd.f32 0.0, %v8819
        %v8821 = vpop.f32.mrb[0].mxu0
        %8822 = vmatprep.mubr.bf16.mxu0 0
        %8823 = vmatmul.mubr.bf16.gmra.mrb[0].mxu0 %v8679
        %v8824 = vpop.f32.mrb[0].mxu0
        %v8825 = vadd.f32 0.0, %v8824
        %v8826 = vpop.f32.mrb[0].mxu0
        %v8827 = vpop.f32.mrb[0].mxu0
        %v8828 = vadd.f32 0.0, %v8827
        %v8829 = vpop.f32.mrb[0].mxu0
        %8830 = vmatprep.mubr.bf16.mxu0 0
        %8831 = vmatmul.mubr.bf16.gmra.mrb[0].mxu0 %v8682
        %v8832 = vpop.f32.mrb[0].mxu0
        %v8833 = vadd.f32 0.0, %v8832
        %v8834 = vpop.f32.mrb[0].mxu0
        %v8835 = vpop.f32.mrb[0].mxu0
        %v8836 = vadd.f32 0.0, %v8835
        %v8837 = vpop.f32.mrb[0].mxu0
        %8838 = vmatprep.mubr.bf16.mxu0 0
        %8839 = vmatmul.mubr.bf16.gmra.mrb[0].mxu0 %v8685
        %v8840 = vpop.f32.mrb[0].mxu0
        %v8841 = vadd.f32 0.0, %v8840
        %v8842 = vpop.f32.mrb[0].mxu0
        %v8843 = vpop.f32.mrb[0].mxu0
        %v8844 = vadd.f32 0.0, %v8843
        %v8845 = vpop.f32.mrb[0].mxu0
        %8846 = vmatprep.mubr.bf16.mxu0 0
        %8847 = vmatmul.mubr.bf16.gmra.mrb[0].mxu0 %v8688
        %v8848 = vpop.f32.mrb[0].mxu0
        %v8849 = vadd.f32 0.0, %v8848
        %v8850 = vpop.f32.mrb[0].mxu0
        %v8851 = vpop.f32.mrb[0].mxu0
        %v8852 = vadd.f32 0.0, %v8851
        %v8853 = vpop.f32.mrb[0].mxu0
        %8854 = vmatprep.mubr.bf16.mxu0 0
        %8855 = vmatmul.mubr.bf16.gmra.mrb[0].mxu0 %v8691
        %v8856 = vpop.f32.mrb[0].mxu0
        %v8857 = vadd.f32 0.0, %v8856
        %v8858 = vpop.f32.mrb[0].mxu0
        %v8859 = vpop.f32.mrb[0].mxu0
        %v8860 = vadd.f32 0.0, %v8859
        %v8861 = vpop.f32.mrb[0].mxu0
        %8862 = vmatprep.mubr.bf16.mxu0 0
        %8863 = vmatmul.mubr.bf16.gmra.mrb[0].mxu0 %v8694
        %v8864 = vpop.f32.mrb[0].mxu0
        %v8865 = vadd.f32 0.0, %v8864
        %v8866 = vpop.f32.mrb[0].mxu0
        %v8867 = vpop.f32.mrb[0].mxu0
        %v8868 = vadd.f32 0.0, %v8867
        %v8869 = vpop.f32.mrb[0].mxu0
        %8870 = vmatprep.mubr.bf16.mxu0 0
        %8871 = vmatmul.mubr.bf16.gmra.mrb[0].mxu0 %v8697
        %v8872 = vpop.f32.mrb[0].mxu0
        %v8873 = vadd.f32 0.0, %v8872
        %v8874 = vpop.f32.mrb[0].mxu0
        %v8875 = vpop.f32.mrb[0].mxu0
        %v8876 = vadd.f32 0.0, %v8875
        %v8877 = vpop.f32.mrb[0].mxu0
        %8878 = vdwg.mxu0
        %v8879 = vld [vmem:[%s4] sm:$0x1]
        %v8881 = vlaneseq
        %v8882 = vshrl.u32 %v8881, 7
        %v8883 = vsub.s32 0, %v8882
        %v8884 = vrot.slane %v8879, %v8883
        %v8886 = vadd.f32 %v8308, %v8884
        %v8887 = vadd.f32 %v8309, %v8884
        %v8888 = vadd.f32 %v8310, %v8884
        %v8889 = vadd.f32 %v8311, %v8884
        %v8890 = vadd.f32 %v8312, %v8884
        %v8891 = vadd.f32 %v8313, %v8884
        %v8892 = vadd.f32 %v8314, %v8884
        %v8893 = vadd.f32 %v8315, %v8884
        %v8894 = vadd.f32 %v8316, %v8884
        %v8895 = vadd.f32 %v8317, %v8884
        %v8896 = vadd.f32 %v8318, %v8884
        %v8897 = vadd.f32 %v8319, %v8884
        %v8898 = vadd.f32 %v8320, %v8884
        %v8899 = vadd.f32 %v8321, %v8884
        %v8900 = vadd.f32 %v8322, %v8884
        %v8901 = vadd.f32 %v8323, %v8884
        %v8902 = vadd.f32 %v8324, %v8884
        %v8903 = vadd.f32 %v8325, %v8884
        %v8904 = vadd.f32 %v8326, %v8884
        %v8905 = vadd.f32 %v8327, %v8884
        %v8906 = vadd.f32 %v8328, %v8884
        %v8907 = vadd.f32 %v8329, %v8884
        %v8908 = vadd.f32 %v8330, %v8884
        %v8909 = vadd.f32 %v8331, %v8884
        %v8910 = vadd.f32 %v8332, %v8884
        %v8911 = vadd.f32 %v8333, %v8884
        %v8912 = vadd.f32 %v8334, %v8884
        %v8913 = vadd.f32 %v8335, %v8884
        %v8914 = vadd.f32 %v8336, %v8884
        %v8915 = vadd.f32 %v8337, %v8884
        %v8916 = vadd.f32 %v8338, %v8884
        %v8917 = vadd.f32 %v8339, %v8884
        %v8918 = vadd.f32 %v8340, %v8884
        %v8919 = vadd.f32 %v8341, %v8884
        %v8920 = vadd.f32 %v8342, %v8884
        %v8921 = vadd.f32 %v8343, %v8884
        %v8922 = vadd.f32 %v8886, %v8737
        %v8923 = vadd.f32 %v8887, %v8740
        %v8924 = vadd.f32 %v8888, %v8745
        %v8925 = vadd.f32 %v8889, %v8748
        %v8926 = vadd.f32 %v8890, %v8753
        %v8927 = vadd.f32 %v8891, %v8756
        %v8928 = vadd.f32 %v8892, %v8761
        %v8929 = vadd.f32 %v8893, %v8764
        %v8930 = vadd.f32 %v8894, %v8769
        %v8931 = vadd.f32 %v8895, %v8772
        %v8932 = vadd.f32 %v8896, %v8777
        %v8933 = vadd.f32 %v8897, %v8780
        %v8934 = vadd.f32 %v8898, %v8785
        %v8935 = vadd.f32 %v8899, %v8788
        %v8936 = vadd.f32 %v8900, %v8793
        %v8937 = vadd.f32 %v8901, %v8796
        %v8938 = vadd.f32 %v8902, %v8801
        %v8939 = vadd.f32 %v8903, %v8804
        %v8940 = vadd.f32 %v8904, %v8809
        %v8941 = vadd.f32 %v8905, %v8812
        %v8942 = vadd.f32 %v8906, %v8817
        %v8943 = vadd.f32 %v8907, %v8820
        %v8944 = vadd.f32 %v8908, %v8825
        %v8945 = vadd.f32 %v8909, %v8828
        %v8946 = vadd.f32 %v8910, %v8833
        %v8947 = vadd.f32 %v8911, %v8836
        %v8948 = vadd.f32 %v8912, %v8841
        %v8949 = vadd.f32 %v8913, %v8844
        %v8950 = vadd.f32 %v8914, %v8849
        %v8951 = vadd.f32 %v8915, %v8852
        %v8952 = vadd.f32 %v8916, %v8857
        %v8953 = vadd.f32 %v8917, %v8860
        %v8954 = vadd.f32 %v8918, %v8865
        %v8955 = vadd.f32 %v8919, %v8868
        %v8956 = vadd.f32 %v8920, %v8873
        %v8957 = vadd.f32 %v8921, %v8876
        %v8958 = vmax.f32 %v8922, 0.0
        %v8959 = vmax.f32 %v8923, 0.0
        %v8960 = vmax.f32 %v8924, 0.0
        %v8961 = vmax.f32 %v8925, 0.0
        %v8962 = vmax.f32 %v8926, 0.0
        %v8963 = vmax.f32 %v8927, 0.0
        %v8964 = vmax.f32 %v8928, 0.0
        %v8965 = vmax.f32 %v8929, 0.0
        %v8966 = vmax.f32 %v8930, 0.0
        %v8967 = vmax.f32 %v8931, 0.0
        %v8968 = vmax.f32 %v8932, 0.0
        %v8969 = vmax.f32 %v8933, 0.0
        %v8970 = vmax.f32 %v8934, 0.0
        %v8971 = vmax.f32 %v8935, 0.0
        %v8972 = vmax.f32 %v8936, 0.0
        %v8973 = vmax.f32 %v8937, 0.0
        %v8974 = vmax.f32 %v8938, 0.0
        %v8975 = vmax.f32 %v8939, 0.0
        %v8976 = vmax.f32 %v8940, 0.0
        %v8977 = vmax.f32 %v8941, 0.0
        %v8978 = vmax.f32 %v8942, 0.0
        %v8979 = vmax.f32 %v8943, 0.0
        %v8980 = vmax.f32 %v8944, 0.0
        %v8981 = vmax.f32 %v8945, 0.0
        %v8982 = vmax.f32 %v8946, 0.0
        %v8983 = vmax.f32 %v8947, 0.0
        %v8984 = vmax.f32 %v8948, 0.0
        %v8985 = vmax.f32 %v8949, 0.0
        %v8986 = vmax.f32 %v8950, 0.0
        %v8987 = vmax.f32 %v8951, 0.0
        %v8988 = vmax.f32 %v8952, 0.0
        %v8989 = vmax.f32 %v8953, 0.0
        %v8990 = vmax.f32 %v8954, 0.0
        %v8991 = vmax.f32 %v8955, 0.0
        %v8992 = vmax.f32 %v8956, 0.0
        %v8993 = vmax.f32 %v8957, 0.0
        %v8994 = vpack.c.bf16 %v8959, %v8958
        %v8995 = vpack.c.bf16 %v8961, %v8960
        %v8996 = vpack.c.bf16 %v8963, %v8962
        %v8997 = vpack.c.bf16 %v8965, %v8964
        %v8998 = vpack.c.bf16 %v8967, %v8966
        %v8999 = vpack.c.bf16 %v8969, %v8968
        %v9000 = vpack.c.bf16 %v8971, %v8970
        %v9001 = vpack.c.bf16 %v8973, %v8972
        %v9002 = vpack.c.bf16 %v8975, %v8974
        %v9003 = vpack.c.bf16 %v8977, %v8976
        %v9004 = vpack.c.bf16 %v8979, %v8978
        %v9005 = vpack.c.bf16 %v8981, %v8980
        %v9006 = vpack.c.bf16 %v8983, %v8982
        %v9007 = vpack.c.bf16 %v8985, %v8984
        %v9008 = vpack.c.bf16 %v8987, %v8986
        %v9009 = vpack.c.bf16 %v8989, %v8988
        %v9010 = vpack.c.bf16 %v8991, %v8990
        %v9011 = vpack.c.bf16 %v8993, %v8992
        %v9030 = vunpack.c.l.b16 %v8994
        %v9031 = vunpack.c.h.b16 %v8994
        %v9032 = vunpack.c.l.b16 %v8995
        %v9033 = vunpack.c.h.b16 %v8995
        %v9034 = vunpack.c.l.b16 %v8996
        %v9035 = vunpack.c.h.b16 %v8996
        %v9036 = vunpack.c.l.b16 %v8997
        %v9037 = vunpack.c.h.b16 %v8997
        %v9038 = vunpack.c.l.b16 %v8998
        %v9039 = vunpack.c.h.b16 %v8998
        %v9040 = vunpack.c.l.b16 %v8999
        %v9041 = vunpack.c.h.b16 %v8999
        %v9042 = vunpack.c.l.b16 %v9000
        %v9043 = vunpack.c.h.b16 %v9000
        %v9044 = vunpack.c.l.b16 %v9001
        %v9045 = vunpack.c.h.b16 %v9001
        %v9046 = vunpack.c.l.b16 %v9002
        %v9047 = vunpack.c.h.b16 %v9002
        %v9048 = vunpack.c.l.b16 %v9003
        %v9049 = vunpack.c.h.b16 %v9003
        %v9050 = vunpack.c.l.b16 %v9004
        %v9051 = vunpack.c.h.b16 %v9004
        %v9052 = vunpack.c.l.b16 %v9005
        %v9053 = vunpack.c.h.b16 %v9005
        %v9054 = vunpack.c.l.b16 %v9006
        %v9055 = vunpack.c.h.b16 %v9006
        %v9056 = vunpack.c.l.b16 %v9007
        %v9057 = vunpack.c.h.b16 %v9007
        %v9058 = vunpack.c.l.b16 %v9008
        %v9059 = vunpack.c.h.b16 %v9008
        %v9060 = vunpack.c.l.b16 %v9009
        %v9061 = vunpack.c.h.b16 %v9009
        %v9062 = vunpack.c.l.b16 %v9010
        %v9063 = vunpack.c.h.b16 %v9010
        %v9064 = vunpack.c.l.b16 %v9011
        %v9065 = vunpack.c.h.b16 %v9011
        %v9066 = vpack.c.b16 %v9030, %v9030
        %v9067 = vpack.c.b16 %v9031, %v9031
        %v9068 = vpack.c.b16 %v9032, %v9032
        %v9069 = vpack.c.b16 %v9033, %v9033
        %v9070 = vpack.c.b16 %v9034, %v9034
        %v9071 = vpack.c.b16 %v9035, %v9035
        %v9072 = vpack.c.b16 %v9036, %v9036
        %v9073 = vpack.c.b16 %v9037, %v9037
        %v9074 = vpack.c.b16 %v9038, %v9038
        %v9075 = vpack.c.b16 %v9039, %v9039
        %v9076 = vpack.c.b16 %v9040, %v9040
        %v9077 = vpack.c.b16 %v9041, %v9041
        %v9078 = vpack.c.b16 %v9042, %v9042
        %v9079 = vpack.c.b16 %v9043, %v9043
        %v9080 = vpack.c.b16 %v9044, %v9044
        %v9081 = vpack.c.b16 %v9045, %v9045
        %v9082 = vpack.c.b16 %v9046, %v9046
        %v9083 = vpack.c.b16 %v9047, %v9047
        %v9084 = vpack.c.b16 %v9048, %v9048
        %v9085 = vpack.c.b16 %v9049, %v9049
        %v9086 = vpack.c.b16 %v9050, %v9050
        %v9087 = vpack.c.b16 %v9051, %v9051
        %v9088 = vpack.c.b16 %v9052, %v9052
        %v9089 = vpack.c.b16 %v9053, %v9053
        %v9090 = vpack.c.b16 %v9054, %v9054
        %v9091 = vpack.c.b16 %v9055, %v9055
        %v9092 = vpack.c.b16 %v9056, %v9056
        %v9093 = vpack.c.b16 %v9057, %v9057
        %v9094 = vpack.c.b16 %v9058, %v9058
        %v9095 = vpack.c.b16 %v9059, %v9059
        %v9096 = vpack.c.b16 %v9060, %v9060
        %v9097 = vpack.c.b16 %v9061, %v9061
        %v9098 = vpack.c.b16 %v9062, %v9062
        %v9099 = vpack.c.b16 %v9063, %v9063
        %v9100 = vpack.c.b16 %v9064, %v9064
        %v9101 = vpack.c.b16 %v9065, %v9065
        %9138 = vst [vmem:[%s293] sm:$0xf] %v9066
        %9139 = vst [vmem:[%s293 + $0x4] sm:$0xf] %v9067
        %9140 = vst [vmem:[%s293 + $0x8] sm:$0xf] %v9068
        %9141 = vst [vmem:[%s293 + $0xc] sm:$0xf] %v9069
        %9142 = vst [vmem:[%s293 + $0x10] sm:$0xf] %v9070
        %9143 = vst [vmem:[%s293 + $0x14] sm:$0xf] %v9071
        %9144 = vst [vmem:[%s293 + $0x18] sm:$0xf] %v9072
        %9145 = vst [vmem:[%s293 + $0x1c] sm:$0xf] %v9073
        %9146 = vst [vmem:[%s293 + $0x20] sm:$0xf] %v9074
        %9147 = vst [vmem:[%s293 + $0x24] sm:$0xf] %v9075
        %9148 = vst [vmem:[%s293 + $0x28] sm:$0xf] %v9076
        %9149 = vst [vmem:[%s293 + $0x2c] sm:$0xf] %v9077
        %9150 = vst [vmem:[%s293 + $0x30] sm:$0xf] %v9078
        %9151 = vst [vmem:[%s293 + $0x34] sm:$0xf] %v9079
        %9152 = vst [vmem:[%s293 + $0x38] sm:$0xf] %v9080
        %9153 = vst [vmem:[%s293 + $0x3c] sm:$0xf] %v9081
        %9154 = vst [vmem:[%s293 + $0x40] sm:$0xf] %v9082
        %9155 = vst [vmem:[%s293 + $0x44] sm:$0xf] %v9083
        %9156 = vst [vmem:[%s293 + $0x48] sm:$0xf] %v9084
        %9157 = vst [vmem:[%s293 + $0x4c] sm:$0xf] %v9085
        %9158 = vst [vmem:[%s293 + $0x50] sm:$0xf] %v9086
        %9159 = vst [vmem:[%s293 + $0x54] sm:$0xf] %v9087
        %9160 = vst [vmem:[%s293 + $0x58] sm:$0xf] %v9088
        %9161 = vst [vmem:[%s293 + $0x5c] sm:$0xf] %v9089
        %9162 = vst [vmem:[%s293 + $0x60] sm:$0xf] %v9090
        %9163 = vst [vmem:[%s293 + $0x64] sm:$0xf] %v9091
        %9164 = vst [vmem:[%s293 + $0x68] sm:$0xf] %v9092
        %9165 = vst [vmem:[%s293 + $0x6c] sm:$0xf] %v9093
        %9166 = vst [vmem:[%s293 + $0x70] sm:$0xf] %v9094
        %9167 = vst [vmem:[%s293 + $0x74] sm:$0xf] %v9095
        %9168 = vst [vmem:[%s293 + $0x78] sm:$0xf] %v9096
        %9169 = vst [vmem:[%s293 + $0x7c] sm:$0xf] %v9097
        %9170 = vst [vmem:[%s293 + $0x80] sm:$0xf] %v9098
        %9171 = vst [vmem:[%s293 + $0x84] sm:$0xf] %v9099
        %9172 = vst [vmem:[%s293 + $0x88] sm:$0xf] %v9100
        %9173 = vst [vmem:[%s293 + $0x8c] sm:$0xf] %v9101
        %p9174 = scmp.lt.s32.totalorder %s19, 1
        %s9175 = scalar_select %p9174, %s19, 1
        %s9176 = smul.addr %s9175, 36
        %s9177 = smul.addr %s9176, 4
        %s9178 = scalar_lea.vmem %s7, %s9177
        // Predicated region
        $region53: #{basic_block_forward.1} parent=47 // pred_check
          %p9179 = pneg %p189
        $region54: #{basic_block_forward.1} parent=47 // pred_check_branch
          %9181 = sbr.rel (%p9179) target = $region56
        $region55: #{basic_block_forward.1} parent=47 // pred_region
          _
        $region56: #{basic_block_forward.1} parent=47 // pred_fallthru
          _
      $region48: #{basic_block_forward.1} parent=5 // pred_fallthru
        _
      %p9182 = scmp.le.s32.totalorder 2, %s14
      // Predicated region
      $region57: #{basic_block_forward.1} parent=5 // pred_check
        %p9183 = pneg %p9182
      $region58: #{basic_block_forward.1} parent=5 // pred_check_branch
        %9185 = sbr.rel (%p9183) target = $region60
      $region59: #{basic_block_forward.1} parent=5 // pred_region
        %s9186 = ssub.s32 %s14, 2
        // Predicated region
        $region61: #{basic_block_forward.1} parent=59 // pred_check
          %p9187 = pneg %p195
        $region62: #{basic_block_forward.1} parent=59 // pred_check_branch
          %9189 = sbr.rel (%p9187) target = $region64
        $region63: #{basic_block_forward.1} parent=59 // pred_region
          %p9190 = scmp.lt.s32.totalorder %s20, 1
          %s9191 = scalar_select %p9190, %s20, 1
          %s9192 = smul.addr %s9191, 36
          %s9193 = smul.addr %s9192, 4
          %s9194 = scalar_lea.vmem %s7, %s9193
        $region64: #{basic_block_forward.1} parent=59 // pred_fallthru
          _
      $region60: #{basic_block_forward.1} parent=5 // pred_fallthru
        _
    $region6: #{basic_block_forward.1} parent=1 // loop_footer
      %s18 = sadd.s32 1, %s14
    $region7: #{basic_block_forward.1} parent=1 // loop_footer_branch
      %13 = sbr.rel target = $region3
    $region8: #{basic_block_forward.1} parent=1 // loop_exit
      _
    %9195 = vsyncpa [#allocation4], 1
    %s9196 = scalar_lea.sflag [#allocation4], 1
    %9197 = vsyncpa %s9196, 1

</llo_original>
